<compile_context>
chip_gen: v5e
topology: v5e:2x2
jax: 0.10.0
libtpu: 0.0.40
codegen_flags: <defaults>
</compile_context>

<pallas_src>
import functools

import numpy as np
import jax
import jax.numpy as jnp
from jax.experimental import pallas as pl
from jax.experimental.pallas import tpu as pltpu


# ----------------------------- in-kernel helpers -----------------------------

def _shift_rows(x, s):
    """y[r] = x[r + s] (cyclic along axis 0); callers mask wrapped rows."""
    R = x.shape[0]
    return pltpu.roll(x, shift=(-s) % R, axis=0)


def _conv3(x, w_ref, b_ref, edge, relu=True):
    """Conv1d(kernel=3, padding=1) + optional ReLU on batch-folded rows.

    x:     (R, Cin) f32 value, R = N * Lc (batch-major rows)
    w_ref: (3, Cin, Cout) bf16 ref      (tap k uses x[r + k - 1])
    b_ref: (1, Cout) f32 ref
    edge:  (left_ok, right_ok) precomputed (R, 1) f32 per-sample boundary masks
    """
    left_ok, right_ok = edge
    # center tap (k=1)
    acc = jnp.dot(x.astype(jnp.bfloat16), w_ref[1],
                  preferred_element_type=jnp.float32)
    # left tap (k=0) uses x[r-1]; invalid at the first row of each sample
    x_left = _shift_rows(x, -1) * left_ok
    acc = acc + jnp.dot(x_left.astype(jnp.bfloat16), w_ref[0],
                        preferred_element_type=jnp.float32)
    # right tap (k=2) uses x[r+1]; invalid at the last row of each sample
    x_right = _shift_rows(x, 1) * right_ok
    acc = acc + jnp.dot(x_right.astype(jnp.bfloat16), w_ref[2],
                        preferred_element_type=jnp.float32)
    acc = acc + b_ref[...]
    if relu:
        acc = jnp.maximum(acc, 0.0)
    return acc


def _conv_block(x, blk, edge):
    x = _conv3(x, blk["c1"]["w"], blk["c1"]["b"], edge)
    x = _conv3(x, blk["c2"]["w"], blk["c2"]["b"], edge)
    return x


def _pool_mats(R):
    """0/1 row-selection matrices picking even / odd rows: each (R//2, R)."""
    Rh = R // 2
    i = jax.lax.broadcasted_iota(jnp.int32, (Rh, R), 0)
    j = jax.lax.broadcasted_iota(jnp.int32, (Rh, R), 1)
    sel_even = jnp.where(j == 2 * i, 1.0, 0.0)
    sel_odd = jnp.where(j == 2 * i + 1, 1.0, 0.0)
    return sel_even, sel_odd


def _unpool_mats(R):
    """Transposed selection matrices scattering back to even/odd rows: (R, R//2)."""
    Rh = R // 2
    i = jax.lax.broadcasted_iota(jnp.int32, (R, Rh), 0)
    j = jax.lax.broadcasted_iota(jnp.int32, (R, Rh), 1)
    put_even = jnp.where(i == 2 * j, 1.0, 0.0)
    put_odd = jnp.where(i == 2 * j + 1, 1.0, 0.0)
    return put_even, put_odd


def _maxpool2(x, sel):
    """MaxPool1d(2,2) with indices via precomputed selection matmuls (VMEM only)."""
    sel_even, sel_odd = sel
    even = jnp.dot(sel_even, x, preferred_element_type=jnp.float32)
    odd = jnp.dot(sel_odd, x, preferred_element_type=jnp.float32)
    pooled = jnp.maximum(even, odd)
    take_odd = odd > even              # even wins ties (PyTorch first-index rule)
    return pooled, take_odd


def _unpool_add(v, take_odd, skip, put):
    """MaxUnpool1d(2,2)(v, idx) + skip via precomputed transposed selections."""
    put_even, put_odd = put
    v_even = jnp.where(take_odd, 0.0, v)
    v_odd = jnp.where(take_odd, v, 0.0)
    up = (jnp.dot(put_even, v_even, preferred_element_type=jnp.float32)
          + jnp.dot(put_odd, v_odd, preferred_element_type=jnp.float32))
    return skip + up


def _unet(x, p, geom):
    e0, e1, e2, sel0, sel1, put0, put1 = geom
    f1 = _conv_block(x, p["l1"], e0)
    f1p, i1 = _maxpool2(f1, sel0)
    f2 = _conv_block(f1p, p["l2"], e1)
    f2p, i2 = _maxpool2(f2, sel1)
    d2 = _conv_block(f2p, p["l3"], e2)
    t = _unpool_add(d2, i2, f2, put1)
    d1 = _conv_block(t, p["r2"], e1)
    t = _unpool_add(d1, i1, f1, put0)
    return _conv_block(t, p["r1"], e0)


def _psf_logconv(x, psf_ref, rmod, Lc, K):
    """log(conv1d(exp(x), psf, padding=(K-1)//2)) with log-sum-exp stabilization.

    x: (R, 1) f32 batch-folded; out-of-sample taps contribute 0, matching
    PyTorch's zero padding of exp(x).
    """
    pad = (K - 1) // 2
    neg = jnp.float32(-1e30)           # exp(neg - m) underflows to exactly 0
    shifted = []
    for k in range(K):
        s = k - pad
        if s == 0:
            shifted.append(x)
        else:
            xs = _shift_rows(x, s)
            valid = (rmod >= -s) if s < 0 else (rmod <= Lc - 1 - s)
            shifted.append(jnp.where(valid, xs, neg))
    m = shifted[0]
    for xs in shifted[1:]:
        m = jnp.maximum(m, xs)         # per-window max (center tap keeps it finite)
    acc = jnp.zeros_like(x)
    for k in range(K):
        acc = acc + psf_ref[k] * jnp.exp(shifted[k] - m)
    return m + jnp.log(acc)


# ------------------------------- fused kernel -------------------------------

def _combine_kernel(*refs, treedef, n_params, L, K_psf):
    x_ref, rm0_ref, rm1_ref, rm2_ref = refs[:4]
    param_refs = refs[4:4 + n_params]
    psf_ref = refs[4 + n_params]
    xc_ref = refs[5 + n_params]        # x_clear output
    xv_ref = refs[6 + n_params]        # x_conv  output
    p = jax.tree_util.tree_unflatten(treedef, list(param_refs))

    rm0 = rm0_ref[...]
    rm1 = rm1_ref[...]
    rm2 = rm2_ref[...]
    R0 = rm0.shape[0]
    R1 = rm1.shape[0]

    # -------- geometry hoisted: built ONCE, reused by all 3 UNet modules -----
    def edge(rmod, Lc):
        return (jnp.where(rmod >= 1, 1.0, 0.0),          # left tap valid
                jnp.where(rmod <= Lc - 2, 1.0, 0.0))      # right tap valid

    geom = (edge(rm0, L), edge(rm1, L // 2), edge(rm2, L // 4),
            _pool_mats(R0), _pool_mats(R1),
            _unpool_mats(R0), _unpool_mats(R1))

    # conv_in: Conv1d(1 -> 64, kernel_size=1) + ReLU (broadcast multiply-add)
    h = jnp.maximum(x_ref[...] * p["conv_in"]["w"][...] + p["conv_in"]["b"][...],
                    0.0)

    # three UNet modules; all activations stay in VMEM / vregs
    h = _unet(h, p["u1"], geom)
    h = _unet(h, p["u2"], geom)
    h = _unet(h, p["u3"], geom)

    # conv_out: Conv1d(64 -> 1, kernel_size=1), no ReLU (lane reduction)
    x_clear = (jnp.sum(h * p["conv_out"]["w"][...], axis=1, keepdims=True)
               + p["conv_out"]["b"][...])
    xc_ref[...] = x_clear

    # ConvPSF: log(conv1d(exp(x_clear), psf)), fused (no extra HBM round-trip)
    xv_ref[...] = _psf_logconv(x_clear, psf_ref, rm0, L, K_psf)


# --------------------------------- wrapper ----------------------------------

def combine_net(params, psf, x_ncl):
    """x_ncl: (N, 1, L) float32 (PyTorch NCL). Returns (psf, x_conv, x_clear)."""
    N, _, L = x_ncl.shape
    if L % 4 != 0:
        raise ValueError("L must be divisible by 4 (two MaxPool1d(2,2) levels).")
    R0 = N * L
    K = int(psf.shape[0])

    x2d = x_ncl.reshape(R0, 1)                      # batch-folded rows

    def row_mod(lc):
        return (jnp.arange(N * lc, dtype=jnp.int32) % lc).reshape(N * lc, 1)

    rm0, rm1, rm2 = row_mod(L), row_mod(L // 2), row_mod(L // 4)

    flat, treedef = jax.tree_util.tree_flatten(params)
    kernel = functools.partial(_combine_kernel, treedef=treedef,
                               n_params=len(flat), L=L, K_psf=K)

    vmem = pl.BlockSpec(memory_space=pltpu.MemorySpace.VMEM)
    smem = pl.BlockSpec(memory_space=pltpu.MemorySpace.SMEM)

    x_clear2d, x_conv2d = pl.pallas_call(
        kernel,
        out_shape=(jax.ShapeDtypeStruct((R0, 1), jnp.float32),
                   jax.ShapeDtypeStruct((R0, 1), jnp.float32)),
        in_specs=[vmem] * (4 + len(flat)) + [smem],
        out_specs=(vmem, vmem),
    )(x2d, rm0, rm1, rm2, *flat, psf)

    x_clear = x_clear2d.reshape(N, 1, L)
    x_conv = x_conv2d.reshape(N, 1, L)
    return psf[None, None, :], x_conv, x_clear


# -------------------------- parameter initialization -------------------------

def _init_conv3(key, cin, cout):
    bound = 1.0 / np.sqrt(cin * 3)
    kw, kb = jax.random.split(key)
    w = jax.random.uniform(kw, (3, cin, cout), jnp.float32, -bound, bound)
    b = jax.random.uniform(kb, (1, cout), jnp.float32, -bound, bound)
    return {"w": w.astype(jnp.bfloat16), "b": b}     # bf16 weights feed the MXU


def _init_conv_in(key):
    # Conv1d(1, 64, kernel_size=1): stored as a (1, 64) row, w[0, cout]
    bound = 1.0
    kw, kb = jax.random.split(key)
    return {"w": jax.random.uniform(kw, (1, 64), jnp.float32, -bound, bound),
            "b": jax.random.uniform(kb, (1, 64), jnp.float32, -bound, bound)}


def _init_conv_out(key):
    # Conv1d(64, 1, kernel_size=1): stored as a (1, 64) row, w[0, cin]
    bound = 1.0 / np.sqrt(64)
    kw, kb = jax.random.split(key)
    return {"w": jax.random.uniform(kw, (1, 64), jnp.float32, -bound, bound),
            "b": jax.random.uniform(kb, (1, 1), jnp.float32, -bound, bound)}


def _init_block(key, cin, cmid, cout):
    k1, k2 = jax.random.split(key)
    return {"c1": _init_conv3(k1, cin, cmid), "c2": _init_conv3(k2, cmid, cout)}


def _init_unet(key, cin):
    ks = jax.random.split(key, 5)
    return {"l1": _init_block(ks[0], cin, 64, 64),
            "l2": _init_block(ks[1], 64, 128, 128),
            "l3": _init_block(ks[2], 128, 256, 128),
            "r2": _init_block(ks[3], 128, 128, 64),
            "r1": _init_block(ks[4], 64, 64, 64)}


def _init_params(key):
    ks = jax.random.split(key, 5)
    return {"conv_in": _init_conv_in(ks[0]),
            "u1": _init_unet(ks[1], 64),
            "u2": _init_unet(ks[2], 64),
            "u3": _init_unet(ks[3], 64),
            "conv_out": _init_conv_out(ks[4])}


# -------------------------------- entry point --------------------------------

if __name__ == "__main__":
    key = jax.random.PRNGKey(0)
    kp, kx = jax.random.split(key)
    params = _init_params(kp)

    # TODO(synk): the original module loads the PSF from 'PSF.mat'; synthesized
    # deterministically here as a normalized Gaussian of length 7.
    t = jnp.arange(7, dtype=jnp.float32) - 3.0
    psf = jnp.exp(-0.5 * (t / 1.5) ** 2)
    psf = psf / jnp.sum(psf)

    N, L = 2, 16
    x = jax.random.normal(kx, (N, 1, L), dtype=jnp.float32)

    psf_out, x_conv, x_clear = jax.jit(combine_net)(params, psf, x)
    jax.block_until_ready((psf_out, x_conv, x_clear))

    assert psf_out.shape == (1, 1, 7)
    assert x_conv.shape == (N, 1, L)
    assert x_clear.shape == (N, 1, L)
    assert bool(jnp.all(jnp.isfinite(x_conv))) and bool(jnp.all(jnp.isfinite(x_clear)))
    print("KERNEL_OK")
</pallas_src>

<mosaic_0001>
module attributes {stable_mosaic.version = 11 : i64} {
  func.func @_combine_kernel(%arg0: memref<32x1xf32, #tpu.memory_space<vmem>>, %arg1: memref<32x1xi32, #tpu.memory_space<vmem>>, %arg2: memref<16x1xi32, #tpu.memory_space<vmem>>, %arg3: memref<8x1xi32, #tpu.memory_space<vmem>>, %arg4: memref<1x64xf32, #tpu.memory_space<vmem>>, %arg5: memref<1x64xf32, #tpu.memory_space<vmem>>, %arg6: memref<1x1xf32, #tpu.memory_space<vmem>>, %arg7: memref<1x64xf32, #tpu.memory_space<vmem>>, %arg8: memref<1x64xf32, #tpu.memory_space<vmem>>, %arg9: memref<3x64x64xbf16, #tpu.memory_space<vmem>>, %arg10: memref<1x64xf32, #tpu.memory_space<vmem>>, %arg11: memref<3x64x64xbf16, #tpu.memory_space<vmem>>, %arg12: memref<1x128xf32, #tpu.memory_space<vmem>>, %arg13: memref<3x64x128xbf16, #tpu.memory_space<vmem>>, %arg14: memref<1x128xf32, #tpu.memory_space<vmem>>, %arg15: memref<3x128x128xbf16, #tpu.memory_space<vmem>>, %arg16: memref<1x256xf32, #tpu.memory_space<vmem>>, %arg17: memref<3x128x256xbf16, #tpu.memory_space<vmem>>, %arg18: memref<1x128xf32, #tpu.memory_space<vmem>>, %arg19: memref<3x256x128xbf16, #tpu.memory_space<vmem>>, %arg20: memref<1x64xf32, #tpu.memory_space<vmem>>, %arg21: memref<3x64x64xbf16, #tpu.memory_space<vmem>>, %arg22: memref<1x64xf32, #tpu.memory_space<vmem>>, %arg23: memref<3x64x64xbf16, #tpu.memory_space<vmem>>, %arg24: memref<1x128xf32, #tpu.memory_space<vmem>>, %arg25: memref<3x128x128xbf16, #tpu.memory_space<vmem>>, %arg26: memref<1x64xf32, #tpu.memory_space<vmem>>, %arg27: memref<3x128x64xbf16, #tpu.memory_space<vmem>>, %arg28: memref<1x64xf32, #tpu.memory_space<vmem>>, %arg29: memref<3x64x64xbf16, #tpu.memory_space<vmem>>, %arg30: memref<1x64xf32, #tpu.memory_space<vmem>>, %arg31: memref<3x64x64xbf16, #tpu.memory_space<vmem>>, %arg32: memref<1x128xf32, #tpu.memory_space<vmem>>, %arg33: memref<3x64x128xbf16, #tpu.memory_space<vmem>>, %arg34: memref<1x128xf32, #tpu.memory_space<vmem>>, %arg35: memref<3x128x128xbf16, #tpu.memory_space<vmem>>, %arg36: memref<1x256xf32, #tpu.memory_space<vmem>>, %arg37: memref<3x128x256xbf16, #tpu.memory_space<vmem>>, %arg38: memref<1x128xf32, #tpu.memory_space<vmem>>, %arg39: memref<3x256x128xbf16, #tpu.memory_space<vmem>>, %arg40: memref<1x64xf32, #tpu.memory_space<vmem>>, %arg41: memref<3x64x64xbf16, #tpu.memory_space<vmem>>, %arg42: memref<1x64xf32, #tpu.memory_space<vmem>>, %arg43: memref<3x64x64xbf16, #tpu.memory_space<vmem>>, %arg44: memref<1x128xf32, #tpu.memory_space<vmem>>, %arg45: memref<3x128x128xbf16, #tpu.memory_space<vmem>>, %arg46: memref<1x64xf32, #tpu.memory_space<vmem>>, %arg47: memref<3x128x64xbf16, #tpu.memory_space<vmem>>, %arg48: memref<1x64xf32, #tpu.memory_space<vmem>>, %arg49: memref<3x64x64xbf16, #tpu.memory_space<vmem>>, %arg50: memref<1x64xf32, #tpu.memory_space<vmem>>, %arg51: memref<3x64x64xbf16, #tpu.memory_space<vmem>>, %arg52: memref<1x128xf32, #tpu.memory_space<vmem>>, %arg53: memref<3x64x128xbf16, #tpu.memory_space<vmem>>, %arg54: memref<1x128xf32, #tpu.memory_space<vmem>>, %arg55: memref<3x128x128xbf16, #tpu.memory_space<vmem>>, %arg56: memref<1x256xf32, #tpu.memory_space<vmem>>, %arg57: memref<3x128x256xbf16, #tpu.memory_space<vmem>>, %arg58: memref<1x128xf32, #tpu.memory_space<vmem>>, %arg59: memref<3x256x128xbf16, #tpu.memory_space<vmem>>, %arg60: memref<1x64xf32, #tpu.memory_space<vmem>>, %arg61: memref<3x64x64xbf16, #tpu.memory_space<vmem>>, %arg62: memref<1x64xf32, #tpu.memory_space<vmem>>, %arg63: memref<3x64x64xbf16, #tpu.memory_space<vmem>>, %arg64: memref<1x128xf32, #tpu.memory_space<vmem>>, %arg65: memref<3x128x128xbf16, #tpu.memory_space<vmem>>, %arg66: memref<1x64xf32, #tpu.memory_space<vmem>>, %arg67: memref<3x128x64xbf16, #tpu.memory_space<vmem>>, %arg68: memref<7xf32, #tpu.memory_space<smem>>, %arg69: memref<32x1xf32, #tpu.memory_space<vmem>>, %arg70: memref<32x1xf32, #tpu.memory_space<vmem>>) attributes {dimension_semantics = [], scalar_prefetch = 0 : i64, scratch_operands = 0 : i64, tpu.core_type = #tpu.core_type<tc>} {
    %c0 = arith.constant 0 : index
    %c0_0 = arith.constant 0 : index
    %0 = vector.load %arg1[%c0, %c0_0] : memref<32x1xi32, #tpu.memory_space<vmem>>, vector<32x1xi32>
    %c0_1 = arith.constant 0 : index
    %c0_2 = arith.constant 0 : index
    %1 = vector.load %arg2[%c0_1, %c0_2] : memref<16x1xi32, #tpu.memory_space<vmem>>, vector<16x1xi32>
    %c0_3 = arith.constant 0 : index
    %c0_4 = arith.constant 0 : index
    %2 = vector.load %arg3[%c0_3, %c0_4] : memref<8x1xi32, #tpu.memory_space<vmem>>, vector<8x1xi32>
    %c1_i32 = arith.constant 1 : i32
    %3 = vector.broadcast %c1_i32 : i32 to vector<32x1xi32>
    %4 = arith.cmpi sge, %0, %3 : vector<32x1xi32>
    %cst = arith.constant 1.000000e+00 : f32
    %cst_5 = arith.constant 0.000000e+00 : f32
    %5 = vector.broadcast %cst : f32 to vector<32x1xf32>
    %6 = vector.broadcast %cst_5 : f32 to vector<32x1xf32>
    %7 = arith.select %4, %5, %6 : vector<32x1xi1>, vector<32x1xf32>
    %c14_i32 = arith.constant 14 : i32
    %8 = vector.broadcast %c14_i32 : i32 to vector<32x1xi32>
    %9 = arith.cmpi sle, %0, %8 : vector<32x1xi32>
    %cst_6 = arith.constant 1.000000e+00 : f32
    %cst_7 = arith.constant 0.000000e+00 : f32
    %10 = vector.broadcast %cst_6 : f32 to vector<32x1xf32>
    %11 = vector.broadcast %cst_7 : f32 to vector<32x1xf32>
    %12 = arith.select %9, %10, %11 : vector<32x1xi1>, vector<32x1xf32>
    %c1_i32_8 = arith.constant 1 : i32
    %13 = vector.broadcast %c1_i32_8 : i32 to vector<16x1xi32>
    %14 = arith.cmpi sge, %1, %13 : vector<16x1xi32>
    %cst_9 = arith.constant 1.000000e+00 : f32
    %cst_10 = arith.constant 0.000000e+00 : f32
    %15 = vector.broadcast %cst_9 : f32 to vector<16x1xf32>
    %16 = vector.broadcast %cst_10 : f32 to vector<16x1xf32>
    %17 = arith.select %14, %15, %16 : vector<16x1xi1>, vector<16x1xf32>
    %c6_i32 = arith.constant 6 : i32
    %18 = vector.broadcast %c6_i32 : i32 to vector<16x1xi32>
    %19 = arith.cmpi sle, %1, %18 : vector<16x1xi32>
    %cst_11 = arith.constant 1.000000e+00 : f32
    %cst_12 = arith.constant 0.000000e+00 : f32
    %20 = vector.broadcast %cst_11 : f32 to vector<16x1xf32>
    %21 = vector.broadcast %cst_12 : f32 to vector<16x1xf32>
    %22 = arith.select %19, %20, %21 : vector<16x1xi1>, vector<16x1xf32>
    %c1_i32_13 = arith.constant 1 : i32
    %23 = vector.broadcast %c1_i32_13 : i32 to vector<8x1xi32>
    %24 = arith.cmpi sge, %2, %23 : vector<8x1xi32>
    %cst_14 = arith.constant 1.000000e+00 : f32
    %cst_15 = arith.constant 0.000000e+00 : f32
    %25 = vector.broadcast %cst_14 : f32 to vector<8x1xf32>
    %26 = vector.broadcast %cst_15 : f32 to vector<8x1xf32>
    %27 = arith.select %24, %25, %26 : vector<8x1xi1>, vector<8x1xf32>
    %c2_i32 = arith.constant 2 : i32
    %28 = vector.broadcast %c2_i32 : i32 to vector<8x1xi32>
    %29 = arith.cmpi sle, %2, %28 : vector<8x1xi32>
    %cst_16 = arith.constant 1.000000e+00 : f32
    %cst_17 = arith.constant 0.000000e+00 : f32
    %30 = vector.broadcast %cst_16 : f32 to vector<8x1xf32>
    %31 = vector.broadcast %cst_17 : f32 to vector<8x1xf32>
    %32 = arith.select %29, %30, %31 : vector<8x1xi1>, vector<8x1xf32>
    %33 = tpu.iota {dimensions = array<i32: 0>} : vector<16x32xi32>
    %34 = tpu.iota {dimensions = array<i32: 1>} : vector<16x32xi32>
    %c2_i32_18 = arith.constant 2 : i32
    %35 = vector.broadcast %c2_i32_18 : i32 to vector<16x32xi32>
    %36 = arith.muli %35, %33 : vector<16x32xi32>
    %37 = arith.cmpi eq, %34, %36 : vector<16x32xi32>
    %cst_19 = arith.constant 1.000000e+00 : f32
    %cst_20 = arith.constant 0.000000e+00 : f32
    %38 = vector.broadcast %cst_19 : f32 to vector<16x32xf32>
    %39 = vector.broadcast %cst_20 : f32 to vector<16x32xf32>
    %40 = arith.select %37, %38, %39 : vector<16x32xi1>, vector<16x32xf32>
    %c2_i32_21 = arith.constant 2 : i32
    %41 = vector.broadcast %c2_i32_21 : i32 to vector<16x32xi32>
    %42 = arith.muli %41, %33 : vector<16x32xi32>
    %c1_i32_22 = arith.constant 1 : i32
    %43 = vector.broadcast %c1_i32_22 : i32 to vector<16x32xi32>
    %44 = arith.addi %42, %43 : vector<16x32xi32>
    %45 = arith.cmpi eq, %34, %44 : vector<16x32xi32>
    %cst_23 = arith.constant 1.000000e+00 : f32
    %cst_24 = arith.constant 0.000000e+00 : f32
    %46 = vector.broadcast %cst_23 : f32 to vector<16x32xf32>
    %47 = vector.broadcast %cst_24 : f32 to vector<16x32xf32>
    %48 = arith.select %45, %46, %47 : vector<16x32xi1>, vector<16x32xf32>
    %49 = tpu.iota {dimensions = array<i32: 0>} : vector<8x16xi32>
    %50 = tpu.iota {dimensions = array<i32: 1>} : vector<8x16xi32>
    %c2_i32_25 = arith.constant 2 : i32
    %51 = vector.broadcast %c2_i32_25 : i32 to vector<8x16xi32>
    %52 = arith.muli %51, %49 : vector<8x16xi32>
    %53 = arith.cmpi eq, %50, %52 : vector<8x16xi32>
    %cst_26 = arith.constant 1.000000e+00 : f32
    %cst_27 = arith.constant 0.000000e+00 : f32
    %54 = vector.broadcast %cst_26 : f32 to vector<8x16xf32>
    %55 = vector.broadcast %cst_27 : f32 to vector<8x16xf32>
    %56 = arith.select %53, %54, %55 : vector<8x16xi1>, vector<8x16xf32>
    %c2_i32_28 = arith.constant 2 : i32
    %57 = vector.broadcast %c2_i32_28 : i32 to vector<8x16xi32>
    %58 = arith.muli %57, %49 : vector<8x16xi32>
    %c1_i32_29 = arith.constant 1 : i32
    %59 = vector.broadcast %c1_i32_29 : i32 to vector<8x16xi32>
    %60 = arith.addi %58, %59 : vector<8x16xi32>
    %61 = arith.cmpi eq, %50, %60 : vector<8x16xi32>
    %cst_30 = arith.constant 1.000000e+00 : f32
    %cst_31 = arith.constant 0.000000e+00 : f32
    %62 = vector.broadcast %cst_30 : f32 to vector<8x16xf32>
    %63 = vector.broadcast %cst_31 : f32 to vector<8x16xf32>
    %64 = arith.select %61, %62, %63 : vector<8x16xi1>, vector<8x16xf32>
    %65 = tpu.iota {dimensions = array<i32: 0>} : vector<32x16xi32>
    %66 = tpu.iota {dimensions = array<i32: 1>} : vector<32x16xi32>
    %c2_i32_32 = arith.constant 2 : i32
    %67 = vector.broadcast %c2_i32_32 : i32 to vector<32x16xi32>
    %68 = arith.muli %67, %66 : vector<32x16xi32>
    %69 = arith.cmpi eq, %65, %68 : vector<32x16xi32>
    %cst_33 = arith.constant 1.000000e+00 : f32
    %cst_34 = arith.constant 0.000000e+00 : f32
    %70 = vector.broadcast %cst_33 : f32 to vector<32x16xf32>
    %71 = vector.broadcast %cst_34 : f32 to vector<32x16xf32>
    %72 = arith.select %69, %70, %71 : vector<32x16xi1>, vector<32x16xf32>
    %c2_i32_35 = arith.constant 2 : i32
    %73 = vector.broadcast %c2_i32_35 : i32 to vector<32x16xi32>
    %74 = arith.muli %73, %66 : vector<32x16xi32>
    %c1_i32_36 = arith.constant 1 : i32
    %75 = vector.broadcast %c1_i32_36 : i32 to vector<32x16xi32>
    %76 = arith.addi %74, %75 : vector<32x16xi32>
    %77 = arith.cmpi eq, %65, %76 : vector<32x16xi32>
    %cst_37 = arith.constant 1.000000e+00 : f32
    %cst_38 = arith.constant 0.000000e+00 : f32
    %78 = vector.broadcast %cst_37 : f32 to vector<32x16xf32>
    %79 = vector.broadcast %cst_38 : f32 to vector<32x16xf32>
    %80 = arith.select %77, %78, %79 : vector<32x16xi1>, vector<32x16xf32>
    %81 = tpu.iota {dimensions = array<i32: 0>} : vector<16x8xi32>
    %82 = tpu.iota {dimensions = array<i32: 1>} : vector<16x8xi32>
    %c2_i32_39 = arith.constant 2 : i32
    %83 = vector.broadcast %c2_i32_39 : i32 to vector<16x8xi32>
    %84 = arith.muli %83, %82 : vector<16x8xi32>
    %85 = arith.cmpi eq, %81, %84 : vector<16x8xi32>
    %cst_40 = arith.constant 1.000000e+00 : f32
    %cst_41 = arith.constant 0.000000e+00 : f32
    %86 = vector.broadcast %cst_40 : f32 to vector<16x8xf32>
    %87 = vector.broadcast %cst_41 : f32 to vector<16x8xf32>
    %88 = arith.select %85, %86, %87 : vector<16x8xi1>, vector<16x8xf32>
    %c2_i32_42 = arith.constant 2 : i32
    %89 = vector.broadcast %c2_i32_42 : i32 to vector<16x8xi32>
    %90 = arith.muli %89, %82 : vector<16x8xi32>
    %c1_i32_43 = arith.constant 1 : i32
    %91 = vector.broadcast %c1_i32_43 : i32 to vector<16x8xi32>
    %92 = arith.addi %90, %91 : vector<16x8xi32>
    %93 = arith.cmpi eq, %81, %92 : vector<16x8xi32>
    %cst_44 = arith.constant 1.000000e+00 : f32
    %cst_45 = arith.constant 0.000000e+00 : f32
    %94 = vector.broadcast %cst_44 : f32 to vector<16x8xf32>
    %95 = vector.broadcast %cst_45 : f32 to vector<16x8xf32>
    %96 = arith.select %93, %94, %95 : vector<16x8xi1>, vector<16x8xf32>
    %c0_46 = arith.constant 0 : index
    %c0_47 = arith.constant 0 : index
    %97 = vector.load %arg0[%c0_46, %c0_47] : memref<32x1xf32, #tpu.memory_space<vmem>>, vector<32x1xf32>
    %c0_48 = arith.constant 0 : index
    %c0_49 = arith.constant 0 : index
    %98 = vector.load %arg5[%c0_48, %c0_49] : memref<1x64xf32, #tpu.memory_space<vmem>>, vector<1x64xf32>
    %99 = vector.broadcast %97 : vector<32x1xf32> to vector<32x64xf32>
    %100 = vector.broadcast %98 : vector<1x64xf32> to vector<32x64xf32>
    %101 = arith.mulf %99, %100 : vector<32x64xf32>
    %c0_50 = arith.constant 0 : index
    %c0_51 = arith.constant 0 : index
    %102 = vector.load %arg4[%c0_50, %c0_51] : memref<1x64xf32, #tpu.memory_space<vmem>>, vector<1x64xf32>
    %103 = vector.broadcast %102 : vector<1x64xf32> to vector<32x64xf32>
    %104 = arith.addf %101, %103 : vector<32x64xf32>
    %cst_52 = arith.constant 0.000000e+00 : f32
    %105 = vector.broadcast %cst_52 : f32 to vector<32x64xf32>
    %106 = arith.maximumf %104, %105 : vector<32x64xf32>
    %107 = arith.truncf %106 : vector<32x64xf32> to vector<32x64xbf16>
    %c1 = arith.constant 1 : index
    %c0_53 = arith.constant 0 : index
    %c0_54 = arith.constant 0 : index
    %108 = vector.load %arg9[%c1, %c0_53, %c0_54] : memref<3x64x64xbf16, #tpu.memory_space<vmem>>, vector<1x64x64xbf16>
    %109 = vector.shape_cast %108 : vector<1x64x64xbf16> to vector<64x64xbf16>
    %cst_55 = arith.constant dense<0.000000e+00> : vector<32x64xf32>
    %110 = tpu.matmul %107, %109, %cst_55 {dimension_numbers = #tpu.dot_dimension_numbers<[1], [0], [0], [1], [0, 0, 1, 1], [], []>} : vector<32x64xbf16>, vector<64x64xbf16>, vector<32x64xf32> -> vector<32x64xf32>
    %c1_i32_56 = arith.constant 1 : i32
    %111 = tpu.dynamic_rotate %106 by %c1_i32_56 dim 0 : vector<32x64xf32>, i32 -> vector<32x64xf32>
    %112 = vector.broadcast %7 : vector<32x1xf32> to vector<32x64xf32>
    %113 = arith.mulf %111, %112 : vector<32x64xf32>
    %114 = arith.truncf %113 : vector<32x64xf32> to vector<32x64xbf16>
    %c0_57 = arith.constant 0 : index
    %c0_58 = arith.constant 0 : index
    %c0_59 = arith.constant 0 : index
    %115 = vector.load %arg9[%c0_57, %c0_58, %c0_59] : memref<3x64x64xbf16, #tpu.memory_space<vmem>>, vector<1x64x64xbf16>
    %116 = vector.shape_cast %115 : vector<1x64x64xbf16> to vector<64x64xbf16>
    %cst_60 = arith.constant dense<0.000000e+00> : vector<32x64xf32>
    %117 = tpu.matmul %114, %116, %cst_60 {dimension_numbers = #tpu.dot_dimension_numbers<[1], [0], [0], [1], [0, 0, 1, 1], [], []>} : vector<32x64xbf16>, vector<64x64xbf16>, vector<32x64xf32> -> vector<32x64xf32>
    %118 = arith.addf %110, %117 : vector<32x64xf32>
    %c31_i32 = arith.constant 31 : i32
    %119 = tpu.dynamic_rotate %106 by %c31_i32 dim 0 : vector<32x64xf32>, i32 -> vector<32x64xf32>
    %120 = vector.broadcast %12 : vector<32x1xf32> to vector<32x64xf32>
    %121 = arith.mulf %119, %120 : vector<32x64xf32>
    %122 = arith.truncf %121 : vector<32x64xf32> to vector<32x64xbf16>
    %c2 = arith.constant 2 : index
    %c0_61 = arith.constant 0 : index
    %c0_62 = arith.constant 0 : index
    %123 = vector.load %arg9[%c2, %c0_61, %c0_62] : memref<3x64x64xbf16, #tpu.memory_space<vmem>>, vector<1x64x64xbf16>
    %124 = vector.shape_cast %123 : vector<1x64x64xbf16> to vector<64x64xbf16>
    %cst_63 = arith.constant dense<0.000000e+00> : vector<32x64xf32>
    %125 = tpu.matmul %122, %124, %cst_63 {dimension_numbers = #tpu.dot_dimension_numbers<[1], [0], [0], [1], [0, 0, 1, 1], [], []>} : vector<32x64xbf16>, vector<64x64xbf16>, vector<32x64xf32> -> vector<32x64xf32>
    %126 = arith.addf %118, %125 : vector<32x64xf32>
    %c0_64 = arith.constant 0 : index
    %c0_65 = arith.constant 0 : index
    %127 = vector.load %arg8[%c0_64, %c0_65] : memref<1x64xf32, #tpu.memory_space<vmem>>, vector<1x64xf32>
    %128 = vector.broadcast %127 : vector<1x64xf32> to vector<32x64xf32>
    %129 = arith.addf %126, %128 : vector<32x64xf32>
    %cst_66 = arith.constant 0.000000e+00 : f32
    %130 = vector.broadcast %cst_66 : f32 to vector<32x64xf32>
    %131 = arith.maximumf %129, %130 : vector<32x64xf32>
    %132 = arith.truncf %131 : vector<32x64xf32> to vector<32x64xbf16>
    %c1_67 = arith.constant 1 : index
    %c0_68 = arith.constant 0 : index
    %c0_69 = arith.constant 0 : index
    %133 = vector.load %arg11[%c1_67, %c0_68, %c0_69] : memref<3x64x64xbf16, #tpu.memory_space<vmem>>, vector<1x64x64xbf16>
    %134 = vector.shape_cast %133 : vector<1x64x64xbf16> to vector<64x64xbf16>
    %cst_70 = arith.constant dense<0.000000e+00> : vector<32x64xf32>
    %135 = tpu.matmul %132, %134, %cst_70 {dimension_numbers = #tpu.dot_dimension_numbers<[1], [0], [0], [1], [0, 0, 1, 1], [], []>} : vector<32x64xbf16>, vector<64x64xbf16>, vector<32x64xf32> -> vector<32x64xf32>
    %c1_i32_71 = arith.constant 1 : i32
    %136 = tpu.dynamic_rotate %131 by %c1_i32_71 dim 0 : vector<32x64xf32>, i32 -> vector<32x64xf32>
    %137 = vector.broadcast %7 : vector<32x1xf32> to vector<32x64xf32>
    %138 = arith.mulf %136, %137 : vector<32x64xf32>
    %139 = arith.truncf %138 : vector<32x64xf32> to vector<32x64xbf16>
    %c0_72 = arith.constant 0 : index
    %c0_73 = arith.constant 0 : index
    %c0_74 = arith.constant 0 : index
    %140 = vector.load %arg11[%c0_72, %c0_73, %c0_74] : memref<3x64x64xbf16, #tpu.memory_space<vmem>>, vector<1x64x64xbf16>
    %141 = vector.shape_cast %140 : vector<1x64x64xbf16> to vector<64x64xbf16>
    %cst_75 = arith.constant dense<0.000000e+00> : vector<32x64xf32>
    %142 = tpu.matmul %139, %141, %cst_75 {dimension_numbers = #tpu.dot_dimension_numbers<[1], [0], [0], [1], [0, 0, 1, 1], [], []>} : vector<32x64xbf16>, vector<64x64xbf16>, vector<32x64xf32> -> vector<32x64xf32>
    %143 = arith.addf %135, %142 : vector<32x64xf32>
    %c31_i32_76 = arith.constant 31 : i32
    %144 = tpu.dynamic_rotate %131 by %c31_i32_76 dim 0 : vector<32x64xf32>, i32 -> vector<32x64xf32>
    %145 = vector.broadcast %12 : vector<32x1xf32> to vector<32x64xf32>
    %146 = arith.mulf %144, %145 : vector<32x64xf32>
    %147 = arith.truncf %146 : vector<32x64xf32> to vector<32x64xbf16>
    %c2_77 = arith.constant 2 : index
    %c0_78 = arith.constant 0 : index
    %c0_79 = arith.constant 0 : index
    %148 = vector.load %arg11[%c2_77, %c0_78, %c0_79] : memref<3x64x64xbf16, #tpu.memory_space<vmem>>, vector<1x64x64xbf16>
    %149 = vector.shape_cast %148 : vector<1x64x64xbf16> to vector<64x64xbf16>
    %cst_80 = arith.constant dense<0.000000e+00> : vector<32x64xf32>
    %150 = tpu.matmul %147, %149, %cst_80 {dimension_numbers = #tpu.dot_dimension_numbers<[1], [0], [0], [1], [0, 0, 1, 1], [], []>} : vector<32x64xbf16>, vector<64x64xbf16>, vector<32x64xf32> -> vector<32x64xf32>
    %151 = arith.addf %143, %150 : vector<32x64xf32>
    %c0_81 = arith.constant 0 : index
    %c0_82 = arith.constant 0 : index
    %152 = vector.load %arg10[%c0_81, %c0_82] : memref<1x64xf32, #tpu.memory_space<vmem>>, vector<1x64xf32>
    %153 = vector.broadcast %152 : vector<1x64xf32> to vector<32x64xf32>
    %154 = arith.addf %151, %153 : vector<32x64xf32>
    %cst_83 = arith.constant 0.000000e+00 : f32
    %155 = vector.broadcast %cst_83 : f32 to vector<32x64xf32>
    %156 = arith.maximumf %154, %155 : vector<32x64xf32>
    %cst_84 = arith.constant dense<0.000000e+00> : vector<16x64xf32>
    %157 = tpu.matmul %40, %156, %cst_84 {dimension_numbers = #tpu.dot_dimension_numbers<[1], [0], [0], [1], [0, 0, 1, 1], [], []>} : vector<16x32xf32>, vector<32x64xf32>, vector<16x64xf32> -> vector<16x64xf32>
    %cst_85 = arith.constant dense<0.000000e+00> : vector<16x64xf32>
    %158 = tpu.matmul %48, %156, %cst_85 {dimension_numbers = #tpu.dot_dimension_numbers<[1], [0], [0], [1], [0, 0, 1, 1], [], []>} : vector<16x32xf32>, vector<32x64xf32>, vector<16x64xf32> -> vector<16x64xf32>
    %159 = arith.maximumf %157, %158 : vector<16x64xf32>
    %160 = arith.cmpf ogt, %158, %157 : vector<16x64xf32>
    %161 = arith.truncf %159 : vector<16x64xf32> to vector<16x64xbf16>
    %c1_86 = arith.constant 1 : index
    %c0_87 = arith.constant 0 : index
    %c0_88 = arith.constant 0 : index
    %162 = vector.load %arg13[%c1_86, %c0_87, %c0_88] : memref<3x64x128xbf16, #tpu.memory_space<vmem>>, vector<1x64x128xbf16>
    %163 = vector.shape_cast %162 : vector<1x64x128xbf16> to vector<64x128xbf16>
    %cst_89 = arith.constant dense<0.000000e+00> : vector<16x128xf32>
    %164 = tpu.matmul %161, %163, %cst_89 {dimension_numbers = #tpu.dot_dimension_numbers<[1], [0], [0], [1], [0, 0, 1, 1], [], []>} : vector<16x64xbf16>, vector<64x128xbf16>, vector<16x128xf32> -> vector<16x128xf32>
    %c1_i32_90 = arith.constant 1 : i32
    %165 = tpu.dynamic_rotate %159 by %c1_i32_90 dim 0 : vector<16x64xf32>, i32 -> vector<16x64xf32>
    %166 = vector.broadcast %17 : vector<16x1xf32> to vector<16x64xf32>
    %167 = arith.mulf %165, %166 : vector<16x64xf32>
    %168 = arith.truncf %167 : vector<16x64xf32> to vector<16x64xbf16>
    %c0_91 = arith.constant 0 : index
    %c0_92 = arith.constant 0 : index
    %c0_93 = arith.constant 0 : index
    %169 = vector.load %arg13[%c0_91, %c0_92, %c0_93] : memref<3x64x128xbf16, #tpu.memory_space<vmem>>, vector<1x64x128xbf16>
    %170 = vector.shape_cast %169 : vector<1x64x128xbf16> to vector<64x128xbf16>
    %cst_94 = arith.constant dense<0.000000e+00> : vector<16x128xf32>
    %171 = tpu.matmul %168, %170, %cst_94 {dimension_numbers = #tpu.dot_dimension_numbers<[1], [0], [0], [1], [0, 0, 1, 1], [], []>} : vector<16x64xbf16>, vector<64x128xbf16>, vector<16x128xf32> -> vector<16x128xf32>
    %172 = arith.addf %164, %171 : vector<16x128xf32>
    %c15_i32 = arith.constant 15 : i32
    %173 = tpu.dynamic_rotate %159 by %c15_i32 dim 0 : vector<16x64xf32>, i32 -> vector<16x64xf32>
    %174 = vector.broadcast %22 : vector<16x1xf32> to vector<16x64xf32>
    %175 = arith.mulf %173, %174 : vector<16x64xf32>
    %176 = arith.truncf %175 : vector<16x64xf32> to vector<16x64xbf16>
    %c2_95 = arith.constant 2 : index
    %c0_96 = arith.constant 0 : index
    %c0_97 = arith.constant 0 : index
    %177 = vector.load %arg13[%c2_95, %c0_96, %c0_97] : memref<3x64x128xbf16, #tpu.memory_space<vmem>>, vector<1x64x128xbf16>
    %178 = vector.shape_cast %177 : vector<1x64x128xbf16> to vector<64x128xbf16>
    %cst_98 = arith.constant dense<0.000000e+00> : vector<16x128xf32>
    %179 = tpu.matmul %176, %178, %cst_98 {dimension_numbers = #tpu.dot_dimension_numbers<[1], [0], [0], [1], [0, 0, 1, 1], [], []>} : vector<16x64xbf16>, vector<64x128xbf16>, vector<16x128xf32> -> vector<16x128xf32>
    %180 = arith.addf %172, %179 : vector<16x128xf32>
    %c0_99 = arith.constant 0 : index
    %c0_100 = arith.constant 0 : index
    %181 = vector.load %arg12[%c0_99, %c0_100] : memref<1x128xf32, #tpu.memory_space<vmem>>, vector<1x128xf32>
    %182 = vector.broadcast %181 : vector<1x128xf32> to vector<16x128xf32>
    %183 = arith.addf %180, %182 : vector<16x128xf32>
    %cst_101 = arith.constant 0.000000e+00 : f32
    %184 = vector.broadcast %cst_101 : f32 to vector<16x128xf32>
    %185 = arith.maximumf %183, %184 : vector<16x128xf32>
    %186 = arith.truncf %185 : vector<16x128xf32> to vector<16x128xbf16>
    %c1_102 = arith.constant 1 : index
    %c0_103 = arith.constant 0 : index
    %c0_104 = arith.constant 0 : index
    %187 = vector.load %arg15[%c1_102, %c0_103, %c0_104] : memref<3x128x128xbf16, #tpu.memory_space<vmem>>, vector<1x128x128xbf16>
    %188 = vector.shape_cast %187 : vector<1x128x128xbf16> to vector<128x128xbf16>
    %cst_105 = arith.constant dense<0.000000e+00> : vector<16x128xf32>
    %189 = tpu.matmul %186, %188, %cst_105 {dimension_numbers = #tpu.dot_dimension_numbers<[1], [0], [0], [1], [0, 0, 1, 1], [], []>} : vector<16x128xbf16>, vector<128x128xbf16>, vector<16x128xf32> -> vector<16x128xf32>
    %c1_i32_106 = arith.constant 1 : i32
    %190 = tpu.dynamic_rotate %185 by %c1_i32_106 dim 0 : vector<16x128xf32>, i32 -> vector<16x128xf32>
    %191 = vector.broadcast %17 : vector<16x1xf32> to vector<16x128xf32>
    %192 = arith.mulf %190, %191 : vector<16x128xf32>
    %193 = arith.truncf %192 : vector<16x128xf32> to vector<16x128xbf16>
    %c0_107 = arith.constant 0 : index
    %c0_108 = arith.constant 0 : index
    %c0_109 = arith.constant 0 : index
    %194 = vector.load %arg15[%c0_107, %c0_108, %c0_109] : memref<3x128x128xbf16, #tpu.memory_space<vmem>>, vector<1x128x128xbf16>
    %195 = vector.shape_cast %194 : vector<1x128x128xbf16> to vector<128x128xbf16>
    %cst_110 = arith.constant dense<0.000000e+00> : vector<16x128xf32>
    %196 = tpu.matmul %193, %195, %cst_110 {dimension_numbers = #tpu.dot_dimension_numbers<[1], [0], [0], [1], [0, 0, 1, 1], [], []>} : vector<16x128xbf16>, vector<128x128xbf16>, vector<16x128xf32> -> vector<16x128xf32>
    %197 = arith.addf %189, %196 : vector<16x128xf32>
    %c15_i32_111 = arith.constant 15 : i32
    %198 = tpu.dynamic_rotate %185 by %c15_i32_111 dim 0 : vector<16x128xf32>, i32 -> vector<16x128xf32>
    %199 = vector.broadcast %22 : vector<16x1xf32> to vector<16x128xf32>
    %200 = arith.mulf %198, %199 : vector<16x128xf32>
    %201 = arith.truncf %200 : vector<16x128xf32> to vector<16x128xbf16>
    %c2_112 = arith.constant 2 : index
    %c0_113 = arith.constant 0 : index
    %c0_114 = arith.constant 0 : index
    %202 = vector.load %arg15[%c2_112, %c0_113, %c0_114] : memref<3x128x128xbf16, #tpu.memory_space<vmem>>, vector<1x128x128xbf16>
    %203 = vector.shape_cast %202 : vector<1x128x128xbf16> to vector<128x128xbf16>
    %cst_115 = arith.constant dense<0.000000e+00> : vector<16x128xf32>
    %204 = tpu.matmul %201, %203, %cst_115 {dimension_numbers = #tpu.dot_dimension_numbers<[1], [0], [0], [1], [0, 0, 1, 1], [], []>} : vector<16x128xbf16>, vector<128x128xbf16>, vector<16x128xf32> -> vector<16x128xf32>
    %205 = arith.addf %197, %204 : vector<16x128xf32>
    %c0_116 = arith.constant 0 : index
    %c0_117 = arith.constant 0 : index
    %206 = vector.load %arg14[%c0_116, %c0_117] : memref<1x128xf32, #tpu.memory_space<vmem>>, vector<1x128xf32>
    %207 = vector.broadcast %206 : vector<1x128xf32> to vector<16x128xf32>
    %208 = arith.addf %205, %207 : vector<16x128xf32>
    %cst_118 = arith.constant 0.000000e+00 : f32
    %209 = vector.broadcast %cst_118 : f32 to vector<16x128xf32>
    %210 = arith.maximumf %208, %209 : vector<16x128xf32>
    %cst_119 = arith.constant dense<0.000000e+00> : vector<8x128xf32>
    %211 = tpu.matmul %56, %210, %cst_119 {dimension_numbers = #tpu.dot_dimension_numbers<[1], [0], [0], [1], [0, 0, 1, 1], [], []>} : vector<8x16xf32>, vector<16x128xf32>, vector<8x128xf32> -> vector<8x128xf32>
    %cst_120 = arith.constant dense<0.000000e+00> : vector<8x128xf32>
    %212 = tpu.matmul %64, %210, %cst_120 {dimension_numbers = #tpu.dot_dimension_numbers<[1], [0], [0], [1], [0, 0, 1, 1], [], []>} : vector<8x16xf32>, vector<16x128xf32>, vector<8x128xf32> -> vector<8x128xf32>
    %213 = arith.maximumf %211, %212 : vector<8x128xf32>
    %214 = arith.cmpf ogt, %212, %211 : vector<8x128xf32>
    %215 = arith.truncf %213 : vector<8x128xf32> to vector<8x128xbf16>
    %c1_121 = arith.constant 1 : index
    %c0_122 = arith.constant 0 : index
    %c0_123 = arith.constant 0 : index
    %216 = vector.load %arg17[%c1_121, %c0_122, %c0_123] : memref<3x128x256xbf16, #tpu.memory_space<vmem>>, vector<1x128x256xbf16>
    %217 = vector.shape_cast %216 : vector<1x128x256xbf16> to vector<128x256xbf16>
    %cst_124 = arith.constant dense<0.000000e+00> : vector<8x256xf32>
    %218 = tpu.matmul %215, %217, %cst_124 {dimension_numbers = #tpu.dot_dimension_numbers<[1], [0], [0], [1], [0, 0, 1, 1], [], []>} : vector<8x128xbf16>, vector<128x256xbf16>, vector<8x256xf32> -> vector<8x256xf32>
    %c1_i32_125 = arith.constant 1 : i32
    %219 = tpu.dynamic_rotate %213 by %c1_i32_125 dim 0 : vector<8x128xf32>, i32 -> vector<8x128xf32>
    %220 = vector.broadcast %27 : vector<8x1xf32> to vector<8x128xf32>
    %221 = arith.mulf %219, %220 : vector<8x128xf32>
    %222 = arith.truncf %221 : vector<8x128xf32> to vector<8x128xbf16>
    %c0_126 = arith.constant 0 : index
    %c0_127 = arith.constant 0 : index
    %c0_128 = arith.constant 0 : index
    %223 = vector.load %arg17[%c0_126, %c0_127, %c0_128] : memref<3x128x256xbf16, #tpu.memory_space<vmem>>, vector<1x128x256xbf16>
    %224 = vector.shape_cast %223 : vector<1x128x256xbf16> to vector<128x256xbf16>
    %cst_129 = arith.constant dense<0.000000e+00> : vector<8x256xf32>
    %225 = tpu.matmul %222, %224, %cst_129 {dimension_numbers = #tpu.dot_dimension_numbers<[1], [0], [0], [1], [0, 0, 1, 1], [], []>} : vector<8x128xbf16>, vector<128x256xbf16>, vector<8x256xf32> -> vector<8x256xf32>
    %226 = arith.addf %218, %225 : vector<8x256xf32>
    %c7_i32 = arith.constant 7 : i32
    %227 = tpu.dynamic_rotate %213 by %c7_i32 dim 0 : vector<8x128xf32>, i32 -> vector<8x128xf32>
    %228 = vector.broadcast %32 : vector<8x1xf32> to vector<8x128xf32>
    %229 = arith.mulf %227, %228 : vector<8x128xf32>
    %230 = arith.truncf %229 : vector<8x128xf32> to vector<8x128xbf16>
    %c2_130 = arith.constant 2 : index
    %c0_131 = arith.constant 0 : index
    %c0_132 = arith.constant 0 : index
    %231 = vector.load %arg17[%c2_130, %c0_131, %c0_132] : memref<3x128x256xbf16, #tpu.memory_space<vmem>>, vector<1x128x256xbf16>
    %232 = vector.shape_cast %231 : vector<1x128x256xbf16> to vector<128x256xbf16>
    %cst_133 = arith.constant dense<0.000000e+00> : vector<8x256xf32>
    %233 = tpu.matmul %230, %232, %cst_133 {dimension_numbers = #tpu.dot_dimension_numbers<[1], [0], [0], [1], [0, 0, 1, 1], [], []>} : vector<8x128xbf16>, vector<128x256xbf16>, vector<8x256xf32> -> vector<8x256xf32>
    %234 = arith.addf %226, %233 : vector<8x256xf32>
    %c0_134 = arith.constant 0 : index
    %c0_135 = arith.constant 0 : index
    %235 = vector.load %arg16[%c0_134, %c0_135] : memref<1x256xf32, #tpu.memory_space<vmem>>, vector<1x256xf32>
    %236 = vector.broadcast %235 : vector<1x256xf32> to vector<8x256xf32>
    %237 = arith.addf %234, %236 : vector<8x256xf32>
    %cst_136 = arith.constant 0.000000e+00 : f32
    %238 = vector.broadcast %cst_136 : f32 to vector<8x256xf32>
    %239 = arith.maximumf %237, %238 : vector<8x256xf32>
    %240 = arith.truncf %239 : vector<8x256xf32> to vector<8x256xbf16>
    %c1_137 = arith.constant 1 : index
    %c0_138 = arith.constant 0 : index
    %c0_139 = arith.constant 0 : index
    %241 = vector.load %arg19[%c1_137, %c0_138, %c0_139] : memref<3x256x128xbf16, #tpu.memory_space<vmem>>, vector<1x256x128xbf16>
    %242 = vector.shape_cast %241 : vector<1x256x128xbf16> to vector<256x128xbf16>
    %cst_140 = arith.constant dense<0.000000e+00> : vector<8x128xf32>
    %243 = tpu.matmul %240, %242, %cst_140 {dimension_numbers = #tpu.dot_dimension_numbers<[1], [0], [0], [1], [0, 0, 1, 1], [], []>} : vector<8x256xbf16>, vector<256x128xbf16>, vector<8x128xf32> -> vector<8x128xf32>
    %c1_i32_141 = arith.constant 1 : i32
    %244 = tpu.dynamic_rotate %239 by %c1_i32_141 dim 0 : vector<8x256xf32>, i32 -> vector<8x256xf32>
    %245 = vector.broadcast %27 : vector<8x1xf32> to vector<8x256xf32>
    %246 = arith.mulf %244, %245 : vector<8x256xf32>
    %247 = arith.truncf %246 : vector<8x256xf32> to vector<8x256xbf16>
    %c0_142 = arith.constant 0 : index
    %c0_143 = arith.constant 0 : index
    %c0_144 = arith.constant 0 : index
    %248 = vector.load %arg19[%c0_142, %c0_143, %c0_144] : memref<3x256x128xbf16, #tpu.memory_space<vmem>>, vector<1x256x128xbf16>
    %249 = vector.shape_cast %248 : vector<1x256x128xbf16> to vector<256x128xbf16>
    %cst_145 = arith.constant dense<0.000000e+00> : vector<8x128xf32>
    %250 = tpu.matmul %247, %249, %cst_145 {dimension_numbers = #tpu.dot_dimension_numbers<[1], [0], [0], [1], [0, 0, 1, 1], [], []>} : vector<8x256xbf16>, vector<256x128xbf16>, vector<8x128xf32> -> vector<8x128xf32>
    %251 = arith.addf %243, %250 : vector<8x128xf32>
    %c7_i32_146 = arith.constant 7 : i32
    %252 = tpu.dynamic_rotate %239 by %c7_i32_146 dim 0 : vector<8x256xf32>, i32 -> vector<8x256xf32>
    %253 = vector.broadcast %32 : vector<8x1xf32> to vector<8x256xf32>
    %254 = arith.mulf %252, %253 : vector<8x256xf32>
    %255 = arith.truncf %254 : vector<8x256xf32> to vector<8x256xbf16>
    %c2_147 = arith.constant 2 : index
    %c0_148 = arith.constant 0 : index
    %c0_149 = arith.constant 0 : index
    %256 = vector.load %arg19[%c2_147, %c0_148, %c0_149] : memref<3x256x128xbf16, #tpu.memory_space<vmem>>, vector<1x256x128xbf16>
    %257 = vector.shape_cast %256 : vector<1x256x128xbf16> to vector<256x128xbf16>
    %cst_150 = arith.constant dense<0.000000e+00> : vector<8x128xf32>
    %258 = tpu.matmul %255, %257, %cst_150 {dimension_numbers = #tpu.dot_dimension_numbers<[1], [0], [0], [1], [0, 0, 1, 1], [], []>} : vector<8x256xbf16>, vector<256x128xbf16>, vector<8x128xf32> -> vector<8x128xf32>
    %259 = arith.addf %251, %258 : vector<8x128xf32>
    %c0_151 = arith.constant 0 : index
    %c0_152 = arith.constant 0 : index
    %260 = vector.load %arg18[%c0_151, %c0_152] : memref<1x128xf32, #tpu.memory_space<vmem>>, vector<1x128xf32>
    %261 = vector.broadcast %260 : vector<1x128xf32> to vector<8x128xf32>
    %262 = arith.addf %259, %261 : vector<8x128xf32>
    %cst_153 = arith.constant 0.000000e+00 : f32
    %263 = vector.broadcast %cst_153 : f32 to vector<8x128xf32>
    %264 = arith.maximumf %262, %263 : vector<8x128xf32>
    %cst_154 = arith.constant 0.000000e+00 : f32
    %265 = vector.broadcast %cst_154 : f32 to vector<8x128xf32>
    %266 = arith.select %214, %265, %264 : vector<8x128xi1>, vector<8x128xf32>
    %cst_155 = arith.constant 0.000000e+00 : f32
    %267 = vector.broadcast %cst_155 : f32 to vector<8x128xf32>
    %268 = arith.select %214, %264, %267 : vector<8x128xi1>, vector<8x128xf32>
    %cst_156 = arith.constant dense<0.000000e+00> : vector<16x128xf32>
    %269 = tpu.matmul %88, %266, %cst_156 {dimension_numbers = #tpu.dot_dimension_numbers<[1], [0], [0], [1], [0, 0, 1, 1], [], []>} : vector<16x8xf32>, vector<8x128xf32>, vector<16x128xf32> -> vector<16x128xf32>
    %cst_157 = arith.constant dense<0.000000e+00> : vector<16x128xf32>
    %270 = tpu.matmul %96, %268, %cst_157 {dimension_numbers = #tpu.dot_dimension_numbers<[1], [0], [0], [1], [0, 0, 1, 1], [], []>} : vector<16x8xf32>, vector<8x128xf32>, vector<16x128xf32> -> vector<16x128xf32>
    %271 = arith.addf %269, %270 : vector<16x128xf32>
    %272 = arith.addf %210, %271 : vector<16x128xf32>
    %273 = arith.truncf %272 : vector<16x128xf32> to vector<16x128xbf16>
    %c1_158 = arith.constant 1 : index
    %c0_159 = arith.constant 0 : index
    %c0_160 = arith.constant 0 : index
    %274 = vector.load %arg25[%c1_158, %c0_159, %c0_160] : memref<3x128x128xbf16, #tpu.memory_space<vmem>>, vector<1x128x128xbf16>
    %275 = vector.shape_cast %274 : vector<1x128x128xbf16> to vector<128x128xbf16>
    %cst_161 = arith.constant dense<0.000000e+00> : vector<16x128xf32>
    %276 = tpu.matmul %273, %275, %cst_161 {dimension_numbers = #tpu.dot_dimension_numbers<[1], [0], [0], [1], [0, 0, 1, 1], [], []>} : vector<16x128xbf16>, vector<128x128xbf16>, vector<16x128xf32> -> vector<16x128xf32>
    %c1_i32_162 = arith.constant 1 : i32
    %277 = tpu.dynamic_rotate %272 by %c1_i32_162 dim 0 : vector<16x128xf32>, i32 -> vector<16x128xf32>
    %278 = vector.broadcast %17 : vector<16x1xf32> to vector<16x128xf32>
    %279 = arith.mulf %277, %278 : vector<16x128xf32>
    %280 = arith.truncf %279 : vector<16x128xf32> to vector<16x128xbf16>
    %c0_163 = arith.constant 0 : index
    %c0_164 = arith.constant 0 : index
    %c0_165 = arith.constant 0 : index
    %281 = vector.load %arg25[%c0_163, %c0_164, %c0_165] : memref<3x128x128xbf16, #tpu.memory_space<vmem>>, vector<1x128x128xbf16>
    %282 = vector.shape_cast %281 : vector<1x128x128xbf16> to vector<128x128xbf16>
    %cst_166 = arith.constant dense<0.000000e+00> : vector<16x128xf32>
    %283 = tpu.matmul %280, %282, %cst_166 {dimension_numbers = #tpu.dot_dimension_numbers<[1], [0], [0], [1], [0, 0, 1, 1], [], []>} : vector<16x128xbf16>, vector<128x128xbf16>, vector<16x128xf32> -> vector<16x128xf32>
    %284 = arith.addf %276, %283 : vector<16x128xf32>
    %c15_i32_167 = arith.constant 15 : i32
    %285 = tpu.dynamic_rotate %272 by %c15_i32_167 dim 0 : vector<16x128xf32>, i32 -> vector<16x128xf32>
    %286 = vector.broadcast %22 : vector<16x1xf32> to vector<16x128xf32>
    %287 = arith.mulf %285, %286 : vector<16x128xf32>
    %288 = arith.truncf %287 : vector<16x128xf32> to vector<16x128xbf16>
    %c2_168 = arith.constant 2 : index
    %c0_169 = arith.constant 0 : index
    %c0_170 = arith.constant 0 : index
    %289 = vector.load %arg25[%c2_168, %c0_169, %c0_170] : memref<3x128x128xbf16, #tpu.memory_space<vmem>>, vector<1x128x128xbf16>
    %290 = vector.shape_cast %289 : vector<1x128x128xbf16> to vector<128x128xbf16>
    %cst_171 = arith.constant dense<0.000000e+00> : vector<16x128xf32>
    %291 = tpu.matmul %288, %290, %cst_171 {dimension_numbers = #tpu.dot_dimension_numbers<[1], [0], [0], [1], [0, 0, 1, 1], [], []>} : vector<16x128xbf16>, vector<128x128xbf16>, vector<16x128xf32> -> vector<16x128xf32>
    %292 = arith.addf %284, %291 : vector<16x128xf32>
    %c0_172 = arith.constant 0 : index
    %c0_173 = arith.constant 0 : index
    %293 = vector.load %arg24[%c0_172, %c0_173] : memref<1x128xf32, #tpu.memory_space<vmem>>, vector<1x128xf32>
    %294 = vector.broadcast %293 : vector<1x128xf32> to vector<16x128xf32>
    %295 = arith.addf %292, %294 : vector<16x128xf32>
    %cst_174 = arith.constant 0.000000e+00 : f32
    %296 = vector.broadcast %cst_174 : f32 to vector<16x128xf32>
    %297 = arith.maximumf %295, %296 : vector<16x128xf32>
    %298 = arith.truncf %297 : vector<16x128xf32> to vector<16x128xbf16>
    %c1_175 = arith.constant 1 : index
    %c0_176 = arith.constant 0 : index
    %c0_177 = arith.constant 0 : index
    %299 = vector.load %arg27[%c1_175, %c0_176, %c0_177] : memref<3x128x64xbf16, #tpu.memory_space<vmem>>, vector<1x128x64xbf16>
    %300 = vector.shape_cast %299 : vector<1x128x64xbf16> to vector<128x64xbf16>
    %cst_178 = arith.constant dense<0.000000e+00> : vector<16x64xf32>
    %301 = tpu.matmul %298, %300, %cst_178 {dimension_numbers = #tpu.dot_dimension_numbers<[1], [0], [0], [1], [0, 0, 1, 1], [], []>} : vector<16x128xbf16>, vector<128x64xbf16>, vector<16x64xf32> -> vector<16x64xf32>
    %c1_i32_179 = arith.constant 1 : i32
    %302 = tpu.dynamic_rotate %297 by %c1_i32_179 dim 0 : vector<16x128xf32>, i32 -> vector<16x128xf32>
    %303 = vector.broadcast %17 : vector<16x1xf32> to vector<16x128xf32>
    %304 = arith.mulf %302, %303 : vector<16x128xf32>
    %305 = arith.truncf %304 : vector<16x128xf32> to vector<16x128xbf16>
    %c0_180 = arith.constant 0 : index
    %c0_181 = arith.constant 0 : index
    %c0_182 = arith.constant 0 : index
    %306 = vector.load %arg27[%c0_180, %c0_181, %c0_182] : memref<3x128x64xbf16, #tpu.memory_space<vmem>>, vector<1x128x64xbf16>
    %307 = vector.shape_cast %306 : vector<1x128x64xbf16> to vector<128x64xbf16>
    %cst_183 = arith.constant dense<0.000000e+00> : vector<16x64xf32>
    %308 = tpu.matmul %305, %307, %cst_183 {dimension_numbers = #tpu.dot_dimension_numbers<[1], [0], [0], [1], [0, 0, 1, 1], [], []>} : vector<16x128xbf16>, vector<128x64xbf16>, vector<16x64xf32> -> vector<16x64xf32>
    %309 = arith.addf %301, %308 : vector<16x64xf32>
    %c15_i32_184 = arith.constant 15 : i32
    %310 = tpu.dynamic_rotate %297 by %c15_i32_184 dim 0 : vector<16x128xf32>, i32 -> vector<16x128xf32>
    %311 = vector.broadcast %22 : vector<16x1xf32> to vector<16x128xf32>
    %312 = arith.mulf %310, %311 : vector<16x128xf32>
    %313 = arith.truncf %312 : vector<16x128xf32> to vector<16x128xbf16>
    %c2_185 = arith.constant 2 : index
    %c0_186 = arith.constant 0 : index
    %c0_187 = arith.constant 0 : index
    %314 = vector.load %arg27[%c2_185, %c0_186, %c0_187] : memref<3x128x64xbf16, #tpu.memory_space<vmem>>, vector<1x128x64xbf16>
    %315 = vector.shape_cast %314 : vector<1x128x64xbf16> to vector<128x64xbf16>
    %cst_188 = arith.constant dense<0.000000e+00> : vector<16x64xf32>
    %316 = tpu.matmul %313, %315, %cst_188 {dimension_numbers = #tpu.dot_dimension_numbers<[1], [0], [0], [1], [0, 0, 1, 1], [], []>} : vector<16x128xbf16>, vector<128x64xbf16>, vector<16x64xf32> -> vector<16x64xf32>
    %317 = arith.addf %309, %316 : vector<16x64xf32>
    %c0_189 = arith.constant 0 : index
    %c0_190 = arith.constant 0 : index
    %318 = vector.load %arg26[%c0_189, %c0_190] : memref<1x64xf32, #tpu.memory_space<vmem>>, vector<1x64xf32>
    %319 = vector.broadcast %318 : vector<1x64xf32> to vector<16x64xf32>
    %320 = arith.addf %317, %319 : vector<16x64xf32>
    %cst_191 = arith.constant 0.000000e+00 : f32
    %321 = vector.broadcast %cst_191 : f32 to vector<16x64xf32>
    %322 = arith.maximumf %320, %321 : vector<16x64xf32>
    %cst_192 = arith.constant 0.000000e+00 : f32
    %323 = vector.broadcast %cst_192 : f32 to vector<16x64xf32>
    %324 = arith.select %160, %323, %322 : vector<16x64xi1>, vector<16x64xf32>
    %cst_193 = arith.constant 0.000000e+00 : f32
    %325 = vector.broadcast %cst_193 : f32 to vector<16x64xf32>
    %326 = arith.select %160, %322, %325 : vector<16x64xi1>, vector<16x64xf32>
    %cst_194 = arith.constant dense<0.000000e+00> : vector<32x64xf32>
    %327 = tpu.matmul %72, %324, %cst_194 {dimension_numbers = #tpu.dot_dimension_numbers<[1], [0], [0], [1], [0, 0, 1, 1], [], []>} : vector<32x16xf32>, vector<16x64xf32>, vector<32x64xf32> -> vector<32x64xf32>
    %cst_195 = arith.constant dense<0.000000e+00> : vector<32x64xf32>
    %328 = tpu.matmul %80, %326, %cst_195 {dimension_numbers = #tpu.dot_dimension_numbers<[1], [0], [0], [1], [0, 0, 1, 1], [], []>} : vector<32x16xf32>, vector<16x64xf32>, vector<32x64xf32> -> vector<32x64xf32>
    %329 = arith.addf %327, %328 : vector<32x64xf32>
    %330 = arith.addf %156, %329 : vector<32x64xf32>
    %331 = arith.truncf %330 : vector<32x64xf32> to vector<32x64xbf16>
    %c1_196 = arith.constant 1 : index
    %c0_197 = arith.constant 0 : index
    %c0_198 = arith.constant 0 : index
    %332 = vector.load %arg21[%c1_196, %c0_197, %c0_198] : memref<3x64x64xbf16, #tpu.memory_space<vmem>>, vector<1x64x64xbf16>
    %333 = vector.shape_cast %332 : vector<1x64x64xbf16> to vector<64x64xbf16>
    %cst_199 = arith.constant dense<0.000000e+00> : vector<32x64xf32>
    %334 = tpu.matmul %331, %333, %cst_199 {dimension_numbers = #tpu.dot_dimension_numbers<[1], [0], [0], [1], [0, 0, 1, 1], [], []>} : vector<32x64xbf16>, vector<64x64xbf16>, vector<32x64xf32> -> vector<32x64xf32>
    %c1_i32_200 = arith.constant 1 : i32
    %335 = tpu.dynamic_rotate %330 by %c1_i32_200 dim 0 : vector<32x64xf32>, i32 -> vector<32x64xf32>
    %336 = vector.broadcast %7 : vector<32x1xf32> to vector<32x64xf32>
    %337 = arith.mulf %335, %336 : vector<32x64xf32>
    %338 = arith.truncf %337 : vector<32x64xf32> to vector<32x64xbf16>
    %c0_201 = arith.constant 0 : index
    %c0_202 = arith.constant 0 : index
    %c0_203 = arith.constant 0 : index
    %339 = vector.load %arg21[%c0_201, %c0_202, %c0_203] : memref<3x64x64xbf16, #tpu.memory_space<vmem>>, vector<1x64x64xbf16>
    %340 = vector.shape_cast %339 : vector<1x64x64xbf16> to vector<64x64xbf16>
    %cst_204 = arith.constant dense<0.000000e+00> : vector<32x64xf32>
    %341 = tpu.matmul %338, %340, %cst_204 {dimension_numbers = #tpu.dot_dimension_numbers<[1], [0], [0], [1], [0, 0, 1, 1], [], []>} : vector<32x64xbf16>, vector<64x64xbf16>, vector<32x64xf32> -> vector<32x64xf32>
    %342 = arith.addf %334, %341 : vector<32x64xf32>
    %c31_i32_205 = arith.constant 31 : i32
    %343 = tpu.dynamic_rotate %330 by %c31_i32_205 dim 0 : vector<32x64xf32>, i32 -> vector<32x64xf32>
    %344 = vector.broadcast %12 : vector<32x1xf32> to vector<32x64xf32>
    %345 = arith.mulf %343, %344 : vector<32x64xf32>
    %346 = arith.truncf %345 : vector<32x64xf32> to vector<32x64xbf16>
    %c2_206 = arith.constant 2 : index
    %c0_207 = arith.constant 0 : index
    %c0_208 = arith.constant 0 : index
    %347 = vector.load %arg21[%c2_206, %c0_207, %c0_208] : memref<3x64x64xbf16, #tpu.memory_space<vmem>>, vector<1x64x64xbf16>
    %348 = vector.shape_cast %347 : vector<1x64x64xbf16> to vector<64x64xbf16>
    %cst_209 = arith.constant dense<0.000000e+00> : vector<32x64xf32>
    %349 = tpu.matmul %346, %348, %cst_209 {dimension_numbers = #tpu.dot_dimension_numbers<[1], [0], [0], [1], [0, 0, 1, 1], [], []>} : vector<32x64xbf16>, vector<64x64xbf16>, vector<32x64xf32> -> vector<32x64xf32>
    %350 = arith.addf %342, %349 : vector<32x64xf32>
    %c0_210 = arith.constant 0 : index
    %c0_211 = arith.constant 0 : index
    %351 = vector.load %arg20[%c0_210, %c0_211] : memref<1x64xf32, #tpu.memory_space<vmem>>, vector<1x64xf32>
    %352 = vector.broadcast %351 : vector<1x64xf32> to vector<32x64xf32>
    %353 = arith.addf %350, %352 : vector<32x64xf32>
    %cst_212 = arith.constant 0.000000e+00 : f32
    %354 = vector.broadcast %cst_212 : f32 to vector<32x64xf32>
    %355 = arith.maximumf %353, %354 : vector<32x64xf32>
    %356 = arith.truncf %355 : vector<32x64xf32> to vector<32x64xbf16>
    %c1_213 = arith.constant 1 : index
    %c0_214 = arith.constant 0 : index
    %c0_215 = arith.constant 0 : index
    %357 = vector.load %arg23[%c1_213, %c0_214, %c0_215] : memref<3x64x64xbf16, #tpu.memory_space<vmem>>, vector<1x64x64xbf16>
    %358 = vector.shape_cast %357 : vector<1x64x64xbf16> to vector<64x64xbf16>
    %cst_216 = arith.constant dense<0.000000e+00> : vector<32x64xf32>
    %359 = tpu.matmul %356, %358, %cst_216 {dimension_numbers = #tpu.dot_dimension_numbers<[1], [0], [0], [1], [0, 0, 1, 1], [], []>} : vector<32x64xbf16>, vector<64x64xbf16>, vector<32x64xf32> -> vector<32x64xf32>
    %c1_i32_217 = arith.constant 1 : i32
    %360 = tpu.dynamic_rotate %355 by %c1_i32_217 dim 0 : vector<32x64xf32>, i32 -> vector<32x64xf32>
    %361 = vector.broadcast %7 : vector<32x1xf32> to vector<32x64xf32>
    %362 = arith.mulf %360, %361 : vector<32x64xf32>
    %363 = arith.truncf %362 : vector<32x64xf32> to vector<32x64xbf16>
    %c0_218 = arith.constant 0 : index
    %c0_219 = arith.constant 0 : index
    %c0_220 = arith.constant 0 : index
    %364 = vector.load %arg23[%c0_218, %c0_219, %c0_220] : memref<3x64x64xbf16, #tpu.memory_space<vmem>>, vector<1x64x64xbf16>
    %365 = vector.shape_cast %364 : vector<1x64x64xbf16> to vector<64x64xbf16>
    %cst_221 = arith.constant dense<0.000000e+00> : vector<32x64xf32>
    %366 = tpu.matmul %363, %365, %cst_221 {dimension_numbers = #tpu.dot_dimension_numbers<[1], [0], [0], [1], [0, 0, 1, 1], [], []>} : vector<32x64xbf16>, vector<64x64xbf16>, vector<32x64xf32> -> vector<32x64xf32>
    %367 = arith.addf %359, %366 : vector<32x64xf32>
    %c31_i32_222 = arith.constant 31 : i32
    %368 = tpu.dynamic_rotate %355 by %c31_i32_222 dim 0 : vector<32x64xf32>, i32 -> vector<32x64xf32>
    %369 = vector.broadcast %12 : vector<32x1xf32> to vector<32x64xf32>
    %370 = arith.mulf %368, %369 : vector<32x64xf32>
    %371 = arith.truncf %370 : vector<32x64xf32> to vector<32x64xbf16>
    %c2_223 = arith.constant 2 : index
    %c0_224 = arith.constant 0 : index
    %c0_225 = arith.constant 0 : index
    %372 = vector.load %arg23[%c2_223, %c0_224, %c0_225] : memref<3x64x64xbf16, #tpu.memory_space<vmem>>, vector<1x64x64xbf16>
    %373 = vector.shape_cast %372 : vector<1x64x64xbf16> to vector<64x64xbf16>
    %cst_226 = arith.constant dense<0.000000e+00> : vector<32x64xf32>
    %374 = tpu.matmul %371, %373, %cst_226 {dimension_numbers = #tpu.dot_dimension_numbers<[1], [0], [0], [1], [0, 0, 1, 1], [], []>} : vector<32x64xbf16>, vector<64x64xbf16>, vector<32x64xf32> -> vector<32x64xf32>
    %375 = arith.addf %367, %374 : vector<32x64xf32>
    %c0_227 = arith.constant 0 : index
    %c0_228 = arith.constant 0 : index
    %376 = vector.load %arg22[%c0_227, %c0_228] : memref<1x64xf32, #tpu.memory_space<vmem>>, vector<1x64xf32>
    %377 = vector.broadcast %376 : vector<1x64xf32> to vector<32x64xf32>
    %378 = arith.addf %375, %377 : vector<32x64xf32>
    %cst_229 = arith.constant 0.000000e+00 : f32
    %379 = vector.broadcast %cst_229 : f32 to vector<32x64xf32>
    %380 = arith.maximumf %378, %379 : vector<32x64xf32>
    %381 = arith.truncf %380 : vector<32x64xf32> to vector<32x64xbf16>
    %c1_230 = arith.constant 1 : index
    %c0_231 = arith.constant 0 : index
    %c0_232 = arith.constant 0 : index
    %382 = vector.load %arg29[%c1_230, %c0_231, %c0_232] : memref<3x64x64xbf16, #tpu.memory_space<vmem>>, vector<1x64x64xbf16>
    %383 = vector.shape_cast %382 : vector<1x64x64xbf16> to vector<64x64xbf16>
    %cst_233 = arith.constant dense<0.000000e+00> : vector<32x64xf32>
    %384 = tpu.matmul %381, %383, %cst_233 {dimension_numbers = #tpu.dot_dimension_numbers<[1], [0], [0], [1], [0, 0, 1, 1], [], []>} : vector<32x64xbf16>, vector<64x64xbf16>, vector<32x64xf32> -> vector<32x64xf32>
    %c1_i32_234 = arith.constant 1 : i32
    %385 = tpu.dynamic_rotate %380 by %c1_i32_234 dim 0 : vector<32x64xf32>, i32 -> vector<32x64xf32>
    %386 = vector.broadcast %7 : vector<32x1xf32> to vector<32x64xf32>
    %387 = arith.mulf %385, %386 : vector<32x64xf32>
    %388 = arith.truncf %387 : vector<32x64xf32> to vector<32x64xbf16>
    %c0_235 = arith.constant 0 : index
    %c0_236 = arith.constant 0 : index
    %c0_237 = arith.constant 0 : index
    %389 = vector.load %arg29[%c0_235, %c0_236, %c0_237] : memref<3x64x64xbf16, #tpu.memory_space<vmem>>, vector<1x64x64xbf16>
    %390 = vector.shape_cast %389 : vector<1x64x64xbf16> to vector<64x64xbf16>
    %cst_238 = arith.constant dense<0.000000e+00> : vector<32x64xf32>
    %391 = tpu.matmul %388, %390, %cst_238 {dimension_numbers = #tpu.dot_dimension_numbers<[1], [0], [0], [1], [0, 0, 1, 1], [], []>} : vector<32x64xbf16>, vector<64x64xbf16>, vector<32x64xf32> -> vector<32x64xf32>
    %392 = arith.addf %384, %391 : vector<32x64xf32>
    %c31_i32_239 = arith.constant 31 : i32
    %393 = tpu.dynamic_rotate %380 by %c31_i32_239 dim 0 : vector<32x64xf32>, i32 -> vector<32x64xf32>
    %394 = vector.broadcast %12 : vector<32x1xf32> to vector<32x64xf32>
    %395 = arith.mulf %393, %394 : vector<32x64xf32>
    %396 = arith.truncf %395 : vector<32x64xf32> to vector<32x64xbf16>
    %c2_240 = arith.constant 2 : index
    %c0_241 = arith.constant 0 : index
    %c0_242 = arith.constant 0 : index
    %397 = vector.load %arg29[%c2_240, %c0_241, %c0_242] : memref<3x64x64xbf16, #tpu.memory_space<vmem>>, vector<1x64x64xbf16>
    %398 = vector.shape_cast %397 : vector<1x64x64xbf16> to vector<64x64xbf16>
    %cst_243 = arith.constant dense<0.000000e+00> : vector<32x64xf32>
    %399 = tpu.matmul %396, %398, %cst_243 {dimension_numbers = #tpu.dot_dimension_numbers<[1], [0], [0], [1], [0, 0, 1, 1], [], []>} : vector<32x64xbf16>, vector<64x64xbf16>, vector<32x64xf32> -> vector<32x64xf32>
    %400 = arith.addf %392, %399 : vector<32x64xf32>
    %c0_244 = arith.constant 0 : index
    %c0_245 = arith.constant 0 : index
    %401 = vector.load %arg28[%c0_244, %c0_245] : memref<1x64xf32, #tpu.memory_space<vmem>>, vector<1x64xf32>
    %402 = vector.broadcast %401 : vector<1x64xf32> to vector<32x64xf32>
    %403 = arith.addf %400, %402 : vector<32x64xf32>
    %cst_246 = arith.constant 0.000000e+00 : f32
    %404 = vector.broadcast %cst_246 : f32 to vector<32x64xf32>
    %405 = arith.maximumf %403, %404 : vector<32x64xf32>
    %406 = arith.truncf %405 : vector<32x64xf32> to vector<32x64xbf16>
    %c1_247 = arith.constant 1 : index
    %c0_248 = arith.constant 0 : index
    %c0_249 = arith.constant 0 : index
    %407 = vector.load %arg31[%c1_247, %c0_248, %c0_249] : memref<3x64x64xbf16, #tpu.memory_space<vmem>>, vector<1x64x64xbf16>
    %408 = vector.shape_cast %407 : vector<1x64x64xbf16> to vector<64x64xbf16>
    %cst_250 = arith.constant dense<0.000000e+00> : vector<32x64xf32>
    %409 = tpu.matmul %406, %408, %cst_250 {dimension_numbers = #tpu.dot_dimension_numbers<[1], [0], [0], [1], [0, 0, 1, 1], [], []>} : vector<32x64xbf16>, vector<64x64xbf16>, vector<32x64xf32> -> vector<32x64xf32>
    %c1_i32_251 = arith.constant 1 : i32
    %410 = tpu.dynamic_rotate %405 by %c1_i32_251 dim 0 : vector<32x64xf32>, i32 -> vector<32x64xf32>
    %411 = vector.broadcast %7 : vector<32x1xf32> to vector<32x64xf32>
    %412 = arith.mulf %410, %411 : vector<32x64xf32>
    %413 = arith.truncf %412 : vector<32x64xf32> to vector<32x64xbf16>
    %c0_252 = arith.constant 0 : index
    %c0_253 = arith.constant 0 : index
    %c0_254 = arith.constant 0 : index
    %414 = vector.load %arg31[%c0_252, %c0_253, %c0_254] : memref<3x64x64xbf16, #tpu.memory_space<vmem>>, vector<1x64x64xbf16>
    %415 = vector.shape_cast %414 : vector<1x64x64xbf16> to vector<64x64xbf16>
    %cst_255 = arith.constant dense<0.000000e+00> : vector<32x64xf32>
    %416 = tpu.matmul %413, %415, %cst_255 {dimension_numbers = #tpu.dot_dimension_numbers<[1], [0], [0], [1], [0, 0, 1, 1], [], []>} : vector<32x64xbf16>, vector<64x64xbf16>, vector<32x64xf32> -> vector<32x64xf32>
    %417 = arith.addf %409, %416 : vector<32x64xf32>
    %c31_i32_256 = arith.constant 31 : i32
    %418 = tpu.dynamic_rotate %405 by %c31_i32_256 dim 0 : vector<32x64xf32>, i32 -> vector<32x64xf32>
    %419 = vector.broadcast %12 : vector<32x1xf32> to vector<32x64xf32>
    %420 = arith.mulf %418, %419 : vector<32x64xf32>
    %421 = arith.truncf %420 : vector<32x64xf32> to vector<32x64xbf16>
    %c2_257 = arith.constant 2 : index
    %c0_258 = arith.constant 0 : index
    %c0_259 = arith.constant 0 : index
    %422 = vector.load %arg31[%c2_257, %c0_258, %c0_259] : memref<3x64x64xbf16, #tpu.memory_space<vmem>>, vector<1x64x64xbf16>
    %423 = vector.shape_cast %422 : vector<1x64x64xbf16> to vector<64x64xbf16>
    %cst_260 = arith.constant dense<0.000000e+00> : vector<32x64xf32>
    %424 = tpu.matmul %421, %423, %cst_260 {dimension_numbers = #tpu.dot_dimension_numbers<[1], [0], [0], [1], [0, 0, 1, 1], [], []>} : vector<32x64xbf16>, vector<64x64xbf16>, vector<32x64xf32> -> vector<32x64xf32>
    %425 = arith.addf %417, %424 : vector<32x64xf32>
    %c0_261 = arith.constant 0 : index
    %c0_262 = arith.constant 0 : index
    %426 = vector.load %arg30[%c0_261, %c0_262] : memref<1x64xf32, #tpu.memory_space<vmem>>, vector<1x64xf32>
    %427 = vector.broadcast %426 : vector<1x64xf32> to vector<32x64xf32>
    %428 = arith.addf %425, %427 : vector<32x64xf32>
    %cst_263 = arith.constant 0.000000e+00 : f32
    %429 = vector.broadcast %cst_263 : f32 to vector<32x64xf32>
    %430 = arith.maximumf %428, %429 : vector<32x64xf32>
    %cst_264 = arith.constant dense<0.000000e+00> : vector<16x64xf32>
    %431 = tpu.matmul %40, %430, %cst_264 {dimension_numbers = #tpu.dot_dimension_numbers<[1], [0], [0], [1], [0, 0, 1, 1], [], []>} : vector<16x32xf32>, vector<32x64xf32>, vector<16x64xf32> -> vector<16x64xf32>
    %cst_265 = arith.constant dense<0.000000e+00> : vector<16x64xf32>
    %432 = tpu.matmul %48, %430, %cst_265 {dimension_numbers = #tpu.dot_dimension_numbers<[1], [0], [0], [1], [0, 0, 1, 1], [], []>} : vector<16x32xf32>, vector<32x64xf32>, vector<16x64xf32> -> vector<16x64xf32>
    %433 = arith.maximumf %431, %432 : vector<16x64xf32>
    %434 = arith.cmpf ogt, %432, %431 : vector<16x64xf32>
    %435 = arith.truncf %433 : vector<16x64xf32> to vector<16x64xbf16>
    %c1_266 = arith.constant 1 : index
    %c0_267 = arith.constant 0 : index
    %c0_268 = arith.constant 0 : index
    %436 = vector.load %arg33[%c1_266, %c0_267, %c0_268] : memref<3x64x128xbf16, #tpu.memory_space<vmem>>, vector<1x64x128xbf16>
    %437 = vector.shape_cast %436 : vector<1x64x128xbf16> to vector<64x128xbf16>
    %cst_269 = arith.constant dense<0.000000e+00> : vector<16x128xf32>
    %438 = tpu.matmul %435, %437, %cst_269 {dimension_numbers = #tpu.dot_dimension_numbers<[1], [0], [0], [1], [0, 0, 1, 1], [], []>} : vector<16x64xbf16>, vector<64x128xbf16>, vector<16x128xf32> -> vector<16x128xf32>
    %c1_i32_270 = arith.constant 1 : i32
    %439 = tpu.dynamic_rotate %433 by %c1_i32_270 dim 0 : vector<16x64xf32>, i32 -> vector<16x64xf32>
    %440 = vector.broadcast %17 : vector<16x1xf32> to vector<16x64xf32>
    %441 = arith.mulf %439, %440 : vector<16x64xf32>
    %442 = arith.truncf %441 : vector<16x64xf32> to vector<16x64xbf16>
    %c0_271 = arith.constant 0 : index
    %c0_272 = arith.constant 0 : index
    %c0_273 = arith.constant 0 : index
    %443 = vector.load %arg33[%c0_271, %c0_272, %c0_273] : memref<3x64x128xbf16, #tpu.memory_space<vmem>>, vector<1x64x128xbf16>
    %444 = vector.shape_cast %443 : vector<1x64x128xbf16> to vector<64x128xbf16>
    %cst_274 = arith.constant dense<0.000000e+00> : vector<16x128xf32>
    %445 = tpu.matmul %442, %444, %cst_274 {dimension_numbers = #tpu.dot_dimension_numbers<[1], [0], [0], [1], [0, 0, 1, 1], [], []>} : vector<16x64xbf16>, vector<64x128xbf16>, vector<16x128xf32> -> vector<16x128xf32>
    %446 = arith.addf %438, %445 : vector<16x128xf32>
    %c15_i32_275 = arith.constant 15 : i32
    %447 = tpu.dynamic_rotate %433 by %c15_i32_275 dim 0 : vector<16x64xf32>, i32 -> vector<16x64xf32>
    %448 = vector.broadcast %22 : vector<16x1xf32> to vector<16x64xf32>
    %449 = arith.mulf %447, %448 : vector<16x64xf32>
    %450 = arith.truncf %449 : vector<16x64xf32> to vector<16x64xbf16>
    %c2_276 = arith.constant 2 : index
    %c0_277 = arith.constant 0 : index
    %c0_278 = arith.constant 0 : index
    %451 = vector.load %arg33[%c2_276, %c0_277, %c0_278] : memref<3x64x128xbf16, #tpu.memory_space<vmem>>, vector<1x64x128xbf16>
    %452 = vector.shape_cast %451 : vector<1x64x128xbf16> to vector<64x128xbf16>
    %cst_279 = arith.constant dense<0.000000e+00> : vector<16x128xf32>
    %453 = tpu.matmul %450, %452, %cst_279 {dimension_numbers = #tpu.dot_dimension_numbers<[1], [0], [0], [1], [0, 0, 1, 1], [], []>} : vector<16x64xbf16>, vector<64x128xbf16>, vector<16x128xf32> -> vector<16x128xf32>
    %454 = arith.addf %446, %453 : vector<16x128xf32>
    %c0_280 = arith.constant 0 : index
    %c0_281 = arith.constant 0 : index
    %455 = vector.load %arg32[%c0_280, %c0_281] : memref<1x128xf32, #tpu.memory_space<vmem>>, vector<1x128xf32>
    %456 = vector.broadcast %455 : vector<1x128xf32> to vector<16x128xf32>
    %457 = arith.addf %454, %456 : vector<16x128xf32>
    %cst_282 = arith.constant 0.000000e+00 : f32
    %458 = vector.broadcast %cst_282 : f32 to vector<16x128xf32>
    %459 = arith.maximumf %457, %458 : vector<16x128xf32>
    %460 = arith.truncf %459 : vector<16x128xf32> to vector<16x128xbf16>
    %c1_283 = arith.constant 1 : index
    %c0_284 = arith.constant 0 : index
    %c0_285 = arith.constant 0 : index
    %461 = vector.load %arg35[%c1_283, %c0_284, %c0_285] : memref<3x128x128xbf16, #tpu.memory_space<vmem>>, vector<1x128x128xbf16>
    %462 = vector.shape_cast %461 : vector<1x128x128xbf16> to vector<128x128xbf16>
    %cst_286 = arith.constant dense<0.000000e+00> : vector<16x128xf32>
    %463 = tpu.matmul %460, %462, %cst_286 {dimension_numbers = #tpu.dot_dimension_numbers<[1], [0], [0], [1], [0, 0, 1, 1], [], []>} : vector<16x128xbf16>, vector<128x128xbf16>, vector<16x128xf32> -> vector<16x128xf32>
    %c1_i32_287 = arith.constant 1 : i32
    %464 = tpu.dynamic_rotate %459 by %c1_i32_287 dim 0 : vector<16x128xf32>, i32 -> vector<16x128xf32>
    %465 = vector.broadcast %17 : vector<16x1xf32> to vector<16x128xf32>
    %466 = arith.mulf %464, %465 : vector<16x128xf32>
    %467 = arith.truncf %466 : vector<16x128xf32> to vector<16x128xbf16>
    %c0_288 = arith.constant 0 : index
    %c0_289 = arith.constant 0 : index
    %c0_290 = arith.constant 0 : index
    %468 = vector.load %arg35[%c0_288, %c0_289, %c0_290] : memref<3x128x128xbf16, #tpu.memory_space<vmem>>, vector<1x128x128xbf16>
    %469 = vector.shape_cast %468 : vector<1x128x128xbf16> to vector<128x128xbf16>
    %cst_291 = arith.constant dense<0.000000e+00> : vector<16x128xf32>
    %470 = tpu.matmul %467, %469, %cst_291 {dimension_numbers = #tpu.dot_dimension_numbers<[1], [0], [0], [1], [0, 0, 1, 1], [], []>} : vector<16x128xbf16>, vector<128x128xbf16>, vector<16x128xf32> -> vector<16x128xf32>
    %471 = arith.addf %463, %470 : vector<16x128xf32>
    %c15_i32_292 = arith.constant 15 : i32
    %472 = tpu.dynamic_rotate %459 by %c15_i32_292 dim 0 : vector<16x128xf32>, i32 -> vector<16x128xf32>
    %473 = vector.broadcast %22 : vector<16x1xf32> to vector<16x128xf32>
    %474 = arith.mulf %472, %473 : vector<16x128xf32>
    %475 = arith.truncf %474 : vector<16x128xf32> to vector<16x128xbf16>
    %c2_293 = arith.constant 2 : index
    %c0_294 = arith.constant 0 : index
    %c0_295 = arith.constant 0 : index
    %476 = vector.load %arg35[%c2_293, %c0_294, %c0_295] : memref<3x128x128xbf16, #tpu.memory_space<vmem>>, vector<1x128x128xbf16>
    %477 = vector.shape_cast %476 : vector<1x128x128xbf16> to vector<128x128xbf16>
    %cst_296 = arith.constant dense<0.000000e+00> : vector<16x128xf32>
    %478 = tpu.matmul %475, %477, %cst_296 {dimension_numbers = #tpu.dot_dimension_numbers<[1], [0], [0], [1], [0, 0, 1, 1], [], []>} : vector<16x128xbf16>, vector<128x128xbf16>, vector<16x128xf32> -> vector<16x128xf32>
    %479 = arith.addf %471, %478 : vector<16x128xf32>
    %c0_297 = arith.constant 0 : index
    %c0_298 = arith.constant 0 : index
    %480 = vector.load %arg34[%c0_297, %c0_298] : memref<1x128xf32, #tpu.memory_space<vmem>>, vector<1x128xf32>
    %481 = vector.broadcast %480 : vector<1x128xf32> to vector<16x128xf32>
    %482 = arith.addf %479, %481 : vector<16x128xf32>
    %cst_299 = arith.constant 0.000000e+00 : f32
    %483 = vector.broadcast %cst_299 : f32 to vector<16x128xf32>
    %484 = arith.maximumf %482, %483 : vector<16x128xf32>
    %cst_300 = arith.constant dense<0.000000e+00> : vector<8x128xf32>
    %485 = tpu.matmul %56, %484, %cst_300 {dimension_numbers = #tpu.dot_dimension_numbers<[1], [0], [0], [1], [0, 0, 1, 1], [], []>} : vector<8x16xf32>, vector<16x128xf32>, vector<8x128xf32> -> vector<8x128xf32>
    %cst_301 = arith.constant dense<0.000000e+00> : vector<8x128xf32>
    %486 = tpu.matmul %64, %484, %cst_301 {dimension_numbers = #tpu.dot_dimension_numbers<[1], [0], [0], [1], [0, 0, 1, 1], [], []>} : vector<8x16xf32>, vector<16x128xf32>, vector<8x128xf32> -> vector<8x128xf32>
    %487 = arith.maximumf %485, %486 : vector<8x128xf32>
    %488 = arith.cmpf ogt, %486, %485 : vector<8x128xf32>
    %489 = arith.truncf %487 : vector<8x128xf32> to vector<8x128xbf16>
    %c1_302 = arith.constant 1 : index
    %c0_303 = arith.constant 0 : index
    %c0_304 = arith.constant 0 : index
    %490 = vector.load %arg37[%c1_302, %c0_303, %c0_304] : memref<3x128x256xbf16, #tpu.memory_space<vmem>>, vector<1x128x256xbf16>
    %491 = vector.shape_cast %490 : vector<1x128x256xbf16> to vector<128x256xbf16>
    %cst_305 = arith.constant dense<0.000000e+00> : vector<8x256xf32>
    %492 = tpu.matmul %489, %491, %cst_305 {dimension_numbers = #tpu.dot_dimension_numbers<[1], [0], [0], [1], [0, 0, 1, 1], [], []>} : vector<8x128xbf16>, vector<128x256xbf16>, vector<8x256xf32> -> vector<8x256xf32>
    %c1_i32_306 = arith.constant 1 : i32
    %493 = tpu.dynamic_rotate %487 by %c1_i32_306 dim 0 : vector<8x128xf32>, i32 -> vector<8x128xf32>
    %494 = vector.broadcast %27 : vector<8x1xf32> to vector<8x128xf32>
    %495 = arith.mulf %493, %494 : vector<8x128xf32>
    %496 = arith.truncf %495 : vector<8x128xf32> to vector<8x128xbf16>
    %c0_307 = arith.constant 0 : index
    %c0_308 = arith.constant 0 : index
    %c0_309 = arith.constant 0 : index
    %497 = vector.load %arg37[%c0_307, %c0_308, %c0_309] : memref<3x128x256xbf16, #tpu.memory_space<vmem>>, vector<1x128x256xbf16>
    %498 = vector.shape_cast %497 : vector<1x128x256xbf16> to vector<128x256xbf16>
    %cst_310 = arith.constant dense<0.000000e+00> : vector<8x256xf32>
    %499 = tpu.matmul %496, %498, %cst_310 {dimension_numbers = #tpu.dot_dimension_numbers<[1], [0], [0], [1], [0, 0, 1, 1], [], []>} : vector<8x128xbf16>, vector<128x256xbf16>, vector<8x256xf32> -> vector<8x256xf32>
    %500 = arith.addf %492, %499 : vector<8x256xf32>
    %c7_i32_311 = arith.constant 7 : i32
    %501 = tpu.dynamic_rotate %487 by %c7_i32_311 dim 0 : vector<8x128xf32>, i32 -> vector<8x128xf32>
    %502 = vector.broadcast %32 : vector<8x1xf32> to vector<8x128xf32>
    %503 = arith.mulf %501, %502 : vector<8x128xf32>
    %504 = arith.truncf %503 : vector<8x128xf32> to vector<8x128xbf16>
    %c2_312 = arith.constant 2 : index
    %c0_313 = arith.constant 0 : index
    %c0_314 = arith.constant 0 : index
    %505 = vector.load %arg37[%c2_312, %c0_313, %c0_314] : memref<3x128x256xbf16, #tpu.memory_space<vmem>>, vector<1x128x256xbf16>
    %506 = vector.shape_cast %505 : vector<1x128x256xbf16> to vector<128x256xbf16>
    %cst_315 = arith.constant dense<0.000000e+00> : vector<8x256xf32>
    %507 = tpu.matmul %504, %506, %cst_315 {dimension_numbers = #tpu.dot_dimension_numbers<[1], [0], [0], [1], [0, 0, 1, 1], [], []>} : vector<8x128xbf16>, vector<128x256xbf16>, vector<8x256xf32> -> vector<8x256xf32>
    %508 = arith.addf %500, %507 : vector<8x256xf32>
    %c0_316 = arith.constant 0 : index
    %c0_317 = arith.constant 0 : index
    %509 = vector.load %arg36[%c0_316, %c0_317] : memref<1x256xf32, #tpu.memory_space<vmem>>, vector<1x256xf32>
    %510 = vector.broadcast %509 : vector<1x256xf32> to vector<8x256xf32>
    %511 = arith.addf %508, %510 : vector<8x256xf32>
    %cst_318 = arith.constant 0.000000e+00 : f32
    %512 = vector.broadcast %cst_318 : f32 to vector<8x256xf32>
    %513 = arith.maximumf %511, %512 : vector<8x256xf32>
    %514 = arith.truncf %513 : vector<8x256xf32> to vector<8x256xbf16>
    %c1_319 = arith.constant 1 : index
    %c0_320 = arith.constant 0 : index
    %c0_321 = arith.constant 0 : index
    %515 = vector.load %arg39[%c1_319, %c0_320, %c0_321] : memref<3x256x128xbf16, #tpu.memory_space<vmem>>, vector<1x256x128xbf16>
    %516 = vector.shape_cast %515 : vector<1x256x128xbf16> to vector<256x128xbf16>
    %cst_322 = arith.constant dense<0.000000e+00> : vector<8x128xf32>
    %517 = tpu.matmul %514, %516, %cst_322 {dimension_numbers = #tpu.dot_dimension_numbers<[1], [0], [0], [1], [0, 0, 1, 1], [], []>} : vector<8x256xbf16>, vector<256x128xbf16>, vector<8x128xf32> -> vector<8x128xf32>
    %c1_i32_323 = arith.constant 1 : i32
    %518 = tpu.dynamic_rotate %513 by %c1_i32_323 dim 0 : vector<8x256xf32>, i32 -> vector<8x256xf32>
    %519 = vector.broadcast %27 : vector<8x1xf32> to vector<8x256xf32>
    %520 = arith.mulf %518, %519 : vector<8x256xf32>
    %521 = arith.truncf %520 : vector<8x256xf32> to vector<8x256xbf16>
    %c0_324 = arith.constant 0 : index
    %c0_325 = arith.constant 0 : index
    %c0_326 = arith.constant 0 : index
    %522 = vector.load %arg39[%c0_324, %c0_325, %c0_326] : memref<3x256x128xbf16, #tpu.memory_space<vmem>>, vector<1x256x128xbf16>
    %523 = vector.shape_cast %522 : vector<1x256x128xbf16> to vector<256x128xbf16>
    %cst_327 = arith.constant dense<0.000000e+00> : vector<8x128xf32>
    %524 = tpu.matmul %521, %523, %cst_327 {dimension_numbers = #tpu.dot_dimension_numbers<[1], [0], [0], [1], [0, 0, 1, 1], [], []>} : vector<8x256xbf16>, vector<256x128xbf16>, vector<8x128xf32> -> vector<8x128xf32>
    %525 = arith.addf %517, %524 : vector<8x128xf32>
    %c7_i32_328 = arith.constant 7 : i32
    %526 = tpu.dynamic_rotate %513 by %c7_i32_328 dim 0 : vector<8x256xf32>, i32 -> vector<8x256xf32>
    %527 = vector.broadcast %32 : vector<8x1xf32> to vector<8x256xf32>
    %528 = arith.mulf %526, %527 : vector<8x256xf32>
    %529 = arith.truncf %528 : vector<8x256xf32> to vector<8x256xbf16>
    %c2_329 = arith.constant 2 : index
    %c0_330 = arith.constant 0 : index
    %c0_331 = arith.constant 0 : index
    %530 = vector.load %arg39[%c2_329, %c0_330, %c0_331] : memref<3x256x128xbf16, #tpu.memory_space<vmem>>, vector<1x256x128xbf16>
    %531 = vector.shape_cast %530 : vector<1x256x128xbf16> to vector<256x128xbf16>
    %cst_332 = arith.constant dense<0.000000e+00> : vector<8x128xf32>
    %532 = tpu.matmul %529, %531, %cst_332 {dimension_numbers = #tpu.dot_dimension_numbers<[1], [0], [0], [1], [0, 0, 1, 1], [], []>} : vector<8x256xbf16>, vector<256x128xbf16>, vector<8x128xf32> -> vector<8x128xf32>
    %533 = arith.addf %525, %532 : vector<8x128xf32>
    %c0_333 = arith.constant 0 : index
    %c0_334 = arith.constant 0 : index
    %534 = vector.load %arg38[%c0_333, %c0_334] : memref<1x128xf32, #tpu.memory_space<vmem>>, vector<1x128xf32>
    %535 = vector.broadcast %534 : vector<1x128xf32> to vector<8x128xf32>
    %536 = arith.addf %533, %535 : vector<8x128xf32>
    %cst_335 = arith.constant 0.000000e+00 : f32
    %537 = vector.broadcast %cst_335 : f32 to vector<8x128xf32>
    %538 = arith.maximumf %536, %537 : vector<8x128xf32>
    %cst_336 = arith.constant 0.000000e+00 : f32
    %539 = vector.broadcast %cst_336 : f32 to vector<8x128xf32>
    %540 = arith.select %488, %539, %538 : vector<8x128xi1>, vector<8x128xf32>
    %cst_337 = arith.constant 0.000000e+00 : f32
    %541 = vector.broadcast %cst_337 : f32 to vector<8x128xf32>
    %542 = arith.select %488, %538, %541 : vector<8x128xi1>, vector<8x128xf32>
    %cst_338 = arith.constant dense<0.000000e+00> : vector<16x128xf32>
    %543 = tpu.matmul %88, %540, %cst_338 {dimension_numbers = #tpu.dot_dimension_numbers<[1], [0], [0], [1], [0, 0, 1, 1], [], []>} : vector<16x8xf32>, vector<8x128xf32>, vector<16x128xf32> -> vector<16x128xf32>
    %cst_339 = arith.constant dense<0.000000e+00> : vector<16x128xf32>
    %544 = tpu.matmul %96, %542, %cst_339 {dimension_numbers = #tpu.dot_dimension_numbers<[1], [0], [0], [1], [0, 0, 1, 1], [], []>} : vector<16x8xf32>, vector<8x128xf32>, vector<16x128xf32> -> vector<16x128xf32>
    %545 = arith.addf %543, %544 : vector<16x128xf32>
    %546 = arith.addf %484, %545 : vector<16x128xf32>
    %547 = arith.truncf %546 : vector<16x128xf32> to vector<16x128xbf16>
    %c1_340 = arith.constant 1 : index
    %c0_341 = arith.constant 0 : index
    %c0_342 = arith.constant 0 : index
    %548 = vector.load %arg45[%c1_340, %c0_341, %c0_342] : memref<3x128x128xbf16, #tpu.memory_space<vmem>>, vector<1x128x128xbf16>
    %549 = vector.shape_cast %548 : vector<1x128x128xbf16> to vector<128x128xbf16>
    %cst_343 = arith.constant dense<0.000000e+00> : vector<16x128xf32>
    %550 = tpu.matmul %547, %549, %cst_343 {dimension_numbers = #tpu.dot_dimension_numbers<[1], [0], [0], [1], [0, 0, 1, 1], [], []>} : vector<16x128xbf16>, vector<128x128xbf16>, vector<16x128xf32> -> vector<16x128xf32>
    %c1_i32_344 = arith.constant 1 : i32
    %551 = tpu.dynamic_rotate %546 by %c1_i32_344 dim 0 : vector<16x128xf32>, i32 -> vector<16x128xf32>
    %552 = vector.broadcast %17 : vector<16x1xf32> to vector<16x128xf32>
    %553 = arith.mulf %551, %552 : vector<16x128xf32>
    %554 = arith.truncf %553 : vector<16x128xf32> to vector<16x128xbf16>
    %c0_345 = arith.constant 0 : index
    %c0_346 = arith.constant 0 : index
    %c0_347 = arith.constant 0 : index
    %555 = vector.load %arg45[%c0_345, %c0_346, %c0_347] : memref<3x128x128xbf16, #tpu.memory_space<vmem>>, vector<1x128x128xbf16>
    %556 = vector.shape_cast %555 : vector<1x128x128xbf16> to vector<128x128xbf16>
    %cst_348 = arith.constant dense<0.000000e+00> : vector<16x128xf32>
    %557 = tpu.matmul %554, %556, %cst_348 {dimension_numbers = #tpu.dot_dimension_numbers<[1], [0], [0], [1], [0, 0, 1, 1], [], []>} : vector<16x128xbf16>, vector<128x128xbf16>, vector<16x128xf32> -> vector<16x128xf32>
    %558 = arith.addf %550, %557 : vector<16x128xf32>
    %c15_i32_349 = arith.constant 15 : i32
    %559 = tpu.dynamic_rotate %546 by %c15_i32_349 dim 0 : vector<16x128xf32>, i32 -> vector<16x128xf32>
    %560 = vector.broadcast %22 : vector<16x1xf32> to vector<16x128xf32>
    %561 = arith.mulf %559, %560 : vector<16x128xf32>
    %562 = arith.truncf %561 : vector<16x128xf32> to vector<16x128xbf16>
    %c2_350 = arith.constant 2 : index
    %c0_351 = arith.constant 0 : index
    %c0_352 = arith.constant 0 : index
    %563 = vector.load %arg45[%c2_350, %c0_351, %c0_352] : memref<3x128x128xbf16, #tpu.memory_space<vmem>>, vector<1x128x128xbf16>
    %564 = vector.shape_cast %563 : vector<1x128x128xbf16> to vector<128x128xbf16>
    %cst_353 = arith.constant dense<0.000000e+00> : vector<16x128xf32>
    %565 = tpu.matmul %562, %564, %cst_353 {dimension_numbers = #tpu.dot_dimension_numbers<[1], [0], [0], [1], [0, 0, 1, 1], [], []>} : vector<16x128xbf16>, vector<128x128xbf16>, vector<16x128xf32> -> vector<16x128xf32>
    %566 = arith.addf %558, %565 : vector<16x128xf32>
    %c0_354 = arith.constant 0 : index
    %c0_355 = arith.constant 0 : index
    %567 = vector.load %arg44[%c0_354, %c0_355] : memref<1x128xf32, #tpu.memory_space<vmem>>, vector<1x128xf32>
    %568 = vector.broadcast %567 : vector<1x128xf32> to vector<16x128xf32>
    %569 = arith.addf %566, %568 : vector<16x128xf32>
    %cst_356 = arith.constant 0.000000e+00 : f32
    %570 = vector.broadcast %cst_356 : f32 to vector<16x128xf32>
    %571 = arith.maximumf %569, %570 : vector<16x128xf32>
    %572 = arith.truncf %571 : vector<16x128xf32> to vector<16x128xbf16>
    %c1_357 = arith.constant 1 : index
    %c0_358 = arith.constant 0 : index
    %c0_359 = arith.constant 0 : index
    %573 = vector.load %arg47[%c1_357, %c0_358, %c0_359] : memref<3x128x64xbf16, #tpu.memory_space<vmem>>, vector<1x128x64xbf16>
    %574 = vector.shape_cast %573 : vector<1x128x64xbf16> to vector<128x64xbf16>
    %cst_360 = arith.constant dense<0.000000e+00> : vector<16x64xf32>
    %575 = tpu.matmul %572, %574, %cst_360 {dimension_numbers = #tpu.dot_dimension_numbers<[1], [0], [0], [1], [0, 0, 1, 1], [], []>} : vector<16x128xbf16>, vector<128x64xbf16>, vector<16x64xf32> -> vector<16x64xf32>
    %c1_i32_361 = arith.constant 1 : i32
    %576 = tpu.dynamic_rotate %571 by %c1_i32_361 dim 0 : vector<16x128xf32>, i32 -> vector<16x128xf32>
    %577 = vector.broadcast %17 : vector<16x1xf32> to vector<16x128xf32>
    %578 = arith.mulf %576, %577 : vector<16x128xf32>
    %579 = arith.truncf %578 : vector<16x128xf32> to vector<16x128xbf16>
    %c0_362 = arith.constant 0 : index
    %c0_363 = arith.constant 0 : index
    %c0_364 = arith.constant 0 : index
    %580 = vector.load %arg47[%c0_362, %c0_363, %c0_364] : memref<3x128x64xbf16, #tpu.memory_space<vmem>>, vector<1x128x64xbf16>
    %581 = vector.shape_cast %580 : vector<1x128x64xbf16> to vector<128x64xbf16>
    %cst_365 = arith.constant dense<0.000000e+00> : vector<16x64xf32>
    %582 = tpu.matmul %579, %581, %cst_365 {dimension_numbers = #tpu.dot_dimension_numbers<[1], [0], [0], [1], [0, 0, 1, 1], [], []>} : vector<16x128xbf16>, vector<128x64xbf16>, vector<16x64xf32> -> vector<16x64xf32>
    %583 = arith.addf %575, %582 : vector<16x64xf32>
    %c15_i32_366 = arith.constant 15 : i32
    %584 = tpu.dynamic_rotate %571 by %c15_i32_366 dim 0 : vector<16x128xf32>, i32 -> vector<16x128xf32>
    %585 = vector.broadcast %22 : vector<16x1xf32> to vector<16x128xf32>
    %586 = arith.mulf %584, %585 : vector<16x128xf32>
    %587 = arith.truncf %586 : vector<16x128xf32> to vector<16x128xbf16>
    %c2_367 = arith.constant 2 : index
    %c0_368 = arith.constant 0 : index
    %c0_369 = arith.constant 0 : index
    %588 = vector.load %arg47[%c2_367, %c0_368, %c0_369] : memref<3x128x64xbf16, #tpu.memory_space<vmem>>, vector<1x128x64xbf16>
    %589 = vector.shape_cast %588 : vector<1x128x64xbf16> to vector<128x64xbf16>
    %cst_370 = arith.constant dense<0.000000e+00> : vector<16x64xf32>
    %590 = tpu.matmul %587, %589, %cst_370 {dimension_numbers = #tpu.dot_dimension_numbers<[1], [0], [0], [1], [0, 0, 1, 1], [], []>} : vector<16x128xbf16>, vector<128x64xbf16>, vector<16x64xf32> -> vector<16x64xf32>
    %591 = arith.addf %583, %590 : vector<16x64xf32>
    %c0_371 = arith.constant 0 : index
    %c0_372 = arith.constant 0 : index
    %592 = vector.load %arg46[%c0_371, %c0_372] : memref<1x64xf32, #tpu.memory_space<vmem>>, vector<1x64xf32>
    %593 = vector.broadcast %592 : vector<1x64xf32> to vector<16x64xf32>
    %594 = arith.addf %591, %593 : vector<16x64xf32>
    %cst_373 = arith.constant 0.000000e+00 : f32
    %595 = vector.broadcast %cst_373 : f32 to vector<16x64xf32>
    %596 = arith.maximumf %594, %595 : vector<16x64xf32>
    %cst_374 = arith.constant 0.000000e+00 : f32
    %597 = vector.broadcast %cst_374 : f32 to vector<16x64xf32>
    %598 = arith.select %434, %597, %596 : vector<16x64xi1>, vector<16x64xf32>
    %cst_375 = arith.constant 0.000000e+00 : f32
    %599 = vector.broadcast %cst_375 : f32 to vector<16x64xf32>
    %600 = arith.select %434, %596, %599 : vector<16x64xi1>, vector<16x64xf32>
    %cst_376 = arith.constant dense<0.000000e+00> : vector<32x64xf32>
    %601 = tpu.matmul %72, %598, %cst_376 {dimension_numbers = #tpu.dot_dimension_numbers<[1], [0], [0], [1], [0, 0, 1, 1], [], []>} : vector<32x16xf32>, vector<16x64xf32>, vector<32x64xf32> -> vector<32x64xf32>
    %cst_377 = arith.constant dense<0.000000e+00> : vector<32x64xf32>
    %602 = tpu.matmul %80, %600, %cst_377 {dimension_numbers = #tpu.dot_dimension_numbers<[1], [0], [0], [1], [0, 0, 1, 1], [], []>} : vector<32x16xf32>, vector<16x64xf32>, vector<32x64xf32> -> vector<32x64xf32>
    %603 = arith.addf %601, %602 : vector<32x64xf32>
    %604 = arith.addf %430, %603 : vector<32x64xf32>
    %605 = arith.truncf %604 : vector<32x64xf32> to vector<32x64xbf16>
    %c1_378 = arith.constant 1 : index
    %c0_379 = arith.constant 0 : index
    %c0_380 = arith.constant 0 : index
    %606 = vector.load %arg41[%c1_378, %c0_379, %c0_380] : memref<3x64x64xbf16, #tpu.memory_space<vmem>>, vector<1x64x64xbf16>
    %607 = vector.shape_cast %606 : vector<1x64x64xbf16> to vector<64x64xbf16>
    %cst_381 = arith.constant dense<0.000000e+00> : vector<32x64xf32>
    %608 = tpu.matmul %605, %607, %cst_381 {dimension_numbers = #tpu.dot_dimension_numbers<[1], [0], [0], [1], [0, 0, 1, 1], [], []>} : vector<32x64xbf16>, vector<64x64xbf16>, vector<32x64xf32> -> vector<32x64xf32>
    %c1_i32_382 = arith.constant 1 : i32
    %609 = tpu.dynamic_rotate %604 by %c1_i32_382 dim 0 : vector<32x64xf32>, i32 -> vector<32x64xf32>
    %610 = vector.broadcast %7 : vector<32x1xf32> to vector<32x64xf32>
    %611 = arith.mulf %609, %610 : vector<32x64xf32>
    %612 = arith.truncf %611 : vector<32x64xf32> to vector<32x64xbf16>
    %c0_383 = arith.constant 0 : index
    %c0_384 = arith.constant 0 : index
    %c0_385 = arith.constant 0 : index
    %613 = vector.load %arg41[%c0_383, %c0_384, %c0_385] : memref<3x64x64xbf16, #tpu.memory_space<vmem>>, vector<1x64x64xbf16>
    %614 = vector.shape_cast %613 : vector<1x64x64xbf16> to vector<64x64xbf16>
    %cst_386 = arith.constant dense<0.000000e+00> : vector<32x64xf32>
    %615 = tpu.matmul %612, %614, %cst_386 {dimension_numbers = #tpu.dot_dimension_numbers<[1], [0], [0], [1], [0, 0, 1, 1], [], []>} : vector<32x64xbf16>, vector<64x64xbf16>, vector<32x64xf32> -> vector<32x64xf32>
    %616 = arith.addf %608, %615 : vector<32x64xf32>
    %c31_i32_387 = arith.constant 31 : i32
    %617 = tpu.dynamic_rotate %604 by %c31_i32_387 dim 0 : vector<32x64xf32>, i32 -> vector<32x64xf32>
    %618 = vector.broadcast %12 : vector<32x1xf32> to vector<32x64xf32>
    %619 = arith.mulf %617, %618 : vector<32x64xf32>
    %620 = arith.truncf %619 : vector<32x64xf32> to vector<32x64xbf16>
    %c2_388 = arith.constant 2 : index
    %c0_389 = arith.constant 0 : index
    %c0_390 = arith.constant 0 : index
    %621 = vector.load %arg41[%c2_388, %c0_389, %c0_390] : memref<3x64x64xbf16, #tpu.memory_space<vmem>>, vector<1x64x64xbf16>
    %622 = vector.shape_cast %621 : vector<1x64x64xbf16> to vector<64x64xbf16>
    %cst_391 = arith.constant dense<0.000000e+00> : vector<32x64xf32>
    %623 = tpu.matmul %620, %622, %cst_391 {dimension_numbers = #tpu.dot_dimension_numbers<[1], [0], [0], [1], [0, 0, 1, 1], [], []>} : vector<32x64xbf16>, vector<64x64xbf16>, vector<32x64xf32> -> vector<32x64xf32>
    %624 = arith.addf %616, %623 : vector<32x64xf32>
    %c0_392 = arith.constant 0 : index
    %c0_393 = arith.constant 0 : index
    %625 = vector.load %arg40[%c0_392, %c0_393] : memref<1x64xf32, #tpu.memory_space<vmem>>, vector<1x64xf32>
    %626 = vector.broadcast %625 : vector<1x64xf32> to vector<32x64xf32>
    %627 = arith.addf %624, %626 : vector<32x64xf32>
    %cst_394 = arith.constant 0.000000e+00 : f32
    %628 = vector.broadcast %cst_394 : f32 to vector<32x64xf32>
    %629 = arith.maximumf %627, %628 : vector<32x64xf32>
    %630 = arith.truncf %629 : vector<32x64xf32> to vector<32x64xbf16>
    %c1_395 = arith.constant 1 : index
    %c0_396 = arith.constant 0 : index
    %c0_397 = arith.constant 0 : index
    %631 = vector.load %arg43[%c1_395, %c0_396, %c0_397] : memref<3x64x64xbf16, #tpu.memory_space<vmem>>, vector<1x64x64xbf16>
    %632 = vector.shape_cast %631 : vector<1x64x64xbf16> to vector<64x64xbf16>
    %cst_398 = arith.constant dense<0.000000e+00> : vector<32x64xf32>
    %633 = tpu.matmul %630, %632, %cst_398 {dimension_numbers = #tpu.dot_dimension_numbers<[1], [0], [0], [1], [0, 0, 1, 1], [], []>} : vector<32x64xbf16>, vector<64x64xbf16>, vector<32x64xf32> -> vector<32x64xf32>
    %c1_i32_399 = arith.constant 1 : i32
    %634 = tpu.dynamic_rotate %629 by %c1_i32_399 dim 0 : vector<32x64xf32>, i32 -> vector<32x64xf32>
    %635 = vector.broadcast %7 : vector<32x1xf32> to vector<32x64xf32>
    %636 = arith.mulf %634, %635 : vector<32x64xf32>
    %637 = arith.truncf %636 : vector<32x64xf32> to vector<32x64xbf16>
    %c0_400 = arith.constant 0 : index
    %c0_401 = arith.constant 0 : index
    %c0_402 = arith.constant 0 : index
    %638 = vector.load %arg43[%c0_400, %c0_401, %c0_402] : memref<3x64x64xbf16, #tpu.memory_space<vmem>>, vector<1x64x64xbf16>
    %639 = vector.shape_cast %638 : vector<1x64x64xbf16> to vector<64x64xbf16>
    %cst_403 = arith.constant dense<0.000000e+00> : vector<32x64xf32>
    %640 = tpu.matmul %637, %639, %cst_403 {dimension_numbers = #tpu.dot_dimension_numbers<[1], [0], [0], [1], [0, 0, 1, 1], [], []>} : vector<32x64xbf16>, vector<64x64xbf16>, vector<32x64xf32> -> vector<32x64xf32>
    %641 = arith.addf %633, %640 : vector<32x64xf32>
    %c31_i32_404 = arith.constant 31 : i32
    %642 = tpu.dynamic_rotate %629 by %c31_i32_404 dim 0 : vector<32x64xf32>, i32 -> vector<32x64xf32>
    %643 = vector.broadcast %12 : vector<32x1xf32> to vector<32x64xf32>
    %644 = arith.mulf %642, %643 : vector<32x64xf32>
    %645 = arith.truncf %644 : vector<32x64xf32> to vector<32x64xbf16>
    %c2_405 = arith.constant 2 : index
    %c0_406 = arith.constant 0 : index
    %c0_407 = arith.constant 0 : index
    %646 = vector.load %arg43[%c2_405, %c0_406, %c0_407] : memref<3x64x64xbf16, #tpu.memory_space<vmem>>, vector<1x64x64xbf16>
    %647 = vector.shape_cast %646 : vector<1x64x64xbf16> to vector<64x64xbf16>
    %cst_408 = arith.constant dense<0.000000e+00> : vector<32x64xf32>
    %648 = tpu.matmul %645, %647, %cst_408 {dimension_numbers = #tpu.dot_dimension_numbers<[1], [0], [0], [1], [0, 0, 1, 1], [], []>} : vector<32x64xbf16>, vector<64x64xbf16>, vector<32x64xf32> -> vector<32x64xf32>
    %649 = arith.addf %641, %648 : vector<32x64xf32>
    %c0_409 = arith.constant 0 : index
    %c0_410 = arith.constant 0 : index
    %650 = vector.load %arg42[%c0_409, %c0_410] : memref<1x64xf32, #tpu.memory_space<vmem>>, vector<1x64xf32>
    %651 = vector.broadcast %650 : vector<1x64xf32> to vector<32x64xf32>
    %652 = arith.addf %649, %651 : vector<32x64xf32>
    %cst_411 = arith.constant 0.000000e+00 : f32
    %653 = vector.broadcast %cst_411 : f32 to vector<32x64xf32>
    %654 = arith.maximumf %652, %653 : vector<32x64xf32>
    %655 = arith.truncf %654 : vector<32x64xf32> to vector<32x64xbf16>
    %c1_412 = arith.constant 1 : index
    %c0_413 = arith.constant 0 : index
    %c0_414 = arith.constant 0 : index
    %656 = vector.load %arg49[%c1_412, %c0_413, %c0_414] : memref<3x64x64xbf16, #tpu.memory_space<vmem>>, vector<1x64x64xbf16>
    %657 = vector.shape_cast %656 : vector<1x64x64xbf16> to vector<64x64xbf16>
    %cst_415 = arith.constant dense<0.000000e+00> : vector<32x64xf32>
    %658 = tpu.matmul %655, %657, %cst_415 {dimension_numbers = #tpu.dot_dimension_numbers<[1], [0], [0], [1], [0, 0, 1, 1], [], []>} : vector<32x64xbf16>, vector<64x64xbf16>, vector<32x64xf32> -> vector<32x64xf32>
    %c1_i32_416 = arith.constant 1 : i32
    %659 = tpu.dynamic_rotate %654 by %c1_i32_416 dim 0 : vector<32x64xf32>, i32 -> vector<32x64xf32>
    %660 = vector.broadcast %7 : vector<32x1xf32> to vector<32x64xf32>
    %661 = arith.mulf %659, %660 : vector<32x64xf32>
    %662 = arith.truncf %661 : vector<32x64xf32> to vector<32x64xbf16>
    %c0_417 = arith.constant 0 : index
    %c0_418 = arith.constant 0 : index
    %c0_419 = arith.constant 0 : index
    %663 = vector.load %arg49[%c0_417, %c0_418, %c0_419] : memref<3x64x64xbf16, #tpu.memory_space<vmem>>, vector<1x64x64xbf16>
    %664 = vector.shape_cast %663 : vector<1x64x64xbf16> to vector<64x64xbf16>
    %cst_420 = arith.constant dense<0.000000e+00> : vector<32x64xf32>
    %665 = tpu.matmul %662, %664, %cst_420 {dimension_numbers = #tpu.dot_dimension_numbers<[1], [0], [0], [1], [0, 0, 1, 1], [], []>} : vector<32x64xbf16>, vector<64x64xbf16>, vector<32x64xf32> -> vector<32x64xf32>
    %666 = arith.addf %658, %665 : vector<32x64xf32>
    %c31_i32_421 = arith.constant 31 : i32
    %667 = tpu.dynamic_rotate %654 by %c31_i32_421 dim 0 : vector<32x64xf32>, i32 -> vector<32x64xf32>
    %668 = vector.broadcast %12 : vector<32x1xf32> to vector<32x64xf32>
    %669 = arith.mulf %667, %668 : vector<32x64xf32>
    %670 = arith.truncf %669 : vector<32x64xf32> to vector<32x64xbf16>
    %c2_422 = arith.constant 2 : index
    %c0_423 = arith.constant 0 : index
    %c0_424 = arith.constant 0 : index
    %671 = vector.load %arg49[%c2_422, %c0_423, %c0_424] : memref<3x64x64xbf16, #tpu.memory_space<vmem>>, vector<1x64x64xbf16>
    %672 = vector.shape_cast %671 : vector<1x64x64xbf16> to vector<64x64xbf16>
    %cst_425 = arith.constant dense<0.000000e+00> : vector<32x64xf32>
    %673 = tpu.matmul %670, %672, %cst_425 {dimension_numbers = #tpu.dot_dimension_numbers<[1], [0], [0], [1], [0, 0, 1, 1], [], []>} : vector<32x64xbf16>, vector<64x64xbf16>, vector<32x64xf32> -> vector<32x64xf32>
    %674 = arith.addf %666, %673 : vector<32x64xf32>
    %c0_426 = arith.constant 0 : index
    %c0_427 = arith.constant 0 : index
    %675 = vector.load %arg48[%c0_426, %c0_427] : memref<1x64xf32, #tpu.memory_space<vmem>>, vector<1x64xf32>
    %676 = vector.broadcast %675 : vector<1x64xf32> to vector<32x64xf32>
    %677 = arith.addf %674, %676 : vector<32x64xf32>
    %cst_428 = arith.constant 0.000000e+00 : f32
    %678 = vector.broadcast %cst_428 : f32 to vector<32x64xf32>
    %679 = arith.maximumf %677, %678 : vector<32x64xf32>
    %680 = arith.truncf %679 : vector<32x64xf32> to vector<32x64xbf16>
    %c1_429 = arith.constant 1 : index
    %c0_430 = arith.constant 0 : index
    %c0_431 = arith.constant 0 : index
    %681 = vector.load %arg51[%c1_429, %c0_430, %c0_431] : memref<3x64x64xbf16, #tpu.memory_space<vmem>>, vector<1x64x64xbf16>
    %682 = vector.shape_cast %681 : vector<1x64x64xbf16> to vector<64x64xbf16>
    %cst_432 = arith.constant dense<0.000000e+00> : vector<32x64xf32>
    %683 = tpu.matmul %680, %682, %cst_432 {dimension_numbers = #tpu.dot_dimension_numbers<[1], [0], [0], [1], [0, 0, 1, 1], [], []>} : vector<32x64xbf16>, vector<64x64xbf16>, vector<32x64xf32> -> vector<32x64xf32>
    %c1_i32_433 = arith.constant 1 : i32
    %684 = tpu.dynamic_rotate %679 by %c1_i32_433 dim 0 : vector<32x64xf32>, i32 -> vector<32x64xf32>
    %685 = vector.broadcast %7 : vector<32x1xf32> to vector<32x64xf32>
    %686 = arith.mulf %684, %685 : vector<32x64xf32>
    %687 = arith.truncf %686 : vector<32x64xf32> to vector<32x64xbf16>
    %c0_434 = arith.constant 0 : index
    %c0_435 = arith.constant 0 : index
    %c0_436 = arith.constant 0 : index
    %688 = vector.load %arg51[%c0_434, %c0_435, %c0_436] : memref<3x64x64xbf16, #tpu.memory_space<vmem>>, vector<1x64x64xbf16>
    %689 = vector.shape_cast %688 : vector<1x64x64xbf16> to vector<64x64xbf16>
    %cst_437 = arith.constant dense<0.000000e+00> : vector<32x64xf32>
    %690 = tpu.matmul %687, %689, %cst_437 {dimension_numbers = #tpu.dot_dimension_numbers<[1], [0], [0], [1], [0, 0, 1, 1], [], []>} : vector<32x64xbf16>, vector<64x64xbf16>, vector<32x64xf32> -> vector<32x64xf32>
    %691 = arith.addf %683, %690 : vector<32x64xf32>
    %c31_i32_438 = arith.constant 31 : i32
    %692 = tpu.dynamic_rotate %679 by %c31_i32_438 dim 0 : vector<32x64xf32>, i32 -> vector<32x64xf32>
    %693 = vector.broadcast %12 : vector<32x1xf32> to vector<32x64xf32>
    %694 = arith.mulf %692, %693 : vector<32x64xf32>
    %695 = arith.truncf %694 : vector<32x64xf32> to vector<32x64xbf16>
    %c2_439 = arith.constant 2 : index
    %c0_440 = arith.constant 0 : index
    %c0_441 = arith.constant 0 : index
    %696 = vector.load %arg51[%c2_439, %c0_440, %c0_441] : memref<3x64x64xbf16, #tpu.memory_space<vmem>>, vector<1x64x64xbf16>
    %697 = vector.shape_cast %696 : vector<1x64x64xbf16> to vector<64x64xbf16>
    %cst_442 = arith.constant dense<0.000000e+00> : vector<32x64xf32>
    %698 = tpu.matmul %695, %697, %cst_442 {dimension_numbers = #tpu.dot_dimension_numbers<[1], [0], [0], [1], [0, 0, 1, 1], [], []>} : vector<32x64xbf16>, vector<64x64xbf16>, vector<32x64xf32> -> vector<32x64xf32>
    %699 = arith.addf %691, %698 : vector<32x64xf32>
    %c0_443 = arith.constant 0 : index
    %c0_444 = arith.constant 0 : index
    %700 = vector.load %arg50[%c0_443, %c0_444] : memref<1x64xf32, #tpu.memory_space<vmem>>, vector<1x64xf32>
    %701 = vector.broadcast %700 : vector<1x64xf32> to vector<32x64xf32>
    %702 = arith.addf %699, %701 : vector<32x64xf32>
    %cst_445 = arith.constant 0.000000e+00 : f32
    %703 = vector.broadcast %cst_445 : f32 to vector<32x64xf32>
    %704 = arith.maximumf %702, %703 : vector<32x64xf32>
    %cst_446 = arith.constant dense<0.000000e+00> : vector<16x64xf32>
    %705 = tpu.matmul %40, %704, %cst_446 {dimension_numbers = #tpu.dot_dimension_numbers<[1], [0], [0], [1], [0, 0, 1, 1], [], []>} : vector<16x32xf32>, vector<32x64xf32>, vector<16x64xf32> -> vector<16x64xf32>
    %cst_447 = arith.constant dense<0.000000e+00> : vector<16x64xf32>
    %706 = tpu.matmul %48, %704, %cst_447 {dimension_numbers = #tpu.dot_dimension_numbers<[1], [0], [0], [1], [0, 0, 1, 1], [], []>} : vector<16x32xf32>, vector<32x64xf32>, vector<16x64xf32> -> vector<16x64xf32>
    %707 = arith.maximumf %705, %706 : vector<16x64xf32>
    %708 = arith.cmpf ogt, %706, %705 : vector<16x64xf32>
    %709 = arith.truncf %707 : vector<16x64xf32> to vector<16x64xbf16>
    %c1_448 = arith.constant 1 : index
    %c0_449 = arith.constant 0 : index
    %c0_450 = arith.constant 0 : index
    %710 = vector.load %arg53[%c1_448, %c0_449, %c0_450] : memref<3x64x128xbf16, #tpu.memory_space<vmem>>, vector<1x64x128xbf16>
    %711 = vector.shape_cast %710 : vector<1x64x128xbf16> to vector<64x128xbf16>
    %cst_451 = arith.constant dense<0.000000e+00> : vector<16x128xf32>
    %712 = tpu.matmul %709, %711, %cst_451 {dimension_numbers = #tpu.dot_dimension_numbers<[1], [0], [0], [1], [0, 0, 1, 1], [], []>} : vector<16x64xbf16>, vector<64x128xbf16>, vector<16x128xf32> -> vector<16x128xf32>
    %c1_i32_452 = arith.constant 1 : i32
    %713 = tpu.dynamic_rotate %707 by %c1_i32_452 dim 0 : vector<16x64xf32>, i32 -> vector<16x64xf32>
    %714 = vector.broadcast %17 : vector<16x1xf32> to vector<16x64xf32>
    %715 = arith.mulf %713, %714 : vector<16x64xf32>
    %716 = arith.truncf %715 : vector<16x64xf32> to vector<16x64xbf16>
    %c0_453 = arith.constant 0 : index
    %c0_454 = arith.constant 0 : index
    %c0_455 = arith.constant 0 : index
    %717 = vector.load %arg53[%c0_453, %c0_454, %c0_455] : memref<3x64x128xbf16, #tpu.memory_space<vmem>>, vector<1x64x128xbf16>
    %718 = vector.shape_cast %717 : vector<1x64x128xbf16> to vector<64x128xbf16>
    %cst_456 = arith.constant dense<0.000000e+00> : vector<16x128xf32>
    %719 = tpu.matmul %716, %718, %cst_456 {dimension_numbers = #tpu.dot_dimension_numbers<[1], [0], [0], [1], [0, 0, 1, 1], [], []>} : vector<16x64xbf16>, vector<64x128xbf16>, vector<16x128xf32> -> vector<16x128xf32>
    %720 = arith.addf %712, %719 : vector<16x128xf32>
    %c15_i32_457 = arith.constant 15 : i32
    %721 = tpu.dynamic_rotate %707 by %c15_i32_457 dim 0 : vector<16x64xf32>, i32 -> vector<16x64xf32>
    %722 = vector.broadcast %22 : vector<16x1xf32> to vector<16x64xf32>
    %723 = arith.mulf %721, %722 : vector<16x64xf32>
    %724 = arith.truncf %723 : vector<16x64xf32> to vector<16x64xbf16>
    %c2_458 = arith.constant 2 : index
    %c0_459 = arith.constant 0 : index
    %c0_460 = arith.constant 0 : index
    %725 = vector.load %arg53[%c2_458, %c0_459, %c0_460] : memref<3x64x128xbf16, #tpu.memory_space<vmem>>, vector<1x64x128xbf16>
    %726 = vector.shape_cast %725 : vector<1x64x128xbf16> to vector<64x128xbf16>
    %cst_461 = arith.constant dense<0.000000e+00> : vector<16x128xf32>
    %727 = tpu.matmul %724, %726, %cst_461 {dimension_numbers = #tpu.dot_dimension_numbers<[1], [0], [0], [1], [0, 0, 1, 1], [], []>} : vector<16x64xbf16>, vector<64x128xbf16>, vector<16x128xf32> -> vector<16x128xf32>
    %728 = arith.addf %720, %727 : vector<16x128xf32>
    %c0_462 = arith.constant 0 : index
    %c0_463 = arith.constant 0 : index
    %729 = vector.load %arg52[%c0_462, %c0_463] : memref<1x128xf32, #tpu.memory_space<vmem>>, vector<1x128xf32>
    %730 = vector.broadcast %729 : vector<1x128xf32> to vector<16x128xf32>
    %731 = arith.addf %728, %730 : vector<16x128xf32>
    %cst_464 = arith.constant 0.000000e+00 : f32
    %732 = vector.broadcast %cst_464 : f32 to vector<16x128xf32>
    %733 = arith.maximumf %731, %732 : vector<16x128xf32>
    %734 = arith.truncf %733 : vector<16x128xf32> to vector<16x128xbf16>
    %c1_465 = arith.constant 1 : index
    %c0_466 = arith.constant 0 : index
    %c0_467 = arith.constant 0 : index
    %735 = vector.load %arg55[%c1_465, %c0_466, %c0_467] : memref<3x128x128xbf16, #tpu.memory_space<vmem>>, vector<1x128x128xbf16>
    %736 = vector.shape_cast %735 : vector<1x128x128xbf16> to vector<128x128xbf16>
    %cst_468 = arith.constant dense<0.000000e+00> : vector<16x128xf32>
    %737 = tpu.matmul %734, %736, %cst_468 {dimension_numbers = #tpu.dot_dimension_numbers<[1], [0], [0], [1], [0, 0, 1, 1], [], []>} : vector<16x128xbf16>, vector<128x128xbf16>, vector<16x128xf32> -> vector<16x128xf32>
    %c1_i32_469 = arith.constant 1 : i32
    %738 = tpu.dynamic_rotate %733 by %c1_i32_469 dim 0 : vector<16x128xf32>, i32 -> vector<16x128xf32>
    %739 = vector.broadcast %17 : vector<16x1xf32> to vector<16x128xf32>
    %740 = arith.mulf %738, %739 : vector<16x128xf32>
    %741 = arith.truncf %740 : vector<16x128xf32> to vector<16x128xbf16>
    %c0_470 = arith.constant 0 : index
    %c0_471 = arith.constant 0 : index
    %c0_472 = arith.constant 0 : index
    %742 = vector.load %arg55[%c0_470, %c0_471, %c0_472] : memref<3x128x128xbf16, #tpu.memory_space<vmem>>, vector<1x128x128xbf16>
    %743 = vector.shape_cast %742 : vector<1x128x128xbf16> to vector<128x128xbf16>
    %cst_473 = arith.constant dense<0.000000e+00> : vector<16x128xf32>
    %744 = tpu.matmul %741, %743, %cst_473 {dimension_numbers = #tpu.dot_dimension_numbers<[1], [0], [0], [1], [0, 0, 1, 1], [], []>} : vector<16x128xbf16>, vector<128x128xbf16>, vector<16x128xf32> -> vector<16x128xf32>
    %745 = arith.addf %737, %744 : vector<16x128xf32>
    %c15_i32_474 = arith.constant 15 : i32
    %746 = tpu.dynamic_rotate %733 by %c15_i32_474 dim 0 : vector<16x128xf32>, i32 -> vector<16x128xf32>
    %747 = vector.broadcast %22 : vector<16x1xf32> to vector<16x128xf32>
    %748 = arith.mulf %746, %747 : vector<16x128xf32>
    %749 = arith.truncf %748 : vector<16x128xf32> to vector<16x128xbf16>
    %c2_475 = arith.constant 2 : index
    %c0_476 = arith.constant 0 : index
    %c0_477 = arith.constant 0 : index
    %750 = vector.load %arg55[%c2_475, %c0_476, %c0_477] : memref<3x128x128xbf16, #tpu.memory_space<vmem>>, vector<1x128x128xbf16>
    %751 = vector.shape_cast %750 : vector<1x128x128xbf16> to vector<128x128xbf16>
    %cst_478 = arith.constant dense<0.000000e+00> : vector<16x128xf32>
    %752 = tpu.matmul %749, %751, %cst_478 {dimension_numbers = #tpu.dot_dimension_numbers<[1], [0], [0], [1], [0, 0, 1, 1], [], []>} : vector<16x128xbf16>, vector<128x128xbf16>, vector<16x128xf32> -> vector<16x128xf32>
    %753 = arith.addf %745, %752 : vector<16x128xf32>
    %c0_479 = arith.constant 0 : index
    %c0_480 = arith.constant 0 : index
    %754 = vector.load %arg54[%c0_479, %c0_480] : memref<1x128xf32, #tpu.memory_space<vmem>>, vector<1x128xf32>
    %755 = vector.broadcast %754 : vector<1x128xf32> to vector<16x128xf32>
    %756 = arith.addf %753, %755 : vector<16x128xf32>
    %cst_481 = arith.constant 0.000000e+00 : f32
    %757 = vector.broadcast %cst_481 : f32 to vector<16x128xf32>
    %758 = arith.maximumf %756, %757 : vector<16x128xf32>
    %cst_482 = arith.constant dense<0.000000e+00> : vector<8x128xf32>
    %759 = tpu.matmul %56, %758, %cst_482 {dimension_numbers = #tpu.dot_dimension_numbers<[1], [0], [0], [1], [0, 0, 1, 1], [], []>} : vector<8x16xf32>, vector<16x128xf32>, vector<8x128xf32> -> vector<8x128xf32>
    %cst_483 = arith.constant dense<0.000000e+00> : vector<8x128xf32>
    %760 = tpu.matmul %64, %758, %cst_483 {dimension_numbers = #tpu.dot_dimension_numbers<[1], [0], [0], [1], [0, 0, 1, 1], [], []>} : vector<8x16xf32>, vector<16x128xf32>, vector<8x128xf32> -> vector<8x128xf32>
    %761 = arith.maximumf %759, %760 : vector<8x128xf32>
    %762 = arith.cmpf ogt, %760, %759 : vector<8x128xf32>
    %763 = arith.truncf %761 : vector<8x128xf32> to vector<8x128xbf16>
    %c1_484 = arith.constant 1 : index
    %c0_485 = arith.constant 0 : index
    %c0_486 = arith.constant 0 : index
    %764 = vector.load %arg57[%c1_484, %c0_485, %c0_486] : memref<3x128x256xbf16, #tpu.memory_space<vmem>>, vector<1x128x256xbf16>
    %765 = vector.shape_cast %764 : vector<1x128x256xbf16> to vector<128x256xbf16>
    %cst_487 = arith.constant dense<0.000000e+00> : vector<8x256xf32>
    %766 = tpu.matmul %763, %765, %cst_487 {dimension_numbers = #tpu.dot_dimension_numbers<[1], [0], [0], [1], [0, 0, 1, 1], [], []>} : vector<8x128xbf16>, vector<128x256xbf16>, vector<8x256xf32> -> vector<8x256xf32>
    %c1_i32_488 = arith.constant 1 : i32
    %767 = tpu.dynamic_rotate %761 by %c1_i32_488 dim 0 : vector<8x128xf32>, i32 -> vector<8x128xf32>
    %768 = vector.broadcast %27 : vector<8x1xf32> to vector<8x128xf32>
    %769 = arith.mulf %767, %768 : vector<8x128xf32>
    %770 = arith.truncf %769 : vector<8x128xf32> to vector<8x128xbf16>
    %c0_489 = arith.constant 0 : index
    %c0_490 = arith.constant 0 : index
    %c0_491 = arith.constant 0 : index
    %771 = vector.load %arg57[%c0_489, %c0_490, %c0_491] : memref<3x128x256xbf16, #tpu.memory_space<vmem>>, vector<1x128x256xbf16>
    %772 = vector.shape_cast %771 : vector<1x128x256xbf16> to vector<128x256xbf16>
    %cst_492 = arith.constant dense<0.000000e+00> : vector<8x256xf32>
    %773 = tpu.matmul %770, %772, %cst_492 {dimension_numbers = #tpu.dot_dimension_numbers<[1], [0], [0], [1], [0, 0, 1, 1], [], []>} : vector<8x128xbf16>, vector<128x256xbf16>, vector<8x256xf32> -> vector<8x256xf32>
    %774 = arith.addf %766, %773 : vector<8x256xf32>
    %c7_i32_493 = arith.constant 7 : i32
    %775 = tpu.dynamic_rotate %761 by %c7_i32_493 dim 0 : vector<8x128xf32>, i32 -> vector<8x128xf32>
    %776 = vector.broadcast %32 : vector<8x1xf32> to vector<8x128xf32>
    %777 = arith.mulf %775, %776 : vector<8x128xf32>
    %778 = arith.truncf %777 : vector<8x128xf32> to vector<8x128xbf16>
    %c2_494 = arith.constant 2 : index
    %c0_495 = arith.constant 0 : index
    %c0_496 = arith.constant 0 : index
    %779 = vector.load %arg57[%c2_494, %c0_495, %c0_496] : memref<3x128x256xbf16, #tpu.memory_space<vmem>>, vector<1x128x256xbf16>
    %780 = vector.shape_cast %779 : vector<1x128x256xbf16> to vector<128x256xbf16>
    %cst_497 = arith.constant dense<0.000000e+00> : vector<8x256xf32>
    %781 = tpu.matmul %778, %780, %cst_497 {dimension_numbers = #tpu.dot_dimension_numbers<[1], [0], [0], [1], [0, 0, 1, 1], [], []>} : vector<8x128xbf16>, vector<128x256xbf16>, vector<8x256xf32> -> vector<8x256xf32>
    %782 = arith.addf %774, %781 : vector<8x256xf32>
    %c0_498 = arith.constant 0 : index
    %c0_499 = arith.constant 0 : index
    %783 = vector.load %arg56[%c0_498, %c0_499] : memref<1x256xf32, #tpu.memory_space<vmem>>, vector<1x256xf32>
    %784 = vector.broadcast %783 : vector<1x256xf32> to vector<8x256xf32>
    %785 = arith.addf %782, %784 : vector<8x256xf32>
    %cst_500 = arith.constant 0.000000e+00 : f32
    %786 = vector.broadcast %cst_500 : f32 to vector<8x256xf32>
    %787 = arith.maximumf %785, %786 : vector<8x256xf32>
    %788 = arith.truncf %787 : vector<8x256xf32> to vector<8x256xbf16>
    %c1_501 = arith.constant 1 : index
    %c0_502 = arith.constant 0 : index
    %c0_503 = arith.constant 0 : index
    %789 = vector.load %arg59[%c1_501, %c0_502, %c0_503] : memref<3x256x128xbf16, #tpu.memory_space<vmem>>, vector<1x256x128xbf16>
    %790 = vector.shape_cast %789 : vector<1x256x128xbf16> to vector<256x128xbf16>
    %cst_504 = arith.constant dense<0.000000e+00> : vector<8x128xf32>
    %791 = tpu.matmul %788, %790, %cst_504 {dimension_numbers = #tpu.dot_dimension_numbers<[1], [0], [0], [1], [0, 0, 1, 1], [], []>} : vector<8x256xbf16>, vector<256x128xbf16>, vector<8x128xf32> -> vector<8x128xf32>
    %c1_i32_505 = arith.constant 1 : i32
    %792 = tpu.dynamic_rotate %787 by %c1_i32_505 dim 0 : vector<8x256xf32>, i32 -> vector<8x256xf32>
    %793 = vector.broadcast %27 : vector<8x1xf32> to vector<8x256xf32>
    %794 = arith.mulf %792, %793 : vector<8x256xf32>
    %795 = arith.truncf %794 : vector<8x256xf32> to vector<8x256xbf16>
    %c0_506 = arith.constant 0 : index
    %c0_507 = arith.constant 0 : index
    %c0_508 = arith.constant 0 : index
    %796 = vector.load %arg59[%c0_506, %c0_507, %c0_508] : memref<3x256x128xbf16, #tpu.memory_space<vmem>>, vector<1x256x128xbf16>
    %797 = vector.shape_cast %796 : vector<1x256x128xbf16> to vector<256x128xbf16>
    %cst_509 = arith.constant dense<0.000000e+00> : vector<8x128xf32>
    %798 = tpu.matmul %795, %797, %cst_509 {dimension_numbers = #tpu.dot_dimension_numbers<[1], [0], [0], [1], [0, 0, 1, 1], [], []>} : vector<8x256xbf16>, vector<256x128xbf16>, vector<8x128xf32> -> vector<8x128xf32>
    %799 = arith.addf %791, %798 : vector<8x128xf32>
    %c7_i32_510 = arith.constant 7 : i32
    %800 = tpu.dynamic_rotate %787 by %c7_i32_510 dim 0 : vector<8x256xf32>, i32 -> vector<8x256xf32>
    %801 = vector.broadcast %32 : vector<8x1xf32> to vector<8x256xf32>
    %802 = arith.mulf %800, %801 : vector<8x256xf32>
    %803 = arith.truncf %802 : vector<8x256xf32> to vector<8x256xbf16>
    %c2_511 = arith.constant 2 : index
    %c0_512 = arith.constant 0 : index
    %c0_513 = arith.constant 0 : index
    %804 = vector.load %arg59[%c2_511, %c0_512, %c0_513] : memref<3x256x128xbf16, #tpu.memory_space<vmem>>, vector<1x256x128xbf16>
    %805 = vector.shape_cast %804 : vector<1x256x128xbf16> to vector<256x128xbf16>
    %cst_514 = arith.constant dense<0.000000e+00> : vector<8x128xf32>
    %806 = tpu.matmul %803, %805, %cst_514 {dimension_numbers = #tpu.dot_dimension_numbers<[1], [0], [0], [1], [0, 0, 1, 1], [], []>} : vector<8x256xbf16>, vector<256x128xbf16>, vector<8x128xf32> -> vector<8x128xf32>
    %807 = arith.addf %799, %806 : vector<8x128xf32>
    %c0_515 = arith.constant 0 : index
    %c0_516 = arith.constant 0 : index
    %808 = vector.load %arg58[%c0_515, %c0_516] : memref<1x128xf32, #tpu.memory_space<vmem>>, vector<1x128xf32>
    %809 = vector.broadcast %808 : vector<1x128xf32> to vector<8x128xf32>
    %810 = arith.addf %807, %809 : vector<8x128xf32>
    %cst_517 = arith.constant 0.000000e+00 : f32
    %811 = vector.broadcast %cst_517 : f32 to vector<8x128xf32>
    %812 = arith.maximumf %810, %811 : vector<8x128xf32>
    %cst_518 = arith.constant 0.000000e+00 : f32
    %813 = vector.broadcast %cst_518 : f32 to vector<8x128xf32>
    %814 = arith.select %762, %813, %812 : vector<8x128xi1>, vector<8x128xf32>
    %cst_519 = arith.constant 0.000000e+00 : f32
    %815 = vector.broadcast %cst_519 : f32 to vector<8x128xf32>
    %816 = arith.select %762, %812, %815 : vector<8x128xi1>, vector<8x128xf32>
    %cst_520 = arith.constant dense<0.000000e+00> : vector<16x128xf32>
    %817 = tpu.matmul %88, %814, %cst_520 {dimension_numbers = #tpu.dot_dimension_numbers<[1], [0], [0], [1], [0, 0, 1, 1], [], []>} : vector<16x8xf32>, vector<8x128xf32>, vector<16x128xf32> -> vector<16x128xf32>
    %cst_521 = arith.constant dense<0.000000e+00> : vector<16x128xf32>
    %818 = tpu.matmul %96, %816, %cst_521 {dimension_numbers = #tpu.dot_dimension_numbers<[1], [0], [0], [1], [0, 0, 1, 1], [], []>} : vector<16x8xf32>, vector<8x128xf32>, vector<16x128xf32> -> vector<16x128xf32>
    %819 = arith.addf %817, %818 : vector<16x128xf32>
    %820 = arith.addf %758, %819 : vector<16x128xf32>
    %821 = arith.truncf %820 : vector<16x128xf32> to vector<16x128xbf16>
    %c1_522 = arith.constant 1 : index
    %c0_523 = arith.constant 0 : index
    %c0_524 = arith.constant 0 : index
    %822 = vector.load %arg65[%c1_522, %c0_523, %c0_524] : memref<3x128x128xbf16, #tpu.memory_space<vmem>>, vector<1x128x128xbf16>
    %823 = vector.shape_cast %822 : vector<1x128x128xbf16> to vector<128x128xbf16>
    %cst_525 = arith.constant dense<0.000000e+00> : vector<16x128xf32>
    %824 = tpu.matmul %821, %823, %cst_525 {dimension_numbers = #tpu.dot_dimension_numbers<[1], [0], [0], [1], [0, 0, 1, 1], [], []>} : vector<16x128xbf16>, vector<128x128xbf16>, vector<16x128xf32> -> vector<16x128xf32>
    %c1_i32_526 = arith.constant 1 : i32
    %825 = tpu.dynamic_rotate %820 by %c1_i32_526 dim 0 : vector<16x128xf32>, i32 -> vector<16x128xf32>
    %826 = vector.broadcast %17 : vector<16x1xf32> to vector<16x128xf32>
    %827 = arith.mulf %825, %826 : vector<16x128xf32>
    %828 = arith.truncf %827 : vector<16x128xf32> to vector<16x128xbf16>
    %c0_527 = arith.constant 0 : index
    %c0_528 = arith.constant 0 : index
    %c0_529 = arith.constant 0 : index
    %829 = vector.load %arg65[%c0_527, %c0_528, %c0_529] : memref<3x128x128xbf16, #tpu.memory_space<vmem>>, vector<1x128x128xbf16>
    %830 = vector.shape_cast %829 : vector<1x128x128xbf16> to vector<128x128xbf16>
    %cst_530 = arith.constant dense<0.000000e+00> : vector<16x128xf32>
    %831 = tpu.matmul %828, %830, %cst_530 {dimension_numbers = #tpu.dot_dimension_numbers<[1], [0], [0], [1], [0, 0, 1, 1], [], []>} : vector<16x128xbf16>, vector<128x128xbf16>, vector<16x128xf32> -> vector<16x128xf32>
    %832 = arith.addf %824, %831 : vector<16x128xf32>
    %c15_i32_531 = arith.constant 15 : i32
    %833 = tpu.dynamic_rotate %820 by %c15_i32_531 dim 0 : vector<16x128xf32>, i32 -> vector<16x128xf32>
    %834 = vector.broadcast %22 : vector<16x1xf32> to vector<16x128xf32>
    %835 = arith.mulf %833, %834 : vector<16x128xf32>
    %836 = arith.truncf %835 : vector<16x128xf32> to vector<16x128xbf16>
    %c2_532 = arith.constant 2 : index
    %c0_533 = arith.constant 0 : index
    %c0_534 = arith.constant 0 : index
    %837 = vector.load %arg65[%c2_532, %c0_533, %c0_534] : memref<3x128x128xbf16, #tpu.memory_space<vmem>>, vector<1x128x128xbf16>
    %838 = vector.shape_cast %837 : vector<1x128x128xbf16> to vector<128x128xbf16>
    %cst_535 = arith.constant dense<0.000000e+00> : vector<16x128xf32>
    %839 = tpu.matmul %836, %838, %cst_535 {dimension_numbers = #tpu.dot_dimension_numbers<[1], [0], [0], [1], [0, 0, 1, 1], [], []>} : vector<16x128xbf16>, vector<128x128xbf16>, vector<16x128xf32> -> vector<16x128xf32>
    %840 = arith.addf %832, %839 : vector<16x128xf32>
    %c0_536 = arith.constant 0 : index
    %c0_537 = arith.constant 0 : index
    %841 = vector.load %arg64[%c0_536, %c0_537] : memref<1x128xf32, #tpu.memory_space<vmem>>, vector<1x128xf32>
    %842 = vector.broadcast %841 : vector<1x128xf32> to vector<16x128xf32>
    %843 = arith.addf %840, %842 : vector<16x128xf32>
    %cst_538 = arith.constant 0.000000e+00 : f32
    %844 = vector.broadcast %cst_538 : f32 to vector<16x128xf32>
    %845 = arith.maximumf %843, %844 : vector<16x128xf32>
    %846 = arith.truncf %845 : vector<16x128xf32> to vector<16x128xbf16>
    %c1_539 = arith.constant 1 : index
    %c0_540 = arith.constant 0 : index
    %c0_541 = arith.constant 0 : index
    %847 = vector.load %arg67[%c1_539, %c0_540, %c0_541] : memref<3x128x64xbf16, #tpu.memory_space<vmem>>, vector<1x128x64xbf16>
    %848 = vector.shape_cast %847 : vector<1x128x64xbf16> to vector<128x64xbf16>
    %cst_542 = arith.constant dense<0.000000e+00> : vector<16x64xf32>
    %849 = tpu.matmul %846, %848, %cst_542 {dimension_numbers = #tpu.dot_dimension_numbers<[1], [0], [0], [1], [0, 0, 1, 1], [], []>} : vector<16x128xbf16>, vector<128x64xbf16>, vector<16x64xf32> -> vector<16x64xf32>
    %c1_i32_543 = arith.constant 1 : i32
    %850 = tpu.dynamic_rotate %845 by %c1_i32_543 dim 0 : vector<16x128xf32>, i32 -> vector<16x128xf32>
    %851 = vector.broadcast %17 : vector<16x1xf32> to vector<16x128xf32>
    %852 = arith.mulf %850, %851 : vector<16x128xf32>
    %853 = arith.truncf %852 : vector<16x128xf32> to vector<16x128xbf16>
    %c0_544 = arith.constant 0 : index
    %c0_545 = arith.constant 0 : index
    %c0_546 = arith.constant 0 : index
    %854 = vector.load %arg67[%c0_544, %c0_545, %c0_546] : memref<3x128x64xbf16, #tpu.memory_space<vmem>>, vector<1x128x64xbf16>
    %855 = vector.shape_cast %854 : vector<1x128x64xbf16> to vector<128x64xbf16>
    %cst_547 = arith.constant dense<0.000000e+00> : vector<16x64xf32>
    %856 = tpu.matmul %853, %855, %cst_547 {dimension_numbers = #tpu.dot_dimension_numbers<[1], [0], [0], [1], [0, 0, 1, 1], [], []>} : vector<16x128xbf16>, vector<128x64xbf16>, vector<16x64xf32> -> vector<16x64xf32>
    %857 = arith.addf %849, %856 : vector<16x64xf32>
    %c15_i32_548 = arith.constant 15 : i32
    %858 = tpu.dynamic_rotate %845 by %c15_i32_548 dim 0 : vector<16x128xf32>, i32 -> vector<16x128xf32>
    %859 = vector.broadcast %22 : vector<16x1xf32> to vector<16x128xf32>
    %860 = arith.mulf %858, %859 : vector<16x128xf32>
    %861 = arith.truncf %860 : vector<16x128xf32> to vector<16x128xbf16>
    %c2_549 = arith.constant 2 : index
    %c0_550 = arith.constant 0 : index
    %c0_551 = arith.constant 0 : index
    %862 = vector.load %arg67[%c2_549, %c0_550, %c0_551] : memref<3x128x64xbf16, #tpu.memory_space<vmem>>, vector<1x128x64xbf16>
    %863 = vector.shape_cast %862 : vector<1x128x64xbf16> to vector<128x64xbf16>
    %cst_552 = arith.constant dense<0.000000e+00> : vector<16x64xf32>
    %864 = tpu.matmul %861, %863, %cst_552 {dimension_numbers = #tpu.dot_dimension_numbers<[1], [0], [0], [1], [0, 0, 1, 1], [], []>} : vector<16x128xbf16>, vector<128x64xbf16>, vector<16x64xf32> -> vector<16x64xf32>
    %865 = arith.addf %857, %864 : vector<16x64xf32>
    %c0_553 = arith.constant 0 : index
    %c0_554 = arith.constant 0 : index
    %866 = vector.load %arg66[%c0_553, %c0_554] : memref<1x64xf32, #tpu.memory_space<vmem>>, vector<1x64xf32>
    %867 = vector.broadcast %866 : vector<1x64xf32> to vector<16x64xf32>
    %868 = arith.addf %865, %867 : vector<16x64xf32>
    %cst_555 = arith.constant 0.000000e+00 : f32
    %869 = vector.broadcast %cst_555 : f32 to vector<16x64xf32>
    %870 = arith.maximumf %868, %869 : vector<16x64xf32>
    %cst_556 = arith.constant 0.000000e+00 : f32
    %871 = vector.broadcast %cst_556 : f32 to vector<16x64xf32>
    %872 = arith.select %708, %871, %870 : vector<16x64xi1>, vector<16x64xf32>
    %cst_557 = arith.constant 0.000000e+00 : f32
    %873 = vector.broadcast %cst_557 : f32 to vector<16x64xf32>
    %874 = arith.select %708, %870, %873 : vector<16x64xi1>, vector<16x64xf32>
    %cst_558 = arith.constant dense<0.000000e+00> : vector<32x64xf32>
    %875 = tpu.matmul %72, %872, %cst_558 {dimension_numbers = #tpu.dot_dimension_numbers<[1], [0], [0], [1], [0, 0, 1, 1], [], []>} : vector<32x16xf32>, vector<16x64xf32>, vector<32x64xf32> -> vector<32x64xf32>
    %cst_559 = arith.constant dense<0.000000e+00> : vector<32x64xf32>
    %876 = tpu.matmul %80, %874, %cst_559 {dimension_numbers = #tpu.dot_dimension_numbers<[1], [0], [0], [1], [0, 0, 1, 1], [], []>} : vector<32x16xf32>, vector<16x64xf32>, vector<32x64xf32> -> vector<32x64xf32>
    %877 = arith.addf %875, %876 : vector<32x64xf32>
    %878 = arith.addf %704, %877 : vector<32x64xf32>
    %879 = arith.truncf %878 : vector<32x64xf32> to vector<32x64xbf16>
    %c1_560 = arith.constant 1 : index
    %c0_561 = arith.constant 0 : index
    %c0_562 = arith.constant 0 : index
    %880 = vector.load %arg61[%c1_560, %c0_561, %c0_562] : memref<3x64x64xbf16, #tpu.memory_space<vmem>>, vector<1x64x64xbf16>
    %881 = vector.shape_cast %880 : vector<1x64x64xbf16> to vector<64x64xbf16>
    %cst_563 = arith.constant dense<0.000000e+00> : vector<32x64xf32>
    %882 = tpu.matmul %879, %881, %cst_563 {dimension_numbers = #tpu.dot_dimension_numbers<[1], [0], [0], [1], [0, 0, 1, 1], [], []>} : vector<32x64xbf16>, vector<64x64xbf16>, vector<32x64xf32> -> vector<32x64xf32>
    %c1_i32_564 = arith.constant 1 : i32
    %883 = tpu.dynamic_rotate %878 by %c1_i32_564 dim 0 : vector<32x64xf32>, i32 -> vector<32x64xf32>
    %884 = vector.broadcast %7 : vector<32x1xf32> to vector<32x64xf32>
    %885 = arith.mulf %883, %884 : vector<32x64xf32>
    %886 = arith.truncf %885 : vector<32x64xf32> to vector<32x64xbf16>
    %c0_565 = arith.constant 0 : index
    %c0_566 = arith.constant 0 : index
    %c0_567 = arith.constant 0 : index
    %887 = vector.load %arg61[%c0_565, %c0_566, %c0_567] : memref<3x64x64xbf16, #tpu.memory_space<vmem>>, vector<1x64x64xbf16>
    %888 = vector.shape_cast %887 : vector<1x64x64xbf16> to vector<64x64xbf16>
    %cst_568 = arith.constant dense<0.000000e+00> : vector<32x64xf32>
    %889 = tpu.matmul %886, %888, %cst_568 {dimension_numbers = #tpu.dot_dimension_numbers<[1], [0], [0], [1], [0, 0, 1, 1], [], []>} : vector<32x64xbf16>, vector<64x64xbf16>, vector<32x64xf32> -> vector<32x64xf32>
    %890 = arith.addf %882, %889 : vector<32x64xf32>
    %c31_i32_569 = arith.constant 31 : i32
    %891 = tpu.dynamic_rotate %878 by %c31_i32_569 dim 0 : vector<32x64xf32>, i32 -> vector<32x64xf32>
    %892 = vector.broadcast %12 : vector<32x1xf32> to vector<32x64xf32>
    %893 = arith.mulf %891, %892 : vector<32x64xf32>
    %894 = arith.truncf %893 : vector<32x64xf32> to vector<32x64xbf16>
    %c2_570 = arith.constant 2 : index
    %c0_571 = arith.constant 0 : index
    %c0_572 = arith.constant 0 : index
    %895 = vector.load %arg61[%c2_570, %c0_571, %c0_572] : memref<3x64x64xbf16, #tpu.memory_space<vmem>>, vector<1x64x64xbf16>
    %896 = vector.shape_cast %895 : vector<1x64x64xbf16> to vector<64x64xbf16>
    %cst_573 = arith.constant dense<0.000000e+00> : vector<32x64xf32>
    %897 = tpu.matmul %894, %896, %cst_573 {dimension_numbers = #tpu.dot_dimension_numbers<[1], [0], [0], [1], [0, 0, 1, 1], [], []>} : vector<32x64xbf16>, vector<64x64xbf16>, vector<32x64xf32> -> vector<32x64xf32>
    %898 = arith.addf %890, %897 : vector<32x64xf32>
    %c0_574 = arith.constant 0 : index
    %c0_575 = arith.constant 0 : index
    %899 = vector.load %arg60[%c0_574, %c0_575] : memref<1x64xf32, #tpu.memory_space<vmem>>, vector<1x64xf32>
    %900 = vector.broadcast %899 : vector<1x64xf32> to vector<32x64xf32>
    %901 = arith.addf %898, %900 : vector<32x64xf32>
    %cst_576 = arith.constant 0.000000e+00 : f32
    %902 = vector.broadcast %cst_576 : f32 to vector<32x64xf32>
    %903 = arith.maximumf %901, %902 : vector<32x64xf32>
    %904 = arith.truncf %903 : vector<32x64xf32> to vector<32x64xbf16>
    %c1_577 = arith.constant 1 : index
    %c0_578 = arith.constant 0 : index
    %c0_579 = arith.constant 0 : index
    %905 = vector.load %arg63[%c1_577, %c0_578, %c0_579] : memref<3x64x64xbf16, #tpu.memory_space<vmem>>, vector<1x64x64xbf16>
    %906 = vector.shape_cast %905 : vector<1x64x64xbf16> to vector<64x64xbf16>
    %cst_580 = arith.constant dense<0.000000e+00> : vector<32x64xf32>
    %907 = tpu.matmul %904, %906, %cst_580 {dimension_numbers = #tpu.dot_dimension_numbers<[1], [0], [0], [1], [0, 0, 1, 1], [], []>} : vector<32x64xbf16>, vector<64x64xbf16>, vector<32x64xf32> -> vector<32x64xf32>
    %c1_i32_581 = arith.constant 1 : i32
    %908 = tpu.dynamic_rotate %903 by %c1_i32_581 dim 0 : vector<32x64xf32>, i32 -> vector<32x64xf32>
    %909 = vector.broadcast %7 : vector<32x1xf32> to vector<32x64xf32>
    %910 = arith.mulf %908, %909 : vector<32x64xf32>
    %911 = arith.truncf %910 : vector<32x64xf32> to vector<32x64xbf16>
    %c0_582 = arith.constant 0 : index
    %c0_583 = arith.constant 0 : index
    %c0_584 = arith.constant 0 : index
    %912 = vector.load %arg63[%c0_582, %c0_583, %c0_584] : memref<3x64x64xbf16, #tpu.memory_space<vmem>>, vector<1x64x64xbf16>
    %913 = vector.shape_cast %912 : vector<1x64x64xbf16> to vector<64x64xbf16>
    %cst_585 = arith.constant dense<0.000000e+00> : vector<32x64xf32>
    %914 = tpu.matmul %911, %913, %cst_585 {dimension_numbers = #tpu.dot_dimension_numbers<[1], [0], [0], [1], [0, 0, 1, 1], [], []>} : vector<32x64xbf16>, vector<64x64xbf16>, vector<32x64xf32> -> vector<32x64xf32>
    %915 = arith.addf %907, %914 : vector<32x64xf32>
    %c31_i32_586 = arith.constant 31 : i32
    %916 = tpu.dynamic_rotate %903 by %c31_i32_586 dim 0 : vector<32x64xf32>, i32 -> vector<32x64xf32>
    %917 = vector.broadcast %12 : vector<32x1xf32> to vector<32x64xf32>
    %918 = arith.mulf %916, %917 : vector<32x64xf32>
    %919 = arith.truncf %918 : vector<32x64xf32> to vector<32x64xbf16>
    %c2_587 = arith.constant 2 : index
    %c0_588 = arith.constant 0 : index
    %c0_589 = arith.constant 0 : index
    %920 = vector.load %arg63[%c2_587, %c0_588, %c0_589] : memref<3x64x64xbf16, #tpu.memory_space<vmem>>, vector<1x64x64xbf16>
    %921 = vector.shape_cast %920 : vector<1x64x64xbf16> to vector<64x64xbf16>
    %cst_590 = arith.constant dense<0.000000e+00> : vector<32x64xf32>
    %922 = tpu.matmul %919, %921, %cst_590 {dimension_numbers = #tpu.dot_dimension_numbers<[1], [0], [0], [1], [0, 0, 1, 1], [], []>} : vector<32x64xbf16>, vector<64x64xbf16>, vector<32x64xf32> -> vector<32x64xf32>
    %923 = arith.addf %915, %922 : vector<32x64xf32>
    %c0_591 = arith.constant 0 : index
    %c0_592 = arith.constant 0 : index
    %924 = vector.load %arg62[%c0_591, %c0_592] : memref<1x64xf32, #tpu.memory_space<vmem>>, vector<1x64xf32>
    %925 = vector.broadcast %924 : vector<1x64xf32> to vector<32x64xf32>
    %926 = arith.addf %923, %925 : vector<32x64xf32>
    %cst_593 = arith.constant 0.000000e+00 : f32
    %927 = vector.broadcast %cst_593 : f32 to vector<32x64xf32>
    %928 = arith.maximumf %926, %927 : vector<32x64xf32>
    %c0_594 = arith.constant 0 : index
    %c0_595 = arith.constant 0 : index
    %929 = vector.load %arg7[%c0_594, %c0_595] : memref<1x64xf32, #tpu.memory_space<vmem>>, vector<1x64xf32>
    %930 = vector.broadcast %929 : vector<1x64xf32> to vector<32x64xf32>
    %931 = arith.mulf %928, %930 : vector<32x64xf32>
    %cst_596 = arith.constant dense<0.000000e+00> : vector<32xf32>
    %932 = vector.multi_reduction <add>, %931, %cst_596 [1] : vector<32x64xf32> to vector<32xf32>
    %933 = vector.shape_cast %932 : vector<32xf32> to vector<32x1xf32>
    %c0_597 = arith.constant 0 : index
    %c0_598 = arith.constant 0 : index
    %934 = vector.load %arg6[%c0_597, %c0_598] : memref<1x1xf32, #tpu.memory_space<vmem>>, vector<1x1xf32>
    %935 = vector.broadcast %934 : vector<1x1xf32> to vector<32x1xf32>
    %936 = arith.addf %933, %935 : vector<32x1xf32>
    %c0_599 = arith.constant 0 : index
    %c0_600 = arith.constant 0 : index
    %937 = vector.load %arg69[%c0_599, %c0_600] : memref<32x1xf32, #tpu.memory_space<vmem>>, vector<32x1xf32>
    tpu.vector_store %arg69[%c0_599, %c0_600], %936 {strides = array<i32>} : memref<32x1xf32, #tpu.memory_space<vmem>>, vector<32x1xf32>,
    %c3_i32 = arith.constant 3 : i32
    %938 = tpu.dynamic_rotate %936 by %c3_i32 dim 0 : vector<32x1xf32>, i32 -> vector<32x1xf32>
    %c3_i32_601 = arith.constant 3 : i32
    %939 = vector.broadcast %c3_i32_601 : i32 to vector<32x1xi32>
    %940 = arith.cmpi sge, %0, %939 : vector<32x1xi32>
    %cst_602 = arith.constant -1.000000e+30 : f32
    %941 = vector.broadcast %cst_602 : f32 to vector<32x1xf32>
    %942 = arith.select %940, %938, %941 : vector<32x1xi1>, vector<32x1xf32>
    %c2_i32_603 = arith.constant 2 : i32
    %943 = tpu.dynamic_rotate %936 by %c2_i32_603 dim 0 : vector<32x1xf32>, i32 -> vector<32x1xf32>
    %c2_i32_604 = arith.constant 2 : i32
    %944 = vector.broadcast %c2_i32_604 : i32 to vector<32x1xi32>
    %945 = arith.cmpi sge, %0, %944 : vector<32x1xi32>
    %cst_605 = arith.constant -1.000000e+30 : f32
    %946 = vector.broadcast %cst_605 : f32 to vector<32x1xf32>
    %947 = arith.select %945, %943, %946 : vector<32x1xi1>, vector<32x1xf32>
    %c1_i32_606 = arith.constant 1 : i32
    %948 = tpu.dynamic_rotate %936 by %c1_i32_606 dim 0 : vector<32x1xf32>, i32 -> vector<32x1xf32>
    %c1_i32_607 = arith.constant 1 : i32
    %949 = vector.broadcast %c1_i32_607 : i32 to vector<32x1xi32>
    %950 = arith.cmpi sge, %0, %949 : vector<32x1xi32>
    %cst_608 = arith.constant -1.000000e+30 : f32
    %951 = vector.broadcast %cst_608 : f32 to vector<32x1xf32>
    %952 = arith.select %950, %948, %951 : vector<32x1xi1>, vector<32x1xf32>
    %c31_i32_609 = arith.constant 31 : i32
    %953 = tpu.dynamic_rotate %936 by %c31_i32_609 dim 0 : vector<32x1xf32>, i32 -> vector<32x1xf32>
    %c14_i32_610 = arith.constant 14 : i32
    %954 = vector.broadcast %c14_i32_610 : i32 to vector<32x1xi32>
    %955 = arith.cmpi sle, %0, %954 : vector<32x1xi32>
    %cst_611 = arith.constant -1.000000e+30 : f32
    %956 = vector.broadcast %cst_611 : f32 to vector<32x1xf32>
    %957 = arith.select %955, %953, %956 : vector<32x1xi1>, vector<32x1xf32>
    %c30_i32 = arith.constant 30 : i32
    %958 = tpu.dynamic_rotate %936 by %c30_i32 dim 0 : vector<32x1xf32>, i32 -> vector<32x1xf32>
    %c13_i32 = arith.constant 13 : i32
    %959 = vector.broadcast %c13_i32 : i32 to vector<32x1xi32>
    %960 = arith.cmpi sle, %0, %959 : vector<32x1xi32>
    %cst_612 = arith.constant -1.000000e+30 : f32
    %961 = vector.broadcast %cst_612 : f32 to vector<32x1xf32>
    %962 = arith.select %960, %958, %961 : vector<32x1xi1>, vector<32x1xf32>
    %c29_i32 = arith.constant 29 : i32
    %963 = tpu.dynamic_rotate %936 by %c29_i32 dim 0 : vector<32x1xf32>, i32 -> vector<32x1xf32>
    %c12_i32 = arith.constant 12 : i32
    %964 = vector.broadcast %c12_i32 : i32 to vector<32x1xi32>
    %965 = arith.cmpi sle, %0, %964 : vector<32x1xi32>
    %cst_613 = arith.constant -1.000000e+30 : f32
    %966 = vector.broadcast %cst_613 : f32 to vector<32x1xf32>
    %967 = arith.select %965, %963, %966 : vector<32x1xi1>, vector<32x1xf32>
    %968 = arith.maximumf %942, %947 : vector<32x1xf32>
    %969 = arith.maximumf %968, %952 : vector<32x1xf32>
    %970 = arith.maximumf %969, %936 : vector<32x1xf32>
    %971 = arith.maximumf %970, %957 : vector<32x1xf32>
    %972 = arith.maximumf %971, %962 : vector<32x1xf32>
    %973 = arith.maximumf %972, %967 : vector<32x1xf32>
    %cst_614 = arith.constant 0.000000e+00 : f32
    %974 = vector.broadcast %cst_614 : f32 to vector<32x1xf32>
    %c0_615 = arith.constant 0 : index
    %975 = memref.load %arg68[%c0_615] : memref<7xf32, #tpu.memory_space<smem>>
    %976 = arith.subf %942, %973 : vector<32x1xf32>
    %977 = math.exp %976 : vector<32x1xf32>
    %978 = vector.broadcast %975 : f32 to vector<32x1xf32>
    %979 = arith.mulf %978, %977 : vector<32x1xf32>
    %980 = arith.addf %974, %979 : vector<32x1xf32>
    %c1_616 = arith.constant 1 : index
    %981 = memref.load %arg68[%c1_616] : memref<7xf32, #tpu.memory_space<smem>>
    %982 = arith.subf %947, %973 : vector<32x1xf32>
    %983 = math.exp %982 : vector<32x1xf32>
    %984 = vector.broadcast %981 : f32 to vector<32x1xf32>
    %985 = arith.mulf %984, %983 : vector<32x1xf32>
    %986 = arith.addf %980, %985 : vector<32x1xf32>
    %c2_617 = arith.constant 2 : index
    %987 = memref.load %arg68[%c2_617] : memref<7xf32, #tpu.memory_space<smem>>
    %988 = arith.subf %952, %973 : vector<32x1xf32>
    %989 = math.exp %988 : vector<32x1xf32>
    %990 = vector.broadcast %987 : f32 to vector<32x1xf32>
    %991 = arith.mulf %990, %989 : vector<32x1xf32>
    %992 = arith.addf %986, %991 : vector<32x1xf32>
    %c3 = arith.constant 3 : index
    %993 = memref.load %arg68[%c3] : memref<7xf32, #tpu.memory_space<smem>>
    %994 = arith.subf %936, %973 : vector<32x1xf32>
    %995 = math.exp %994 : vector<32x1xf32>
    %996 = vector.broadcast %993 : f32 to vector<32x1xf32>
    %997 = arith.mulf %996, %995 : vector<32x1xf32>
    %998 = arith.addf %992, %997 : vector<32x1xf32>
    %c4 = arith.constant 4 : index
    %999 = memref.load %arg68[%c4] : memref<7xf32, #tpu.memory_space<smem>>
    %1000 = arith.subf %957, %973 : vector<32x1xf32>
    %1001 = math.exp %1000 : vector<32x1xf32>
    %1002 = vector.broadcast %999 : f32 to vector<32x1xf32>
    %1003 = arith.mulf %1002, %1001 : vector<32x1xf32>
    %1004 = arith.addf %998, %1003 : vector<32x1xf32>
    %c5 = arith.constant 5 : index
    %1005 = memref.load %arg68[%c5] : memref<7xf32, #tpu.memory_space<smem>>
    %1006 = arith.subf %962, %973 : vector<32x1xf32>
    %1007 = math.exp %1006 : vector<32x1xf32>
    %1008 = vector.broadcast %1005 : f32 to vector<32x1xf32>
    %1009 = arith.mulf %1008, %1007 : vector<32x1xf32>
    %1010 = arith.addf %1004, %1009 : vector<32x1xf32>
    %c6 = arith.constant 6 : index
    %1011 = memref.load %arg68[%c6] : memref<7xf32, #tpu.memory_space<smem>>
    %1012 = arith.subf %967, %973 : vector<32x1xf32>
    %1013 = math.exp %1012 : vector<32x1xf32>
    %1014 = vector.broadcast %1011 : f32 to vector<32x1xf32>
    %1015 = arith.mulf %1014, %1013 : vector<32x1xf32>
    %1016 = arith.addf %1010, %1015 : vector<32x1xf32>
    %1017 = math.log %1016 : vector<32x1xf32>
    %1018 = arith.addf %973, %1017 : vector<32x1xf32>
    %c0_618 = arith.constant 0 : index
    %c0_619 = arith.constant 0 : index
    %1019 = vector.load %arg70[%c0_618, %c0_619] : memref<32x1xf32, #tpu.memory_space<vmem>>, vector<32x1xf32>
    tpu.vector_store %arg70[%c0_618, %c0_619], %1018 {strides = array<i32>} : memref<32x1xf32, #tpu.memory_space<vmem>>, vector<32x1xf32>,
    return
  }
}

</mosaic_0001>

<llo_original>
// kernel: combine_net.1
$region0: #{combine_net.1}
  #allocation0 [shape = 'u32[]', space=smem, size = 0x4, offset = 0x4, fixed_abs, tag = 'smem constant byte address 0x4 - core index']
  #allocation1 [shape = 'u32[72,128]{1,0:T(1,128)}', space=vmem, size = 0x9000, scoped, tag = 'internal scratch']
  #allocation2 [shape = 'f32[1,1]{1,0:T(1,128)S(1)}', space=vmem, size = 0x200, scoped, tag = 'scoped memory for combine_net.1']
  %s0 = inlined_call_operand.smem [shape: u32[71], index: -1, kind: input, shape index: {}]
  %s1 = sld [smem:[%s0]]
  %s2 = scalar_lea.smem %s0, 1
  %s3 = sld [smem:[%s2]]
  %s4 = scalar_lea.smem %s0, 2
  %s5 = sld [smem:[%s4]]
  %s6 = scalar_lea.smem %s0, 3
  %s7 = sld [smem:[%s6]]
  %s8 = scalar_lea.smem %s0, 4
  %s9 = sld [smem:[%s8]]
  %s10 = scalar_lea.smem %s0, 5
  %s11 = sld [smem:[%s10]]
  %s12 = scalar_lea.smem %s0, 6
  %s13 = sld [smem:[%s12]]
  %s14 = scalar_lea.smem %s0, 7
  %s15 = sld [smem:[%s14]]
  %s16 = scalar_lea.smem %s0, 8
  %s17 = sld [smem:[%s16]]
  %s18 = scalar_lea.smem %s0, 9
  %s19 = sld [smem:[%s18]]
  %s20 = scalar_lea.smem %s0, 10
  %s21 = sld [smem:[%s20]]
  %s22 = scalar_lea.smem %s0, 11
  %s23 = sld [smem:[%s22]]
  %s24 = scalar_lea.smem %s0, 12
  %s25 = sld [smem:[%s24]]
  %s26 = scalar_lea.smem %s0, 13
  %s27 = sld [smem:[%s26]]
  %s28 = scalar_lea.smem %s0, 14
  %s29 = sld [smem:[%s28]]
  %s30 = scalar_lea.smem %s0, 15
  %s31 = sld [smem:[%s30]]
  %s32 = scalar_lea.smem %s0, 16
  %s33 = sld [smem:[%s32]]
  %s34 = scalar_lea.smem %s0, 17
  %s35 = sld [smem:[%s34]]
  %s36 = scalar_lea.smem %s0, 18
  %s37 = sld [smem:[%s36]]
  %s38 = scalar_lea.smem %s0, 19
  %s39 = sld [smem:[%s38]]
  %s40 = scalar_lea.smem %s0, 20
  %s41 = sld [smem:[%s40]]
  %s42 = scalar_lea.smem %s0, 21
  %s43 = sld [smem:[%s42]]
  %s44 = scalar_lea.smem %s0, 22
  %s45 = sld [smem:[%s44]]
  %s46 = scalar_lea.smem %s0, 23
  %s47 = sld [smem:[%s46]]
  %s48 = scalar_lea.smem %s0, 24
  %s49 = sld [smem:[%s48]]
  %s50 = scalar_lea.smem %s0, 25
  %s51 = sld [smem:[%s50]]
  %s52 = scalar_lea.smem %s0, 26
  %s53 = sld [smem:[%s52]]
  %s54 = scalar_lea.smem %s0, 27
  %s55 = sld [smem:[%s54]]
  %s56 = scalar_lea.smem %s0, 28
  %s57 = sld [smem:[%s56]]
  %s58 = scalar_lea.smem %s0, 29
  %s59 = sld [smem:[%s58]]
  %s60 = scalar_lea.smem %s0, 30
  %s61 = sld [smem:[%s60]]
  %s62 = scalar_lea.smem %s0, 31
  %s63 = sld [smem:[%s62]]
  %s64 = scalar_lea.smem %s0, 32
  %s65 = sld [smem:[%s64]]
  %s66 = scalar_lea.smem %s0, 33
  %s67 = sld [smem:[%s66]]
  %s68 = scalar_lea.smem %s0, 34
  %s69 = sld [smem:[%s68]]
  %s70 = scalar_lea.smem %s0, 35
  %s71 = sld [smem:[%s70]]
  %s72 = scalar_lea.smem %s0, 36
  %s73 = sld [smem:[%s72]]
  %s74 = scalar_lea.smem %s0, 37
  %s75 = sld [smem:[%s74]]
  %s76 = scalar_lea.smem %s0, 38
  %s77 = sld [smem:[%s76]]
  %s78 = scalar_lea.smem %s0, 39
  %s79 = sld [smem:[%s78]]
  %s80 = scalar_lea.smem %s0, 40
  %s81 = sld [smem:[%s80]]
  %s82 = scalar_lea.smem %s0, 41
  %s83 = sld [smem:[%s82]]
  %s84 = scalar_lea.smem %s0, 42
  %s85 = sld [smem:[%s84]]
  %s86 = scalar_lea.smem %s0, 43
  %s87 = sld [smem:[%s86]]
  %s88 = scalar_lea.smem %s0, 44
  %s89 = sld [smem:[%s88]]
  %s90 = scalar_lea.smem %s0, 45
  %s91 = sld [smem:[%s90]]
  %s92 = scalar_lea.smem %s0, 46
  %s93 = sld [smem:[%s92]]
  %s94 = scalar_lea.smem %s0, 47
  %s95 = sld [smem:[%s94]]
  %s96 = scalar_lea.smem %s0, 48
  %s97 = sld [smem:[%s96]]
  %s98 = scalar_lea.smem %s0, 49
  %s99 = sld [smem:[%s98]]
  %s100 = scalar_lea.smem %s0, 50
  %s101 = sld [smem:[%s100]]
  %s102 = scalar_lea.smem %s0, 51
  %s103 = sld [smem:[%s102]]
  %s104 = scalar_lea.smem %s0, 52
  %s105 = sld [smem:[%s104]]
  %s106 = scalar_lea.smem %s0, 53
  %s107 = sld [smem:[%s106]]
  %s108 = scalar_lea.smem %s0, 54
  %s109 = sld [smem:[%s108]]
  %s110 = scalar_lea.smem %s0, 55
  %s111 = sld [smem:[%s110]]
  %s112 = scalar_lea.smem %s0, 56
  %s113 = sld [smem:[%s112]]
  %s114 = scalar_lea.smem %s0, 57
  %s115 = sld [smem:[%s114]]
  %s116 = scalar_lea.smem %s0, 58
  %s117 = sld [smem:[%s116]]
  %s118 = scalar_lea.smem %s0, 59
  %s119 = sld [smem:[%s118]]
  %s120 = scalar_lea.smem %s0, 60
  %s121 = sld [smem:[%s120]]
  %s122 = scalar_lea.smem %s0, 61
  %s123 = sld [smem:[%s122]]
  %s124 = scalar_lea.smem %s0, 62
  %s125 = sld [smem:[%s124]]
  %s126 = scalar_lea.smem %s0, 63
  %s127 = sld [smem:[%s126]]
  %s128 = scalar_lea.smem %s0, 64
  %s129 = sld [smem:[%s128]]
  %s130 = scalar_lea.smem %s0, 65
  %s131 = sld [smem:[%s130]]
  %s132 = scalar_lea.smem %s0, 66
  %s133 = sld [smem:[%s132]]
  %s134 = scalar_lea.smem %s0, 67
  %s135 = sld [smem:[%s134]]
  %s136 = scalar_lea.smem %s0, 68
  %s137 = sld [smem:[%s136]]
  %s138 = scalar_lea.smem %s0, 69
  %s139 = sld [smem:[%s138]]
  %s140 = scalar_lea.smem %s0, 70
  %s141 = sld [smem:[%s140]]
  %142 = xla_tuple %s139, %s141
  %s143 = sld [smem:[#allocation0]]
  $region394: #{combine_net.1} parent=0
    _
  %s145 = ssub.s32 1, %s143
  %s146 = scalar_select 0, %s145, %s143
  %v147 = vstv %s13
  %148 = vst [vmem:[#allocation2] sm:$0x1] %v147
  $region1: #{combine_net.1} parent=0
    #allocation3 [shape = 'u8[49152]{0}', space=vmem, size = 0xc000, scoped, tag = 'input window, operand 11, single buffered']
    #allocation4 [shape = 's32[1]{0}', space=sflag, size = 0x4, scoped, tag = 'scoped memory for combine_net.1']
    #allocation5 [shape = 's32[1]{0}', space=sflag, size = 0x4, scoped, tag = 'scoped memory for combine_net.1']
    #allocation6 [shape = 'u8[49152]{0}', space=vmem, size = 0xc000, scoped, tag = 'input window, operand 13, single buffered']
    #allocation7 [shape = 's32[1]{0}', space=sflag, size = 0x4, scoped, tag = 'scoped memory for combine_net.1']
    #allocation8 [shape = 'u8[196608]{0}', space=vmem, size = 0x30000, scoped, tag = 'input window, operand 19, single buffered']
    #allocation9 [shape = 'u8[49152]{0}', space=vmem, size = 0xc000, scoped, tag = 'input window, operand 21, single buffered']
    #allocation10 [shape = 's32[1]{0}', space=sflag, size = 0x4, scoped, tag = 'scoped memory for combine_net.1']
    #allocation11 [shape = 'u8[49152]{0}', space=vmem, size = 0xc000, scoped, tag = 'input window, operand 23, single buffered']
    #allocation12 [shape = 'u8[98304]{0}', space=vmem, size = 0x18000, scoped, tag = 'input window, operand 25, single buffered']
    #allocation13 [shape = 's32[1]{0}', space=sflag, size = 0x4, scoped, tag = 'scoped memory for combine_net.1']
    #allocation14 [shape = 'u8[49152]{0}', space=vmem, size = 0xc000, scoped, tag = 'input window, operand 29, single buffered']
    #allocation15 [shape = 'u8[49152]{0}', space=vmem, size = 0xc000, scoped, tag = 'input window, operand 31, single buffered']
    #allocation16 [shape = 's32[1]{0}', space=sflag, size = 0x4, scoped, tag = 'scoped memory for combine_net.1']
    #allocation17 [shape = 'u8[49152]{0}', space=vmem, size = 0xc000, scoped, tag = 'input window, operand 33, single buffered']
    #allocation18 [shape = 'u8[98304]{0}', space=vmem, size = 0x18000, scoped, tag = 'input window, operand 35, single buffered']
    #allocation19 [shape = 's32[1]{0}', space=sflag, size = 0x4, scoped, tag = 'scoped memory for combine_net.1']
    #allocation20 [shape = 'u8[196608]{0}', space=vmem, size = 0x30000, scoped, tag = 'input window, operand 37, single buffered']
    #allocation21 [shape = 'u8[196608]{0}', space=vmem, size = 0x30000, scoped, tag = 'input window, operand 39, single buffered']
    #allocation22 [shape = 's32[1]{0}', space=sflag, size = 0x4, scoped, tag = 'scoped memory for combine_net.1']
    #allocation23 [shape = 'u8[49152]{0}', space=vmem, size = 0xc000, scoped, tag = 'input window, operand 41, single buffered']
    #allocation24 [shape = 'u8[49152]{0}', space=vmem, size = 0xc000, scoped, tag = 'input window, operand 43, single buffered']
    #allocation25 [shape = 's32[1]{0}', space=sflag, size = 0x4, scoped, tag = 'scoped memory for combine_net.1']
    #allocation26 [shape = 'u8[98304]{0}', space=vmem, size = 0x18000, scoped, tag = 'input window, operand 45, single buffered']
    #allocation27 [shape = 'u8[49152]{0}', space=vmem, size = 0xc000, scoped, tag = 'input window, operand 49, single buffered']
    #allocation28 [shape = 's32[1]{0}', space=sflag, size = 0x4, scoped, tag = 'scoped memory for combine_net.1']
    #allocation29 [shape = 'u8[49152]{0}', space=vmem, size = 0xc000, scoped, tag = 'input window, operand 51, single buffered']
    #allocation30 [shape = 'u8[49152]{0}', space=vmem, size = 0xc000, scoped, tag = 'input window, operand 53, single buffered']
    #allocation31 [shape = 's32[1]{0}', space=sflag, size = 0x4, scoped, tag = 'scoped memory for combine_net.1']
    #allocation32 [shape = 'u8[98304]{0}', space=vmem, size = 0x18000, scoped, tag = 'input window, operand 55, single buffered']
    #allocation33 [shape = 'u8[196608]{0}', space=vmem, size = 0x30000, scoped, tag = 'input window, operand 57, single buffered']
    #allocation34 [shape = 's32[1]{0}', space=sflag, size = 0x4, scoped, tag = 'scoped memory for combine_net.1']
    #allocation35 [shape = 'u8[196608]{0}', space=vmem, size = 0x30000, scoped, tag = 'input window, operand 59, single buffered']
    #allocation36 [shape = 'u8[49152]{0}', space=vmem, size = 0xc000, scoped, tag = 'input window, operand 61, single buffered']
    #allocation37 [shape = 's32[1]{0}', space=sflag, size = 0x4, scoped, tag = 'scoped memory for combine_net.1']
    #allocation38 [shape = 'u8[49152]{0}', space=vmem, size = 0xc000, scoped, tag = 'input window, operand 63, single buffered']
    #allocation39 [shape = 'u8[98304]{0}', space=vmem, size = 0x18000, scoped, tag = 'input window, operand 65, single buffered']
    #allocation40 [shape = 's32[1]{0}', space=sflag, size = 0x4, scoped, tag = 'scoped memory for combine_net.1']
    #allocation41 [shape = 'u8[512]{0}', space=smem, size = 0x200, scoped, tag = 'input window, operand 68, single buffered']
    %149 = vsyncpa [#allocation4], 0
    %150 = vsyncpa [#allocation7], 0
    %151 = vsyncpa [#allocation10], 0
    %152 = vsyncpa [#allocation13], 0
    %153 = vsyncpa [#allocation16], 0
    %154 = vsyncpa [#allocation19], 0
    %155 = vsyncpa [#allocation22], 0
    %156 = vsyncpa [#allocation25], 0
    %157 = vsyncpa [#allocation28], 0
    %158 = vsyncpa [#allocation31], 0
    %159 = vsyncpa [#allocation34], 0
    %160 = vsyncpa [#allocation37], 0
    %161 = vsyncpa [#allocation40], 0
    %162 = vsyncpa [#allocation5], 0
    // Predicated region
    $region2: #{combine_net.1} parent=1 // pred_check
      _
    $region3: #{combine_net.1} parent=1 // pred_check_branch
      %164 = sbr.rel (0) target = $region5
    $region4: #{combine_net.1} parent=1 // pred_region
      _
    $region5: #{combine_net.1} parent=1 // pred_fallthru
      _
    // Predicated region
    $region6: #{combine_net.1} parent=1 // pred_check
      _
    $region7: #{combine_net.1} parent=1 // pred_check_branch
      %166 = sbr.rel (0) target = $region9
    $region8: #{combine_net.1} parent=1 // pred_region
      _
    $region9: #{combine_net.1} parent=1 // pred_fallthru
      _
    // Predicated region
    $region10: #{combine_net.1} parent=1 // pred_check
      _
    $region11: #{combine_net.1} parent=1 // pred_check_branch
      %168 = sbr.rel (0) target = $region13
    $region12: #{combine_net.1} parent=1 // pred_region
      _
    $region13: #{combine_net.1} parent=1 // pred_fallthru
      _
    // Predicated region
    $region14: #{combine_net.1} parent=1 // pred_check
      _
    $region15: #{combine_net.1} parent=1 // pred_check_branch
      %170 = sbr.rel (0) target = $region17
    $region16: #{combine_net.1} parent=1 // pred_region
      _
    $region17: #{combine_net.1} parent=1 // pred_fallthru
      _
    // Predicated region
    $region18: #{combine_net.1} parent=1 // pred_check
      _
    $region19: #{combine_net.1} parent=1 // pred_check_branch
      %172 = sbr.rel (0) target = $region21
    $region20: #{combine_net.1} parent=1 // pred_region
      _
    $region21: #{combine_net.1} parent=1 // pred_fallthru
      _
    // Predicated region
    $region22: #{combine_net.1} parent=1 // pred_check
      _
    $region23: #{combine_net.1} parent=1 // pred_check_branch
      %174 = sbr.rel (0) target = $region25
    $region24: #{combine_net.1} parent=1 // pred_region
      _
    $region25: #{combine_net.1} parent=1 // pred_fallthru
      _
    // Predicated region
    $region26: #{combine_net.1} parent=1 // pred_check
      _
    $region27: #{combine_net.1} parent=1 // pred_check_branch
      %176 = sbr.rel (0) target = $region29
    $region28: #{combine_net.1} parent=1 // pred_region
      _
    $region29: #{combine_net.1} parent=1 // pred_fallthru
      _
    // Predicated region
    $region30: #{combine_net.1} parent=1 // pred_check
      _
    $region31: #{combine_net.1} parent=1 // pred_check_branch
      %178 = sbr.rel (0) target = $region33
    $region32: #{combine_net.1} parent=1 // pred_region
      _
    $region33: #{combine_net.1} parent=1 // pred_fallthru
      _
    // Predicated region
    $region34: #{combine_net.1} parent=1 // pred_check
      _
    $region35: #{combine_net.1} parent=1 // pred_check_branch
      %180 = sbr.rel (0) target = $region37
    $region36: #{combine_net.1} parent=1 // pred_region
      _
    $region37: #{combine_net.1} parent=1 // pred_fallthru
      _
    // Predicated region
    $region38: #{combine_net.1} parent=1 // pred_check
      _
    $region39: #{combine_net.1} parent=1 // pred_check_branch
      %182 = sbr.rel (0) target = $region41
    $region40: #{combine_net.1} parent=1 // pred_region
      _
    $region41: #{combine_net.1} parent=1 // pred_fallthru
      _
    // Predicated region
    $region42: #{combine_net.1} parent=1 // pred_check
      _
    $region43: #{combine_net.1} parent=1 // pred_check_branch
      %184 = sbr.rel (0) target = $region45
    $region44: #{combine_net.1} parent=1 // pred_region
      _
    $region45: #{combine_net.1} parent=1 // pred_fallthru
      _
    // Predicated region
    $region46: #{combine_net.1} parent=1 // pred_check
      _
    $region47: #{combine_net.1} parent=1 // pred_check_branch
      %186 = sbr.rel (0) target = $region49
    $region48: #{combine_net.1} parent=1 // pred_region
      %188 = vsyncadd [#allocation4], 0
      %s189 = sshll.u32 %s23, 4
      %s190 = int_to_ptr.hbm [resolvable:$true] %s189
      %s191 = sshll.u32 [#allocation3], 4
      %s192 = int_to_ptr.vmem [resolvable:$true] %s191
      %197 = dma.hbm_to_vmem [thread:$0]  %s190, 1536, %s192, [#allocation4], 64, 64, 4
    $region49: #{combine_net.1} parent=1 // pred_fallthru
      _
    // Predicated region
    $region50: #{combine_net.1} parent=1 // pred_check
      _
    $region51: #{combine_net.1} parent=1 // pred_check_branch
      %199 = sbr.rel (0) target = $region53
    $region52: #{combine_net.1} parent=1 // pred_region
      _
    $region53: #{combine_net.1} parent=1 // pred_fallthru
      _
    // Predicated region
    $region54: #{combine_net.1} parent=1 // pred_check
      _
    $region55: #{combine_net.1} parent=1 // pred_check_branch
      %201 = sbr.rel (0) target = $region57
    $region56: #{combine_net.1} parent=1 // pred_region
      %203 = vsyncadd [#allocation7], 0
      %s204 = sshll.u32 %s27, 4
      %s205 = int_to_ptr.hbm [resolvable:$true] %s204
      %s206 = sshll.u32 [#allocation6], 4
      %s207 = int_to_ptr.vmem [resolvable:$true] %s206
      %212 = dma.hbm_to_vmem [thread:$0]  %s205, 1536, %s207, [#allocation7], 64, 64, 4
    $region57: #{combine_net.1} parent=1 // pred_fallthru
      _
    // Predicated region
    $region58: #{combine_net.1} parent=1 // pred_check
      _
    $region59: #{combine_net.1} parent=1 // pred_check_branch
      %214 = sbr.rel (0) target = $region61
    $region60: #{combine_net.1} parent=1 // pred_region
      _
    $region61: #{combine_net.1} parent=1 // pred_fallthru
      _
    // Predicated region
    $region62: #{combine_net.1} parent=1 // pred_check
      _
    $region63: #{combine_net.1} parent=1 // pred_check_branch
      %216 = sbr.rel (0) target = $region65
    $region64: #{combine_net.1} parent=1 // pred_region
      _
    $region65: #{combine_net.1} parent=1 // pred_fallthru
      _
    // Predicated region
    $region66: #{combine_net.1} parent=1 // pred_check
      _
    $region67: #{combine_net.1} parent=1 // pred_check_branch
      %218 = sbr.rel (0) target = $region69
    $region68: #{combine_net.1} parent=1 // pred_region
      _
    $region69: #{combine_net.1} parent=1 // pred_fallthru
      _
    // Predicated region
    $region70: #{combine_net.1} parent=1 // pred_check
      _
    $region71: #{combine_net.1} parent=1 // pred_check_branch
      %220 = sbr.rel (0) target = $region73
    $region72: #{combine_net.1} parent=1 // pred_region
      _
    $region73: #{combine_net.1} parent=1 // pred_fallthru
      _
    // Predicated region
    $region74: #{combine_net.1} parent=1 // pred_check
      _
    $region75: #{combine_net.1} parent=1 // pred_check_branch
      %222 = sbr.rel (0) target = $region77
    $region76: #{combine_net.1} parent=1 // pred_region
      _
    $region77: #{combine_net.1} parent=1 // pred_fallthru
      _
    // Predicated region
    $region78: #{combine_net.1} parent=1 // pred_check
      _
    $region79: #{combine_net.1} parent=1 // pred_check_branch
      %224 = sbr.rel (0) target = $region81
    $region80: #{combine_net.1} parent=1 // pred_region
      %226 = vsyncadd [#allocation7], 0
      %s227 = sshll.u32 %s39, 4
      %s228 = int_to_ptr.hbm [resolvable:$true] %s227
      %s229 = sshll.u32 [#allocation8], 4
      %s230 = int_to_ptr.vmem [resolvable:$true] %s229
      %235 = dma.hbm_to_vmem [thread:$0]  %s228, 6144, %s230, [#allocation7], 64, 64, 4
    $region81: #{combine_net.1} parent=1 // pred_fallthru
      _
    // Predicated region
    $region82: #{combine_net.1} parent=1 // pred_check
      _
    $region83: #{combine_net.1} parent=1 // pred_check_branch
      %237 = sbr.rel (0) target = $region85
    $region84: #{combine_net.1} parent=1 // pred_region
      _
    $region85: #{combine_net.1} parent=1 // pred_fallthru
      _
    // Predicated region
    $region86: #{combine_net.1} parent=1 // pred_check
      _
    $region87: #{combine_net.1} parent=1 // pred_check_branch
      %239 = sbr.rel (0) target = $region89
    $region88: #{combine_net.1} parent=1 // pred_region
      %241 = vsyncadd [#allocation10], 0
      %s242 = sshll.u32 %s43, 4
      %s243 = int_to_ptr.hbm [resolvable:$true] %s242
      %s244 = sshll.u32 [#allocation9], 4
      %s245 = int_to_ptr.vmem [resolvable:$true] %s244
      %250 = dma.hbm_to_vmem [thread:$0]  %s243, 1536, %s245, [#allocation10], 64, 64, 4
    $region89: #{combine_net.1} parent=1 // pred_fallthru
      _
    // Predicated region
    $region90: #{combine_net.1} parent=1 // pred_check
      _
    $region91: #{combine_net.1} parent=1 // pred_check_branch
      %252 = sbr.rel (0) target = $region93
    $region92: #{combine_net.1} parent=1 // pred_region
      _
    $region93: #{combine_net.1} parent=1 // pred_fallthru
      _
    // Predicated region
    $region94: #{combine_net.1} parent=1 // pred_check
      _
    $region95: #{combine_net.1} parent=1 // pred_check_branch
      %254 = sbr.rel (0) target = $region97
    $region96: #{combine_net.1} parent=1 // pred_region
      %256 = vsyncadd [#allocation10], 0
      %s257 = sshll.u32 %s47, 4
      %s258 = int_to_ptr.hbm [resolvable:$true] %s257
      %s259 = sshll.u32 [#allocation11], 4
      %s260 = int_to_ptr.vmem [resolvable:$true] %s259
      %265 = dma.hbm_to_vmem [thread:$0]  %s258, 1536, %s260, [#allocation10], 64, 64, 4
    $region97: #{combine_net.1} parent=1 // pred_fallthru
      _
    // Predicated region
    $region98: #{combine_net.1} parent=1 // pred_check
      _
    $region99: #{combine_net.1} parent=1 // pred_check_branch
      %267 = sbr.rel (0) target = $region101
    $region100: #{combine_net.1} parent=1 // pred_region
      _
    $region101: #{combine_net.1} parent=1 // pred_fallthru
      _
    // Predicated region
    $region102: #{combine_net.1} parent=1 // pred_check
      _
    $region103: #{combine_net.1} parent=1 // pred_check_branch
      %269 = sbr.rel (0) target = $region105
    $region104: #{combine_net.1} parent=1 // pred_region
      %271 = vsyncadd [#allocation13], 0
      %s272 = sshll.u32 %s51, 4
      %s273 = int_to_ptr.hbm [resolvable:$true] %s272
      %s274 = sshll.u32 [#allocation12], 4
      %s275 = int_to_ptr.vmem [resolvable:$true] %s274
      %280 = dma.hbm_to_vmem [thread:$0]  %s273, 3072, %s275, [#allocation13], 64, 64, 4
    $region105: #{combine_net.1} parent=1 // pred_fallthru
      _
    // Predicated region
    $region106: #{combine_net.1} parent=1 // pred_check
      _
    $region107: #{combine_net.1} parent=1 // pred_check_branch
      %282 = sbr.rel (0) target = $region109
    $region108: #{combine_net.1} parent=1 // pred_region
      _
    $region109: #{combine_net.1} parent=1 // pred_fallthru
      _
    // Predicated region
    $region110: #{combine_net.1} parent=1 // pred_check
      _
    $region111: #{combine_net.1} parent=1 // pred_check_branch
      %284 = sbr.rel (0) target = $region113
    $region112: #{combine_net.1} parent=1 // pred_region
      _
    $region113: #{combine_net.1} parent=1 // pred_fallthru
      _
    // Predicated region
    $region114: #{combine_net.1} parent=1 // pred_check
      _
    $region115: #{combine_net.1} parent=1 // pred_check_branch
      %286 = sbr.rel (0) target = $region117
    $region116: #{combine_net.1} parent=1 // pred_region
      _
    $region117: #{combine_net.1} parent=1 // pred_fallthru
      _
    // Predicated region
    $region118: #{combine_net.1} parent=1 // pred_check
      _
    $region119: #{combine_net.1} parent=1 // pred_check_branch
      %288 = sbr.rel (0) target = $region121
    $region120: #{combine_net.1} parent=1 // pred_region
      %290 = vsyncadd [#allocation13], 0
      %s291 = sshll.u32 %s59, 4
      %s292 = int_to_ptr.hbm [resolvable:$true] %s291
      %s293 = sshll.u32 [#allocation14], 4
      %s294 = int_to_ptr.vmem [resolvable:$true] %s293
      %299 = dma.hbm_to_vmem [thread:$0]  %s292, 1536, %s294, [#allocation13], 64, 64, 4
    $region121: #{combine_net.1} parent=1 // pred_fallthru
      _
    // Predicated region
    $region122: #{combine_net.1} parent=1 // pred_check
      _
    $region123: #{combine_net.1} parent=1 // pred_check_branch
      %301 = sbr.rel (0) target = $region125
    $region124: #{combine_net.1} parent=1 // pred_region
      _
    $region125: #{combine_net.1} parent=1 // pred_fallthru
      _
    // Predicated region
    $region126: #{combine_net.1} parent=1 // pred_check
      _
    $region127: #{combine_net.1} parent=1 // pred_check_branch
      %303 = sbr.rel (0) target = $region129
    $region128: #{combine_net.1} parent=1 // pred_region
      %305 = vsyncadd [#allocation16], 0
      %s306 = sshll.u32 %s63, 4
      %s307 = int_to_ptr.hbm [resolvable:$true] %s306
      %s308 = sshll.u32 [#allocation15], 4
      %s309 = int_to_ptr.vmem [resolvable:$true] %s308
      %314 = dma.hbm_to_vmem [thread:$0]  %s307, 1536, %s309, [#allocation16], 64, 64, 4
    $region129: #{combine_net.1} parent=1 // pred_fallthru
      _
    // Predicated region
    $region130: #{combine_net.1} parent=1 // pred_check
      _
    $region131: #{combine_net.1} parent=1 // pred_check_branch
      %316 = sbr.rel (0) target = $region133
    $region132: #{combine_net.1} parent=1 // pred_region
      _
    $region133: #{combine_net.1} parent=1 // pred_fallthru
      _
    // Predicated region
    $region134: #{combine_net.1} parent=1 // pred_check
      _
    $region135: #{combine_net.1} parent=1 // pred_check_branch
      %318 = sbr.rel (0) target = $region137
    $region136: #{combine_net.1} parent=1 // pred_region
      %320 = vsyncadd [#allocation16], 0
      %s321 = sshll.u32 %s67, 4
      %s322 = int_to_ptr.hbm [resolvable:$true] %s321
      %s323 = sshll.u32 [#allocation17], 4
      %s324 = int_to_ptr.vmem [resolvable:$true] %s323
      %329 = dma.hbm_to_vmem [thread:$0]  %s322, 1536, %s324, [#allocation16], 64, 64, 4
    $region137: #{combine_net.1} parent=1 // pred_fallthru
      _
    // Predicated region
    $region138: #{combine_net.1} parent=1 // pred_check
      _
    $region139: #{combine_net.1} parent=1 // pred_check_branch
      %331 = sbr.rel (0) target = $region141
    $region140: #{combine_net.1} parent=1 // pred_region
      _
    $region141: #{combine_net.1} parent=1 // pred_fallthru
      _
    // Predicated region
    $region142: #{combine_net.1} parent=1 // pred_check
      _
    $region143: #{combine_net.1} parent=1 // pred_check_branch
      %333 = sbr.rel (0) target = $region145
    $region144: #{combine_net.1} parent=1 // pred_region
      %335 = vsyncadd [#allocation19], 0
      %s336 = sshll.u32 %s71, 4
      %s337 = int_to_ptr.hbm [resolvable:$true] %s336
      %s338 = sshll.u32 [#allocation18], 4
      %s339 = int_to_ptr.vmem [resolvable:$true] %s338
      %344 = dma.hbm_to_vmem [thread:$0]  %s337, 3072, %s339, [#allocation19], 64, 64, 4
    $region145: #{combine_net.1} parent=1 // pred_fallthru
      _
    // Predicated region
    $region146: #{combine_net.1} parent=1 // pred_check
      _
    $region147: #{combine_net.1} parent=1 // pred_check_branch
      %346 = sbr.rel (0) target = $region149
    $region148: #{combine_net.1} parent=1 // pred_region
      _
    $region149: #{combine_net.1} parent=1 // pred_fallthru
      _
    // Predicated region
    $region150: #{combine_net.1} parent=1 // pred_check
      _
    $region151: #{combine_net.1} parent=1 // pred_check_branch
      %348 = sbr.rel (0) target = $region153
    $region152: #{combine_net.1} parent=1 // pred_region
      %350 = vsyncadd [#allocation19], 0
      %s351 = sshll.u32 %s75, 4
      %s352 = int_to_ptr.hbm [resolvable:$true] %s351
      %s353 = sshll.u32 [#allocation20], 4
      %s354 = int_to_ptr.vmem [resolvable:$true] %s353
      %359 = dma.hbm_to_vmem [thread:$0]  %s352, 6144, %s354, [#allocation19], 128, 128, 8
    $region153: #{combine_net.1} parent=1 // pred_fallthru
      _
    // Predicated region
    $region154: #{combine_net.1} parent=1 // pred_check
      _
    $region155: #{combine_net.1} parent=1 // pred_check_branch
      %361 = sbr.rel (0) target = $region157
    $region156: #{combine_net.1} parent=1 // pred_region
      _
    $region157: #{combine_net.1} parent=1 // pred_fallthru
      _
    // Predicated region
    $region158: #{combine_net.1} parent=1 // pred_check
      _
    $region159: #{combine_net.1} parent=1 // pred_check_branch
      %363 = sbr.rel (0) target = $region161
    $region160: #{combine_net.1} parent=1 // pred_region
      %365 = vsyncadd [#allocation22], 0
      %s366 = sshll.u32 %s79, 4
      %s367 = int_to_ptr.hbm [resolvable:$true] %s366
      %s368 = sshll.u32 [#allocation21], 4
      %s369 = int_to_ptr.vmem [resolvable:$true] %s368
      %374 = dma.hbm_to_vmem [thread:$0]  %s367, 6144, %s369, [#allocation22], 64, 64, 4
    $region161: #{combine_net.1} parent=1 // pred_fallthru
      _
    // Predicated region
    $region162: #{combine_net.1} parent=1 // pred_check
      _
    $region163: #{combine_net.1} parent=1 // pred_check_branch
      %376 = sbr.rel (0) target = $region165
    $region164: #{combine_net.1} parent=1 // pred_region
      _
    $region165: #{combine_net.1} parent=1 // pred_fallthru
      _
    // Predicated region
    $region166: #{combine_net.1} parent=1 // pred_check
      _
    $region167: #{combine_net.1} parent=1 // pred_check_branch
      %378 = sbr.rel (0) target = $region169
    $region168: #{combine_net.1} parent=1 // pred_region
      %380 = vsyncadd [#allocation22], 0
      %s381 = sshll.u32 %s83, 4
      %s382 = int_to_ptr.hbm [resolvable:$true] %s381
      %s383 = sshll.u32 [#allocation23], 4
      %s384 = int_to_ptr.vmem [resolvable:$true] %s383
      %389 = dma.hbm_to_vmem [thread:$0]  %s382, 1536, %s384, [#allocation22], 64, 64, 4
    $region169: #{combine_net.1} parent=1 // pred_fallthru
      _
    // Predicated region
    $region170: #{combine_net.1} parent=1 // pred_check
      _
    $region171: #{combine_net.1} parent=1 // pred_check_branch
      %391 = sbr.rel (0) target = $region173
    $region172: #{combine_net.1} parent=1 // pred_region
      _
    $region173: #{combine_net.1} parent=1 // pred_fallthru
      _
    // Predicated region
    $region174: #{combine_net.1} parent=1 // pred_check
      _
    $region175: #{combine_net.1} parent=1 // pred_check_branch
      %393 = sbr.rel (0) target = $region177
    $region176: #{combine_net.1} parent=1 // pred_region
      %395 = vsyncadd [#allocation25], 0
      %s396 = sshll.u32 %s87, 4
      %s397 = int_to_ptr.hbm [resolvable:$true] %s396
      %s398 = sshll.u32 [#allocation24], 4
      %s399 = int_to_ptr.vmem [resolvable:$true] %s398
      %404 = dma.hbm_to_vmem [thread:$0]  %s397, 1536, %s399, [#allocation25], 64, 64, 4
    $region177: #{combine_net.1} parent=1 // pred_fallthru
      _
    // Predicated region
    $region178: #{combine_net.1} parent=1 // pred_check
      _
    $region179: #{combine_net.1} parent=1 // pred_check_branch
      %406 = sbr.rel (0) target = $region181
    $region180: #{combine_net.1} parent=1 // pred_region
      _
    $region181: #{combine_net.1} parent=1 // pred_fallthru
      _
    // Predicated region
    $region182: #{combine_net.1} parent=1 // pred_check
      _
    $region183: #{combine_net.1} parent=1 // pred_check_branch
      %408 = sbr.rel (0) target = $region185
    $region184: #{combine_net.1} parent=1 // pred_region
      %410 = vsyncadd [#allocation25], 0
      %s411 = sshll.u32 %s91, 4
      %s412 = int_to_ptr.hbm [resolvable:$true] %s411
      %s413 = sshll.u32 [#allocation26], 4
      %s414 = int_to_ptr.vmem [resolvable:$true] %s413
      %419 = dma.hbm_to_vmem [thread:$0]  %s412, 3072, %s414, [#allocation25], 64, 64, 4
    $region185: #{combine_net.1} parent=1 // pred_fallthru
      _
    // Predicated region
    $region186: #{combine_net.1} parent=1 // pred_check
      _
    $region187: #{combine_net.1} parent=1 // pred_check_branch
      %421 = sbr.rel (0) target = $region189
    $region188: #{combine_net.1} parent=1 // pred_region
      _
    $region189: #{combine_net.1} parent=1 // pred_fallthru
      _
    // Predicated region
    $region190: #{combine_net.1} parent=1 // pred_check
      _
    $region191: #{combine_net.1} parent=1 // pred_check_branch
      %423 = sbr.rel (0) target = $region193
    $region192: #{combine_net.1} parent=1 // pred_region
      _
    $region193: #{combine_net.1} parent=1 // pred_fallthru
      _
    // Predicated region
    $region194: #{combine_net.1} parent=1 // pred_check
      _
    $region195: #{combine_net.1} parent=1 // pred_check_branch
      %425 = sbr.rel (0) target = $region197
    $region196: #{combine_net.1} parent=1 // pred_region
      _
    $region197: #{combine_net.1} parent=1 // pred_fallthru
      _
    // Predicated region
    $region198: #{combine_net.1} parent=1 // pred_check
      _
    $region199: #{combine_net.1} parent=1 // pred_check_branch
      %427 = sbr.rel (0) target = $region201
    $region200: #{combine_net.1} parent=1 // pred_region
      %429 = vsyncadd [#allocation28], 0
      %s430 = sshll.u32 %s99, 4
      %s431 = int_to_ptr.hbm [resolvable:$true] %s430
      %s432 = sshll.u32 [#allocation27], 4
      %s433 = int_to_ptr.vmem [resolvable:$true] %s432
      %438 = dma.hbm_to_vmem [thread:$0]  %s431, 1536, %s433, [#allocation28], 64, 64, 4
    $region201: #{combine_net.1} parent=1 // pred_fallthru
      _
    // Predicated region
    $region202: #{combine_net.1} parent=1 // pred_check
      _
    $region203: #{combine_net.1} parent=1 // pred_check_branch
      %440 = sbr.rel (0) target = $region205
    $region204: #{combine_net.1} parent=1 // pred_region
      _
    $region205: #{combine_net.1} parent=1 // pred_fallthru
      _
    // Predicated region
    $region206: #{combine_net.1} parent=1 // pred_check
      _
    $region207: #{combine_net.1} parent=1 // pred_check_branch
      %442 = sbr.rel (0) target = $region209
    $region208: #{combine_net.1} parent=1 // pred_region
      %444 = vsyncadd [#allocation28], 0
      %s445 = sshll.u32 %s103, 4
      %s446 = int_to_ptr.hbm [resolvable:$true] %s445
      %s447 = sshll.u32 [#allocation29], 4
      %s448 = int_to_ptr.vmem [resolvable:$true] %s447
      %453 = dma.hbm_to_vmem [thread:$0]  %s446, 1536, %s448, [#allocation28], 64, 64, 4
    $region209: #{combine_net.1} parent=1 // pred_fallthru
      _
    // Predicated region
    $region210: #{combine_net.1} parent=1 // pred_check
      _
    $region211: #{combine_net.1} parent=1 // pred_check_branch
      %455 = sbr.rel (0) target = $region213
    $region212: #{combine_net.1} parent=1 // pred_region
      _
    $region213: #{combine_net.1} parent=1 // pred_fallthru
      _
    // Predicated region
    $region214: #{combine_net.1} parent=1 // pred_check
      _
    $region215: #{combine_net.1} parent=1 // pred_check_branch
      %457 = sbr.rel (0) target = $region217
    $region216: #{combine_net.1} parent=1 // pred_region
      %459 = vsyncadd [#allocation31], 0
      %s460 = sshll.u32 %s107, 4
      %s461 = int_to_ptr.hbm [resolvable:$true] %s460
      %s462 = sshll.u32 [#allocation30], 4
      %s463 = int_to_ptr.vmem [resolvable:$true] %s462
      %468 = dma.hbm_to_vmem [thread:$0]  %s461, 1536, %s463, [#allocation31], 64, 64, 4
    $region217: #{combine_net.1} parent=1 // pred_fallthru
      _
    // Predicated region
    $region218: #{combine_net.1} parent=1 // pred_check
      _
    $region219: #{combine_net.1} parent=1 // pred_check_branch
      %470 = sbr.rel (0) target = $region221
    $region220: #{combine_net.1} parent=1 // pred_region
      _
    $region221: #{combine_net.1} parent=1 // pred_fallthru
      _
    // Predicated region
    $region222: #{combine_net.1} parent=1 // pred_check
      _
    $region223: #{combine_net.1} parent=1 // pred_check_branch
      %472 = sbr.rel (0) target = $region225
    $region224: #{combine_net.1} parent=1 // pred_region
      %474 = vsyncadd [#allocation31], 0
      %s475 = sshll.u32 %s111, 4
      %s476 = int_to_ptr.hbm [resolvable:$true] %s475
      %s477 = sshll.u32 [#allocation32], 4
      %s478 = int_to_ptr.vmem [resolvable:$true] %s477
      %483 = dma.hbm_to_vmem [thread:$0]  %s476, 3072, %s478, [#allocation31], 64, 64, 4
    $region225: #{combine_net.1} parent=1 // pred_fallthru
      _
    // Predicated region
    $region226: #{combine_net.1} parent=1 // pred_check
      _
    $region227: #{combine_net.1} parent=1 // pred_check_branch
      %485 = sbr.rel (0) target = $region229
    $region228: #{combine_net.1} parent=1 // pred_region
      _
    $region229: #{combine_net.1} parent=1 // pred_fallthru
      _
    // Predicated region
    $region230: #{combine_net.1} parent=1 // pred_check
      _
    $region231: #{combine_net.1} parent=1 // pred_check_branch
      %487 = sbr.rel (0) target = $region233
    $region232: #{combine_net.1} parent=1 // pred_region
      %489 = vsyncadd [#allocation34], 0
      %s490 = sshll.u32 %s115, 4
      %s491 = int_to_ptr.hbm [resolvable:$true] %s490
      %s492 = sshll.u32 [#allocation33], 4
      %s493 = int_to_ptr.vmem [resolvable:$true] %s492
      %498 = dma.hbm_to_vmem [thread:$0]  %s491, 6144, %s493, [#allocation34], 128, 128, 8
    $region233: #{combine_net.1} parent=1 // pred_fallthru
      _
    // Predicated region
    $region234: #{combine_net.1} parent=1 // pred_check
      _
    $region235: #{combine_net.1} parent=1 // pred_check_branch
      %500 = sbr.rel (0) target = $region237
    $region236: #{combine_net.1} parent=1 // pred_region
      _
    $region237: #{combine_net.1} parent=1 // pred_fallthru
      _
    // Predicated region
    $region238: #{combine_net.1} parent=1 // pred_check
      _
    $region239: #{combine_net.1} parent=1 // pred_check_branch
      %502 = sbr.rel (0) target = $region241
    $region240: #{combine_net.1} parent=1 // pred_region
      %504 = vsyncadd [#allocation34], 0
      %s505 = sshll.u32 %s119, 4
      %s506 = int_to_ptr.hbm [resolvable:$true] %s505
      %s507 = sshll.u32 [#allocation35], 4
      %s508 = int_to_ptr.vmem [resolvable:$true] %s507
      %513 = dma.hbm_to_vmem [thread:$0]  %s506, 6144, %s508, [#allocation34], 64, 64, 4
    $region241: #{combine_net.1} parent=1 // pred_fallthru
      _
    // Predicated region
    $region242: #{combine_net.1} parent=1 // pred_check
      _
    $region243: #{combine_net.1} parent=1 // pred_check_branch
      %515 = sbr.rel (0) target = $region245
    $region244: #{combine_net.1} parent=1 // pred_region
      _
    $region245: #{combine_net.1} parent=1 // pred_fallthru
      _
    // Predicated region
    $region246: #{combine_net.1} parent=1 // pred_check
      _
    $region247: #{combine_net.1} parent=1 // pred_check_branch
      %517 = sbr.rel (0) target = $region249
    $region248: #{combine_net.1} parent=1 // pred_region
      %519 = vsyncadd [#allocation37], 0
      %s520 = sshll.u32 %s123, 4
      %s521 = int_to_ptr.hbm [resolvable:$true] %s520
      %s522 = sshll.u32 [#allocation36], 4
      %s523 = int_to_ptr.vmem [resolvable:$true] %s522
      %528 = dma.hbm_to_vmem [thread:$0]  %s521, 1536, %s523, [#allocation37], 64, 64, 4
    $region249: #{combine_net.1} parent=1 // pred_fallthru
      _
    // Predicated region
    $region250: #{combine_net.1} parent=1 // pred_check
      _
    $region251: #{combine_net.1} parent=1 // pred_check_branch
      %530 = sbr.rel (0) target = $region253
    $region252: #{combine_net.1} parent=1 // pred_region
      _
    $region253: #{combine_net.1} parent=1 // pred_fallthru
      _
    // Predicated region
    $region254: #{combine_net.1} parent=1 // pred_check
      _
    $region255: #{combine_net.1} parent=1 // pred_check_branch
      %532 = sbr.rel (0) target = $region257
    $region256: #{combine_net.1} parent=1 // pred_region
      %534 = vsyncadd [#allocation37], 0
      %s535 = sshll.u32 %s127, 4
      %s536 = int_to_ptr.hbm [resolvable:$true] %s535
      %s537 = sshll.u32 [#allocation38], 4
      %s538 = int_to_ptr.vmem [resolvable:$true] %s537
      %543 = dma.hbm_to_vmem [thread:$0]  %s536, 1536, %s538, [#allocation37], 64, 64, 4
    $region257: #{combine_net.1} parent=1 // pred_fallthru
      _
    // Predicated region
    $region258: #{combine_net.1} parent=1 // pred_check
      _
    $region259: #{combine_net.1} parent=1 // pred_check_branch
      %545 = sbr.rel (0) target = $region261
    $region260: #{combine_net.1} parent=1 // pred_region
      _
    $region261: #{combine_net.1} parent=1 // pred_fallthru
      _
    // Predicated region
    $region262: #{combine_net.1} parent=1 // pred_check
      _
    $region263: #{combine_net.1} parent=1 // pred_check_branch
      %547 = sbr.rel (0) target = $region265
    $region264: #{combine_net.1} parent=1 // pred_region
      %549 = vsyncadd [#allocation40], 0
      %s550 = sshll.u32 %s131, 4
      %s551 = int_to_ptr.hbm [resolvable:$true] %s550
      %s552 = sshll.u32 [#allocation39], 4
      %s553 = int_to_ptr.vmem [resolvable:$true] %s552
      %558 = dma.hbm_to_vmem [thread:$0]  %s551, 3072, %s553, [#allocation40], 64, 64, 4
    $region265: #{combine_net.1} parent=1 // pred_fallthru
      _
    // Predicated region
    $region266: #{combine_net.1} parent=1 // pred_check
      _
    $region267: #{combine_net.1} parent=1 // pred_check_branch
      %560 = sbr.rel (0) target = $region269
    $region268: #{combine_net.1} parent=1 // pred_region
      _
    $region269: #{combine_net.1} parent=1 // pred_fallthru
      _
    // Predicated region
    $region270: #{combine_net.1} parent=1 // pred_check
      _
    $region271: #{combine_net.1} parent=1 // pred_check_branch
      %562 = sbr.rel (0) target = $region273
    $region272: #{combine_net.1} parent=1 // pred_region
      _
    $region273: #{combine_net.1} parent=1 // pred_fallthru
      _
    // Predicated region
    $region274: #{combine_net.1} parent=1 // pred_check
      _
    $region275: #{combine_net.1} parent=1 // pred_check_branch
      %564 = sbr.rel (0) target = $region277
    $region276: #{combine_net.1} parent=1 // pred_region
      %566 = vsyncadd [#allocation5], 0
      %s568 = sshll.u32 %s137, 4
      %s569 = int_to_ptr.vmem [resolvable:$true] %s568
      %571 = dma.vmem_to_smem %s569, 16, [#allocation41], [#allocation5]
    $region277: #{combine_net.1} parent=1 // pred_fallthru
      _
    // Predicated region
    $region278: #{combine_net.1} parent=1 // pred_check
      _
    $region279: #{combine_net.1} parent=1 // pred_check_branch
      %573 = sbr.rel (0) target = $region281
    $region280: #{combine_net.1} parent=1 // pred_region
      %575 = dma.done [#allocation4], 1536
    $region281: #{combine_net.1} parent=1 // pred_fallthru
      _
    // Predicated region
    $region282: #{combine_net.1} parent=1 // pred_check
      _
    $region283: #{combine_net.1} parent=1 // pred_check_branch
      %577 = sbr.rel (0) target = $region285
    $region284: #{combine_net.1} parent=1 // pred_region
      %579 = dma.done [#allocation7], 1536
    $region285: #{combine_net.1} parent=1 // pred_fallthru
      _
    // Predicated region
    $region286: #{combine_net.1} parent=1 // pred_check
      _
    $region287: #{combine_net.1} parent=1 // pred_check_branch
      %581 = sbr.rel (0) target = $region289
    $region288: #{combine_net.1} parent=1 // pred_region
      %583 = dma.done [#allocation7], 6144
    $region289: #{combine_net.1} parent=1 // pred_fallthru
      _
    // Predicated region
    $region290: #{combine_net.1} parent=1 // pred_check
      _
    $region291: #{combine_net.1} parent=1 // pred_check_branch
      %585 = sbr.rel (0) target = $region293
    $region292: #{combine_net.1} parent=1 // pred_region
      %587 = dma.done [#allocation10], 1536
    $region293: #{combine_net.1} parent=1 // pred_fallthru
      _
    // Predicated region
    $region294: #{combine_net.1} parent=1 // pred_check
      _
    $region295: #{combine_net.1} parent=1 // pred_check_branch
      %589 = sbr.rel (0) target = $region297
    $region296: #{combine_net.1} parent=1 // pred_region
      %591 = dma.done [#allocation10], 1536
    $region297: #{combine_net.1} parent=1 // pred_fallthru
      _
    // Predicated region
    $region298: #{combine_net.1} parent=1 // pred_check
      _
    $region299: #{combine_net.1} parent=1 // pred_check_branch
      %593 = sbr.rel (0) target = $region301
    $region300: #{combine_net.1} parent=1 // pred_region
      %595 = dma.done [#allocation13], 3072
    $region301: #{combine_net.1} parent=1 // pred_fallthru
      _
    // Predicated region
    $region302: #{combine_net.1} parent=1 // pred_check
      _
    $region303: #{combine_net.1} parent=1 // pred_check_branch
      %597 = sbr.rel (0) target = $region305
    $region304: #{combine_net.1} parent=1 // pred_region
      %599 = dma.done [#allocation13], 1536
    $region305: #{combine_net.1} parent=1 // pred_fallthru
      _
    // Predicated region
    $region306: #{combine_net.1} parent=1 // pred_check
      _
    $region307: #{combine_net.1} parent=1 // pred_check_branch
      %601 = sbr.rel (0) target = $region309
    $region308: #{combine_net.1} parent=1 // pred_region
      %603 = dma.done [#allocation16], 1536
    $region309: #{combine_net.1} parent=1 // pred_fallthru
      _
    // Predicated region
    $region310: #{combine_net.1} parent=1 // pred_check
      _
    $region311: #{combine_net.1} parent=1 // pred_check_branch
      %605 = sbr.rel (0) target = $region313
    $region312: #{combine_net.1} parent=1 // pred_region
      %607 = dma.done [#allocation16], 1536
    $region313: #{combine_net.1} parent=1 // pred_fallthru
      _
    // Predicated region
    $region314: #{combine_net.1} parent=1 // pred_check
      _
    $region315: #{combine_net.1} parent=1 // pred_check_branch
      %609 = sbr.rel (0) target = $region317
    $region316: #{combine_net.1} parent=1 // pred_region
      %611 = dma.done [#allocation19], 3072
    $region317: #{combine_net.1} parent=1 // pred_fallthru
      _
    // Predicated region
    $region318: #{combine_net.1} parent=1 // pred_check
      _
    $region319: #{combine_net.1} parent=1 // pred_check_branch
      %613 = sbr.rel (0) target = $region321
    $region320: #{combine_net.1} parent=1 // pred_region
      %615 = dma.done [#allocation19], 6144
    $region321: #{combine_net.1} parent=1 // pred_fallthru
      _
    // Predicated region
    $region322: #{combine_net.1} parent=1 // pred_check
      _
    $region323: #{combine_net.1} parent=1 // pred_check_branch
      %617 = sbr.rel (0) target = $region325
    $region324: #{combine_net.1} parent=1 // pred_region
      %619 = dma.done [#allocation22], 6144
    $region325: #{combine_net.1} parent=1 // pred_fallthru
      _
    // Predicated region
    $region326: #{combine_net.1} parent=1 // pred_check
      _
    $region327: #{combine_net.1} parent=1 // pred_check_branch
      %621 = sbr.rel (0) target = $region329
    $region328: #{combine_net.1} parent=1 // pred_region
      %623 = dma.done [#allocation22], 1536
    $region329: #{combine_net.1} parent=1 // pred_fallthru
      _
    // Predicated region
    $region330: #{combine_net.1} parent=1 // pred_check
      _
    $region331: #{combine_net.1} parent=1 // pred_check_branch
      %625 = sbr.rel (0) target = $region333
    $region332: #{combine_net.1} parent=1 // pred_region
      %627 = dma.done [#allocation25], 1536
    $region333: #{combine_net.1} parent=1 // pred_fallthru
      _
    // Predicated region
    $region334: #{combine_net.1} parent=1 // pred_check
      _
    $region335: #{combine_net.1} parent=1 // pred_check_branch
      %629 = sbr.rel (0) target = $region337
    $region336: #{combine_net.1} parent=1 // pred_region
      %631 = dma.done [#allocation25], 3072
    $region337: #{combine_net.1} parent=1 // pred_fallthru
      _
    // Predicated region
    $region338: #{combine_net.1} parent=1 // pred_check
      _
    $region339: #{combine_net.1} parent=1 // pred_check_branch
      %633 = sbr.rel (0) target = $region341
    $region340: #{combine_net.1} parent=1 // pred_region
      %635 = dma.done [#allocation28], 1536
    $region341: #{combine_net.1} parent=1 // pred_fallthru
      _
    // Predicated region
    $region342: #{combine_net.1} parent=1 // pred_check
      _
    $region343: #{combine_net.1} parent=1 // pred_check_branch
      %637 = sbr.rel (0) target = $region345
    $region344: #{combine_net.1} parent=1 // pred_region
      %639 = dma.done [#allocation28], 1536
    $region345: #{combine_net.1} parent=1 // pred_fallthru
      _
    // Predicated region
    $region346: #{combine_net.1} parent=1 // pred_check
      _
    $region347: #{combine_net.1} parent=1 // pred_check_branch
      %641 = sbr.rel (0) target = $region349
    $region348: #{combine_net.1} parent=1 // pred_region
      %643 = dma.done [#allocation31], 1536
    $region349: #{combine_net.1} parent=1 // pred_fallthru
      _
    // Predicated region
    $region350: #{combine_net.1} parent=1 // pred_check
      _
    $region351: #{combine_net.1} parent=1 // pred_check_branch
      %645 = sbr.rel (0) target = $region353
    $region352: #{combine_net.1} parent=1 // pred_region
      %647 = dma.done [#allocation31], 3072
    $region353: #{combine_net.1} parent=1 // pred_fallthru
      _
    // Predicated region
    $region354: #{combine_net.1} parent=1 // pred_check
      _
    $region355: #{combine_net.1} parent=1 // pred_check_branch
      %649 = sbr.rel (0) target = $region357
    $region356: #{combine_net.1} parent=1 // pred_region
      %651 = dma.done [#allocation34], 6144
    $region357: #{combine_net.1} parent=1 // pred_fallthru
      _
    // Predicated region
    $region358: #{combine_net.1} parent=1 // pred_check
      _
    $region359: #{combine_net.1} parent=1 // pred_check_branch
      %653 = sbr.rel (0) target = $region361
    $region360: #{combine_net.1} parent=1 // pred_region
      %655 = dma.done [#allocation34], 6144
    $region361: #{combine_net.1} parent=1 // pred_fallthru
      _
    // Predicated region
    $region362: #{combine_net.1} parent=1 // pred_check
      _
    $region363: #{combine_net.1} parent=1 // pred_check_branch
      %657 = sbr.rel (0) target = $region365
    $region364: #{combine_net.1} parent=1 // pred_region
      %659 = dma.done [#allocation37], 1536
    $region365: #{combine_net.1} parent=1 // pred_fallthru
      _
    // Predicated region
    $region366: #{combine_net.1} parent=1 // pred_check
      _
    $region367: #{combine_net.1} parent=1 // pred_check_branch
      %661 = sbr.rel (0) target = $region369
    $region368: #{combine_net.1} parent=1 // pred_region
      %663 = dma.done [#allocation37], 1536
    $region369: #{combine_net.1} parent=1 // pred_fallthru
      _
    // Predicated region
    $region370: #{combine_net.1} parent=1 // pred_check
      _
    $region371: #{combine_net.1} parent=1 // pred_check_branch
      %665 = sbr.rel (0) target = $region373
    $region372: #{combine_net.1} parent=1 // pred_region
      %667 = dma.done [#allocation40], 3072
    $region373: #{combine_net.1} parent=1 // pred_fallthru
      _
    // Predicated region
    $region374: #{combine_net.1} parent=1 // pred_check
      _
    $region375: #{combine_net.1} parent=1 // pred_check_branch
      %669 = sbr.rel (0) target = $region377
    $region376: #{combine_net.1} parent=1 // pred_region
      %671 = dma.done [#allocation5], 16
    $region377: #{combine_net.1} parent=1 // pred_fallthru
      _
    %672 = sfence
    %v674 = vld [vmem:[%s3] sm:$0xff]
    %v675 = vld [vmem:[%s3 + $0x8] sm:$0xff]
    %v676 = vld [vmem:[%s3 + $0x10] sm:$0xff]
    %v677 = vld [vmem:[%s3 + $0x18] sm:$0xff]
    %v678 = vld [vmem:[%s5] sm:$0xff]
    %v679 = vld [vmem:[%s5 + $0x8] sm:$0xff]
    %v680 = vld [vmem:[%s7] sm:$0xff]
    %vm681 = vcmp.ge.s32.totalorder %v674, 1
    %vm682 = vcmp.ge.s32.totalorder %v675, 1
    %vm683 = vcmp.ge.s32.totalorder %v676, 1
    %vm684 = vcmp.ge.s32.totalorder %v677, 1
    %v685 = vsel %vm681, 1.0, 0.0
    %v686 = vsel %vm682, 1.0, 0.0
    %v687 = vsel %vm683, 1.0, 0.0
    %v688 = vsel %vm684, 1.0, 0.0
    %vm689 = vcmp.le.s32.totalorder %v674, 14
    %vm690 = vcmp.le.s32.totalorder %v675, 14
    %vm691 = vcmp.le.s32.totalorder %v676, 14
    %vm692 = vcmp.le.s32.totalorder %v677, 14
    %v693 = vsel %vm689, 1.0, 0.0
    %v694 = vsel %vm690, 1.0, 0.0
    %v695 = vsel %vm691, 1.0, 0.0
    %v696 = vsel %vm692, 1.0, 0.0
    %vm697 = vcmp.ge.s32.totalorder %v678, 1
    %vm698 = vcmp.ge.s32.totalorder %v679, 1
    %v699 = vsel %vm697, 1.0, 0.0
    %v700 = vsel %vm698, 1.0, 0.0
    %vm701 = vcmp.le.s32.totalorder %v678, 6
    %vm702 = vcmp.le.s32.totalorder %v679, 6
    %v703 = vsel %vm701, 1.0, 0.0
    %v704 = vsel %vm702, 1.0, 0.0
    %vm705 = vcmp.ge.s32.totalorder %v680, 1
    %v706 = vsel %vm705, 1.0, 0.0
    %vm707 = vcmp.le.s32.totalorder %v680, 2
    %v708 = vsel %vm707, 1.0, 0.0
    %v709 = vlaneseq
    %v710 = vshrl.u32 %v709, 7
    %v711 = vadd.s32 %v710, 8
    %v712 = vlaneseq
    %v713 = vand.u32 %v712, 127
    %v714 = vmul.u32 %v710, 2
    %v715 = vmul.u32 %v711, 2
    %vm716 = vcmp.eq.s32.totalorder %v713, %v714
    %vm717 = vcmp.eq.s32.totalorder %v713, %v715
    %v718 = vsel %vm716, 1.0, 0.0
    %v719 = vsel %vm717, 1.0, 0.0
    %v720 = vadd.s32 %v714, 1
    %v721 = vadd.s32 %v715, 1
    %vm722 = vcmp.eq.s32.totalorder %v713, %v720
    %vm723 = vcmp.eq.s32.totalorder %v713, %v721
    %v724 = vsel %vm722, 1.0, 0.0
    %v725 = vsel %vm723, 1.0, 0.0
    %v726 = vadd.s32 %v710, 16
    %v727 = vadd.s32 %v710, 24
    %v728 = vmul.u32 %v713, 2
    %vm729 = vcmp.eq.s32.totalorder %v710, %v728
    %vm730 = vcmp.eq.s32.totalorder %v711, %v728
    %vm731 = vcmp.eq.s32.totalorder %v726, %v728
    %vm732 = vcmp.eq.s32.totalorder %v727, %v728
    %v733 = vsel %vm729, 1.0, 0.0
    %v734 = vsel %vm730, 1.0, 0.0
    %v735 = vsel %vm731, 1.0, 0.0
    %v736 = vsel %vm732, 1.0, 0.0
    %v737 = vadd.s32 %v728, 1
    %vm738 = vcmp.eq.s32.totalorder %v710, %v737
    %vm739 = vcmp.eq.s32.totalorder %v711, %v737
    %vm740 = vcmp.eq.s32.totalorder %v726, %v737
    %vm741 = vcmp.eq.s32.totalorder %v727, %v737
    %v742 = vsel %vm738, 1.0, 0.0
    %v743 = vsel %vm739, 1.0, 0.0
    %v744 = vsel %vm740, 1.0, 0.0
    %v745 = vsel %vm741, 1.0, 0.0
    %v746 = vld [vmem:[%s1] sm:$0xff]
    %v747 = vld [vmem:[%s1 + $0x8] sm:$0xff]
    %v748 = vld [vmem:[%s1 + $0x10] sm:$0xff]
    %v749 = vld [vmem:[%s1 + $0x18] sm:$0xff]
    %v750 = vld [vmem:[%s11] sm:$0x1]
    %752 = vset.pattern.permute.xlu0 0
    %753 = vperm.xlu0 %752, %v746
    %v754 = vpop.permute.xlu0 %753
    %757 = vset.pattern.permute.xlu0 0
    %758 = vperm.xlu0 %757, %v747
    %v759 = vpop.permute.xlu0 %758
    %762 = vset.pattern.permute.xlu0 0
    %763 = vperm.xlu0 %762, %v748
    %v764 = vpop.permute.xlu0 %763
    %767 = vset.pattern.permute.xlu0 0
    %768 = vperm.xlu0 %767, %v749
    %v769 = vpop.permute.xlu0 %768
    %v772 = vperm.slane %v750, 0
    %v774 = vmul.f32 %v754, %v772
    %v775 = vmul.f32 %v759, %v772
    %v776 = vmul.f32 %v764, %v772
    %v777 = vmul.f32 %v769, %v772
    %v778 = vld [vmem:[%s9] sm:$0x1]
    %v780 = vperm.slane %v778, 0
    %v782 = vadd.f32 %v774, %v780
    %v783 = vadd.f32 %v775, %v780
    %v784 = vadd.f32 %v776, %v780
    %v785 = vadd.f32 %v777, %v780
    %v786 = vmax.f32 %v782, 0.0
    %v787 = vmax.f32 %v783, 0.0
    %v788 = vmax.f32 %v784, 0.0
    %v789 = vmax.f32 %v785, 0.0
    %v790 = vpack.c.bf16 %v787, %v786
    %v791 = vpack.c.bf16 %v789, %v788
    %s792 = scalar_lea.vmem %s19, 32
    %v793 = vld [vmem:[%s792] sm:$0xf]
    %v794 = vld [vmem:[%s792 + $0x4] sm:$0xf]
    %v795 = vld [vmem:[%s792 + $0x8] sm:$0xf]
    %v796 = vld [vmem:[%s792 + $0xc] sm:$0xf]
    %v797 = vld [vmem:[%s792 + $0x10] sm:$0xf]
    %v798 = vld [vmem:[%s792 + $0x14] sm:$0xf]
    %v799 = vld [vmem:[%s792 + $0x18] sm:$0xf]
    %v800 = vld [vmem:[%s792 + $0x1c] sm:$0xf]
    %v801 = vrot.slane %v786, 7
    %v802 = vrot.slane %v787, 7
    %v803 = vrot.slane %v788, 7
    %v804 = vrot.slane %v789, 7
    %vm805 = vcmp.lt.s32.totalorder %v710, 1
    %v806 = vsel %vm805, %v803, %v804
    %v807 = vsel %vm805, %v802, %v803
    %v808 = vsel %vm805, %v801, %v802
    %v809 = vsel %vm805, %v804, %v801
    %811 = vset.pattern.permute.xlu0 0
    %812 = vperm.xlu0 %811, %v685
    %v813 = vpop.permute.xlu0 %812
    %816 = vset.pattern.permute.xlu0 0
    %817 = vperm.xlu0 %816, %v686
    %v818 = vpop.permute.xlu0 %817
    %821 = vset.pattern.permute.xlu0 0
    %822 = vperm.xlu0 %821, %v687
    %v823 = vpop.permute.xlu0 %822
    %826 = vset.pattern.permute.xlu0 0
    %827 = vperm.xlu0 %826, %v688
    %v828 = vpop.permute.xlu0 %827
    %v830 = vmul.f32 %v809, %v813
    %v831 = vmul.f32 %v808, %v818
    %v832 = vmul.f32 %v807, %v823
    %v833 = vmul.f32 %v806, %v828
    %v834 = vpack.c.bf16 %v831, %v830
    %v835 = vpack.c.bf16 %v833, %v832
    %v836 = vld [vmem:[%s19] sm:$0xf]
    %v837 = vld [vmem:[%s19 + $0x4] sm:$0xf]
    %v838 = vld [vmem:[%s19 + $0x8] sm:$0xf]
    %v839 = vld [vmem:[%s19 + $0xc] sm:$0xf]
    %v840 = vld [vmem:[%s19 + $0x10] sm:$0xf]
    %v841 = vld [vmem:[%s19 + $0x14] sm:$0xf]
    %v842 = vld [vmem:[%s19 + $0x18] sm:$0xf]
    %v843 = vld [vmem:[%s19 + $0x1c] sm:$0xf]
    %v852 = vunpack.c.l.b16 %v836
    %v853 = vunpack.c.l.b16 %v837
    %v854 = vunpack.c.l.b16 %v838
    %v855 = vunpack.c.l.b16 %v839
    %v856 = vunpack.c.l.b16 %v840
    %v857 = vunpack.c.l.b16 %v841
    %v858 = vunpack.c.l.b16 %v842
    %v859 = vunpack.c.l.b16 %v843
    %v860 = vpack.c.b16 %v853, %v852
    %v861 = vpack.c.b16 %v855, %v854
    %v862 = vpack.c.b16 %v857, %v856
    %v863 = vpack.c.b16 %v859, %v858
    %vm868 = vcmask 523264
    %v870 = vsel %vm868, %v834, 0
    %v873 = vsel %vm868, %v835, 0
    %875 = vmatpush.bf16.msra.mxu0 0
    %876 = vmatpush.bf16.msra.mxu0 0
    %877 = vmatpush.bf16.msra.mxu0 0
    %878 = vmatpush.bf16.msra.mxu0 0
    %879 = vmatpush.bf16.msra.mxu0 %v863
    %880 = vmatpush.bf16.msra.mxu0 %v862
    %881 = vmatpush.bf16.msra.mxu0 %v861
    %882 = vmatpush.bf16.msra.mxu0 %v860
    %883 = vmatmul.bf16.gmra.mxu0 %v870
    %v884 = vpop.f32.mrf.mxu0
    %v885 = vadd.f32 0.0, %v884
    %v886 = vpop.f32.mrf.mxu0
    %v887 = vadd.f32 0.0, %v886
    %888 = vmatmul.bf16.gmra.mxu0 %v873
    %v889 = vpop.f32.mrf.mxu0
    %v890 = vadd.f32 0.0, %v889
    %v891 = vpop.f32.mrf.mxu0
    %v892 = vadd.f32 0.0, %v891
    %893 = vdwg.mxu0
    %v902 = vunpack.c.l.b16 %v793
    %v903 = vunpack.c.l.b16 %v794
    %v904 = vunpack.c.l.b16 %v795
    %v905 = vunpack.c.l.b16 %v796
    %v906 = vunpack.c.l.b16 %v797
    %v907 = vunpack.c.l.b16 %v798
    %v908 = vunpack.c.l.b16 %v799
    %v909 = vunpack.c.l.b16 %v800
    %v910 = vpack.c.b16 %v903, %v902
    %v911 = vpack.c.b16 %v905, %v904
    %v912 = vpack.c.b16 %v907, %v906
    %v913 = vpack.c.b16 %v909, %v908
    %v919 = vsel %vm868, %v790, 0
    %v922 = vsel %vm868, %v791, 0
    %924 = vmatpush.bf16.msra.mxu0 0
    %925 = vmatpush.bf16.msra.mxu0 0
    %926 = vmatpush.bf16.msra.mxu0 0
    %927 = vmatpush.bf16.msra.mxu0 0
    %928 = vmatpush.bf16.msra.mxu0 %v913
    %929 = vmatpush.bf16.msra.mxu0 %v912
    %930 = vmatpush.bf16.msra.mxu0 %v911
    %931 = vmatpush.bf16.msra.mxu0 %v910
    %932 = vmatmul.bf16.gmra.mxu0 %v919
    %v933 = vpop.f32.mrf.mxu0
    %v934 = vadd.f32 %v885, %v933
    %v935 = vpop.f32.mrf.mxu0
    %v936 = vadd.f32 %v887, %v935
    %937 = vmatmul.bf16.gmra.mxu0 %v922
    %v938 = vpop.f32.mrf.mxu0
    %v939 = vadd.f32 %v890, %v938
    %v940 = vpop.f32.mrf.mxu0
    %v941 = vadd.f32 %v892, %v940
    %942 = vdwg.mxu0
    %v943 = vrot.slane %v786, 1
    %v944 = vrot.slane %v787, 1
    %v945 = vrot.slane %v788, 1
    %v946 = vrot.slane %v789, 1
    %vm947 = vcmp.lt.s32.totalorder %v710, 7
    %v948 = vsel %vm947, %v945, %v946
    %v949 = vsel %vm947, %v944, %v945
    %v950 = vsel %vm947, %v943, %v944
    %v951 = vsel %vm947, %v946, %v943
    %953 = vset.pattern.permute.xlu0 0
    %954 = vperm.xlu0 %953, %v693
    %v955 = vpop.permute.xlu0 %954
    %958 = vset.pattern.permute.xlu0 0
    %959 = vperm.xlu0 %958, %v694
    %v960 = vpop.permute.xlu0 %959
    %963 = vset.pattern.permute.xlu0 0
    %964 = vperm.xlu0 %963, %v695
    %v965 = vpop.permute.xlu0 %964
    %968 = vset.pattern.permute.xlu0 0
    %969 = vperm.xlu0 %968, %v696
    %v970 = vpop.permute.xlu0 %969
    %v972 = vmul.f32 %v950, %v955
    %v973 = vmul.f32 %v949, %v960
    %v974 = vmul.f32 %v948, %v965
    %v975 = vmul.f32 %v951, %v970
    %v976 = vpack.c.bf16 %v973, %v972
    %v977 = vpack.c.bf16 %v975, %v974
    %s978 = scalar_lea.vmem %s19, 64
    %v979 = vld [vmem:[%s978] sm:$0xf]
    %v980 = vld [vmem:[%s978 + $0x4] sm:$0xf]
    %v981 = vld [vmem:[%s978 + $0x8] sm:$0xf]
    %v982 = vld [vmem:[%s978 + $0xc] sm:$0xf]
    %v983 = vld [vmem:[%s978 + $0x10] sm:$0xf]
    %v984 = vld [vmem:[%s978 + $0x14] sm:$0xf]
    %v985 = vld [vmem:[%s978 + $0x18] sm:$0xf]
    %v986 = vld [vmem:[%s978 + $0x1c] sm:$0xf]
    %v995 = vunpack.c.l.b16 %v979
    %v996 = vunpack.c.l.b16 %v980
    %v997 = vunpack.c.l.b16 %v981
    %v998 = vunpack.c.l.b16 %v982
    %v999 = vunpack.c.l.b16 %v983
    %v1000 = vunpack.c.l.b16 %v984
    %v1001 = vunpack.c.l.b16 %v985
    %v1002 = vunpack.c.l.b16 %v986
    %v1003 = vpack.c.b16 %v996, %v995
    %v1004 = vpack.c.b16 %v998, %v997
    %v1005 = vpack.c.b16 %v1000, %v999
    %v1006 = vpack.c.b16 %v1002, %v1001
    %v1012 = vsel %vm868, %v976, 0
    %v1015 = vsel %vm868, %v977, 0
    %1017 = vmatpush.bf16.msra.mxu0 0
    %1018 = vmatpush.bf16.msra.mxu0 0
    %1019 = vmatpush.bf16.msra.mxu0 0
    %1020 = vmatpush.bf16.msra.mxu0 0
    %1021 = vmatpush.bf16.msra.mxu0 %v1006
    %1022 = vmatpush.bf16.msra.mxu0 %v1005
    %1023 = vmatpush.bf16.msra.mxu0 %v1004
    %1024 = vmatpush.bf16.msra.mxu0 %v1003
    %1025 = vmatmul.bf16.gmra.mxu0 %v1012
    %v1026 = vpop.f32.mrf.mxu0
    %v1027 = vadd.f32 0.0, %v1026
    %v1028 = vpop.f32.mrf.mxu0
    %v1029 = vadd.f32 0.0, %v1028
    %1030 = vmatmul.bf16.gmra.mxu0 %v1015
    %v1031 = vpop.f32.mrf.mxu0
    %v1032 = vadd.f32 0.0, %v1031
    %v1033 = vpop.f32.mrf.mxu0
    %v1034 = vadd.f32 0.0, %v1033
    %1035 = vdwg.mxu0
    %v1036 = vadd.f32 %v934, %v1027
    %v1037 = vadd.f32 %v936, %v1029
    %v1038 = vadd.f32 %v939, %v1032
    %v1039 = vadd.f32 %v941, %v1034
    %v1040 = vld [vmem:[%s17] sm:$0x1]
    %v1042 = vperm.slane %v1040, 0
    %v1044 = vadd.f32 %v1036, %v1042
    %v1045 = vadd.f32 %v1037, %v1042
    %v1046 = vadd.f32 %v1038, %v1042
    %v1047 = vadd.f32 %v1039, %v1042
    %v1048 = vmax.f32 %v1044, 0.0
    %v1049 = vmax.f32 %v1045, 0.0
    %v1050 = vmax.f32 %v1046, 0.0
    %v1051 = vmax.f32 %v1047, 0.0
    %v1052 = vpack.c.bf16 %v1049, %v1048
    %v1053 = vpack.c.bf16 %v1051, %v1050
    %s1054 = scalar_lea.vmem [#allocation3], 32
    %v1055 = vld [vmem:[%s1054] sm:$0xf]
    %v1056 = vld [vmem:[%s1054 + $0x4] sm:$0xf]
    %v1057 = vld [vmem:[%s1054 + $0x8] sm:$0xf]
    %v1058 = vld [vmem:[%s1054 + $0xc] sm:$0xf]
    %v1059 = vld [vmem:[%s1054 + $0x10] sm:$0xf]
    %v1060 = vld [vmem:[%s1054 + $0x14] sm:$0xf]
    %v1061 = vld [vmem:[%s1054 + $0x18] sm:$0xf]
    %v1062 = vld [vmem:[%s1054 + $0x1c] sm:$0xf]
    %v1063 = vrot.slane %v1048, 7
    %v1064 = vrot.slane %v1049, 7
    %v1065 = vrot.slane %v1050, 7
    %v1066 = vrot.slane %v1051, 7
    %v1067 = vsel %vm805, %v1065, %v1066
    %v1068 = vsel %vm805, %v1064, %v1065
    %v1069 = vsel %vm805, %v1063, %v1064
    %v1070 = vsel %vm805, %v1066, %v1063
    %v1071 = vmul.f32 %v1070, %v813
    %v1072 = vmul.f32 %v1069, %v818
    %v1073 = vmul.f32 %v1068, %v823
    %v1074 = vmul.f32 %v1067, %v828
    %v1075 = vpack.c.bf16 %v1072, %v1071
    %v1076 = vpack.c.bf16 %v1074, %v1073
    %v1077 = vld [vmem:[#allocation3] sm:$0xf]
    %v1078 = vld [vmem:[#allocation3 + $0x4] sm:$0xf]
    %v1079 = vld [vmem:[#allocation3 + $0x8] sm:$0xf]
    %v1080 = vld [vmem:[#allocation3 + $0xc] sm:$0xf]
    %v1081 = vld [vmem:[#allocation3 + $0x10] sm:$0xf]
    %v1082 = vld [vmem:[#allocation3 + $0x14] sm:$0xf]
    %v1083 = vld [vmem:[#allocation3 + $0x18] sm:$0xf]
    %v1084 = vld [vmem:[#allocation3 + $0x1c] sm:$0xf]
    %v1093 = vunpack.c.l.b16 %v1077
    %v1094 = vunpack.c.l.b16 %v1078
    %v1095 = vunpack.c.l.b16 %v1079
    %v1096 = vunpack.c.l.b16 %v1080
    %v1097 = vunpack.c.l.b16 %v1081
    %v1098 = vunpack.c.l.b16 %v1082
    %v1099 = vunpack.c.l.b16 %v1083
    %v1100 = vunpack.c.l.b16 %v1084
    %v1101 = vpack.c.b16 %v1094, %v1093
    %v1102 = vpack.c.b16 %v1096, %v1095
    %v1103 = vpack.c.b16 %v1098, %v1097
    %v1104 = vpack.c.b16 %v1100, %v1099
    %v1110 = vsel %vm868, %v1075, 0
    %v1113 = vsel %vm868, %v1076, 0
    %1115 = vmatpush.bf16.msra.mxu0 0
    %1116 = vmatpush.bf16.msra.mxu0 0
    %1117 = vmatpush.bf16.msra.mxu0 0
    %1118 = vmatpush.bf16.msra.mxu0 0
    %1119 = vmatpush.bf16.msra.mxu0 %v1104
    %1120 = vmatpush.bf16.msra.mxu0 %v1103
    %1121 = vmatpush.bf16.msra.mxu0 %v1102
    %1122 = vmatpush.bf16.msra.mxu0 %v1101
    %1123 = vmatmul.bf16.gmra.mxu0 %v1110
    %v1124 = vpop.f32.mrf.mxu0
    %v1125 = vadd.f32 0.0, %v1124
    %v1126 = vpop.f32.mrf.mxu0
    %v1127 = vadd.f32 0.0, %v1126
    %1128 = vmatmul.bf16.gmra.mxu0 %v1113
    %v1129 = vpop.f32.mrf.mxu0
    %v1130 = vadd.f32 0.0, %v1129
    %v1131 = vpop.f32.mrf.mxu0
    %v1132 = vadd.f32 0.0, %v1131
    %1133 = vdwg.mxu0
    %v1142 = vunpack.c.l.b16 %v1055
    %v1143 = vunpack.c.l.b16 %v1056
    %v1144 = vunpack.c.l.b16 %v1057
    %v1145 = vunpack.c.l.b16 %v1058
    %v1146 = vunpack.c.l.b16 %v1059
    %v1147 = vunpack.c.l.b16 %v1060
    %v1148 = vunpack.c.l.b16 %v1061
    %v1149 = vunpack.c.l.b16 %v1062
    %v1150 = vpack.c.b16 %v1143, %v1142
    %v1151 = vpack.c.b16 %v1145, %v1144
    %v1152 = vpack.c.b16 %v1147, %v1146
    %v1153 = vpack.c.b16 %v1149, %v1148
    %v1159 = vsel %vm868, %v1052, 0
    %v1162 = vsel %vm868, %v1053, 0
    %1164 = vmatpush.bf16.msra.mxu0 0
    %1165 = vmatpush.bf16.msra.mxu0 0
    %1166 = vmatpush.bf16.msra.mxu0 0
    %1167 = vmatpush.bf16.msra.mxu0 0
    %1168 = vmatpush.bf16.msra.mxu0 %v1153
    %1169 = vmatpush.bf16.msra.mxu0 %v1152
    %1170 = vmatpush.bf16.msra.mxu0 %v1151
    %1171 = vmatpush.bf16.msra.mxu0 %v1150
    %1172 = vmatmul.bf16.gmra.mxu0 %v1159
    %v1173 = vpop.f32.mrf.mxu0
    %v1174 = vadd.f32 %v1125, %v1173
    %v1175 = vpop.f32.mrf.mxu0
    %v1176 = vadd.f32 %v1127, %v1175
    %1177 = vmatmul.bf16.gmra.mxu0 %v1162
    %v1178 = vpop.f32.mrf.mxu0
    %v1179 = vadd.f32 %v1130, %v1178
    %v1180 = vpop.f32.mrf.mxu0
    %v1181 = vadd.f32 %v1132, %v1180
    %1182 = vdwg.mxu0
    %v1183 = vrot.slane %v1048, 1
    %v1184 = vrot.slane %v1049, 1
    %v1185 = vrot.slane %v1050, 1
    %v1186 = vrot.slane %v1051, 1
    %v1187 = vsel %vm947, %v1185, %v1186
    %v1188 = vsel %vm947, %v1184, %v1185
    %v1189 = vsel %vm947, %v1183, %v1184
    %v1190 = vsel %vm947, %v1186, %v1183
    %v1191 = vmul.f32 %v1189, %v955
    %v1192 = vmul.f32 %v1188, %v960
    %v1193 = vmul.f32 %v1187, %v965
    %v1194 = vmul.f32 %v1190, %v970
    %v1195 = vpack.c.bf16 %v1192, %v1191
    %v1196 = vpack.c.bf16 %v1194, %v1193
    %s1197 = scalar_lea.vmem [#allocation3], 64
    %v1198 = vld [vmem:[%s1197] sm:$0xf]
    %v1199 = vld [vmem:[%s1197 + $0x4] sm:$0xf]
    %v1200 = vld [vmem:[%s1197 + $0x8] sm:$0xf]
    %v1201 = vld [vmem:[%s1197 + $0xc] sm:$0xf]
    %v1202 = vld [vmem:[%s1197 + $0x10] sm:$0xf]
    %v1203 = vld [vmem:[%s1197 + $0x14] sm:$0xf]
    %v1204 = vld [vmem:[%s1197 + $0x18] sm:$0xf]
    %v1205 = vld [vmem:[%s1197 + $0x1c] sm:$0xf]
    %v1214 = vunpack.c.l.b16 %v1198
    %v1215 = vunpack.c.l.b16 %v1199
    %v1216 = vunpack.c.l.b16 %v1200
    %v1217 = vunpack.c.l.b16 %v1201
    %v1218 = vunpack.c.l.b16 %v1202
    %v1219 = vunpack.c.l.b16 %v1203
    %v1220 = vunpack.c.l.b16 %v1204
    %v1221 = vunpack.c.l.b16 %v1205
    %v1222 = vpack.c.b16 %v1215, %v1214
    %v1223 = vpack.c.b16 %v1217, %v1216
    %v1224 = vpack.c.b16 %v1219, %v1218
    %v1225 = vpack.c.b16 %v1221, %v1220
    %v1231 = vsel %vm868, %v1195, 0
    %v1234 = vsel %vm868, %v1196, 0
    %1236 = vmatpush.bf16.msra.mxu0 0
    %1237 = vmatpush.bf16.msra.mxu0 0
    %1238 = vmatpush.bf16.msra.mxu0 0
    %1239 = vmatpush.bf16.msra.mxu0 0
    %1240 = vmatpush.bf16.msra.mxu0 %v1225
    %1241 = vmatpush.bf16.msra.mxu0 %v1224
    %1242 = vmatpush.bf16.msra.mxu0 %v1223
    %1243 = vmatpush.bf16.msra.mxu0 %v1222
    %1244 = vmatmul.bf16.gmra.mxu0 %v1231
    %v1245 = vpop.f32.mrf.mxu0
    %v1246 = vadd.f32 0.0, %v1245
    %v1247 = vpop.f32.mrf.mxu0
    %v1248 = vadd.f32 0.0, %v1247
    %1249 = vmatmul.bf16.gmra.mxu0 %v1234
    %v1250 = vpop.f32.mrf.mxu0
    %v1251 = vadd.f32 0.0, %v1250
    %v1252 = vpop.f32.mrf.mxu0
    %v1253 = vadd.f32 0.0, %v1252
    %1254 = vdwg.mxu0
    %v1255 = vadd.f32 %v1174, %v1246
    %v1256 = vadd.f32 %v1176, %v1248
    %v1257 = vadd.f32 %v1179, %v1251
    %v1258 = vadd.f32 %v1181, %v1253
    %v1259 = vld [vmem:[%s21] sm:$0x1]
    %v1261 = vperm.slane %v1259, 0
    %v1263 = vadd.f32 %v1255, %v1261
    %v1264 = vadd.f32 %v1256, %v1261
    %v1265 = vadd.f32 %v1257, %v1261
    %v1266 = vadd.f32 %v1258, %v1261
    %v1267 = vmax.f32 %v1263, 0.0
    %v1268 = vmax.f32 %v1264, 0.0
    %v1269 = vmax.f32 %v1265, 0.0
    %v1270 = vmax.f32 %v1266, 0.0
    %vm1271 = vcmask 261120
    %v1273 = vsel %vm1271, %v718, 0
    %v1276 = vsel %vm1271, %v719, 0
    %1278 = vmatpush.msra.mxu0 0.0
    %1279 = vmatpush.msra.mxu0 0.0
    %1280 = vmatpush.msra.mxu0 0.0
    %1281 = vmatpush.msra.mxu0 0.0
    %1282 = vmatpush.msra.mxu0 0.0
    %1283 = vmatpush.msra.mxu0 0.0
    %1284 = vmatpush.msra.mxu0 0.0
    %1285 = vmatpush.msra.mxu0 0.0
    %1286 = vmatpush.msra.mxu0 0.0
    %1287 = vmatpush.msra.mxu0 0.0
    %1288 = vmatpush.msra.mxu0 0.0
    %1289 = vmatpush.msra.mxu0 0.0
    %1290 = vmatpush.msra.mxu0 %v1270
    %1291 = vmatpush.msra.mxu0 %v1269
    %1292 = vmatpush.msra.mxu0 %v1268
    %1293 = vmatpush.msra.mxu0 %v1267
    %1294 = vmatmul.f32.gmra.mxu0 %v1273
    %v1295 = vpop.f32.mrf.mxu0
    %v1296 = vadd.f32 0.0, %v1295
    %1297 = vmatmul.f32.gmra.mxu0 %v1276
    %v1298 = vpop.f32.mrf.mxu0
    %v1299 = vadd.f32 0.0, %v1298
    %1300 = vdwg.mxu0
    %v1302 = vsel %vm1271, %v724, 0
    %v1305 = vsel %vm1271, %v725, 0
    %1307 = vmatpush.msra.mxu0 0.0
    %1308 = vmatpush.msra.mxu0 0.0
    %1309 = vmatpush.msra.mxu0 0.0
    %1310 = vmatpush.msra.mxu0 0.0
    %1311 = vmatpush.msra.mxu0 0.0
    %1312 = vmatpush.msra.mxu0 0.0
    %1313 = vmatpush.msra.mxu0 0.0
    %1314 = vmatpush.msra.mxu0 0.0
    %1315 = vmatpush.msra.mxu0 0.0
    %1316 = vmatpush.msra.mxu0 0.0
    %1317 = vmatpush.msra.mxu0 0.0
    %1318 = vmatpush.msra.mxu0 0.0
    %1319 = vmatpush.msra.mxu0 %v1270
    %1320 = vmatpush.msra.mxu0 %v1269
    %1321 = vmatpush.msra.mxu0 %v1268
    %1322 = vmatpush.msra.mxu0 %v1267
    %1323 = vmatmul.f32.gmra.mxu0 %v1302
    %v1324 = vpop.f32.mrf.mxu0
    %v1325 = vadd.f32 0.0, %v1324
    %1326 = vmatmul.f32.gmra.mxu0 %v1305
    %v1327 = vpop.f32.mrf.mxu0
    %v1328 = vadd.f32 0.0, %v1327
    %1329 = vdwg.mxu0
    %v1330 = vmax.f32 %v1296, %v1325
    %v1331 = vmax.f32 %v1299, %v1328
    %vm1332 = vcmp.gt.f32.partialorder %v1325, %v1296
    %vm1333 = vcmp.gt.f32.partialorder %v1328, %v1299
    %v1334 = vpack.c.bf16 %v1331, %v1330
    %s1335 = scalar_lea.vmem [#allocation6], 32
    %v1336 = vld [vmem:[%s1335] sm:$0xf]
    %v1337 = vld [vmem:[%s1335 + $0x4] sm:$0xf]
    %v1338 = vld [vmem:[%s1335 + $0x8] sm:$0xf]
    %v1339 = vld [vmem:[%s1335 + $0xc] sm:$0xf]
    %v1340 = vld [vmem:[%s1335 + $0x10] sm:$0xf]
    %v1341 = vld [vmem:[%s1335 + $0x14] sm:$0xf]
    %v1342 = vld [vmem:[%s1335 + $0x18] sm:$0xf]
    %v1343 = vld [vmem:[%s1335 + $0x1c] sm:$0xf]
    %v1344 = vrot.slane %v1330, 7
    %v1345 = vrot.slane %v1331, 7
    %v1346 = vsel %vm805, %v1344, %v1345
    %v1347 = vsel %vm805, %v1345, %v1344
    %1349 = vset.pattern.permute.xlu0 0
    %1350 = vperm.xlu0 %1349, %v699
    %v1351 = vpop.permute.xlu0 %1350
    %1354 = vset.pattern.permute.xlu0 0
    %1355 = vperm.xlu0 %1354, %v700
    %v1356 = vpop.permute.xlu0 %1355
    %v1358 = vmul.f32 %v1347, %v1351
    %v1359 = vmul.f32 %v1346, %v1356
    %v1360 = vpack.c.bf16 %v1359, %v1358
    %v1361 = vld [vmem:[#allocation6] sm:$0xf]
    %v1362 = vld [vmem:[#allocation6 + $0x4] sm:$0xf]
    %v1363 = vld [vmem:[#allocation6 + $0x8] sm:$0xf]
    %v1364 = vld [vmem:[#allocation6 + $0xc] sm:$0xf]
    %v1365 = vld [vmem:[#allocation6 + $0x10] sm:$0xf]
    %v1366 = vld [vmem:[#allocation6 + $0x14] sm:$0xf]
    %v1367 = vld [vmem:[#allocation6 + $0x18] sm:$0xf]
    %v1368 = vld [vmem:[#allocation6 + $0x1c] sm:$0xf]
    %v1377 = vunpack.c.l.b16 %v1361
    %v1378 = vunpack.c.l.b16 %v1362
    %v1379 = vunpack.c.l.b16 %v1363
    %v1380 = vunpack.c.l.b16 %v1364
    %v1381 = vunpack.c.l.b16 %v1365
    %v1382 = vunpack.c.l.b16 %v1366
    %v1383 = vunpack.c.l.b16 %v1367
    %v1384 = vunpack.c.l.b16 %v1368
    %v1385 = vpack.c.b16 %v1378, %v1377
    %v1386 = vpack.c.b16 %v1380, %v1379
    %v1387 = vpack.c.b16 %v1382, %v1381
    %v1388 = vpack.c.b16 %v1384, %v1383
    %v1394 = vsel %vm868, %v1360, 0
    %1396 = vmatpush.bf16.msra.mxu0 0
    %1397 = vmatpush.bf16.msra.mxu0 0
    %1398 = vmatpush.bf16.msra.mxu0 0
    %1399 = vmatpush.bf16.msra.mxu0 0
    %1400 = vmatpush.bf16.msra.mxu0 %v1388
    %1401 = vmatpush.bf16.msra.mxu0 %v1387
    %1402 = vmatpush.bf16.msra.mxu0 %v1386
    %1403 = vmatpush.bf16.msra.mxu0 %v1385
    %1404 = vmatmul.bf16.gmra.mxu0 %v1394
    %v1405 = vpop.f32.mrf.mxu0
    %v1406 = vadd.f32 0.0, %v1405
    %v1407 = vpop.f32.mrf.mxu0
    %v1408 = vadd.f32 0.0, %v1407
    %1409 = vdwg.mxu0
    %v1418 = vunpack.c.l.b16 %v1336
    %v1419 = vunpack.c.l.b16 %v1337
    %v1420 = vunpack.c.l.b16 %v1338
    %v1421 = vunpack.c.l.b16 %v1339
    %v1422 = vunpack.c.l.b16 %v1340
    %v1423 = vunpack.c.l.b16 %v1341
    %v1424 = vunpack.c.l.b16 %v1342
    %v1425 = vunpack.c.l.b16 %v1343
    %v1426 = vpack.c.b16 %v1419, %v1418
    %v1427 = vpack.c.b16 %v1421, %v1420
    %v1428 = vpack.c.b16 %v1423, %v1422
    %v1429 = vpack.c.b16 %v1425, %v1424
    %v1435 = vsel %vm868, %v1334, 0
    %1437 = vmatpush.bf16.msra.mxu0 0
    %1438 = vmatpush.bf16.msra.mxu0 0
    %1439 = vmatpush.bf16.msra.mxu0 0
    %1440 = vmatpush.bf16.msra.mxu0 0
    %1441 = vmatpush.bf16.msra.mxu0 %v1429
    %1442 = vmatpush.bf16.msra.mxu0 %v1428
    %1443 = vmatpush.bf16.msra.mxu0 %v1427
    %1444 = vmatpush.bf16.msra.mxu0 %v1426
    %1445 = vmatmul.bf16.gmra.mxu0 %v1435
    %v1446 = vpop.f32.mrf.mxu0
    %v1447 = vadd.f32 %v1406, %v1446
    %v1448 = vpop.f32.mrf.mxu0
    %v1449 = vadd.f32 %v1408, %v1448
    %1450 = vdwg.mxu0
    %v1451 = vrot.slane %v1330, 1
    %v1452 = vrot.slane %v1331, 1
    %v1453 = vsel %vm947, %v1451, %v1452
    %v1454 = vsel %vm947, %v1452, %v1451
    %1456 = vset.pattern.permute.xlu0 0
    %1457 = vperm.xlu0 %1456, %v703
    %v1458 = vpop.permute.xlu0 %1457
    %1461 = vset.pattern.permute.xlu0 0
    %1462 = vperm.xlu0 %1461, %v704
    %v1463 = vpop.permute.xlu0 %1462
    %v1465 = vmul.f32 %v1453, %v1458
    %v1466 = vmul.f32 %v1454, %v1463
    %v1467 = vpack.c.bf16 %v1466, %v1465
    %s1468 = scalar_lea.vmem [#allocation6], 64
    %v1469 = vld [vmem:[%s1468] sm:$0xf]
    %v1470 = vld [vmem:[%s1468 + $0x4] sm:$0xf]
    %v1471 = vld [vmem:[%s1468 + $0x8] sm:$0xf]
    %v1472 = vld [vmem:[%s1468 + $0xc] sm:$0xf]
    %v1473 = vld [vmem:[%s1468 + $0x10] sm:$0xf]
    %v1474 = vld [vmem:[%s1468 + $0x14] sm:$0xf]
    %v1475 = vld [vmem:[%s1468 + $0x18] sm:$0xf]
    %v1476 = vld [vmem:[%s1468 + $0x1c] sm:$0xf]
    %v1485 = vunpack.c.l.b16 %v1469
    %v1486 = vunpack.c.l.b16 %v1470
    %v1487 = vunpack.c.l.b16 %v1471
    %v1488 = vunpack.c.l.b16 %v1472
    %v1489 = vunpack.c.l.b16 %v1473
    %v1490 = vunpack.c.l.b16 %v1474
    %v1491 = vunpack.c.l.b16 %v1475
    %v1492 = vunpack.c.l.b16 %v1476
    %v1493 = vpack.c.b16 %v1486, %v1485
    %v1494 = vpack.c.b16 %v1488, %v1487
    %v1495 = vpack.c.b16 %v1490, %v1489
    %v1496 = vpack.c.b16 %v1492, %v1491
    %v1502 = vsel %vm868, %v1467, 0
    %1504 = vmatpush.bf16.msra.mxu0 0
    %1505 = vmatpush.bf16.msra.mxu0 0
    %1506 = vmatpush.bf16.msra.mxu0 0
    %1507 = vmatpush.bf16.msra.mxu0 0
    %1508 = vmatpush.bf16.msra.mxu0 %v1496
    %1509 = vmatpush.bf16.msra.mxu0 %v1495
    %1510 = vmatpush.bf16.msra.mxu0 %v1494
    %1511 = vmatpush.bf16.msra.mxu0 %v1493
    %1512 = vmatmul.bf16.gmra.mxu0 %v1502
    %v1513 = vpop.f32.mrf.mxu0
    %v1514 = vadd.f32 0.0, %v1513
    %v1515 = vpop.f32.mrf.mxu0
    %v1516 = vadd.f32 0.0, %v1515
    %1517 = vdwg.mxu0
    %v1518 = vadd.f32 %v1447, %v1514
    %v1519 = vadd.f32 %v1449, %v1516
    %v1520 = vld [vmem:[%s25] sm:$0x1]
    %v1522 = vperm.slane %v1520, 0
    %v1524 = vadd.f32 %v1518, %v1522
    %v1525 = vadd.f32 %v1519, %v1522
    %v1526 = vmax.f32 %v1524, 0.0
    %v1527 = vmax.f32 %v1525, 0.0
    %v1528 = vpack.c.bf16 %v1527, %v1526
    %s1529 = scalar_lea.vmem %s31, 64
    %v1530 = vld [vmem:[%s1529] sm:$0xf]
    %v1531 = vld [vmem:[%s1529 + $0x4] sm:$0xf]
    %v1532 = vld [vmem:[%s1529 + $0x8] sm:$0xf]
    %v1533 = vld [vmem:[%s1529 + $0xc] sm:$0xf]
    %v1534 = vld [vmem:[%s1529 + $0x10] sm:$0xf]
    %v1535 = vld [vmem:[%s1529 + $0x14] sm:$0xf]
    %v1536 = vld [vmem:[%s1529 + $0x18] sm:$0xf]
    %v1537 = vld [vmem:[%s1529 + $0x1c] sm:$0xf]
    %v1538 = vld [vmem:[%s1529 + $0x20] sm:$0xf]
    %v1539 = vld [vmem:[%s1529 + $0x24] sm:$0xf]
    %v1540 = vld [vmem:[%s1529 + $0x28] sm:$0xf]
    %v1541 = vld [vmem:[%s1529 + $0x2c] sm:$0xf]
    %v1542 = vld [vmem:[%s1529 + $0x30] sm:$0xf]
    %v1543 = vld [vmem:[%s1529 + $0x34] sm:$0xf]
    %v1544 = vld [vmem:[%s1529 + $0x38] sm:$0xf]
    %v1545 = vld [vmem:[%s1529 + $0x3c] sm:$0xf]
    %v1546 = vrot.slane %v1526, 7
    %v1547 = vrot.slane %v1527, 7
    %v1548 = vsel %vm805, %v1546, %v1547
    %v1549 = vsel %vm805, %v1547, %v1546
    %v1550 = vmul.f32 %v1549, %v1351
    %v1551 = vmul.f32 %v1548, %v1356
    %v1552 = vpack.c.bf16 %v1551, %v1550
    %v1553 = vld [vmem:[%s31] sm:$0xf]
    %v1554 = vld [vmem:[%s31 + $0x4] sm:$0xf]
    %v1555 = vld [vmem:[%s31 + $0x8] sm:$0xf]
    %v1556 = vld [vmem:[%s31 + $0xc] sm:$0xf]
    %v1557 = vld [vmem:[%s31 + $0x10] sm:$0xf]
    %v1558 = vld [vmem:[%s31 + $0x14] sm:$0xf]
    %v1559 = vld [vmem:[%s31 + $0x18] sm:$0xf]
    %v1560 = vld [vmem:[%s31 + $0x1c] sm:$0xf]
    %v1561 = vld [vmem:[%s31 + $0x20] sm:$0xf]
    %v1562 = vld [vmem:[%s31 + $0x24] sm:$0xf]
    %v1563 = vld [vmem:[%s31 + $0x28] sm:$0xf]
    %v1564 = vld [vmem:[%s31 + $0x2c] sm:$0xf]
    %v1565 = vld [vmem:[%s31 + $0x30] sm:$0xf]
    %v1566 = vld [vmem:[%s31 + $0x34] sm:$0xf]
    %v1567 = vld [vmem:[%s31 + $0x38] sm:$0xf]
    %v1568 = vld [vmem:[%s31 + $0x3c] sm:$0xf]
    %v1585 = vunpack.c.l.b16 %v1553
    %v1586 = vunpack.c.l.b16 %v1554
    %v1587 = vunpack.c.l.b16 %v1555
    %v1588 = vunpack.c.l.b16 %v1556
    %v1589 = vunpack.c.l.b16 %v1557
    %v1590 = vunpack.c.l.b16 %v1558
    %v1591 = vunpack.c.l.b16 %v1559
    %v1592 = vunpack.c.l.b16 %v1560
    %v1593 = vunpack.c.l.b16 %v1561
    %v1594 = vunpack.c.l.b16 %v1562
    %v1595 = vunpack.c.l.b16 %v1563
    %v1596 = vunpack.c.l.b16 %v1564
    %v1597 = vunpack.c.l.b16 %v1565
    %v1598 = vunpack.c.l.b16 %v1566
    %v1599 = vunpack.c.l.b16 %v1567
    %v1600 = vunpack.c.l.b16 %v1568
    %v1601 = vpack.c.b16 %v1586, %v1585
    %v1602 = vpack.c.b16 %v1588, %v1587
    %v1603 = vpack.c.b16 %v1590, %v1589
    %v1604 = vpack.c.b16 %v1592, %v1591
    %v1605 = vpack.c.b16 %v1594, %v1593
    %v1606 = vpack.c.b16 %v1596, %v1595
    %v1607 = vpack.c.b16 %v1598, %v1597
    %v1608 = vpack.c.b16 %v1600, %v1599
    %1617 = vmatpush.bf16.msra.mxu0 %v1608
    %1618 = vmatpush.bf16.msra.mxu0 %v1607
    %1619 = vmatpush.bf16.msra.mxu0 %v1606
    %1620 = vmatpush.bf16.msra.mxu0 %v1605
    %1621 = vmatpush.bf16.msra.mxu0 %v1604
    %1622 = vmatpush.bf16.msra.mxu0 %v1603
    %1623 = vmatpush.bf16.msra.mxu0 %v1602
    %1624 = vmatpush.bf16.msra.mxu0 %v1601
    %1625 = vmatmul.bf16.gmra.mxu0 %v1552
    %v1626 = vpop.f32.mrf.mxu0
    %v1627 = vadd.f32 0.0, %v1626
    %v1628 = vpop.f32.mrf.mxu0
    %v1629 = vadd.f32 0.0, %v1628
    %1630 = vdwg.mxu0
    %v1647 = vunpack.c.l.b16 %v1530
    %v1648 = vunpack.c.l.b16 %v1531
    %v1649 = vunpack.c.l.b16 %v1532
    %v1650 = vunpack.c.l.b16 %v1533
    %v1651 = vunpack.c.l.b16 %v1534
    %v1652 = vunpack.c.l.b16 %v1535
    %v1653 = vunpack.c.l.b16 %v1536
    %v1654 = vunpack.c.l.b16 %v1537
    %v1655 = vunpack.c.l.b16 %v1538
    %v1656 = vunpack.c.l.b16 %v1539
    %v1657 = vunpack.c.l.b16 %v1540
    %v1658 = vunpack.c.l.b16 %v1541
    %v1659 = vunpack.c.l.b16 %v1542
    %v1660 = vunpack.c.l.b16 %v1543
    %v1661 = vunpack.c.l.b16 %v1544
    %v1662 = vunpack.c.l.b16 %v1545
    %v1663 = vpack.c.b16 %v1648, %v1647
    %v1664 = vpack.c.b16 %v1650, %v1649
    %v1665 = vpack.c.b16 %v1652, %v1651
    %v1666 = vpack.c.b16 %v1654, %v1653
    %v1667 = vpack.c.b16 %v1656, %v1655
    %v1668 = vpack.c.b16 %v1658, %v1657
    %v1669 = vpack.c.b16 %v1660, %v1659
    %v1670 = vpack.c.b16 %v1662, %v1661
    %1679 = vmatpush.bf16.msra.mxu0 %v1670
    %1680 = vmatpush.bf16.msra.mxu0 %v1669
    %1681 = vmatpush.bf16.msra.mxu0 %v1668
    %1682 = vmatpush.bf16.msra.mxu0 %v1667
    %1683 = vmatpush.bf16.msra.mxu0 %v1666
    %1684 = vmatpush.bf16.msra.mxu0 %v1665
    %1685 = vmatpush.bf16.msra.mxu0 %v1664
    %1686 = vmatpush.bf16.msra.mxu0 %v1663
    %1687 = vmatmul.bf16.gmra.mxu0 %v1528
    %v1688 = vpop.f32.mrf.mxu0
    %v1689 = vadd.f32 %v1627, %v1688
    %v1690 = vpop.f32.mrf.mxu0
    %v1691 = vadd.f32 %v1629, %v1690
    %1692 = vdwg.mxu0
    %v1693 = vrot.slane %v1526, 1
    %v1694 = vrot.slane %v1527, 1
    %v1695 = vsel %vm947, %v1693, %v1694
    %v1696 = vsel %vm947, %v1694, %v1693
    %v1697 = vmul.f32 %v1695, %v1458
    %v1698 = vmul.f32 %v1696, %v1463
    %v1699 = vpack.c.bf16 %v1698, %v1697
    %s1700 = scalar_lea.vmem %s31, 128
    %v1701 = vld [vmem:[%s1700] sm:$0xf]
    %v1702 = vld [vmem:[%s1700 + $0x4] sm:$0xf]
    %v1703 = vld [vmem:[%s1700 + $0x8] sm:$0xf]
    %v1704 = vld [vmem:[%s1700 + $0xc] sm:$0xf]
    %v1705 = vld [vmem:[%s1700 + $0x10] sm:$0xf]
    %v1706 = vld [vmem:[%s1700 + $0x14] sm:$0xf]
    %v1707 = vld [vmem:[%s1700 + $0x18] sm:$0xf]
    %v1708 = vld [vmem:[%s1700 + $0x1c] sm:$0xf]
    %v1709 = vld [vmem:[%s1700 + $0x20] sm:$0xf]
    %v1710 = vld [vmem:[%s1700 + $0x24] sm:$0xf]
    %v1711 = vld [vmem:[%s1700 + $0x28] sm:$0xf]
    %v1712 = vld [vmem:[%s1700 + $0x2c] sm:$0xf]
    %v1713 = vld [vmem:[%s1700 + $0x30] sm:$0xf]
    %v1714 = vld [vmem:[%s1700 + $0x34] sm:$0xf]
    %v1715 = vld [vmem:[%s1700 + $0x38] sm:$0xf]
    %v1716 = vld [vmem:[%s1700 + $0x3c] sm:$0xf]
    %v1733 = vunpack.c.l.b16 %v1701
    %v1734 = vunpack.c.l.b16 %v1702
    %v1735 = vunpack.c.l.b16 %v1703
    %v1736 = vunpack.c.l.b16 %v1704
    %v1737 = vunpack.c.l.b16 %v1705
    %v1738 = vunpack.c.l.b16 %v1706
    %v1739 = vunpack.c.l.b16 %v1707
    %v1740 = vunpack.c.l.b16 %v1708
    %v1741 = vunpack.c.l.b16 %v1709
    %v1742 = vunpack.c.l.b16 %v1710
    %v1743 = vunpack.c.l.b16 %v1711
    %v1744 = vunpack.c.l.b16 %v1712
    %v1745 = vunpack.c.l.b16 %v1713
    %v1746 = vunpack.c.l.b16 %v1714
    %v1747 = vunpack.c.l.b16 %v1715
    %v1748 = vunpack.c.l.b16 %v1716
    %v1749 = vpack.c.b16 %v1734, %v1733
    %v1750 = vpack.c.b16 %v1736, %v1735
    %v1751 = vpack.c.b16 %v1738, %v1737
    %v1752 = vpack.c.b16 %v1740, %v1739
    %v1753 = vpack.c.b16 %v1742, %v1741
    %v1754 = vpack.c.b16 %v1744, %v1743
    %v1755 = vpack.c.b16 %v1746, %v1745
    %v1756 = vpack.c.b16 %v1748, %v1747
    %1765 = vmatpush.bf16.msra.mxu0 %v1756
    %1766 = vmatpush.bf16.msra.mxu0 %v1755
    %1767 = vmatpush.bf16.msra.mxu0 %v1754
    %1768 = vmatpush.bf16.msra.mxu0 %v1753
    %1769 = vmatpush.bf16.msra.mxu0 %v1752
    %1770 = vmatpush.bf16.msra.mxu0 %v1751
    %1771 = vmatpush.bf16.msra.mxu0 %v1750
    %1772 = vmatpush.bf16.msra.mxu0 %v1749
    %1773 = vmatmul.bf16.gmra.mxu0 %v1699
    %v1774 = vpop.f32.mrf.mxu0
    %v1775 = vadd.f32 0.0, %v1774
    %v1776 = vpop.f32.mrf.mxu0
    %v1777 = vadd.f32 0.0, %v1776
    %1778 = vdwg.mxu0
    %v1779 = vadd.f32 %v1689, %v1775
    %v1780 = vadd.f32 %v1691, %v1777
    %v1781 = vld [vmem:[%s29] sm:$0x1]
    %v1783 = vperm.slane %v1781, 0
    %v1785 = vadd.f32 %v1779, %v1783
    %v1786 = vadd.f32 %v1780, %v1783
    %v1787 = vmax.f32 %v1785, 0.0
    %v1788 = vmax.f32 %v1786, 0.0
    %vm1789 = vcmask 130048
    %v1790 = vsel %vm1789, %v718, 0
    %1792 = vmatpush.msra.mxu0 0.0
    %1793 = vmatpush.msra.mxu0 0.0
    %1794 = vmatpush.msra.mxu0 0.0
    %1795 = vmatpush.msra.mxu0 0.0
    %1796 = vmatpush.msra.mxu0 0.0
    %1797 = vmatpush.msra.mxu0 0.0
    %1798 = vmatpush.msra.mxu0 0.0
    %1799 = vmatpush.msra.mxu0 0.0
    %1800 = vmatpush.msra.mxu0 0.0
    %1801 = vmatpush.msra.mxu0 0.0
    %1802 = vmatpush.msra.mxu0 0.0
    %1803 = vmatpush.msra.mxu0 0.0
    %1804 = vmatpush.msra.mxu0 0.0
    %1805 = vmatpush.msra.mxu0 0.0
    %1806 = vmatpush.msra.mxu0 %v1788
    %1807 = vmatpush.msra.mxu0 %v1787
    %1808 = vmatmul.f32.gmra.mxu0 %v1790
    %v1809 = vpop.f32.mrf.mxu0
    %v1810 = vadd.f32 0.0, %v1809
    %1811 = vdwg.mxu0
    %v1812 = vsel %vm1789, %v724, 0
    %1814 = vmatpush.msra.mxu0 0.0
    %1815 = vmatpush.msra.mxu0 0.0
    %1816 = vmatpush.msra.mxu0 0.0
    %1817 = vmatpush.msra.mxu0 0.0
    %1818 = vmatpush.msra.mxu0 0.0
    %1819 = vmatpush.msra.mxu0 0.0
    %1820 = vmatpush.msra.mxu0 0.0
    %1821 = vmatpush.msra.mxu0 0.0
    %1822 = vmatpush.msra.mxu0 0.0
    %1823 = vmatpush.msra.mxu0 0.0
    %1824 = vmatpush.msra.mxu0 0.0
    %1825 = vmatpush.msra.mxu0 0.0
    %1826 = vmatpush.msra.mxu0 0.0
    %1827 = vmatpush.msra.mxu0 0.0
    %1828 = vmatpush.msra.mxu0 %v1788
    %1829 = vmatpush.msra.mxu0 %v1787
    %1830 = vmatmul.f32.gmra.mxu0 %v1812
    %v1831 = vpop.f32.mrf.mxu0
    %v1832 = vadd.f32 0.0, %v1831
    %1833 = vdwg.mxu0
    %v1834 = vmax.f32 %v1810, %v1832
    %vm1835 = vcmp.gt.f32.partialorder %v1832, %v1810
    %v1836 = vpack.c.bf16 %v1834, %v1834
    %s1837 = scalar_lea.vmem %s35, 128
    %v1838 = vld [vmem:[%s1837] sm:$0xff]
    %v1839 = vld [vmem:[%s1837 + $0x8] sm:$0xff]
    %v1840 = vld [vmem:[%s1837 + $0x10] sm:$0xff]
    %v1841 = vld [vmem:[%s1837 + $0x18] sm:$0xff]
    %v1842 = vld [vmem:[%s1837 + $0x20] sm:$0xff]
    %v1843 = vld [vmem:[%s1837 + $0x28] sm:$0xff]
    %v1844 = vld [vmem:[%s1837 + $0x30] sm:$0xff]
    %v1845 = vld [vmem:[%s1837 + $0x38] sm:$0xff]
    %v1846 = vld [vmem:[%s1837 + $0x40] sm:$0xff]
    %v1847 = vld [vmem:[%s1837 + $0x48] sm:$0xff]
    %v1848 = vld [vmem:[%s1837 + $0x50] sm:$0xff]
    %v1849 = vld [vmem:[%s1837 + $0x58] sm:$0xff]
    %v1850 = vld [vmem:[%s1837 + $0x60] sm:$0xff]
    %v1851 = vld [vmem:[%s1837 + $0x68] sm:$0xff]
    %v1852 = vld [vmem:[%s1837 + $0x70] sm:$0xff]
    %v1853 = vld [vmem:[%s1837 + $0x78] sm:$0xff]
    %v1854 = vrot.slane %v1834, 7
    %1856 = vset.pattern.permute.xlu0 0
    %1857 = vperm.xlu0 %1856, %v706
    %v1858 = vpop.permute.xlu0 %1857
    %v1860 = vmul.f32 %v1854, %v1858
    %v1861 = vpack.c.bf16 %v1860, %v1860
    %v1862 = vld [vmem:[%s35] sm:$0xff]
    %v1863 = vld [vmem:[%s35 + $0x8] sm:$0xff]
    %v1864 = vld [vmem:[%s35 + $0x10] sm:$0xff]
    %v1865 = vld [vmem:[%s35 + $0x18] sm:$0xff]
    %v1866 = vld [vmem:[%s35 + $0x20] sm:$0xff]
    %v1867 = vld [vmem:[%s35 + $0x28] sm:$0xff]
    %v1868 = vld [vmem:[%s35 + $0x30] sm:$0xff]
    %v1869 = vld [vmem:[%s35 + $0x38] sm:$0xff]
    %v1870 = vld [vmem:[%s35 + $0x40] sm:$0xff]
    %v1871 = vld [vmem:[%s35 + $0x48] sm:$0xff]
    %v1872 = vld [vmem:[%s35 + $0x50] sm:$0xff]
    %v1873 = vld [vmem:[%s35 + $0x58] sm:$0xff]
    %v1874 = vld [vmem:[%s35 + $0x60] sm:$0xff]
    %v1875 = vld [vmem:[%s35 + $0x68] sm:$0xff]
    %v1876 = vld [vmem:[%s35 + $0x70] sm:$0xff]
    %v1877 = vld [vmem:[%s35 + $0x78] sm:$0xff]
    %v1894 = vunpack.c.l.b16 %v1862
    %v1895 = vunpack.c.h.b16 %v1862
    %v1896 = vunpack.c.l.b16 %v1863
    %v1897 = vunpack.c.h.b16 %v1863
    %v1898 = vunpack.c.l.b16 %v1864
    %v1899 = vunpack.c.h.b16 %v1864
    %v1900 = vunpack.c.l.b16 %v1865
    %v1901 = vunpack.c.h.b16 %v1865
    %v1902 = vunpack.c.l.b16 %v1866
    %v1903 = vunpack.c.h.b16 %v1866
    %v1904 = vunpack.c.l.b16 %v1867
    %v1905 = vunpack.c.h.b16 %v1867
    %v1906 = vunpack.c.l.b16 %v1868
    %v1907 = vunpack.c.h.b16 %v1868
    %v1908 = vunpack.c.l.b16 %v1869
    %v1909 = vunpack.c.h.b16 %v1869
    %v1910 = vunpack.c.l.b16 %v1870
    %v1911 = vunpack.c.h.b16 %v1870
    %v1912 = vunpack.c.l.b16 %v1871
    %v1913 = vunpack.c.h.b16 %v1871
    %v1914 = vunpack.c.l.b16 %v1872
    %v1915 = vunpack.c.h.b16 %v1872
    %v1916 = vunpack.c.l.b16 %v1873
    %v1917 = vunpack.c.h.b16 %v1873
    %v1918 = vunpack.c.l.b16 %v1874
    %v1919 = vunpack.c.h.b16 %v1874
    %v1920 = vunpack.c.l.b16 %v1875
    %v1921 = vunpack.c.h.b16 %v1875
    %v1922 = vunpack.c.l.b16 %v1876
    %v1923 = vunpack.c.h.b16 %v1876
    %v1924 = vunpack.c.l.b16 %v1877
    %v1925 = vunpack.c.h.b16 %v1877
    %v1926 = vpack.c.b16 %v1896, %v1894
    %v1927 = vpack.c.b16 %v1897, %v1895
    %v1928 = vpack.c.b16 %v1900, %v1898
    %v1929 = vpack.c.b16 %v1901, %v1899
    %v1930 = vpack.c.b16 %v1904, %v1902
    %v1931 = vpack.c.b16 %v1905, %v1903
    %v1932 = vpack.c.b16 %v1908, %v1906
    %v1933 = vpack.c.b16 %v1909, %v1907
    %v1934 = vpack.c.b16 %v1912, %v1910
    %v1935 = vpack.c.b16 %v1913, %v1911
    %v1936 = vpack.c.b16 %v1916, %v1914
    %v1937 = vpack.c.b16 %v1917, %v1915
    %v1938 = vpack.c.b16 %v1920, %v1918
    %v1939 = vpack.c.b16 %v1921, %v1919
    %v1940 = vpack.c.b16 %v1924, %v1922
    %v1941 = vpack.c.b16 %v1925, %v1923
    %1958 = vmatpush.bf16.msra.mxu0 %v1940
    %1959 = vmatpush.bf16.msra.mxu0 %v1938
    %1960 = vmatpush.bf16.msra.mxu0 %v1936
    %1961 = vmatpush.bf16.msra.mxu0 %v1934
    %1962 = vmatpush.bf16.msra.mxu0 %v1932
    %1963 = vmatpush.bf16.msra.mxu0 %v1930
    %1964 = vmatpush.bf16.msra.mxu0 %v1928
    %1965 = vmatpush.bf16.msra.mxu0 %v1926
    %1966 = vmatmul.bf16.gmra.mxu0 %v1861
    %v1967 = vpop.f32.mrf.mxu0
    %v1968 = vadd.f32 0.0, %v1967
    %v1969 = vpop.f32.mrf.mxu0
    %1970 = vdwg.mxu0
    %1971 = vmatpush.bf16.msra.mxu0 %v1941
    %1972 = vmatpush.bf16.msra.mxu0 %v1939
    %1973 = vmatpush.bf16.msra.mxu0 %v1937
    %1974 = vmatpush.bf16.msra.mxu0 %v1935
    %1975 = vmatpush.bf16.msra.mxu0 %v1933
    %1976 = vmatpush.bf16.msra.mxu0 %v1931
    %1977 = vmatpush.bf16.msra.mxu0 %v1929
    %1978 = vmatpush.bf16.msra.mxu0 %v1927
    %1979 = vmatmul.bf16.gmra.mxu0 %v1861
    %v1980 = vpop.f32.mrf.mxu0
    %v1981 = vadd.f32 0.0, %v1980
    %v1982 = vpop.f32.mrf.mxu0
    %1983 = vdwg.mxu0
    %v2000 = vunpack.c.l.b16 %v1838
    %v2001 = vunpack.c.h.b16 %v1838
    %v2002 = vunpack.c.l.b16 %v1839
    %v2003 = vunpack.c.h.b16 %v1839
    %v2004 = vunpack.c.l.b16 %v1840
    %v2005 = vunpack.c.h.b16 %v1840
    %v2006 = vunpack.c.l.b16 %v1841
    %v2007 = vunpack.c.h.b16 %v1841
    %v2008 = vunpack.c.l.b16 %v1842
    %v2009 = vunpack.c.h.b16 %v1842
    %v2010 = vunpack.c.l.b16 %v1843
    %v2011 = vunpack.c.h.b16 %v1843
    %v2012 = vunpack.c.l.b16 %v1844
    %v2013 = vunpack.c.h.b16 %v1844
    %v2014 = vunpack.c.l.b16 %v1845
    %v2015 = vunpack.c.h.b16 %v1845
    %v2016 = vunpack.c.l.b16 %v1846
    %v2017 = vunpack.c.h.b16 %v1846
    %v2018 = vunpack.c.l.b16 %v1847
    %v2019 = vunpack.c.h.b16 %v1847
    %v2020 = vunpack.c.l.b16 %v1848
    %v2021 = vunpack.c.h.b16 %v1848
    %v2022 = vunpack.c.l.b16 %v1849
    %v2023 = vunpack.c.h.b16 %v1849
    %v2024 = vunpack.c.l.b16 %v1850
    %v2025 = vunpack.c.h.b16 %v1850
    %v2026 = vunpack.c.l.b16 %v1851
    %v2027 = vunpack.c.h.b16 %v1851
    %v2028 = vunpack.c.l.b16 %v1852
    %v2029 = vunpack.c.h.b16 %v1852
    %v2030 = vunpack.c.l.b16 %v1853
    %v2031 = vunpack.c.h.b16 %v1853
    %v2032 = vpack.c.b16 %v2002, %v2000
    %v2033 = vpack.c.b16 %v2003, %v2001
    %v2034 = vpack.c.b16 %v2006, %v2004
    %v2035 = vpack.c.b16 %v2007, %v2005
    %v2036 = vpack.c.b16 %v2010, %v2008
    %v2037 = vpack.c.b16 %v2011, %v2009
    %v2038 = vpack.c.b16 %v2014, %v2012
    %v2039 = vpack.c.b16 %v2015, %v2013
    %v2040 = vpack.c.b16 %v2018, %v2016
    %v2041 = vpack.c.b16 %v2019, %v2017
    %v2042 = vpack.c.b16 %v2022, %v2020
    %v2043 = vpack.c.b16 %v2023, %v2021
    %v2044 = vpack.c.b16 %v2026, %v2024
    %v2045 = vpack.c.b16 %v2027, %v2025
    %v2046 = vpack.c.b16 %v2030, %v2028
    %v2047 = vpack.c.b16 %v2031, %v2029
    %2064 = vmatpush.bf16.msra.mxu0 %v2046
    %2065 = vmatpush.bf16.msra.mxu0 %v2044
    %2066 = vmatpush.bf16.msra.mxu0 %v2042
    %2067 = vmatpush.bf16.msra.mxu0 %v2040
    %2068 = vmatpush.bf16.msra.mxu0 %v2038
    %2069 = vmatpush.bf16.msra.mxu0 %v2036
    %2070 = vmatpush.bf16.msra.mxu0 %v2034
    %2071 = vmatpush.bf16.msra.mxu0 %v2032
    %2072 = vmatmul.bf16.gmra.mxu0 %v1836
    %v2073 = vpop.f32.mrf.mxu0
    %v2074 = vadd.f32 %v1968, %v2073
    %v2075 = vpop.f32.mrf.mxu0
    %2076 = vdwg.mxu0
    %2077 = vmatpush.bf16.msra.mxu0 %v2047
    %2078 = vmatpush.bf16.msra.mxu0 %v2045
    %2079 = vmatpush.bf16.msra.mxu0 %v2043
    %2080 = vmatpush.bf16.msra.mxu0 %v2041
    %2081 = vmatpush.bf16.msra.mxu0 %v2039
    %2082 = vmatpush.bf16.msra.mxu0 %v2037
    %2083 = vmatpush.bf16.msra.mxu0 %v2035
    %2084 = vmatpush.bf16.msra.mxu0 %v2033
    %2085 = vmatmul.bf16.gmra.mxu0 %v1836
    %v2086 = vpop.f32.mrf.mxu0
    %v2087 = vadd.f32 %v1981, %v2086
    %v2088 = vpop.f32.mrf.mxu0
    %2089 = vdwg.mxu0
    %v2090 = vrot.slane %v1834, 1
    %2092 = vset.pattern.permute.xlu0 0
    %2093 = vperm.xlu0 %2092, %v708
    %v2094 = vpop.permute.xlu0 %2093
    %v2096 = vmul.f32 %v2090, %v2094
    %v2097 = vpack.c.bf16 %v2096, %v2096
    %s2098 = scalar_lea.vmem %s35, 256
    %v2099 = vld [vmem:[%s2098] sm:$0xff]
    %v2100 = vld [vmem:[%s2098 + $0x8] sm:$0xff]
    %v2101 = vld [vmem:[%s2098 + $0x10] sm:$0xff]
    %v2102 = vld [vmem:[%s2098 + $0x18] sm:$0xff]
    %v2103 = vld [vmem:[%s2098 + $0x20] sm:$0xff]
    %v2104 = vld [vmem:[%s2098 + $0x28] sm:$0xff]
    %v2105 = vld [vmem:[%s2098 + $0x30] sm:$0xff]
    %v2106 = vld [vmem:[%s2098 + $0x38] sm:$0xff]
    %v2107 = vld [vmem:[%s2098 + $0x40] sm:$0xff]
    %v2108 = vld [vmem:[%s2098 + $0x48] sm:$0xff]
    %v2109 = vld [vmem:[%s2098 + $0x50] sm:$0xff]
    %v2110 = vld [vmem:[%s2098 + $0x58] sm:$0xff]
    %v2111 = vld [vmem:[%s2098 + $0x60] sm:$0xff]
    %v2112 = vld [vmem:[%s2098 + $0x68] sm:$0xff]
    %v2113 = vld [vmem:[%s2098 + $0x70] sm:$0xff]
    %v2114 = vld [vmem:[%s2098 + $0x78] sm:$0xff]
    %v2131 = vunpack.c.l.b16 %v2099
    %v2132 = vunpack.c.h.b16 %v2099
    %v2133 = vunpack.c.l.b16 %v2100
    %v2134 = vunpack.c.h.b16 %v2100
    %v2135 = vunpack.c.l.b16 %v2101
    %v2136 = vunpack.c.h.b16 %v2101
    %v2137 = vunpack.c.l.b16 %v2102
    %v2138 = vunpack.c.h.b16 %v2102
    %v2139 = vunpack.c.l.b16 %v2103
    %v2140 = vunpack.c.h.b16 %v2103
    %v2141 = vunpack.c.l.b16 %v2104
    %v2142 = vunpack.c.h.b16 %v2104
    %v2143 = vunpack.c.l.b16 %v2105
    %v2144 = vunpack.c.h.b16 %v2105
    %v2145 = vunpack.c.l.b16 %v2106
    %v2146 = vunpack.c.h.b16 %v2106
    %v2147 = vunpack.c.l.b16 %v2107
    %v2148 = vunpack.c.h.b16 %v2107
    %v2149 = vunpack.c.l.b16 %v2108
    %v2150 = vunpack.c.h.b16 %v2108
    %v2151 = vunpack.c.l.b16 %v2109
    %v2152 = vunpack.c.h.b16 %v2109
    %v2153 = vunpack.c.l.b16 %v2110
    %v2154 = vunpack.c.h.b16 %v2110
    %v2155 = vunpack.c.l.b16 %v2111
    %v2156 = vunpack.c.h.b16 %v2111
    %v2157 = vunpack.c.l.b16 %v2112
    %v2158 = vunpack.c.h.b16 %v2112
    %v2159 = vunpack.c.l.b16 %v2113
    %v2160 = vunpack.c.h.b16 %v2113
    %v2161 = vunpack.c.l.b16 %v2114
    %v2162 = vunpack.c.h.b16 %v2114
    %v2163 = vpack.c.b16 %v2133, %v2131
    %v2164 = vpack.c.b16 %v2134, %v2132
    %v2165 = vpack.c.b16 %v2137, %v2135
    %v2166 = vpack.c.b16 %v2138, %v2136
    %v2167 = vpack.c.b16 %v2141, %v2139
    %v2168 = vpack.c.b16 %v2142, %v2140
    %v2169 = vpack.c.b16 %v2145, %v2143
    %v2170 = vpack.c.b16 %v2146, %v2144
    %v2171 = vpack.c.b16 %v2149, %v2147
    %v2172 = vpack.c.b16 %v2150, %v2148
    %v2173 = vpack.c.b16 %v2153, %v2151
    %v2174 = vpack.c.b16 %v2154, %v2152
    %v2175 = vpack.c.b16 %v2157, %v2155
    %v2176 = vpack.c.b16 %v2158, %v2156
    %v2177 = vpack.c.b16 %v2161, %v2159
    %v2178 = vpack.c.b16 %v2162, %v2160
    %2195 = vmatpush.bf16.msra.mxu0 %v2177
    %2196 = vmatpush.bf16.msra.mxu0 %v2175
    %2197 = vmatpush.bf16.msra.mxu0 %v2173
    %2198 = vmatpush.bf16.msra.mxu0 %v2171
    %2199 = vmatpush.bf16.msra.mxu0 %v2169
    %2200 = vmatpush.bf16.msra.mxu0 %v2167
    %2201 = vmatpush.bf16.msra.mxu0 %v2165
    %2202 = vmatpush.bf16.msra.mxu0 %v2163
    %2203 = vmatmul.bf16.gmra.mxu0 %v2097
    %v2204 = vpop.f32.mrf.mxu0
    %v2205 = vadd.f32 0.0, %v2204
    %v2206 = vpop.f32.mrf.mxu0
    %2207 = vdwg.mxu0
    %2208 = vmatpush.bf16.msra.mxu0 %v2178
    %2209 = vmatpush.bf16.msra.mxu0 %v2176
    %2210 = vmatpush.bf16.msra.mxu0 %v2174
    %2211 = vmatpush.bf16.msra.mxu0 %v2172
    %2212 = vmatpush.bf16.msra.mxu0 %v2170
    %2213 = vmatpush.bf16.msra.mxu0 %v2168
    %2214 = vmatpush.bf16.msra.mxu0 %v2166
    %2215 = vmatpush.bf16.msra.mxu0 %v2164
    %2216 = vmatmul.bf16.gmra.mxu0 %v2097
    %v2217 = vpop.f32.mrf.mxu0
    %v2218 = vadd.f32 0.0, %v2217
    %v2219 = vpop.f32.mrf.mxu0
    %2220 = vdwg.mxu0
    %v2221 = vadd.f32 %v2074, %v2205
    %v2222 = vadd.f32 %v2087, %v2218
    %v2223 = vld [vmem:[%s33] sm:$0x3]
    %v2225 = vperm.slane %v2223, 0
    %v2226 = vperm.slane %v2223, 1
    %v2229 = vadd.f32 %v2221, %v2225
    %v2230 = vadd.f32 %v2222, %v2226
    %v2231 = vmax.f32 %v2229, 0.0
    %v2232 = vmax.f32 %v2230, 0.0
    %v2233 = vpack.c.bf16 %v2231, %v2231
    %v2234 = vpack.c.bf16 %v2232, %v2232
    %s2235 = scalar_lea.vmem [#allocation8], 128
    %v2236 = vld [vmem:[%s2235] sm:$0xf]
    %v2237 = vld [vmem:[%s2235 + $0x4] sm:$0xf]
    %v2238 = vld [vmem:[%s2235 + $0x8] sm:$0xf]
    %v2239 = vld [vmem:[%s2235 + $0xc] sm:$0xf]
    %v2240 = vld [vmem:[%s2235 + $0x10] sm:$0xf]
    %v2241 = vld [vmem:[%s2235 + $0x14] sm:$0xf]
    %v2242 = vld [vmem:[%s2235 + $0x18] sm:$0xf]
    %v2243 = vld [vmem:[%s2235 + $0x1c] sm:$0xf]
    %v2244 = vld [vmem:[%s2235 + $0x20] sm:$0xf]
    %v2245 = vld [vmem:[%s2235 + $0x24] sm:$0xf]
    %v2246 = vld [vmem:[%s2235 + $0x28] sm:$0xf]
    %v2247 = vld [vmem:[%s2235 + $0x2c] sm:$0xf]
    %v2248 = vld [vmem:[%s2235 + $0x30] sm:$0xf]
    %v2249 = vld [vmem:[%s2235 + $0x34] sm:$0xf]
    %v2250 = vld [vmem:[%s2235 + $0x38] sm:$0xf]
    %v2251 = vld [vmem:[%s2235 + $0x3c] sm:$0xf]
    %v2252 = vld [vmem:[%s2235 + $0x40] sm:$0xf]
    %v2253 = vld [vmem:[%s2235 + $0x44] sm:$0xf]
    %v2254 = vld [vmem:[%s2235 + $0x48] sm:$0xf]
    %v2255 = vld [vmem:[%s2235 + $0x4c] sm:$0xf]
    %v2256 = vld [vmem:[%s2235 + $0x50] sm:$0xf]
    %v2257 = vld [vmem:[%s2235 + $0x54] sm:$0xf]
    %v2258 = vld [vmem:[%s2235 + $0x58] sm:$0xf]
    %v2259 = vld [vmem:[%s2235 + $0x5c] sm:$0xf]
    %v2260 = vld [vmem:[%s2235 + $0x60] sm:$0xf]
    %v2261 = vld [vmem:[%s2235 + $0x64] sm:$0xf]
    %v2262 = vld [vmem:[%s2235 + $0x68] sm:$0xf]
    %v2263 = vld [vmem:[%s2235 + $0x6c] sm:$0xf]
    %v2264 = vld [vmem:[%s2235 + $0x70] sm:$0xf]
    %v2265 = vld [vmem:[%s2235 + $0x74] sm:$0xf]
    %v2266 = vld [vmem:[%s2235 + $0x78] sm:$0xf]
    %v2267 = vld [vmem:[%s2235 + $0x7c] sm:$0xf]
    %v2268 = vrot.slane %v2231, 7
    %v2269 = vrot.slane %v2232, 7
    %v2270 = vmul.f32 %v2268, %v1858
    %v2271 = vmul.f32 %v2269, %v1858
    %v2272 = vpack.c.bf16 %v2270, %v2270
    %v2273 = vpack.c.bf16 %v2271, %v2271
    %v2274 = vld [vmem:[#allocation8] sm:$0xf]
    %v2275 = vld [vmem:[#allocation8 + $0x4] sm:$0xf]
    %v2276 = vld [vmem:[#allocation8 + $0x8] sm:$0xf]
    %v2277 = vld [vmem:[#allocation8 + $0xc] sm:$0xf]
    %v2278 = vld [vmem:[#allocation8 + $0x10] sm:$0xf]
    %v2279 = vld [vmem:[#allocation8 + $0x14] sm:$0xf]
    %v2280 = vld [vmem:[#allocation8 + $0x18] sm:$0xf]
    %v2281 = vld [vmem:[#allocation8 + $0x1c] sm:$0xf]
    %v2282 = vld [vmem:[#allocation8 + $0x20] sm:$0xf]
    %v2283 = vld [vmem:[#allocation8 + $0x24] sm:$0xf]
    %v2284 = vld [vmem:[#allocation8 + $0x28] sm:$0xf]
    %v2285 = vld [vmem:[#allocation8 + $0x2c] sm:$0xf]
    %v2286 = vld [vmem:[#allocation8 + $0x30] sm:$0xf]
    %v2287 = vld [vmem:[#allocation8 + $0x34] sm:$0xf]
    %v2288 = vld [vmem:[#allocation8 + $0x38] sm:$0xf]
    %v2289 = vld [vmem:[#allocation8 + $0x3c] sm:$0xf]
    %v2290 = vld [vmem:[#allocation8 + $0x40] sm:$0xf]
    %v2291 = vld [vmem:[#allocation8 + $0x44] sm:$0xf]
    %v2292 = vld [vmem:[#allocation8 + $0x48] sm:$0xf]
    %v2293 = vld [vmem:[#allocation8 + $0x4c] sm:$0xf]
    %v2294 = vld [vmem:[#allocation8 + $0x50] sm:$0xf]
    %v2295 = vld [vmem:[#allocation8 + $0x54] sm:$0xf]
    %v2296 = vld [vmem:[#allocation8 + $0x58] sm:$0xf]
    %v2297 = vld [vmem:[#allocation8 + $0x5c] sm:$0xf]
    %v2298 = vld [vmem:[#allocation8 + $0x60] sm:$0xf]
    %v2299 = vld [vmem:[#allocation8 + $0x64] sm:$0xf]
    %v2300 = vld [vmem:[#allocation8 + $0x68] sm:$0xf]
    %v2301 = vld [vmem:[#allocation8 + $0x6c] sm:$0xf]
    %v2302 = vld [vmem:[#allocation8 + $0x70] sm:$0xf]
    %v2303 = vld [vmem:[#allocation8 + $0x74] sm:$0xf]
    %v2304 = vld [vmem:[#allocation8 + $0x78] sm:$0xf]
    %v2305 = vld [vmem:[#allocation8 + $0x7c] sm:$0xf]
    %v2338 = vunpack.c.l.b16 %v2274
    %v2339 = vunpack.c.l.b16 %v2275
    %v2340 = vunpack.c.l.b16 %v2276
    %v2341 = vunpack.c.l.b16 %v2277
    %v2342 = vunpack.c.l.b16 %v2278
    %v2343 = vunpack.c.l.b16 %v2279
    %v2344 = vunpack.c.l.b16 %v2280
    %v2345 = vunpack.c.l.b16 %v2281
    %v2346 = vunpack.c.l.b16 %v2282
    %v2347 = vunpack.c.l.b16 %v2283
    %v2348 = vunpack.c.l.b16 %v2284
    %v2349 = vunpack.c.l.b16 %v2285
    %v2350 = vunpack.c.l.b16 %v2286
    %v2351 = vunpack.c.l.b16 %v2287
    %v2352 = vunpack.c.l.b16 %v2288
    %v2353 = vunpack.c.l.b16 %v2289
    %v2354 = vunpack.c.l.b16 %v2290
    %v2355 = vunpack.c.l.b16 %v2291
    %v2356 = vunpack.c.l.b16 %v2292
    %v2357 = vunpack.c.l.b16 %v2293
    %v2358 = vunpack.c.l.b16 %v2294
    %v2359 = vunpack.c.l.b16 %v2295
    %v2360 = vunpack.c.l.b16 %v2296
    %v2361 = vunpack.c.l.b16 %v2297
    %v2362 = vunpack.c.l.b16 %v2298
    %v2363 = vunpack.c.l.b16 %v2299
    %v2364 = vunpack.c.l.b16 %v2300
    %v2365 = vunpack.c.l.b16 %v2301
    %v2366 = vunpack.c.l.b16 %v2302
    %v2367 = vunpack.c.l.b16 %v2303
    %v2368 = vunpack.c.l.b16 %v2304
    %v2369 = vunpack.c.l.b16 %v2305
    %v2370 = vpack.c.b16 %v2339, %v2338
    %v2371 = vpack.c.b16 %v2341, %v2340
    %v2372 = vpack.c.b16 %v2343, %v2342
    %v2373 = vpack.c.b16 %v2345, %v2344
    %v2374 = vpack.c.b16 %v2347, %v2346
    %v2375 = vpack.c.b16 %v2349, %v2348
    %v2376 = vpack.c.b16 %v2351, %v2350
    %v2377 = vpack.c.b16 %v2353, %v2352
    %v2378 = vpack.c.b16 %v2355, %v2354
    %v2379 = vpack.c.b16 %v2357, %v2356
    %v2380 = vpack.c.b16 %v2359, %v2358
    %v2381 = vpack.c.b16 %v2361, %v2360
    %v2382 = vpack.c.b16 %v2363, %v2362
    %v2383 = vpack.c.b16 %v2365, %v2364
    %v2384 = vpack.c.b16 %v2367, %v2366
    %v2385 = vpack.c.b16 %v2369, %v2368
    %2402 = vmatpush.bf16.msra.mxu0 %v2377
    %2403 = vmatpush.bf16.msra.mxu0 %v2376
    %2404 = vmatpush.bf16.msra.mxu0 %v2375
    %2405 = vmatpush.bf16.msra.mxu0 %v2374
    %2406 = vmatpush.bf16.msra.mxu0 %v2373
    %2407 = vmatpush.bf16.msra.mxu0 %v2372
    %2408 = vmatpush.bf16.msra.mxu0 %v2371
    %2409 = vmatpush.bf16.msra.mxu0 %v2370
    %2410 = vmatmul.bf16.gmra.mxu0 %v2272
    %v2411 = vpop.f32.mrf.mxu0
    %v2412 = vadd.f32 0.0, %v2411
    %v2413 = vpop.f32.mrf.mxu0
    %2414 = vdwg.mxu0
    %2415 = vmatpush.bf16.msra.mxu0 %v2385
    %2416 = vmatpush.bf16.msra.mxu0 %v2384
    %2417 = vmatpush.bf16.msra.mxu0 %v2383
    %2418 = vmatpush.bf16.msra.mxu0 %v2382
    %2419 = vmatpush.bf16.msra.mxu0 %v2381
    %2420 = vmatpush.bf16.msra.mxu0 %v2380
    %2421 = vmatpush.bf16.msra.mxu0 %v2379
    %2422 = vmatpush.bf16.msra.mxu0 %v2378
    %2423 = vmatmul.bf16.gmra.mxu0 %v2273
    %v2424 = vpop.f32.mrf.mxu0
    %v2425 = vadd.f32 %v2412, %v2424
    %v2426 = vpop.f32.mrf.mxu0
    %2427 = vdwg.mxu0
    %v2460 = vunpack.c.l.b16 %v2236
    %v2461 = vunpack.c.l.b16 %v2237
    %v2462 = vunpack.c.l.b16 %v2238
    %v2463 = vunpack.c.l.b16 %v2239
    %v2464 = vunpack.c.l.b16 %v2240
    %v2465 = vunpack.c.l.b16 %v2241
    %v2466 = vunpack.c.l.b16 %v2242
    %v2467 = vunpack.c.l.b16 %v2243
    %v2468 = vunpack.c.l.b16 %v2244
    %v2469 = vunpack.c.l.b16 %v2245
    %v2470 = vunpack.c.l.b16 %v2246
    %v2471 = vunpack.c.l.b16 %v2247
    %v2472 = vunpack.c.l.b16 %v2248
    %v2473 = vunpack.c.l.b16 %v2249
    %v2474 = vunpack.c.l.b16 %v2250
    %v2475 = vunpack.c.l.b16 %v2251
    %v2476 = vunpack.c.l.b16 %v2252
    %v2477 = vunpack.c.l.b16 %v2253
    %v2478 = vunpack.c.l.b16 %v2254
    %v2479 = vunpack.c.l.b16 %v2255
    %v2480 = vunpack.c.l.b16 %v2256
    %v2481 = vunpack.c.l.b16 %v2257
    %v2482 = vunpack.c.l.b16 %v2258
    %v2483 = vunpack.c.l.b16 %v2259
    %v2484 = vunpack.c.l.b16 %v2260
    %v2485 = vunpack.c.l.b16 %v2261
    %v2486 = vunpack.c.l.b16 %v2262
    %v2487 = vunpack.c.l.b16 %v2263
    %v2488 = vunpack.c.l.b16 %v2264
    %v2489 = vunpack.c.l.b16 %v2265
    %v2490 = vunpack.c.l.b16 %v2266
    %v2491 = vunpack.c.l.b16 %v2267
    %v2492 = vpack.c.b16 %v2461, %v2460
    %v2493 = vpack.c.b16 %v2463, %v2462
    %v2494 = vpack.c.b16 %v2465, %v2464
    %v2495 = vpack.c.b16 %v2467, %v2466
    %v2496 = vpack.c.b16 %v2469, %v2468
    %v2497 = vpack.c.b16 %v2471, %v2470
    %v2498 = vpack.c.b16 %v2473, %v2472
    %v2499 = vpack.c.b16 %v2475, %v2474
    %v2500 = vpack.c.b16 %v2477, %v2476
    %v2501 = vpack.c.b16 %v2479, %v2478
    %v2502 = vpack.c.b16 %v2481, %v2480
    %v2503 = vpack.c.b16 %v2483, %v2482
    %v2504 = vpack.c.b16 %v2485, %v2484
    %v2505 = vpack.c.b16 %v2487, %v2486
    %v2506 = vpack.c.b16 %v2489, %v2488
    %v2507 = vpack.c.b16 %v2491, %v2490
    %2524 = vmatpush.bf16.msra.mxu0 %v2499
    %2525 = vmatpush.bf16.msra.mxu0 %v2498
    %2526 = vmatpush.bf16.msra.mxu0 %v2497
    %2527 = vmatpush.bf16.msra.mxu0 %v2496
    %2528 = vmatpush.bf16.msra.mxu0 %v2495
    %2529 = vmatpush.bf16.msra.mxu0 %v2494
    %2530 = vmatpush.bf16.msra.mxu0 %v2493
    %2531 = vmatpush.bf16.msra.mxu0 %v2492
    %2532 = vmatmul.bf16.gmra.mxu0 %v2233
    %v2533 = vpop.f32.mrf.mxu0
    %v2534 = vadd.f32 %v2425, %v2533
    %v2535 = vpop.f32.mrf.mxu0
    %2536 = vdwg.mxu0
    %2537 = vmatpush.bf16.msra.mxu0 %v2507
    %2538 = vmatpush.bf16.msra.mxu0 %v2506
    %2539 = vmatpush.bf16.msra.mxu0 %v2505
    %2540 = vmatpush.bf16.msra.mxu0 %v2504
    %2541 = vmatpush.bf16.msra.mxu0 %v2503
    %2542 = vmatpush.bf16.msra.mxu0 %v2502
    %2543 = vmatpush.bf16.msra.mxu0 %v2501
    %2544 = vmatpush.bf16.msra.mxu0 %v2500
    %2545 = vmatmul.bf16.gmra.mxu0 %v2234
    %v2546 = vpop.f32.mrf.mxu0
    %v2547 = vadd.f32 %v2534, %v2546
    %v2548 = vpop.f32.mrf.mxu0
    %2549 = vdwg.mxu0
    %v2550 = vrot.slane %v2231, 1
    %v2551 = vrot.slane %v2232, 1
    %v2552 = vmul.f32 %v2550, %v2094
    %v2553 = vmul.f32 %v2551, %v2094
    %v2554 = vpack.c.bf16 %v2552, %v2552
    %v2555 = vpack.c.bf16 %v2553, %v2553
    %s2556 = scalar_lea.vmem [#allocation8], 256
    %v2557 = vld [vmem:[%s2556] sm:$0xf]
    %v2558 = vld [vmem:[%s2556 + $0x4] sm:$0xf]
    %v2559 = vld [vmem:[%s2556 + $0x8] sm:$0xf]
    %v2560 = vld [vmem:[%s2556 + $0xc] sm:$0xf]
    %v2561 = vld [vmem:[%s2556 + $0x10] sm:$0xf]
    %v2562 = vld [vmem:[%s2556 + $0x14] sm:$0xf]
    %v2563 = vld [vmem:[%s2556 + $0x18] sm:$0xf]
    %v2564 = vld [vmem:[%s2556 + $0x1c] sm:$0xf]
    %v2565 = vld [vmem:[%s2556 + $0x20] sm:$0xf]
    %v2566 = vld [vmem:[%s2556 + $0x24] sm:$0xf]
    %v2567 = vld [vmem:[%s2556 + $0x28] sm:$0xf]
    %v2568 = vld [vmem:[%s2556 + $0x2c] sm:$0xf]
    %v2569 = vld [vmem:[%s2556 + $0x30] sm:$0xf]
    %v2570 = vld [vmem:[%s2556 + $0x34] sm:$0xf]
    %v2571 = vld [vmem:[%s2556 + $0x38] sm:$0xf]
    %v2572 = vld [vmem:[%s2556 + $0x3c] sm:$0xf]
    %v2573 = vld [vmem:[%s2556 + $0x40] sm:$0xf]
    %v2574 = vld [vmem:[%s2556 + $0x44] sm:$0xf]
    %v2575 = vld [vmem:[%s2556 + $0x48] sm:$0xf]
    %v2576 = vld [vmem:[%s2556 + $0x4c] sm:$0xf]
    %v2577 = vld [vmem:[%s2556 + $0x50] sm:$0xf]
    %v2578 = vld [vmem:[%s2556 + $0x54] sm:$0xf]
    %v2579 = vld [vmem:[%s2556 + $0x58] sm:$0xf]
    %v2580 = vld [vmem:[%s2556 + $0x5c] sm:$0xf]
    %v2581 = vld [vmem:[%s2556 + $0x60] sm:$0xf]
    %v2582 = vld [vmem:[%s2556 + $0x64] sm:$0xf]
    %v2583 = vld [vmem:[%s2556 + $0x68] sm:$0xf]
    %v2584 = vld [vmem:[%s2556 + $0x6c] sm:$0xf]
    %v2585 = vld [vmem:[%s2556 + $0x70] sm:$0xf]
    %v2586 = vld [vmem:[%s2556 + $0x74] sm:$0xf]
    %v2587 = vld [vmem:[%s2556 + $0x78] sm:$0xf]
    %v2588 = vld [vmem:[%s2556 + $0x7c] sm:$0xf]
    %v2621 = vunpack.c.l.b16 %v2557
    %v2622 = vunpack.c.l.b16 %v2558
    %v2623 = vunpack.c.l.b16 %v2559
    %v2624 = vunpack.c.l.b16 %v2560
    %v2625 = vunpack.c.l.b16 %v2561
    %v2626 = vunpack.c.l.b16 %v2562
    %v2627 = vunpack.c.l.b16 %v2563
    %v2628 = vunpack.c.l.b16 %v2564
    %v2629 = vunpack.c.l.b16 %v2565
    %v2630 = vunpack.c.l.b16 %v2566
    %v2631 = vunpack.c.l.b16 %v2567
    %v2632 = vunpack.c.l.b16 %v2568
    %v2633 = vunpack.c.l.b16 %v2569
    %v2634 = vunpack.c.l.b16 %v2570
    %v2635 = vunpack.c.l.b16 %v2571
    %v2636 = vunpack.c.l.b16 %v2572
    %v2637 = vunpack.c.l.b16 %v2573
    %v2638 = vunpack.c.l.b16 %v2574
    %v2639 = vunpack.c.l.b16 %v2575
    %v2640 = vunpack.c.l.b16 %v2576
    %v2641 = vunpack.c.l.b16 %v2577
    %v2642 = vunpack.c.l.b16 %v2578
    %v2643 = vunpack.c.l.b16 %v2579
    %v2644 = vunpack.c.l.b16 %v2580
    %v2645 = vunpack.c.l.b16 %v2581
    %v2646 = vunpack.c.l.b16 %v2582
    %v2647 = vunpack.c.l.b16 %v2583
    %v2648 = vunpack.c.l.b16 %v2584
    %v2649 = vunpack.c.l.b16 %v2585
    %v2650 = vunpack.c.l.b16 %v2586
    %v2651 = vunpack.c.l.b16 %v2587
    %v2652 = vunpack.c.l.b16 %v2588
    %v2653 = vpack.c.b16 %v2622, %v2621
    %v2654 = vpack.c.b16 %v2624, %v2623
    %v2655 = vpack.c.b16 %v2626, %v2625
    %v2656 = vpack.c.b16 %v2628, %v2627
    %v2657 = vpack.c.b16 %v2630, %v2629
    %v2658 = vpack.c.b16 %v2632, %v2631
    %v2659 = vpack.c.b16 %v2634, %v2633
    %v2660 = vpack.c.b16 %v2636, %v2635
    %v2661 = vpack.c.b16 %v2638, %v2637
    %v2662 = vpack.c.b16 %v2640, %v2639
    %v2663 = vpack.c.b16 %v2642, %v2641
    %v2664 = vpack.c.b16 %v2644, %v2643
    %v2665 = vpack.c.b16 %v2646, %v2645
    %v2666 = vpack.c.b16 %v2648, %v2647
    %v2667 = vpack.c.b16 %v2650, %v2649
    %v2668 = vpack.c.b16 %v2652, %v2651
    %2685 = vmatpush.bf16.msra.mxu0 %v2660
    %2686 = vmatpush.bf16.msra.mxu0 %v2659
    %2687 = vmatpush.bf16.msra.mxu0 %v2658
    %2688 = vmatpush.bf16.msra.mxu0 %v2657
    %2689 = vmatpush.bf16.msra.mxu0 %v2656
    %2690 = vmatpush.bf16.msra.mxu0 %v2655
    %2691 = vmatpush.bf16.msra.mxu0 %v2654
    %2692 = vmatpush.bf16.msra.mxu0 %v2653
    %2693 = vmatmul.bf16.gmra.mxu0 %v2554
    %v2694 = vpop.f32.mrf.mxu0
    %v2695 = vadd.f32 0.0, %v2694
    %v2696 = vpop.f32.mrf.mxu0
    %2697 = vdwg.mxu0
    %2698 = vmatpush.bf16.msra.mxu0 %v2668
    %2699 = vmatpush.bf16.msra.mxu0 %v2667
    %2700 = vmatpush.bf16.msra.mxu0 %v2666
    %2701 = vmatpush.bf16.msra.mxu0 %v2665
    %2702 = vmatpush.bf16.msra.mxu0 %v2664
    %2703 = vmatpush.bf16.msra.mxu0 %v2663
    %2704 = vmatpush.bf16.msra.mxu0 %v2662
    %2705 = vmatpush.bf16.msra.mxu0 %v2661
    %2706 = vmatmul.bf16.gmra.mxu0 %v2555
    %v2707 = vpop.f32.mrf.mxu0
    %v2708 = vadd.f32 %v2695, %v2707
    %v2709 = vpop.f32.mrf.mxu0
    %2710 = vdwg.mxu0
    %v2711 = vadd.f32 %v2547, %v2708
    %v2712 = vld [vmem:[%s37] sm:$0x1]
    %v2714 = vperm.slane %v2712, 0
    %v2716 = vadd.f32 %v2711, %v2714
    %v2717 = vmax.f32 %v2716, 0.0
    %v2718 = vsel %vm1835, 0.0, %v2717
    %v2719 = vsel %vm1835, %v2717, 0.0
    %vm2720 = vcmask 64512
    %v2722 = vsel %vm2720, %v742, 0
    %v2725 = vsel %vm2720, %v743, 0
    %2727 = vmatpush.msra.mxu0 0.0
    %2728 = vmatpush.msra.mxu0 0.0
    %2729 = vmatpush.msra.mxu0 0.0
    %2730 = vmatpush.msra.mxu0 0.0
    %2731 = vmatpush.msra.mxu0 0.0
    %2732 = vmatpush.msra.mxu0 0.0
    %2733 = vmatpush.msra.mxu0 0.0
    %2734 = vmatpush.msra.mxu0 0.0
    %2735 = vmatpush.msra.mxu0 0.0
    %2736 = vmatpush.msra.mxu0 0.0
    %2737 = vmatpush.msra.mxu0 0.0
    %2738 = vmatpush.msra.mxu0 0.0
    %2739 = vmatpush.msra.mxu0 0.0
    %2740 = vmatpush.msra.mxu0 0.0
    %2741 = vmatpush.msra.mxu0 0.0
    %2742 = vmatpush.msra.mxu0 %v2719
    %2743 = vmatmul.f32.gmra.mxu0 %v2722
    %v2744 = vpop.f32.mrf.mxu0
    %v2745 = vadd.f32 0.0, %v2744
    %2746 = vmatmul.f32.gmra.mxu0 %v2725
    %v2747 = vpop.f32.mrf.mxu0
    %v2748 = vadd.f32 0.0, %v2747
    %2749 = vdwg.mxu0
    %v2751 = vsel %vm2720, %v733, 0
    %v2754 = vsel %vm2720, %v734, 0
    %2756 = vmatpush.msra.mxu0 0.0
    %2757 = vmatpush.msra.mxu0 0.0
    %2758 = vmatpush.msra.mxu0 0.0
    %2759 = vmatpush.msra.mxu0 0.0
    %2760 = vmatpush.msra.mxu0 0.0
    %2761 = vmatpush.msra.mxu0 0.0
    %2762 = vmatpush.msra.mxu0 0.0
    %2763 = vmatpush.msra.mxu0 0.0
    %2764 = vmatpush.msra.mxu0 0.0
    %2765 = vmatpush.msra.mxu0 0.0
    %2766 = vmatpush.msra.mxu0 0.0
    %2767 = vmatpush.msra.mxu0 0.0
    %2768 = vmatpush.msra.mxu0 0.0
    %2769 = vmatpush.msra.mxu0 0.0
    %2770 = vmatpush.msra.mxu0 0.0
    %2771 = vmatpush.msra.mxu0 %v2718
    %2772 = vmatmul.f32.gmra.mxu0 %v2751
    %v2773 = vpop.f32.mrf.mxu0
    %v2774 = vadd.f32 %v2745, %v2773
    %2775 = vmatmul.f32.gmra.mxu0 %v2754
    %v2776 = vpop.f32.mrf.mxu0
    %v2777 = vadd.f32 %v2748, %v2776
    %2778 = vdwg.mxu0
    %v2779 = vadd.f32 %v1787, %v2774
    %v2780 = vadd.f32 %v1788, %v2777
    %v2781 = vpack.c.bf16 %v2780, %v2779
    %s2782 = scalar_lea.vmem [#allocation12], 64
    %v2783 = vld [vmem:[%s2782] sm:$0xf]
    %v2784 = vld [vmem:[%s2782 + $0x4] sm:$0xf]
    %v2785 = vld [vmem:[%s2782 + $0x8] sm:$0xf]
    %v2786 = vld [vmem:[%s2782 + $0xc] sm:$0xf]
    %v2787 = vld [vmem:[%s2782 + $0x10] sm:$0xf]
    %v2788 = vld [vmem:[%s2782 + $0x14] sm:$0xf]
    %v2789 = vld [vmem:[%s2782 + $0x18] sm:$0xf]
    %v2790 = vld [vmem:[%s2782 + $0x1c] sm:$0xf]
    %v2791 = vld [vmem:[%s2782 + $0x20] sm:$0xf]
    %v2792 = vld [vmem:[%s2782 + $0x24] sm:$0xf]
    %v2793 = vld [vmem:[%s2782 + $0x28] sm:$0xf]
    %v2794 = vld [vmem:[%s2782 + $0x2c] sm:$0xf]
    %v2795 = vld [vmem:[%s2782 + $0x30] sm:$0xf]
    %v2796 = vld [vmem:[%s2782 + $0x34] sm:$0xf]
    %v2797 = vld [vmem:[%s2782 + $0x38] sm:$0xf]
    %v2798 = vld [vmem:[%s2782 + $0x3c] sm:$0xf]
    %v2799 = vrot.slane %v2779, 7
    %v2800 = vrot.slane %v2780, 7
    %v2801 = vsel %vm805, %v2799, %v2800
    %v2802 = vsel %vm805, %v2800, %v2799
    %v2803 = vmul.f32 %v2802, %v1351
    %v2804 = vmul.f32 %v2801, %v1356
    %v2805 = vpack.c.bf16 %v2804, %v2803
    %v2806 = vld [vmem:[#allocation12] sm:$0xf]
    %v2807 = vld [vmem:[#allocation12 + $0x4] sm:$0xf]
    %v2808 = vld [vmem:[#allocation12 + $0x8] sm:$0xf]
    %v2809 = vld [vmem:[#allocation12 + $0xc] sm:$0xf]
    %v2810 = vld [vmem:[#allocation12 + $0x10] sm:$0xf]
    %v2811 = vld [vmem:[#allocation12 + $0x14] sm:$0xf]
    %v2812 = vld [vmem:[#allocation12 + $0x18] sm:$0xf]
    %v2813 = vld [vmem:[#allocation12 + $0x1c] sm:$0xf]
    %v2814 = vld [vmem:[#allocation12 + $0x20] sm:$0xf]
    %v2815 = vld [vmem:[#allocation12 + $0x24] sm:$0xf]
    %v2816 = vld [vmem:[#allocation12 + $0x28] sm:$0xf]
    %v2817 = vld [vmem:[#allocation12 + $0x2c] sm:$0xf]
    %v2818 = vld [vmem:[#allocation12 + $0x30] sm:$0xf]
    %v2819 = vld [vmem:[#allocation12 + $0x34] sm:$0xf]
    %v2820 = vld [vmem:[#allocation12 + $0x38] sm:$0xf]
    %v2821 = vld [vmem:[#allocation12 + $0x3c] sm:$0xf]
    %v2838 = vunpack.c.l.b16 %v2806
    %v2839 = vunpack.c.l.b16 %v2807
    %v2840 = vunpack.c.l.b16 %v2808
    %v2841 = vunpack.c.l.b16 %v2809
    %v2842 = vunpack.c.l.b16 %v2810
    %v2843 = vunpack.c.l.b16 %v2811
    %v2844 = vunpack.c.l.b16 %v2812
    %v2845 = vunpack.c.l.b16 %v2813
    %v2846 = vunpack.c.l.b16 %v2814
    %v2847 = vunpack.c.l.b16 %v2815
    %v2848 = vunpack.c.l.b16 %v2816
    %v2849 = vunpack.c.l.b16 %v2817
    %v2850 = vunpack.c.l.b16 %v2818
    %v2851 = vunpack.c.l.b16 %v2819
    %v2852 = vunpack.c.l.b16 %v2820
    %v2853 = vunpack.c.l.b16 %v2821
    %v2854 = vpack.c.b16 %v2839, %v2838
    %v2855 = vpack.c.b16 %v2841, %v2840
    %v2856 = vpack.c.b16 %v2843, %v2842
    %v2857 = vpack.c.b16 %v2845, %v2844
    %v2858 = vpack.c.b16 %v2847, %v2846
    %v2859 = vpack.c.b16 %v2849, %v2848
    %v2860 = vpack.c.b16 %v2851, %v2850
    %v2861 = vpack.c.b16 %v2853, %v2852
    %2870 = vmatpush.bf16.msra.mxu0 %v2861
    %2871 = vmatpush.bf16.msra.mxu0 %v2860
    %2872 = vmatpush.bf16.msra.mxu0 %v2859
    %2873 = vmatpush.bf16.msra.mxu0 %v2858
    %2874 = vmatpush.bf16.msra.mxu0 %v2857
    %2875 = vmatpush.bf16.msra.mxu0 %v2856
    %2876 = vmatpush.bf16.msra.mxu0 %v2855
    %2877 = vmatpush.bf16.msra.mxu0 %v2854
    %2878 = vmatmul.bf16.gmra.mxu0 %v2805
    %v2879 = vpop.f32.mrf.mxu0
    %v2880 = vadd.f32 0.0, %v2879
    %v2881 = vpop.f32.mrf.mxu0
    %v2882 = vadd.f32 0.0, %v2881
    %2883 = vdwg.mxu0
    %v2900 = vunpack.c.l.b16 %v2783
    %v2901 = vunpack.c.l.b16 %v2784
    %v2902 = vunpack.c.l.b16 %v2785
    %v2903 = vunpack.c.l.b16 %v2786
    %v2904 = vunpack.c.l.b16 %v2787
    %v2905 = vunpack.c.l.b16 %v2788
    %v2906 = vunpack.c.l.b16 %v2789
    %v2907 = vunpack.c.l.b16 %v2790
    %v2908 = vunpack.c.l.b16 %v2791
    %v2909 = vunpack.c.l.b16 %v2792
    %v2910 = vunpack.c.l.b16 %v2793
    %v2911 = vunpack.c.l.b16 %v2794
    %v2912 = vunpack.c.l.b16 %v2795
    %v2913 = vunpack.c.l.b16 %v2796
    %v2914 = vunpack.c.l.b16 %v2797
    %v2915 = vunpack.c.l.b16 %v2798
    %v2916 = vpack.c.b16 %v2901, %v2900
    %v2917 = vpack.c.b16 %v2903, %v2902
    %v2918 = vpack.c.b16 %v2905, %v2904
    %v2919 = vpack.c.b16 %v2907, %v2906
    %v2920 = vpack.c.b16 %v2909, %v2908
    %v2921 = vpack.c.b16 %v2911, %v2910
    %v2922 = vpack.c.b16 %v2913, %v2912
    %v2923 = vpack.c.b16 %v2915, %v2914
    %2932 = vmatpush.bf16.msra.mxu0 %v2923
    %2933 = vmatpush.bf16.msra.mxu0 %v2922
    %2934 = vmatpush.bf16.msra.mxu0 %v2921
    %2935 = vmatpush.bf16.msra.mxu0 %v2920
    %2936 = vmatpush.bf16.msra.mxu0 %v2919
    %2937 = vmatpush.bf16.msra.mxu0 %v2918
    %2938 = vmatpush.bf16.msra.mxu0 %v2917
    %2939 = vmatpush.bf16.msra.mxu0 %v2916
    %2940 = vmatmul.bf16.gmra.mxu0 %v2781
    %v2941 = vpop.f32.mrf.mxu0
    %v2942 = vadd.f32 %v2880, %v2941
    %v2943 = vpop.f32.mrf.mxu0
    %v2944 = vadd.f32 %v2882, %v2943
    %2945 = vdwg.mxu0
    %v2946 = vrot.slane %v2779, 1
    %v2947 = vrot.slane %v2780, 1
    %v2948 = vsel %vm947, %v2946, %v2947
    %v2949 = vsel %vm947, %v2947, %v2946
    %v2950 = vmul.f32 %v2948, %v1458
    %v2951 = vmul.f32 %v2949, %v1463
    %v2952 = vpack.c.bf16 %v2951, %v2950
    %s2953 = scalar_lea.vmem [#allocation12], 128
    %v2954 = vld [vmem:[%s2953] sm:$0xf]
    %v2955 = vld [vmem:[%s2953 + $0x4] sm:$0xf]
    %v2956 = vld [vmem:[%s2953 + $0x8] sm:$0xf]
    %v2957 = vld [vmem:[%s2953 + $0xc] sm:$0xf]
    %v2958 = vld [vmem:[%s2953 + $0x10] sm:$0xf]
    %v2959 = vld [vmem:[%s2953 + $0x14] sm:$0xf]
    %v2960 = vld [vmem:[%s2953 + $0x18] sm:$0xf]
    %v2961 = vld [vmem:[%s2953 + $0x1c] sm:$0xf]
    %v2962 = vld [vmem:[%s2953 + $0x20] sm:$0xf]
    %v2963 = vld [vmem:[%s2953 + $0x24] sm:$0xf]
    %v2964 = vld [vmem:[%s2953 + $0x28] sm:$0xf]
    %v2965 = vld [vmem:[%s2953 + $0x2c] sm:$0xf]
    %v2966 = vld [vmem:[%s2953 + $0x30] sm:$0xf]
    %v2967 = vld [vmem:[%s2953 + $0x34] sm:$0xf]
    %v2968 = vld [vmem:[%s2953 + $0x38] sm:$0xf]
    %v2969 = vld [vmem:[%s2953 + $0x3c] sm:$0xf]
    %v2986 = vunpack.c.l.b16 %v2954
    %v2987 = vunpack.c.l.b16 %v2955
    %v2988 = vunpack.c.l.b16 %v2956
    %v2989 = vunpack.c.l.b16 %v2957
    %v2990 = vunpack.c.l.b16 %v2958
    %v2991 = vunpack.c.l.b16 %v2959
    %v2992 = vunpack.c.l.b16 %v2960
    %v2993 = vunpack.c.l.b16 %v2961
    %v2994 = vunpack.c.l.b16 %v2962
    %v2995 = vunpack.c.l.b16 %v2963
    %v2996 = vunpack.c.l.b16 %v2964
    %v2997 = vunpack.c.l.b16 %v2965
    %v2998 = vunpack.c.l.b16 %v2966
    %v2999 = vunpack.c.l.b16 %v2967
    %v3000 = vunpack.c.l.b16 %v2968
    %v3001 = vunpack.c.l.b16 %v2969
    %v3002 = vpack.c.b16 %v2987, %v2986
    %v3003 = vpack.c.b16 %v2989, %v2988
    %v3004 = vpack.c.b16 %v2991, %v2990
    %v3005 = vpack.c.b16 %v2993, %v2992
    %v3006 = vpack.c.b16 %v2995, %v2994
    %v3007 = vpack.c.b16 %v2997, %v2996
    %v3008 = vpack.c.b16 %v2999, %v2998
    %v3009 = vpack.c.b16 %v3001, %v3000
    %3018 = vmatpush.bf16.msra.mxu0 %v3009
    %3019 = vmatpush.bf16.msra.mxu0 %v3008
    %3020 = vmatpush.bf16.msra.mxu0 %v3007
    %3021 = vmatpush.bf16.msra.mxu0 %v3006
    %3022 = vmatpush.bf16.msra.mxu0 %v3005
    %3023 = vmatpush.bf16.msra.mxu0 %v3004
    %3024 = vmatpush.bf16.msra.mxu0 %v3003
    %3025 = vmatpush.bf16.msra.mxu0 %v3002
    %3026 = vmatmul.bf16.gmra.mxu0 %v2952
    %v3027 = vpop.f32.mrf.mxu0
    %v3028 = vadd.f32 0.0, %v3027
    %v3029 = vpop.f32.mrf.mxu0
    %v3030 = vadd.f32 0.0, %v3029
    %3031 = vdwg.mxu0
    %v3032 = vadd.f32 %v2942, %v3028
    %v3033 = vadd.f32 %v2944, %v3030
    %v3034 = vld [vmem:[%s49] sm:$0x1]
    %v3036 = vperm.slane %v3034, 0
    %v3038 = vadd.f32 %v3032, %v3036
    %v3039 = vadd.f32 %v3033, %v3036
    %v3040 = vmax.f32 %v3038, 0.0
    %v3041 = vmax.f32 %v3039, 0.0
    %v3042 = vpack.c.bf16 %v3041, %v3040
    %s3043 = scalar_lea.vmem %s55, 64
    %v3044 = vld [vmem:[%s3043] sm:$0xf]
    %v3045 = vld [vmem:[%s3043 + $0x4] sm:$0xf]
    %v3046 = vld [vmem:[%s3043 + $0x8] sm:$0xf]
    %v3047 = vld [vmem:[%s3043 + $0xc] sm:$0xf]
    %v3048 = vld [vmem:[%s3043 + $0x10] sm:$0xf]
    %v3049 = vld [vmem:[%s3043 + $0x14] sm:$0xf]
    %v3050 = vld [vmem:[%s3043 + $0x18] sm:$0xf]
    %v3051 = vld [vmem:[%s3043 + $0x1c] sm:$0xf]
    %v3052 = vld [vmem:[%s3043 + $0x20] sm:$0xf]
    %v3053 = vld [vmem:[%s3043 + $0x24] sm:$0xf]
    %v3054 = vld [vmem:[%s3043 + $0x28] sm:$0xf]
    %v3055 = vld [vmem:[%s3043 + $0x2c] sm:$0xf]
    %v3056 = vld [vmem:[%s3043 + $0x30] sm:$0xf]
    %v3057 = vld [vmem:[%s3043 + $0x34] sm:$0xf]
    %v3058 = vld [vmem:[%s3043 + $0x38] sm:$0xf]
    %v3059 = vld [vmem:[%s3043 + $0x3c] sm:$0xf]
    %v3060 = vrot.slane %v3040, 7
    %v3061 = vrot.slane %v3041, 7
    %v3062 = vsel %vm805, %v3060, %v3061
    %v3063 = vsel %vm805, %v3061, %v3060
    %v3064 = vmul.f32 %v3063, %v1351
    %v3065 = vmul.f32 %v3062, %v1356
    %v3066 = vpack.c.bf16 %v3065, %v3064
    %v3067 = vld [vmem:[%s55] sm:$0xf]
    %v3068 = vld [vmem:[%s55 + $0x4] sm:$0xf]
    %v3069 = vld [vmem:[%s55 + $0x8] sm:$0xf]
    %v3070 = vld [vmem:[%s55 + $0xc] sm:$0xf]
    %v3071 = vld [vmem:[%s55 + $0x10] sm:$0xf]
    %v3072 = vld [vmem:[%s55 + $0x14] sm:$0xf]
    %v3073 = vld [vmem:[%s55 + $0x18] sm:$0xf]
    %v3074 = vld [vmem:[%s55 + $0x1c] sm:$0xf]
    %v3075 = vld [vmem:[%s55 + $0x20] sm:$0xf]
    %v3076 = vld [vmem:[%s55 + $0x24] sm:$0xf]
    %v3077 = vld [vmem:[%s55 + $0x28] sm:$0xf]
    %v3078 = vld [vmem:[%s55 + $0x2c] sm:$0xf]
    %v3079 = vld [vmem:[%s55 + $0x30] sm:$0xf]
    %v3080 = vld [vmem:[%s55 + $0x34] sm:$0xf]
    %v3081 = vld [vmem:[%s55 + $0x38] sm:$0xf]
    %v3082 = vld [vmem:[%s55 + $0x3c] sm:$0xf]
    %v3099 = vunpack.c.l.b16 %v3067
    %v3100 = vunpack.c.l.b16 %v3068
    %v3101 = vunpack.c.l.b16 %v3069
    %v3102 = vunpack.c.l.b16 %v3070
    %v3103 = vunpack.c.l.b16 %v3071
    %v3104 = vunpack.c.l.b16 %v3072
    %v3105 = vunpack.c.l.b16 %v3073
    %v3106 = vunpack.c.l.b16 %v3074
    %v3107 = vunpack.c.l.b16 %v3075
    %v3108 = vunpack.c.l.b16 %v3076
    %v3109 = vunpack.c.l.b16 %v3077
    %v3110 = vunpack.c.l.b16 %v3078
    %v3111 = vunpack.c.l.b16 %v3079
    %v3112 = vunpack.c.l.b16 %v3080
    %v3113 = vunpack.c.l.b16 %v3081
    %v3114 = vunpack.c.l.b16 %v3082
    %v3115 = vpack.c.b16 %v3100, %v3099
    %v3116 = vpack.c.b16 %v3102, %v3101
    %v3117 = vpack.c.b16 %v3104, %v3103
    %v3118 = vpack.c.b16 %v3106, %v3105
    %v3119 = vpack.c.b16 %v3108, %v3107
    %v3120 = vpack.c.b16 %v3110, %v3109
    %v3121 = vpack.c.b16 %v3112, %v3111
    %v3122 = vpack.c.b16 %v3114, %v3113
    %3131 = vmatpush.bf16.msra.mxu0 %v3122
    %3132 = vmatpush.bf16.msra.mxu0 %v3121
    %3133 = vmatpush.bf16.msra.mxu0 %v3120
    %3134 = vmatpush.bf16.msra.mxu0 %v3119
    %3135 = vmatpush.bf16.msra.mxu0 %v3118
    %3136 = vmatpush.bf16.msra.mxu0 %v3117
    %3137 = vmatpush.bf16.msra.mxu0 %v3116
    %3138 = vmatpush.bf16.msra.mxu0 %v3115
    %3139 = vmatmul.bf16.gmra.mxu0 %v3066
    %v3140 = vpop.f32.mrf.mxu0
    %v3141 = vadd.f32 0.0, %v3140
    %v3142 = vpop.f32.mrf.mxu0
    %v3143 = vadd.f32 0.0, %v3142
    %3144 = vdwg.mxu0
    %v3161 = vunpack.c.l.b16 %v3044
    %v3162 = vunpack.c.l.b16 %v3045
    %v3163 = vunpack.c.l.b16 %v3046
    %v3164 = vunpack.c.l.b16 %v3047
    %v3165 = vunpack.c.l.b16 %v3048
    %v3166 = vunpack.c.l.b16 %v3049
    %v3167 = vunpack.c.l.b16 %v3050
    %v3168 = vunpack.c.l.b16 %v3051
    %v3169 = vunpack.c.l.b16 %v3052
    %v3170 = vunpack.c.l.b16 %v3053
    %v3171 = vunpack.c.l.b16 %v3054
    %v3172 = vunpack.c.l.b16 %v3055
    %v3173 = vunpack.c.l.b16 %v3056
    %v3174 = vunpack.c.l.b16 %v3057
    %v3175 = vunpack.c.l.b16 %v3058
    %v3176 = vunpack.c.l.b16 %v3059
    %v3177 = vpack.c.b16 %v3162, %v3161
    %v3178 = vpack.c.b16 %v3164, %v3163
    %v3179 = vpack.c.b16 %v3166, %v3165
    %v3180 = vpack.c.b16 %v3168, %v3167
    %v3181 = vpack.c.b16 %v3170, %v3169
    %v3182 = vpack.c.b16 %v3172, %v3171
    %v3183 = vpack.c.b16 %v3174, %v3173
    %v3184 = vpack.c.b16 %v3176, %v3175
    %3193 = vmatpush.bf16.msra.mxu0 %v3184
    %3194 = vmatpush.bf16.msra.mxu0 %v3183
    %3195 = vmatpush.bf16.msra.mxu0 %v3182
    %3196 = vmatpush.bf16.msra.mxu0 %v3181
    %3197 = vmatpush.bf16.msra.mxu0 %v3180
    %3198 = vmatpush.bf16.msra.mxu0 %v3179
    %3199 = vmatpush.bf16.msra.mxu0 %v3178
    %3200 = vmatpush.bf16.msra.mxu0 %v3177
    %3201 = vmatmul.bf16.gmra.mxu0 %v3042
    %v3202 = vpop.f32.mrf.mxu0
    %v3203 = vadd.f32 %v3141, %v3202
    %v3204 = vpop.f32.mrf.mxu0
    %v3205 = vadd.f32 %v3143, %v3204
    %3206 = vdwg.mxu0
    %v3207 = vrot.slane %v3040, 1
    %v3208 = vrot.slane %v3041, 1
    %v3209 = vsel %vm947, %v3207, %v3208
    %v3210 = vsel %vm947, %v3208, %v3207
    %v3211 = vmul.f32 %v3209, %v1458
    %v3212 = vmul.f32 %v3210, %v1463
    %v3213 = vpack.c.bf16 %v3212, %v3211
    %s3214 = scalar_lea.vmem %s55, 128
    %v3215 = vld [vmem:[%s3214] sm:$0xf]
    %v3216 = vld [vmem:[%s3214 + $0x4] sm:$0xf]
    %v3217 = vld [vmem:[%s3214 + $0x8] sm:$0xf]
    %v3218 = vld [vmem:[%s3214 + $0xc] sm:$0xf]
    %v3219 = vld [vmem:[%s3214 + $0x10] sm:$0xf]
    %v3220 = vld [vmem:[%s3214 + $0x14] sm:$0xf]
    %v3221 = vld [vmem:[%s3214 + $0x18] sm:$0xf]
    %v3222 = vld [vmem:[%s3214 + $0x1c] sm:$0xf]
    %v3223 = vld [vmem:[%s3214 + $0x20] sm:$0xf]
    %v3224 = vld [vmem:[%s3214 + $0x24] sm:$0xf]
    %v3225 = vld [vmem:[%s3214 + $0x28] sm:$0xf]
    %v3226 = vld [vmem:[%s3214 + $0x2c] sm:$0xf]
    %v3227 = vld [vmem:[%s3214 + $0x30] sm:$0xf]
    %v3228 = vld [vmem:[%s3214 + $0x34] sm:$0xf]
    %v3229 = vld [vmem:[%s3214 + $0x38] sm:$0xf]
    %v3230 = vld [vmem:[%s3214 + $0x3c] sm:$0xf]
    %v3247 = vunpack.c.l.b16 %v3215
    %v3248 = vunpack.c.l.b16 %v3216
    %v3249 = vunpack.c.l.b16 %v3217
    %v3250 = vunpack.c.l.b16 %v3218
    %v3251 = vunpack.c.l.b16 %v3219
    %v3252 = vunpack.c.l.b16 %v3220
    %v3253 = vunpack.c.l.b16 %v3221
    %v3254 = vunpack.c.l.b16 %v3222
    %v3255 = vunpack.c.l.b16 %v3223
    %v3256 = vunpack.c.l.b16 %v3224
    %v3257 = vunpack.c.l.b16 %v3225
    %v3258 = vunpack.c.l.b16 %v3226
    %v3259 = vunpack.c.l.b16 %v3227
    %v3260 = vunpack.c.l.b16 %v3228
    %v3261 = vunpack.c.l.b16 %v3229
    %v3262 = vunpack.c.l.b16 %v3230
    %v3263 = vpack.c.b16 %v3248, %v3247
    %v3264 = vpack.c.b16 %v3250, %v3249
    %v3265 = vpack.c.b16 %v3252, %v3251
    %v3266 = vpack.c.b16 %v3254, %v3253
    %v3267 = vpack.c.b16 %v3256, %v3255
    %v3268 = vpack.c.b16 %v3258, %v3257
    %v3269 = vpack.c.b16 %v3260, %v3259
    %v3270 = vpack.c.b16 %v3262, %v3261
    %3279 = vmatpush.bf16.msra.mxu0 %v3270
    %3280 = vmatpush.bf16.msra.mxu0 %v3269
    %3281 = vmatpush.bf16.msra.mxu0 %v3268
    %3282 = vmatpush.bf16.msra.mxu0 %v3267
    %3283 = vmatpush.bf16.msra.mxu0 %v3266
    %3284 = vmatpush.bf16.msra.mxu0 %v3265
    %3285 = vmatpush.bf16.msra.mxu0 %v3264
    %3286 = vmatpush.bf16.msra.mxu0 %v3263
    %3287 = vmatmul.bf16.gmra.mxu0 %v3213
    %v3288 = vpop.f32.mrf.mxu0
    %v3289 = vadd.f32 0.0, %v3288
    %v3290 = vpop.f32.mrf.mxu0
    %v3291 = vadd.f32 0.0, %v3290
    %3292 = vdwg.mxu0
    %v3293 = vadd.f32 %v3203, %v3289
    %v3294 = vadd.f32 %v3205, %v3291
    %v3295 = vld [vmem:[%s53] sm:$0x1]
    %v3297 = vperm.slane %v3295, 0
    %v3299 = vadd.f32 %v3293, %v3297
    %v3300 = vadd.f32 %v3294, %v3297
    %v3301 = vmax.f32 %v3299, 0.0
    %v3302 = vmax.f32 %v3300, 0.0
    %v3303 = vsel %vm1332, 0.0, %v3301
    %v3304 = vsel %vm1333, 0.0, %v3302
    %v3305 = vsel %vm1332, %v3301, 0.0
    %v3306 = vsel %vm1333, %v3302, 0.0
    %v3307 = vsel %vm1789, %v742, 0
    %v3309 = vsel %vm1789, %v743, 0
    %v3312 = vsel %vm1789, %v744, 0
    %v3315 = vsel %vm1789, %v745, 0
    %3317 = vmatpush.msra.mxu0 0.0
    %3318 = vmatpush.msra.mxu0 0.0
    %3319 = vmatpush.msra.mxu0 0.0
    %3320 = vmatpush.msra.mxu0 0.0
    %3321 = vmatpush.msra.mxu0 0.0
    %3322 = vmatpush.msra.mxu0 0.0
    %3323 = vmatpush.msra.mxu0 0.0
    %3324 = vmatpush.msra.mxu0 0.0
    %3325 = vmatpush.msra.mxu0 0.0
    %3326 = vmatpush.msra.mxu0 0.0
    %3327 = vmatpush.msra.mxu0 0.0
    %3328 = vmatpush.msra.mxu0 0.0
    %3329 = vmatpush.msra.mxu0 0.0
    %3330 = vmatpush.msra.mxu0 0.0
    %3331 = vmatpush.msra.mxu0 %v3306
    %3332 = vmatpush.msra.mxu0 %v3305
    %3333 = vmatmul.f32.gmra.mxu0 %v3307
    %v3334 = vpop.f32.mrf.mxu0
    %v3335 = vadd.f32 0.0, %v3334
    %3336 = vmatmul.f32.gmra.mxu0 %v3309
    %v3337 = vpop.f32.mrf.mxu0
    %v3338 = vadd.f32 0.0, %v3337
    %3339 = vmatmul.f32.gmra.mxu0 %v3312
    %v3340 = vpop.f32.mrf.mxu0
    %v3341 = vadd.f32 0.0, %v3340
    %3342 = vmatmul.f32.gmra.mxu0 %v3315
    %v3343 = vpop.f32.mrf.mxu0
    %v3344 = vadd.f32 0.0, %v3343
    %3345 = vdwg.mxu0
    %v3346 = vsel %vm1789, %v733, 0
    %v3348 = vsel %vm1789, %v734, 0
    %v3351 = vsel %vm1789, %v735, 0
    %v3354 = vsel %vm1789, %v736, 0
    %3356 = vmatpush.msra.mxu0 0.0
    %3357 = vmatpush.msra.mxu0 0.0
    %3358 = vmatpush.msra.mxu0 0.0
    %3359 = vmatpush.msra.mxu0 0.0
    %3360 = vmatpush.msra.mxu0 0.0
    %3361 = vmatpush.msra.mxu0 0.0
    %3362 = vmatpush.msra.mxu0 0.0
    %3363 = vmatpush.msra.mxu0 0.0
    %3364 = vmatpush.msra.mxu0 0.0
    %3365 = vmatpush.msra.mxu0 0.0
    %3366 = vmatpush.msra.mxu0 0.0
    %3367 = vmatpush.msra.mxu0 0.0
    %3368 = vmatpush.msra.mxu0 0.0
    %3369 = vmatpush.msra.mxu0 0.0
    %3370 = vmatpush.msra.mxu0 %v3304
    %3371 = vmatpush.msra.mxu0 %v3303
    %3372 = vmatmul.f32.gmra.mxu0 %v3346
    %v3373 = vpop.f32.mrf.mxu0
    %v3374 = vadd.f32 %v3335, %v3373
    %3375 = vmatmul.f32.gmra.mxu0 %v3348
    %v3376 = vpop.f32.mrf.mxu0
    %v3377 = vadd.f32 %v3338, %v3376
    %3378 = vmatmul.f32.gmra.mxu0 %v3351
    %v3379 = vpop.f32.mrf.mxu0
    %v3380 = vadd.f32 %v3341, %v3379
    %3381 = vmatmul.f32.gmra.mxu0 %v3354
    %v3382 = vpop.f32.mrf.mxu0
    %v3383 = vadd.f32 %v3344, %v3382
    %3384 = vdwg.mxu0
    %v3385 = vadd.f32 %v1267, %v3374
    %v3386 = vadd.f32 %v1268, %v3377
    %v3387 = vadd.f32 %v1269, %v3380
    %v3388 = vadd.f32 %v1270, %v3383
    %v3389 = vpack.c.bf16 %v3386, %v3385
    %v3390 = vpack.c.bf16 %v3388, %v3387
    %s3391 = scalar_lea.vmem [#allocation9], 32
    %v3392 = vld [vmem:[%s3391] sm:$0xf]
    %v3393 = vld [vmem:[%s3391 + $0x4] sm:$0xf]
    %v3394 = vld [vmem:[%s3391 + $0x8] sm:$0xf]
    %v3395 = vld [vmem:[%s3391 + $0xc] sm:$0xf]
    %v3396 = vld [vmem:[%s3391 + $0x10] sm:$0xf]
    %v3397 = vld [vmem:[%s3391 + $0x14] sm:$0xf]
    %v3398 = vld [vmem:[%s3391 + $0x18] sm:$0xf]
    %v3399 = vld [vmem:[%s3391 + $0x1c] sm:$0xf]
    %v3400 = vrot.slane %v3385, 7
    %v3401 = vrot.slane %v3386, 7
    %v3402 = vrot.slane %v3387, 7
    %v3403 = vrot.slane %v3388, 7
    %v3404 = vsel %vm805, %v3402, %v3403
    %v3405 = vsel %vm805, %v3401, %v3402
    %v3406 = vsel %vm805, %v3400, %v3401
    %v3407 = vsel %vm805, %v3403, %v3400
    %v3408 = vmul.f32 %v3407, %v813
    %v3409 = vmul.f32 %v3406, %v818
    %v3410 = vmul.f32 %v3405, %v823
    %v3411 = vmul.f32 %v3404, %v828
    %v3412 = vpack.c.bf16 %v3409, %v3408
    %v3413 = vpack.c.bf16 %v3411, %v3410
    %v3414 = vld [vmem:[#allocation9] sm:$0xf]
    %v3415 = vld [vmem:[#allocation9 + $0x4] sm:$0xf]
    %v3416 = vld [vmem:[#allocation9 + $0x8] sm:$0xf]
    %v3417 = vld [vmem:[#allocation9 + $0xc] sm:$0xf]
    %v3418 = vld [vmem:[#allocation9 + $0x10] sm:$0xf]
    %v3419 = vld [vmem:[#allocation9 + $0x14] sm:$0xf]
    %v3420 = vld [vmem:[#allocation9 + $0x18] sm:$0xf]
    %v3421 = vld [vmem:[#allocation9 + $0x1c] sm:$0xf]
    %v3430 = vunpack.c.l.b16 %v3414
    %v3431 = vunpack.c.l.b16 %v3415
    %v3432 = vunpack.c.l.b16 %v3416
    %v3433 = vunpack.c.l.b16 %v3417
    %v3434 = vunpack.c.l.b16 %v3418
    %v3435 = vunpack.c.l.b16 %v3419
    %v3436 = vunpack.c.l.b16 %v3420
    %v3437 = vunpack.c.l.b16 %v3421
    %v3438 = vpack.c.b16 %v3431, %v3430
    %v3439 = vpack.c.b16 %v3433, %v3432
    %v3440 = vpack.c.b16 %v3435, %v3434
    %v3441 = vpack.c.b16 %v3437, %v3436
    %v3447 = vsel %vm868, %v3412, 0
    %v3450 = vsel %vm868, %v3413, 0
    %3452 = vmatpush.bf16.msra.mxu0 0
    %3453 = vmatpush.bf16.msra.mxu0 0
    %3454 = vmatpush.bf16.msra.mxu0 0
    %3455 = vmatpush.bf16.msra.mxu0 0
    %3456 = vmatpush.bf16.msra.mxu0 %v3441
    %3457 = vmatpush.bf16.msra.mxu0 %v3440
    %3458 = vmatpush.bf16.msra.mxu0 %v3439
    %3459 = vmatpush.bf16.msra.mxu0 %v3438
    %3460 = vmatmul.bf16.gmra.mxu0 %v3447
    %v3461 = vpop.f32.mrf.mxu0
    %v3462 = vadd.f32 0.0, %v3461
    %v3463 = vpop.f32.mrf.mxu0
    %v3464 = vadd.f32 0.0, %v3463
    %3465 = vmatmul.bf16.gmra.mxu0 %v3450
    %v3466 = vpop.f32.mrf.mxu0
    %v3467 = vadd.f32 0.0, %v3466
    %v3468 = vpop.f32.mrf.mxu0
    %v3469 = vadd.f32 0.0, %v3468
    %3470 = vdwg.mxu0
    %v3479 = vunpack.c.l.b16 %v3392
    %v3480 = vunpack.c.l.b16 %v3393
    %v3481 = vunpack.c.l.b16 %v3394
    %v3482 = vunpack.c.l.b16 %v3395
    %v3483 = vunpack.c.l.b16 %v3396
    %v3484 = vunpack.c.l.b16 %v3397
    %v3485 = vunpack.c.l.b16 %v3398
    %v3486 = vunpack.c.l.b16 %v3399
    %v3487 = vpack.c.b16 %v3480, %v3479
    %v3488 = vpack.c.b16 %v3482, %v3481
    %v3489 = vpack.c.b16 %v3484, %v3483
    %v3490 = vpack.c.b16 %v3486, %v3485
    %v3496 = vsel %vm868, %v3389, 0
    %v3499 = vsel %vm868, %v3390, 0
    %3501 = vmatpush.bf16.msra.mxu0 0
    %3502 = vmatpush.bf16.msra.mxu0 0
    %3503 = vmatpush.bf16.msra.mxu0 0
    %3504 = vmatpush.bf16.msra.mxu0 0
    %3505 = vmatpush.bf16.msra.mxu0 %v3490
    %3506 = vmatpush.bf16.msra.mxu0 %v3489
    %3507 = vmatpush.bf16.msra.mxu0 %v3488
    %3508 = vmatpush.bf16.msra.mxu0 %v3487
    %3509 = vmatmul.bf16.gmra.mxu0 %v3496
    %v3510 = vpop.f32.mrf.mxu0
    %v3511 = vadd.f32 %v3462, %v3510
    %v3512 = vpop.f32.mrf.mxu0
    %v3513 = vadd.f32 %v3464, %v3512
    %3514 = vmatmul.bf16.gmra.mxu0 %v3499
    %v3515 = vpop.f32.mrf.mxu0
    %v3516 = vadd.f32 %v3467, %v3515
    %v3517 = vpop.f32.mrf.mxu0
    %v3518 = vadd.f32 %v3469, %v3517
    %3519 = vdwg.mxu0
    %v3520 = vrot.slane %v3385, 1
    %v3521 = vrot.slane %v3386, 1
    %v3522 = vrot.slane %v3387, 1
    %v3523 = vrot.slane %v3388, 1
    %v3524 = vsel %vm947, %v3522, %v3523
    %v3525 = vsel %vm947, %v3521, %v3522
    %v3526 = vsel %vm947, %v3520, %v3521
    %v3527 = vsel %vm947, %v3523, %v3520
    %v3528 = vmul.f32 %v3526, %v955
    %v3529 = vmul.f32 %v3525, %v960
    %v3530 = vmul.f32 %v3524, %v965
    %v3531 = vmul.f32 %v3527, %v970
    %v3532 = vpack.c.bf16 %v3529, %v3528
    %v3533 = vpack.c.bf16 %v3531, %v3530
    %s3534 = scalar_lea.vmem [#allocation9], 64
    %v3535 = vld [vmem:[%s3534] sm:$0xf]
    %v3536 = vld [vmem:[%s3534 + $0x4] sm:$0xf]
    %v3537 = vld [vmem:[%s3534 + $0x8] sm:$0xf]
    %v3538 = vld [vmem:[%s3534 + $0xc] sm:$0xf]
    %v3539 = vld [vmem:[%s3534 + $0x10] sm:$0xf]
    %v3540 = vld [vmem:[%s3534 + $0x14] sm:$0xf]
    %v3541 = vld [vmem:[%s3534 + $0x18] sm:$0xf]
    %v3542 = vld [vmem:[%s3534 + $0x1c] sm:$0xf]
    %v3551 = vunpack.c.l.b16 %v3535
    %v3552 = vunpack.c.l.b16 %v3536
    %v3553 = vunpack.c.l.b16 %v3537
    %v3554 = vunpack.c.l.b16 %v3538
    %v3555 = vunpack.c.l.b16 %v3539
    %v3556 = vunpack.c.l.b16 %v3540
    %v3557 = vunpack.c.l.b16 %v3541
    %v3558 = vunpack.c.l.b16 %v3542
    %v3559 = vpack.c.b16 %v3552, %v3551
    %v3560 = vpack.c.b16 %v3554, %v3553
    %v3561 = vpack.c.b16 %v3556, %v3555
    %v3562 = vpack.c.b16 %v3558, %v3557
    %v3568 = vsel %vm868, %v3532, 0
    %v3571 = vsel %vm868, %v3533, 0
    %3573 = vmatpush.bf16.msra.mxu0 0
    %3574 = vmatpush.bf16.msra.mxu0 0
    %3575 = vmatpush.bf16.msra.mxu0 0
    %3576 = vmatpush.bf16.msra.mxu0 0
    %3577 = vmatpush.bf16.msra.mxu0 %v3562
    %3578 = vmatpush.bf16.msra.mxu0 %v3561
    %3579 = vmatpush.bf16.msra.mxu0 %v3560
    %3580 = vmatpush.bf16.msra.mxu0 %v3559
    %3581 = vmatmul.bf16.gmra.mxu0 %v3568
    %v3582 = vpop.f32.mrf.mxu0
    %v3583 = vadd.f32 0.0, %v3582
    %v3584 = vpop.f32.mrf.mxu0
    %v3585 = vadd.f32 0.0, %v3584
    %3586 = vmatmul.bf16.gmra.mxu0 %v3571
    %v3587 = vpop.f32.mrf.mxu0
    %v3588 = vadd.f32 0.0, %v3587
    %v3589 = vpop.f32.mrf.mxu0
    %v3590 = vadd.f32 0.0, %v3589
    %3591 = vdwg.mxu0
    %v3592 = vadd.f32 %v3511, %v3583
    %v3593 = vadd.f32 %v3513, %v3585
    %v3594 = vadd.f32 %v3516, %v3588
    %v3595 = vadd.f32 %v3518, %v3590
    %v3596 = vld [vmem:[%s41] sm:$0x1]
    %v3598 = vperm.slane %v3596, 0
    %v3600 = vadd.f32 %v3592, %v3598
    %v3601 = vadd.f32 %v3593, %v3598
    %v3602 = vadd.f32 %v3594, %v3598
    %v3603 = vadd.f32 %v3595, %v3598
    %v3604 = vmax.f32 %v3600, 0.0
    %v3605 = vmax.f32 %v3601, 0.0
    %v3606 = vmax.f32 %v3602, 0.0
    %v3607 = vmax.f32 %v3603, 0.0
    %v3608 = vpack.c.bf16 %v3605, %v3604
    %v3609 = vpack.c.bf16 %v3607, %v3606
    %s3610 = scalar_lea.vmem [#allocation11], 32
    %v3611 = vld [vmem:[%s3610] sm:$0xf]
    %v3612 = vld [vmem:[%s3610 + $0x4] sm:$0xf]
    %v3613 = vld [vmem:[%s3610 + $0x8] sm:$0xf]
    %v3614 = vld [vmem:[%s3610 + $0xc] sm:$0xf]
    %v3615 = vld [vmem:[%s3610 + $0x10] sm:$0xf]
    %v3616 = vld [vmem:[%s3610 + $0x14] sm:$0xf]
    %v3617 = vld [vmem:[%s3610 + $0x18] sm:$0xf]
    %v3618 = vld [vmem:[%s3610 + $0x1c] sm:$0xf]
    %v3619 = vrot.slane %v3604, 7
    %v3620 = vrot.slane %v3605, 7
    %v3621 = vrot.slane %v3606, 7
    %v3622 = vrot.slane %v3607, 7
    %v3623 = vsel %vm805, %v3621, %v3622
    %v3624 = vsel %vm805, %v3620, %v3621
    %v3625 = vsel %vm805, %v3619, %v3620
    %v3626 = vsel %vm805, %v3622, %v3619
    %v3627 = vmul.f32 %v3626, %v813
    %v3628 = vmul.f32 %v3625, %v818
    %v3629 = vmul.f32 %v3624, %v823
    %v3630 = vmul.f32 %v3623, %v828
    %v3631 = vpack.c.bf16 %v3628, %v3627
    %v3632 = vpack.c.bf16 %v3630, %v3629
    %v3633 = vld [vmem:[#allocation11] sm:$0xf]
    %v3634 = vld [vmem:[#allocation11 + $0x4] sm:$0xf]
    %v3635 = vld [vmem:[#allocation11 + $0x8] sm:$0xf]
    %v3636 = vld [vmem:[#allocation11 + $0xc] sm:$0xf]
    %v3637 = vld [vmem:[#allocation11 + $0x10] sm:$0xf]
    %v3638 = vld [vmem:[#allocation11 + $0x14] sm:$0xf]
    %v3639 = vld [vmem:[#allocation11 + $0x18] sm:$0xf]
    %v3640 = vld [vmem:[#allocation11 + $0x1c] sm:$0xf]
    %v3649 = vunpack.c.l.b16 %v3633
    %v3650 = vunpack.c.l.b16 %v3634
    %v3651 = vunpack.c.l.b16 %v3635
    %v3652 = vunpack.c.l.b16 %v3636
    %v3653 = vunpack.c.l.b16 %v3637
    %v3654 = vunpack.c.l.b16 %v3638
    %v3655 = vunpack.c.l.b16 %v3639
    %v3656 = vunpack.c.l.b16 %v3640
    %v3657 = vpack.c.b16 %v3650, %v3649
    %v3658 = vpack.c.b16 %v3652, %v3651
    %v3659 = vpack.c.b16 %v3654, %v3653
    %v3660 = vpack.c.b16 %v3656, %v3655
    %v3666 = vsel %vm868, %v3631, 0
    %v3669 = vsel %vm868, %v3632, 0
    %3671 = vmatpush.bf16.msra.mxu0 0
    %3672 = vmatpush.bf16.msra.mxu0 0
    %3673 = vmatpush.bf16.msra.mxu0 0
    %3674 = vmatpush.bf16.msra.mxu0 0
    %3675 = vmatpush.bf16.msra.mxu0 %v3660
    %3676 = vmatpush.bf16.msra.mxu0 %v3659
    %3677 = vmatpush.bf16.msra.mxu0 %v3658
    %3678 = vmatpush.bf16.msra.mxu0 %v3657
    %3679 = vmatmul.bf16.gmra.mxu0 %v3666
    %v3680 = vpop.f32.mrf.mxu0
    %v3681 = vadd.f32 0.0, %v3680
    %v3682 = vpop.f32.mrf.mxu0
    %v3683 = vadd.f32 0.0, %v3682
    %3684 = vmatmul.bf16.gmra.mxu0 %v3669
    %v3685 = vpop.f32.mrf.mxu0
    %v3686 = vadd.f32 0.0, %v3685
    %v3687 = vpop.f32.mrf.mxu0
    %v3688 = vadd.f32 0.0, %v3687
    %3689 = vdwg.mxu0
    %v3698 = vunpack.c.l.b16 %v3611
    %v3699 = vunpack.c.l.b16 %v3612
    %v3700 = vunpack.c.l.b16 %v3613
    %v3701 = vunpack.c.l.b16 %v3614
    %v3702 = vunpack.c.l.b16 %v3615
    %v3703 = vunpack.c.l.b16 %v3616
    %v3704 = vunpack.c.l.b16 %v3617
    %v3705 = vunpack.c.l.b16 %v3618
    %v3706 = vpack.c.b16 %v3699, %v3698
    %v3707 = vpack.c.b16 %v3701, %v3700
    %v3708 = vpack.c.b16 %v3703, %v3702
    %v3709 = vpack.c.b16 %v3705, %v3704
    %v3715 = vsel %vm868, %v3608, 0
    %v3718 = vsel %vm868, %v3609, 0
    %3720 = vmatpush.bf16.msra.mxu0 0
    %3721 = vmatpush.bf16.msra.mxu0 0
    %3722 = vmatpush.bf16.msra.mxu0 0
    %3723 = vmatpush.bf16.msra.mxu0 0
    %3724 = vmatpush.bf16.msra.mxu0 %v3709
    %3725 = vmatpush.bf16.msra.mxu0 %v3708
    %3726 = vmatpush.bf16.msra.mxu0 %v3707
    %3727 = vmatpush.bf16.msra.mxu0 %v3706
    %3728 = vmatmul.bf16.gmra.mxu0 %v3715
    %v3729 = vpop.f32.mrf.mxu0
    %v3730 = vadd.f32 %v3681, %v3729
    %v3731 = vpop.f32.mrf.mxu0
    %v3732 = vadd.f32 %v3683, %v3731
    %3733 = vmatmul.bf16.gmra.mxu0 %v3718
    %v3734 = vpop.f32.mrf.mxu0
    %v3735 = vadd.f32 %v3686, %v3734
    %v3736 = vpop.f32.mrf.mxu0
    %v3737 = vadd.f32 %v3688, %v3736
    %3738 = vdwg.mxu0
    %v3739 = vrot.slane %v3604, 1
    %v3740 = vrot.slane %v3605, 1
    %v3741 = vrot.slane %v3606, 1
    %v3742 = vrot.slane %v3607, 1
    %v3743 = vsel %vm947, %v3741, %v3742
    %v3744 = vsel %vm947, %v3740, %v3741
    %v3745 = vsel %vm947, %v3739, %v3740
    %v3746 = vsel %vm947, %v3742, %v3739
    %v3747 = vmul.f32 %v3745, %v955
    %v3748 = vmul.f32 %v3744, %v960
    %v3749 = vmul.f32 %v3743, %v965
    %v3750 = vmul.f32 %v3746, %v970
    %v3751 = vpack.c.bf16 %v3748, %v3747
    %v3752 = vpack.c.bf16 %v3750, %v3749
    %s3753 = scalar_lea.vmem [#allocation11], 64
    %v3754 = vld [vmem:[%s3753] sm:$0xf]
    %v3755 = vld [vmem:[%s3753 + $0x4] sm:$0xf]
    %v3756 = vld [vmem:[%s3753 + $0x8] sm:$0xf]
    %v3757 = vld [vmem:[%s3753 + $0xc] sm:$0xf]
    %v3758 = vld [vmem:[%s3753 + $0x10] sm:$0xf]
    %v3759 = vld [vmem:[%s3753 + $0x14] sm:$0xf]
    %v3760 = vld [vmem:[%s3753 + $0x18] sm:$0xf]
    %v3761 = vld [vmem:[%s3753 + $0x1c] sm:$0xf]
    %v3770 = vunpack.c.l.b16 %v3754
    %v3771 = vunpack.c.l.b16 %v3755
    %v3772 = vunpack.c.l.b16 %v3756
    %v3773 = vunpack.c.l.b16 %v3757
    %v3774 = vunpack.c.l.b16 %v3758
    %v3775 = vunpack.c.l.b16 %v3759
    %v3776 = vunpack.c.l.b16 %v3760
    %v3777 = vunpack.c.l.b16 %v3761
    %v3778 = vpack.c.b16 %v3771, %v3770
    %v3779 = vpack.c.b16 %v3773, %v3772
    %v3780 = vpack.c.b16 %v3775, %v3774
    %v3781 = vpack.c.b16 %v3777, %v3776
    %v3787 = vsel %vm868, %v3751, 0
    %v3790 = vsel %vm868, %v3752, 0
    %3792 = vmatpush.bf16.msra.mxu0 0
    %3793 = vmatpush.bf16.msra.mxu0 0
    %3794 = vmatpush.bf16.msra.mxu0 0
    %3795 = vmatpush.bf16.msra.mxu0 0
    %3796 = vmatpush.bf16.msra.mxu0 %v3781
    %3797 = vmatpush.bf16.msra.mxu0 %v3780
    %3798 = vmatpush.bf16.msra.mxu0 %v3779
    %3799 = vmatpush.bf16.msra.mxu0 %v3778
    %3800 = vmatmul.bf16.gmra.mxu0 %v3787
    %v3801 = vpop.f32.mrf.mxu0
    %v3802 = vadd.f32 0.0, %v3801
    %v3803 = vpop.f32.mrf.mxu0
    %v3804 = vadd.f32 0.0, %v3803
    %3805 = vmatmul.bf16.gmra.mxu0 %v3790
    %v3806 = vpop.f32.mrf.mxu0
    %v3807 = vadd.f32 0.0, %v3806
    %v3808 = vpop.f32.mrf.mxu0
    %v3809 = vadd.f32 0.0, %v3808
    %3810 = vdwg.mxu0
    %v3811 = vadd.f32 %v3730, %v3802
    %v3812 = vadd.f32 %v3732, %v3804
    %v3813 = vadd.f32 %v3735, %v3807
    %v3814 = vadd.f32 %v3737, %v3809
    %v3815 = vld [vmem:[%s45] sm:$0x1]
    %v3817 = vperm.slane %v3815, 0
    %v3819 = vadd.f32 %v3811, %v3817
    %v3820 = vadd.f32 %v3812, %v3817
    %v3821 = vadd.f32 %v3813, %v3817
    %v3822 = vadd.f32 %v3814, %v3817
    %v3823 = vmax.f32 %v3819, 0.0
    %v3824 = vmax.f32 %v3820, 0.0
    %v3825 = vmax.f32 %v3821, 0.0
    %v3826 = vmax.f32 %v3822, 0.0
    %v3827 = vpack.c.bf16 %v3824, %v3823
    %v3828 = vpack.c.bf16 %v3826, %v3825
    %s3829 = scalar_lea.vmem [#allocation14], 32
    %v3830 = vld [vmem:[%s3829] sm:$0xf]
    %v3831 = vld [vmem:[%s3829 + $0x4] sm:$0xf]
    %v3832 = vld [vmem:[%s3829 + $0x8] sm:$0xf]
    %v3833 = vld [vmem:[%s3829 + $0xc] sm:$0xf]
    %v3834 = vld [vmem:[%s3829 + $0x10] sm:$0xf]
    %v3835 = vld [vmem:[%s3829 + $0x14] sm:$0xf]
    %v3836 = vld [vmem:[%s3829 + $0x18] sm:$0xf]
    %v3837 = vld [vmem:[%s3829 + $0x1c] sm:$0xf]
    %v3838 = vrot.slane %v3823, 7
    %v3839 = vrot.slane %v3824, 7
    %v3840 = vrot.slane %v3825, 7
    %v3841 = vrot.slane %v3826, 7
    %v3842 = vsel %vm805, %v3840, %v3841
    %v3843 = vsel %vm805, %v3839, %v3840
    %v3844 = vsel %vm805, %v3838, %v3839
    %v3845 = vsel %vm805, %v3841, %v3838
    %v3846 = vmul.f32 %v3845, %v813
    %v3847 = vmul.f32 %v3844, %v818
    %v3848 = vmul.f32 %v3843, %v823
    %v3849 = vmul.f32 %v3842, %v828
    %v3850 = vpack.c.bf16 %v3847, %v3846
    %v3851 = vpack.c.bf16 %v3849, %v3848
    %v3852 = vld [vmem:[#allocation14] sm:$0xf]
    %v3853 = vld [vmem:[#allocation14 + $0x4] sm:$0xf]
    %v3854 = vld [vmem:[#allocation14 + $0x8] sm:$0xf]
    %v3855 = vld [vmem:[#allocation14 + $0xc] sm:$0xf]
    %v3856 = vld [vmem:[#allocation14 + $0x10] sm:$0xf]
    %v3857 = vld [vmem:[#allocation14 + $0x14] sm:$0xf]
    %v3858 = vld [vmem:[#allocation14 + $0x18] sm:$0xf]
    %v3859 = vld [vmem:[#allocation14 + $0x1c] sm:$0xf]
    %v3868 = vunpack.c.l.b16 %v3852
    %v3869 = vunpack.c.l.b16 %v3853
    %v3870 = vunpack.c.l.b16 %v3854
    %v3871 = vunpack.c.l.b16 %v3855
    %v3872 = vunpack.c.l.b16 %v3856
    %v3873 = vunpack.c.l.b16 %v3857
    %v3874 = vunpack.c.l.b16 %v3858
    %v3875 = vunpack.c.l.b16 %v3859
    %v3876 = vpack.c.b16 %v3869, %v3868
    %v3877 = vpack.c.b16 %v3871, %v3870
    %v3878 = vpack.c.b16 %v3873, %v3872
    %v3879 = vpack.c.b16 %v3875, %v3874
    %v3885 = vsel %vm868, %v3850, 0
    %v3888 = vsel %vm868, %v3851, 0
    %3890 = vmatpush.bf16.msra.mxu0 0
    %3891 = vmatpush.bf16.msra.mxu0 0
    %3892 = vmatpush.bf16.msra.mxu0 0
    %3893 = vmatpush.bf16.msra.mxu0 0
    %3894 = vmatpush.bf16.msra.mxu0 %v3879
    %3895 = vmatpush.bf16.msra.mxu0 %v3878
    %3896 = vmatpush.bf16.msra.mxu0 %v3877
    %3897 = vmatpush.bf16.msra.mxu0 %v3876
    %3898 = vmatmul.bf16.gmra.mxu0 %v3885
    %v3899 = vpop.f32.mrf.mxu0
    %v3900 = vadd.f32 0.0, %v3899
    %v3901 = vpop.f32.mrf.mxu0
    %v3902 = vadd.f32 0.0, %v3901
    %3903 = vmatmul.bf16.gmra.mxu0 %v3888
    %v3904 = vpop.f32.mrf.mxu0
    %v3905 = vadd.f32 0.0, %v3904
    %v3906 = vpop.f32.mrf.mxu0
    %v3907 = vadd.f32 0.0, %v3906
    %3908 = vdwg.mxu0
    %v3917 = vunpack.c.l.b16 %v3830
    %v3918 = vunpack.c.l.b16 %v3831
    %v3919 = vunpack.c.l.b16 %v3832
    %v3920 = vunpack.c.l.b16 %v3833
    %v3921 = vunpack.c.l.b16 %v3834
    %v3922 = vunpack.c.l.b16 %v3835
    %v3923 = vunpack.c.l.b16 %v3836
    %v3924 = vunpack.c.l.b16 %v3837
    %v3925 = vpack.c.b16 %v3918, %v3917
    %v3926 = vpack.c.b16 %v3920, %v3919
    %v3927 = vpack.c.b16 %v3922, %v3921
    %v3928 = vpack.c.b16 %v3924, %v3923
    %v3934 = vsel %vm868, %v3827, 0
    %v3937 = vsel %vm868, %v3828, 0
    %3939 = vmatpush.bf16.msra.mxu0 0
    %3940 = vmatpush.bf16.msra.mxu0 0
    %3941 = vmatpush.bf16.msra.mxu0 0
    %3942 = vmatpush.bf16.msra.mxu0 0
    %3943 = vmatpush.bf16.msra.mxu0 %v3928
    %3944 = vmatpush.bf16.msra.mxu0 %v3927
    %3945 = vmatpush.bf16.msra.mxu0 %v3926
    %3946 = vmatpush.bf16.msra.mxu0 %v3925
    %3947 = vmatmul.bf16.gmra.mxu0 %v3934
    %v3948 = vpop.f32.mrf.mxu0
    %v3949 = vadd.f32 %v3900, %v3948
    %v3950 = vpop.f32.mrf.mxu0
    %v3951 = vadd.f32 %v3902, %v3950
    %3952 = vmatmul.bf16.gmra.mxu0 %v3937
    %v3953 = vpop.f32.mrf.mxu0
    %v3954 = vadd.f32 %v3905, %v3953
    %v3955 = vpop.f32.mrf.mxu0
    %v3956 = vadd.f32 %v3907, %v3955
    %3957 = vdwg.mxu0
    %v3958 = vrot.slane %v3823, 1
    %v3959 = vrot.slane %v3824, 1
    %v3960 = vrot.slane %v3825, 1
    %v3961 = vrot.slane %v3826, 1
    %v3962 = vsel %vm947, %v3960, %v3961
    %v3963 = vsel %vm947, %v3959, %v3960
    %v3964 = vsel %vm947, %v3958, %v3959
    %v3965 = vsel %vm947, %v3961, %v3958
    %v3966 = vmul.f32 %v3964, %v955
    %v3967 = vmul.f32 %v3963, %v960
    %v3968 = vmul.f32 %v3962, %v965
    %v3969 = vmul.f32 %v3965, %v970
    %v3970 = vpack.c.bf16 %v3967, %v3966
    %v3971 = vpack.c.bf16 %v3969, %v3968
    %s3972 = scalar_lea.vmem [#allocation14], 64
    %v3973 = vld [vmem:[%s3972] sm:$0xf]
    %v3974 = vld [vmem:[%s3972 + $0x4] sm:$0xf]
    %v3975 = vld [vmem:[%s3972 + $0x8] sm:$0xf]
    %v3976 = vld [vmem:[%s3972 + $0xc] sm:$0xf]
    %v3977 = vld [vmem:[%s3972 + $0x10] sm:$0xf]
    %v3978 = vld [vmem:[%s3972 + $0x14] sm:$0xf]
    %v3979 = vld [vmem:[%s3972 + $0x18] sm:$0xf]
    %v3980 = vld [vmem:[%s3972 + $0x1c] sm:$0xf]
    %v3989 = vunpack.c.l.b16 %v3973
    %v3990 = vunpack.c.l.b16 %v3974
    %v3991 = vunpack.c.l.b16 %v3975
    %v3992 = vunpack.c.l.b16 %v3976
    %v3993 = vunpack.c.l.b16 %v3977
    %v3994 = vunpack.c.l.b16 %v3978
    %v3995 = vunpack.c.l.b16 %v3979
    %v3996 = vunpack.c.l.b16 %v3980
    %v3997 = vpack.c.b16 %v3990, %v3989
    %v3998 = vpack.c.b16 %v3992, %v3991
    %v3999 = vpack.c.b16 %v3994, %v3993
    %v4000 = vpack.c.b16 %v3996, %v3995
    %v4006 = vsel %vm868, %v3970, 0
    %v4009 = vsel %vm868, %v3971, 0
    %4011 = vmatpush.bf16.msra.mxu0 0
    %4012 = vmatpush.bf16.msra.mxu0 0
    %4013 = vmatpush.bf16.msra.mxu0 0
    %4014 = vmatpush.bf16.msra.mxu0 0
    %4015 = vmatpush.bf16.msra.mxu0 %v4000
    %4016 = vmatpush.bf16.msra.mxu0 %v3999
    %4017 = vmatpush.bf16.msra.mxu0 %v3998
    %4018 = vmatpush.bf16.msra.mxu0 %v3997
    %4019 = vmatmul.bf16.gmra.mxu0 %v4006
    %v4020 = vpop.f32.mrf.mxu0
    %v4021 = vadd.f32 0.0, %v4020
    %v4022 = vpop.f32.mrf.mxu0
    %v4023 = vadd.f32 0.0, %v4022
    %4024 = vmatmul.bf16.gmra.mxu0 %v4009
    %v4025 = vpop.f32.mrf.mxu0
    %v4026 = vadd.f32 0.0, %v4025
    %v4027 = vpop.f32.mrf.mxu0
    %v4028 = vadd.f32 0.0, %v4027
    %4029 = vdwg.mxu0
    %v4030 = vadd.f32 %v3949, %v4021
    %v4031 = vadd.f32 %v3951, %v4023
    %v4032 = vadd.f32 %v3954, %v4026
    %v4033 = vadd.f32 %v3956, %v4028
    %v4034 = vld [vmem:[%s57] sm:$0x1]
    %v4036 = vperm.slane %v4034, 0
    %v4038 = vadd.f32 %v4030, %v4036
    %v4039 = vadd.f32 %v4031, %v4036
    %v4040 = vadd.f32 %v4032, %v4036
    %v4041 = vadd.f32 %v4033, %v4036
    %v4042 = vmax.f32 %v4038, 0.0
    %v4043 = vmax.f32 %v4039, 0.0
    %v4044 = vmax.f32 %v4040, 0.0
    %v4045 = vmax.f32 %v4041, 0.0
    %v4046 = vpack.c.bf16 %v4043, %v4042
    %v4047 = vpack.c.bf16 %v4045, %v4044
    %s4048 = scalar_lea.vmem [#allocation15], 32
    %v4049 = vld [vmem:[%s4048] sm:$0xf]
    %v4050 = vld [vmem:[%s4048 + $0x4] sm:$0xf]
    %v4051 = vld [vmem:[%s4048 + $0x8] sm:$0xf]
    %v4052 = vld [vmem:[%s4048 + $0xc] sm:$0xf]
    %v4053 = vld [vmem:[%s4048 + $0x10] sm:$0xf]
    %v4054 = vld [vmem:[%s4048 + $0x14] sm:$0xf]
    %v4055 = vld [vmem:[%s4048 + $0x18] sm:$0xf]
    %v4056 = vld [vmem:[%s4048 + $0x1c] sm:$0xf]
    %v4057 = vrot.slane %v4042, 7
    %v4058 = vrot.slane %v4043, 7
    %v4059 = vrot.slane %v4044, 7
    %v4060 = vrot.slane %v4045, 7
    %v4061 = vsel %vm805, %v4059, %v4060
    %v4062 = vsel %vm805, %v4058, %v4059
    %v4063 = vsel %vm805, %v4057, %v4058
    %v4064 = vsel %vm805, %v4060, %v4057
    %v4065 = vmul.f32 %v4064, %v813
    %v4066 = vmul.f32 %v4063, %v818
    %v4067 = vmul.f32 %v4062, %v823
    %v4068 = vmul.f32 %v4061, %v828
    %v4069 = vpack.c.bf16 %v4066, %v4065
    %v4070 = vpack.c.bf16 %v4068, %v4067
    %v4071 = vld [vmem:[#allocation15] sm:$0xf]
    %v4072 = vld [vmem:[#allocation15 + $0x4] sm:$0xf]
    %v4073 = vld [vmem:[#allocation15 + $0x8] sm:$0xf]
    %v4074 = vld [vmem:[#allocation15 + $0xc] sm:$0xf]
    %v4075 = vld [vmem:[#allocation15 + $0x10] sm:$0xf]
    %v4076 = vld [vmem:[#allocation15 + $0x14] sm:$0xf]
    %v4077 = vld [vmem:[#allocation15 + $0x18] sm:$0xf]
    %v4078 = vld [vmem:[#allocation15 + $0x1c] sm:$0xf]
    %v4087 = vunpack.c.l.b16 %v4071
    %v4088 = vunpack.c.l.b16 %v4072
    %v4089 = vunpack.c.l.b16 %v4073
    %v4090 = vunpack.c.l.b16 %v4074
    %v4091 = vunpack.c.l.b16 %v4075
    %v4092 = vunpack.c.l.b16 %v4076
    %v4093 = vunpack.c.l.b16 %v4077
    %v4094 = vunpack.c.l.b16 %v4078
    %v4095 = vpack.c.b16 %v4088, %v4087
    %v4096 = vpack.c.b16 %v4090, %v4089
    %v4097 = vpack.c.b16 %v4092, %v4091
    %v4098 = vpack.c.b16 %v4094, %v4093
    %v4104 = vsel %vm868, %v4069, 0
    %v4107 = vsel %vm868, %v4070, 0
    %4109 = vmatpush.bf16.msra.mxu0 0
    %4110 = vmatpush.bf16.msra.mxu0 0
    %4111 = vmatpush.bf16.msra.mxu0 0
    %4112 = vmatpush.bf16.msra.mxu0 0
    %4113 = vmatpush.bf16.msra.mxu0 %v4098
    %4114 = vmatpush.bf16.msra.mxu0 %v4097
    %4115 = vmatpush.bf16.msra.mxu0 %v4096
    %4116 = vmatpush.bf16.msra.mxu0 %v4095
    %4117 = vmatmul.bf16.gmra.mxu0 %v4104
    %v4118 = vpop.f32.mrf.mxu0
    %v4119 = vadd.f32 0.0, %v4118
    %v4120 = vpop.f32.mrf.mxu0
    %v4121 = vadd.f32 0.0, %v4120
    %4122 = vmatmul.bf16.gmra.mxu0 %v4107
    %v4123 = vpop.f32.mrf.mxu0
    %v4124 = vadd.f32 0.0, %v4123
    %v4125 = vpop.f32.mrf.mxu0
    %v4126 = vadd.f32 0.0, %v4125
    %4127 = vdwg.mxu0
    %v4136 = vunpack.c.l.b16 %v4049
    %v4137 = vunpack.c.l.b16 %v4050
    %v4138 = vunpack.c.l.b16 %v4051
    %v4139 = vunpack.c.l.b16 %v4052
    %v4140 = vunpack.c.l.b16 %v4053
    %v4141 = vunpack.c.l.b16 %v4054
    %v4142 = vunpack.c.l.b16 %v4055
    %v4143 = vunpack.c.l.b16 %v4056
    %v4144 = vpack.c.b16 %v4137, %v4136
    %v4145 = vpack.c.b16 %v4139, %v4138
    %v4146 = vpack.c.b16 %v4141, %v4140
    %v4147 = vpack.c.b16 %v4143, %v4142
    %v4153 = vsel %vm868, %v4046, 0
    %v4156 = vsel %vm868, %v4047, 0
    %4158 = vmatpush.bf16.msra.mxu0 0
    %4159 = vmatpush.bf16.msra.mxu0 0
    %4160 = vmatpush.bf16.msra.mxu0 0
    %4161 = vmatpush.bf16.msra.mxu0 0
    %4162 = vmatpush.bf16.msra.mxu0 %v4147
    %4163 = vmatpush.bf16.msra.mxu0 %v4146
    %4164 = vmatpush.bf16.msra.mxu0 %v4145
    %4165 = vmatpush.bf16.msra.mxu0 %v4144
    %4166 = vmatmul.bf16.gmra.mxu0 %v4153
    %v4167 = vpop.f32.mrf.mxu0
    %v4168 = vadd.f32 %v4119, %v4167
    %v4169 = vpop.f32.mrf.mxu0
    %v4170 = vadd.f32 %v4121, %v4169
    %4171 = vmatmul.bf16.gmra.mxu0 %v4156
    %v4172 = vpop.f32.mrf.mxu0
    %v4173 = vadd.f32 %v4124, %v4172
    %v4174 = vpop.f32.mrf.mxu0
    %v4175 = vadd.f32 %v4126, %v4174
    %4176 = vdwg.mxu0
    %v4177 = vrot.slane %v4042, 1
    %v4178 = vrot.slane %v4043, 1
    %v4179 = vrot.slane %v4044, 1
    %v4180 = vrot.slane %v4045, 1
    %v4181 = vsel %vm947, %v4179, %v4180
    %v4182 = vsel %vm947, %v4178, %v4179
    %v4183 = vsel %vm947, %v4177, %v4178
    %v4184 = vsel %vm947, %v4180, %v4177
    %v4185 = vmul.f32 %v4183, %v955
    %v4186 = vmul.f32 %v4182, %v960
    %v4187 = vmul.f32 %v4181, %v965
    %v4188 = vmul.f32 %v4184, %v970
    %v4189 = vpack.c.bf16 %v4186, %v4185
    %v4190 = vpack.c.bf16 %v4188, %v4187
    %s4191 = scalar_lea.vmem [#allocation15], 64
    %v4192 = vld [vmem:[%s4191] sm:$0xf]
    %v4193 = vld [vmem:[%s4191 + $0x4] sm:$0xf]
    %v4194 = vld [vmem:[%s4191 + $0x8] sm:$0xf]
    %v4195 = vld [vmem:[%s4191 + $0xc] sm:$0xf]
    %v4196 = vld [vmem:[%s4191 + $0x10] sm:$0xf]
    %v4197 = vld [vmem:[%s4191 + $0x14] sm:$0xf]
    %v4198 = vld [vmem:[%s4191 + $0x18] sm:$0xf]
    %v4199 = vld [vmem:[%s4191 + $0x1c] sm:$0xf]
    %v4208 = vunpack.c.l.b16 %v4192
    %v4209 = vunpack.c.l.b16 %v4193
    %v4210 = vunpack.c.l.b16 %v4194
    %v4211 = vunpack.c.l.b16 %v4195
    %v4212 = vunpack.c.l.b16 %v4196
    %v4213 = vunpack.c.l.b16 %v4197
    %v4214 = vunpack.c.l.b16 %v4198
    %v4215 = vunpack.c.l.b16 %v4199
    %v4216 = vpack.c.b16 %v4209, %v4208
    %v4217 = vpack.c.b16 %v4211, %v4210
    %v4218 = vpack.c.b16 %v4213, %v4212
    %v4219 = vpack.c.b16 %v4215, %v4214
    %v4225 = vsel %vm868, %v4189, 0
    %v4228 = vsel %vm868, %v4190, 0
    %4230 = vmatpush.bf16.msra.mxu0 0
    %4231 = vmatpush.bf16.msra.mxu0 0
    %4232 = vmatpush.bf16.msra.mxu0 0
    %4233 = vmatpush.bf16.msra.mxu0 0
    %4234 = vmatpush.bf16.msra.mxu0 %v4219
    %4235 = vmatpush.bf16.msra.mxu0 %v4218
    %4236 = vmatpush.bf16.msra.mxu0 %v4217
    %4237 = vmatpush.bf16.msra.mxu0 %v4216
    %4238 = vmatmul.bf16.gmra.mxu0 %v4225
    %v4239 = vpop.f32.mrf.mxu0
    %v4240 = vadd.f32 0.0, %v4239
    %v4241 = vpop.f32.mrf.mxu0
    %v4242 = vadd.f32 0.0, %v4241
    %4243 = vmatmul.bf16.gmra.mxu0 %v4228
    %v4244 = vpop.f32.mrf.mxu0
    %v4245 = vadd.f32 0.0, %v4244
    %v4246 = vpop.f32.mrf.mxu0
    %v4247 = vadd.f32 0.0, %v4246
    %4248 = vdwg.mxu0
    %v4249 = vadd.f32 %v4168, %v4240
    %v4250 = vadd.f32 %v4170, %v4242
    %v4251 = vadd.f32 %v4173, %v4245
    %v4252 = vadd.f32 %v4175, %v4247
    %v4253 = vld [vmem:[%s61] sm:$0x1]
    %v4255 = vperm.slane %v4253, 0
    %v4257 = vadd.f32 %v4249, %v4255
    %v4258 = vadd.f32 %v4250, %v4255
    %v4259 = vadd.f32 %v4251, %v4255
    %v4260 = vadd.f32 %v4252, %v4255
    %v4261 = vmax.f32 %v4257, 0.0
    %v4262 = vmax.f32 %v4258, 0.0
    %v4263 = vmax.f32 %v4259, 0.0
    %v4264 = vmax.f32 %v4260, 0.0
    %4265 = vmatpush.msra.mxu0 0.0
    %4266 = vmatpush.msra.mxu0 0.0
    %4267 = vmatpush.msra.mxu0 0.0
    %4268 = vmatpush.msra.mxu0 0.0
    %4269 = vmatpush.msra.mxu0 0.0
    %4270 = vmatpush.msra.mxu0 0.0
    %4271 = vmatpush.msra.mxu0 0.0
    %4272 = vmatpush.msra.mxu0 0.0
    %4273 = vmatpush.msra.mxu0 0.0
    %4274 = vmatpush.msra.mxu0 0.0
    %4275 = vmatpush.msra.mxu0 0.0
    %4276 = vmatpush.msra.mxu0 0.0
    %4277 = vmatpush.msra.mxu0 %v4264
    %4278 = vmatpush.msra.mxu0 %v4263
    %4279 = vmatpush.msra.mxu0 %v4262
    %4280 = vmatpush.msra.mxu0 %v4261
    %4281 = vmatmul.f32.gmra.mxu0 %v1273
    %v4282 = vpop.f32.mrf.mxu0
    %v4283 = vadd.f32 0.0, %v4282
    %4284 = vmatmul.f32.gmra.mxu0 %v1276
    %v4285 = vpop.f32.mrf.mxu0
    %v4286 = vadd.f32 0.0, %v4285
    %4287 = vdwg.mxu0
    %4288 = vmatpush.msra.mxu0 0.0
    %4289 = vmatpush.msra.mxu0 0.0
    %4290 = vmatpush.msra.mxu0 0.0
    %4291 = vmatpush.msra.mxu0 0.0
    %4292 = vmatpush.msra.mxu0 0.0
    %4293 = vmatpush.msra.mxu0 0.0
    %4294 = vmatpush.msra.mxu0 0.0
    %4295 = vmatpush.msra.mxu0 0.0
    %4296 = vmatpush.msra.mxu0 0.0
    %4297 = vmatpush.msra.mxu0 0.0
    %4298 = vmatpush.msra.mxu0 0.0
    %4299 = vmatpush.msra.mxu0 0.0
    %4300 = vmatpush.msra.mxu0 %v4264
    %4301 = vmatpush.msra.mxu0 %v4263
    %4302 = vmatpush.msra.mxu0 %v4262
    %4303 = vmatpush.msra.mxu0 %v4261
    %4304 = vmatmul.f32.gmra.mxu0 %v1302
    %v4305 = vpop.f32.mrf.mxu0
    %v4306 = vadd.f32 0.0, %v4305
    %4307 = vmatmul.f32.gmra.mxu0 %v1305
    %v4308 = vpop.f32.mrf.mxu0
    %v4309 = vadd.f32 0.0, %v4308
    %4310 = vdwg.mxu0
    %v4311 = vmax.f32 %v4283, %v4306
    %v4312 = vmax.f32 %v4286, %v4309
    %vm4313 = vcmp.gt.f32.partialorder %v4306, %v4283
    %vm4314 = vcmp.gt.f32.partialorder %v4309, %v4286
    %v4315 = vpack.c.bf16 %v4312, %v4311
    %s4316 = scalar_lea.vmem [#allocation17], 32
    %v4317 = vld [vmem:[%s4316] sm:$0xf]
    %v4318 = vld [vmem:[%s4316 + $0x4] sm:$0xf]
    %v4319 = vld [vmem:[%s4316 + $0x8] sm:$0xf]
    %v4320 = vld [vmem:[%s4316 + $0xc] sm:$0xf]
    %v4321 = vld [vmem:[%s4316 + $0x10] sm:$0xf]
    %v4322 = vld [vmem:[%s4316 + $0x14] sm:$0xf]
    %v4323 = vld [vmem:[%s4316 + $0x18] sm:$0xf]
    %v4324 = vld [vmem:[%s4316 + $0x1c] sm:$0xf]
    %v4325 = vrot.slane %v4311, 7
    %v4326 = vrot.slane %v4312, 7
    %v4327 = vsel %vm805, %v4325, %v4326
    %v4328 = vsel %vm805, %v4326, %v4325
    %v4329 = vmul.f32 %v4328, %v1351
    %v4330 = vmul.f32 %v4327, %v1356
    %v4331 = vpack.c.bf16 %v4330, %v4329
    %v4332 = vld [vmem:[#allocation17] sm:$0xf]
    %v4333 = vld [vmem:[#allocation17 + $0x4] sm:$0xf]
    %v4334 = vld [vmem:[#allocation17 + $0x8] sm:$0xf]
    %v4335 = vld [vmem:[#allocation17 + $0xc] sm:$0xf]
    %v4336 = vld [vmem:[#allocation17 + $0x10] sm:$0xf]
    %v4337 = vld [vmem:[#allocation17 + $0x14] sm:$0xf]
    %v4338 = vld [vmem:[#allocation17 + $0x18] sm:$0xf]
    %v4339 = vld [vmem:[#allocation17 + $0x1c] sm:$0xf]
    %v4348 = vunpack.c.l.b16 %v4332
    %v4349 = vunpack.c.l.b16 %v4333
    %v4350 = vunpack.c.l.b16 %v4334
    %v4351 = vunpack.c.l.b16 %v4335
    %v4352 = vunpack.c.l.b16 %v4336
    %v4353 = vunpack.c.l.b16 %v4337
    %v4354 = vunpack.c.l.b16 %v4338
    %v4355 = vunpack.c.l.b16 %v4339
    %v4356 = vpack.c.b16 %v4349, %v4348
    %v4357 = vpack.c.b16 %v4351, %v4350
    %v4358 = vpack.c.b16 %v4353, %v4352
    %v4359 = vpack.c.b16 %v4355, %v4354
    %v4365 = vsel %vm868, %v4331, 0
    %4367 = vmatpush.bf16.msra.mxu0 0
    %4368 = vmatpush.bf16.msra.mxu0 0
    %4369 = vmatpush.bf16.msra.mxu0 0
    %4370 = vmatpush.bf16.msra.mxu0 0
    %4371 = vmatpush.bf16.msra.mxu0 %v4359
    %4372 = vmatpush.bf16.msra.mxu0 %v4358
    %4373 = vmatpush.bf16.msra.mxu0 %v4357
    %4374 = vmatpush.bf16.msra.mxu0 %v4356
    %4375 = vmatmul.bf16.gmra.mxu0 %v4365
    %v4376 = vpop.f32.mrf.mxu0
    %v4377 = vadd.f32 0.0, %v4376
    %v4378 = vpop.f32.mrf.mxu0
    %v4379 = vadd.f32 0.0, %v4378
    %4380 = vdwg.mxu0
    %v4389 = vunpack.c.l.b16 %v4317
    %v4390 = vunpack.c.l.b16 %v4318
    %v4391 = vunpack.c.l.b16 %v4319
    %v4392 = vunpack.c.l.b16 %v4320
    %v4393 = vunpack.c.l.b16 %v4321
    %v4394 = vunpack.c.l.b16 %v4322
    %v4395 = vunpack.c.l.b16 %v4323
    %v4396 = vunpack.c.l.b16 %v4324
    %v4397 = vpack.c.b16 %v4390, %v4389
    %v4398 = vpack.c.b16 %v4392, %v4391
    %v4399 = vpack.c.b16 %v4394, %v4393
    %v4400 = vpack.c.b16 %v4396, %v4395
    %v4406 = vsel %vm868, %v4315, 0
    %4408 = vmatpush.bf16.msra.mxu0 0
    %4409 = vmatpush.bf16.msra.mxu0 0
    %4410 = vmatpush.bf16.msra.mxu0 0
    %4411 = vmatpush.bf16.msra.mxu0 0
    %4412 = vmatpush.bf16.msra.mxu0 %v4400
    %4413 = vmatpush.bf16.msra.mxu0 %v4399
    %4414 = vmatpush.bf16.msra.mxu0 %v4398
    %4415 = vmatpush.bf16.msra.mxu0 %v4397
    %4416 = vmatmul.bf16.gmra.mxu0 %v4406
    %v4417 = vpop.f32.mrf.mxu0
    %v4418 = vadd.f32 %v4377, %v4417
    %v4419 = vpop.f32.mrf.mxu0
    %v4420 = vadd.f32 %v4379, %v4419
    %4421 = vdwg.mxu0
    %v4422 = vrot.slane %v4311, 1
    %v4423 = vrot.slane %v4312, 1
    %v4424 = vsel %vm947, %v4422, %v4423
    %v4425 = vsel %vm947, %v4423, %v4422
    %v4426 = vmul.f32 %v4424, %v1458
    %v4427 = vmul.f32 %v4425, %v1463
    %v4428 = vpack.c.bf16 %v4427, %v4426
    %s4429 = scalar_lea.vmem [#allocation17], 64
    %v4430 = vld [vmem:[%s4429] sm:$0xf]
    %v4431 = vld [vmem:[%s4429 + $0x4] sm:$0xf]
    %v4432 = vld [vmem:[%s4429 + $0x8] sm:$0xf]
    %v4433 = vld [vmem:[%s4429 + $0xc] sm:$0xf]
    %v4434 = vld [vmem:[%s4429 + $0x10] sm:$0xf]
    %v4435 = vld [vmem:[%s4429 + $0x14] sm:$0xf]
    %v4436 = vld [vmem:[%s4429 + $0x18] sm:$0xf]
    %v4437 = vld [vmem:[%s4429 + $0x1c] sm:$0xf]
    %v4446 = vunpack.c.l.b16 %v4430
    %v4447 = vunpack.c.l.b16 %v4431
    %v4448 = vunpack.c.l.b16 %v4432
    %v4449 = vunpack.c.l.b16 %v4433
    %v4450 = vunpack.c.l.b16 %v4434
    %v4451 = vunpack.c.l.b16 %v4435
    %v4452 = vunpack.c.l.b16 %v4436
    %v4453 = vunpack.c.l.b16 %v4437
    %v4454 = vpack.c.b16 %v4447, %v4446
    %v4455 = vpack.c.b16 %v4449, %v4448
    %v4456 = vpack.c.b16 %v4451, %v4450
    %v4457 = vpack.c.b16 %v4453, %v4452
    %v4463 = vsel %vm868, %v4428, 0
    %4465 = vmatpush.bf16.msra.mxu0 0
    %4466 = vmatpush.bf16.msra.mxu0 0
    %4467 = vmatpush.bf16.msra.mxu0 0
    %4468 = vmatpush.bf16.msra.mxu0 0
    %4469 = vmatpush.bf16.msra.mxu0 %v4457
    %4470 = vmatpush.bf16.msra.mxu0 %v4456
    %4471 = vmatpush.bf16.msra.mxu0 %v4455
    %4472 = vmatpush.bf16.msra.mxu0 %v4454
    %4473 = vmatmul.bf16.gmra.mxu0 %v4463
    %v4474 = vpop.f32.mrf.mxu0
    %v4475 = vadd.f32 0.0, %v4474
    %v4476 = vpop.f32.mrf.mxu0
    %v4477 = vadd.f32 0.0, %v4476
    %4478 = vdwg.mxu0
    %v4479 = vadd.f32 %v4418, %v4475
    %v4480 = vadd.f32 %v4420, %v4477
    %v4481 = vld [vmem:[%s65] sm:$0x1]
    %v4483 = vperm.slane %v4481, 0
    %v4485 = vadd.f32 %v4479, %v4483
    %v4486 = vadd.f32 %v4480, %v4483
    %v4487 = vmax.f32 %v4485, 0.0
    %v4488 = vmax.f32 %v4486, 0.0
    %v4489 = vpack.c.bf16 %v4488, %v4487
    %s4490 = scalar_lea.vmem [#allocation18], 64
    %v4491 = vld [vmem:[%s4490] sm:$0xf]
    %v4492 = vld [vmem:[%s4490 + $0x4] sm:$0xf]
    %v4493 = vld [vmem:[%s4490 + $0x8] sm:$0xf]
    %v4494 = vld [vmem:[%s4490 + $0xc] sm:$0xf]
    %v4495 = vld [vmem:[%s4490 + $0x10] sm:$0xf]
    %v4496 = vld [vmem:[%s4490 + $0x14] sm:$0xf]
    %v4497 = vld [vmem:[%s4490 + $0x18] sm:$0xf]
    %v4498 = vld [vmem:[%s4490 + $0x1c] sm:$0xf]
    %v4499 = vld [vmem:[%s4490 + $0x20] sm:$0xf]
    %v4500 = vld [vmem:[%s4490 + $0x24] sm:$0xf]
    %v4501 = vld [vmem:[%s4490 + $0x28] sm:$0xf]
    %v4502 = vld [vmem:[%s4490 + $0x2c] sm:$0xf]
    %v4503 = vld [vmem:[%s4490 + $0x30] sm:$0xf]
    %v4504 = vld [vmem:[%s4490 + $0x34] sm:$0xf]
    %v4505 = vld [vmem:[%s4490 + $0x38] sm:$0xf]
    %v4506 = vld [vmem:[%s4490 + $0x3c] sm:$0xf]
    %v4507 = vrot.slane %v4487, 7
    %v4508 = vrot.slane %v4488, 7
    %v4509 = vsel %vm805, %v4507, %v4508
    %v4510 = vsel %vm805, %v4508, %v4507
    %v4511 = vmul.f32 %v4510, %v1351
    %v4512 = vmul.f32 %v4509, %v1356
    %v4513 = vpack.c.bf16 %v4512, %v4511
    %v4514 = vld [vmem:[#allocation18] sm:$0xf]
    %v4515 = vld [vmem:[#allocation18 + $0x4] sm:$0xf]
    %v4516 = vld [vmem:[#allocation18 + $0x8] sm:$0xf]
    %v4517 = vld [vmem:[#allocation18 + $0xc] sm:$0xf]
    %v4518 = vld [vmem:[#allocation18 + $0x10] sm:$0xf]
    %v4519 = vld [vmem:[#allocation18 + $0x14] sm:$0xf]
    %v4520 = vld [vmem:[#allocation18 + $0x18] sm:$0xf]
    %v4521 = vld [vmem:[#allocation18 + $0x1c] sm:$0xf]
    %v4522 = vld [vmem:[#allocation18 + $0x20] sm:$0xf]
    %v4523 = vld [vmem:[#allocation18 + $0x24] sm:$0xf]
    %v4524 = vld [vmem:[#allocation18 + $0x28] sm:$0xf]
    %v4525 = vld [vmem:[#allocation18 + $0x2c] sm:$0xf]
    %v4526 = vld [vmem:[#allocation18 + $0x30] sm:$0xf]
    %v4527 = vld [vmem:[#allocation18 + $0x34] sm:$0xf]
    %v4528 = vld [vmem:[#allocation18 + $0x38] sm:$0xf]
    %v4529 = vld [vmem:[#allocation18 + $0x3c] sm:$0xf]
    %v4546 = vunpack.c.l.b16 %v4514
    %v4547 = vunpack.c.l.b16 %v4515
    %v4548 = vunpack.c.l.b16 %v4516
    %v4549 = vunpack.c.l.b16 %v4517
    %v4550 = vunpack.c.l.b16 %v4518
    %v4551 = vunpack.c.l.b16 %v4519
    %v4552 = vunpack.c.l.b16 %v4520
    %v4553 = vunpack.c.l.b16 %v4521
    %v4554 = vunpack.c.l.b16 %v4522
    %v4555 = vunpack.c.l.b16 %v4523
    %v4556 = vunpack.c.l.b16 %v4524
    %v4557 = vunpack.c.l.b16 %v4525
    %v4558 = vunpack.c.l.b16 %v4526
    %v4559 = vunpack.c.l.b16 %v4527
    %v4560 = vunpack.c.l.b16 %v4528
    %v4561 = vunpack.c.l.b16 %v4529
    %v4562 = vpack.c.b16 %v4547, %v4546
    %v4563 = vpack.c.b16 %v4549, %v4548
    %v4564 = vpack.c.b16 %v4551, %v4550
    %v4565 = vpack.c.b16 %v4553, %v4552
    %v4566 = vpack.c.b16 %v4555, %v4554
    %v4567 = vpack.c.b16 %v4557, %v4556
    %v4568 = vpack.c.b16 %v4559, %v4558
    %v4569 = vpack.c.b16 %v4561, %v4560
    %4578 = vmatpush.bf16.msra.mxu0 %v4569
    %4579 = vmatpush.bf16.msra.mxu0 %v4568
    %4580 = vmatpush.bf16.msra.mxu0 %v4567
    %4581 = vmatpush.bf16.msra.mxu0 %v4566
    %4582 = vmatpush.bf16.msra.mxu0 %v4565
    %4583 = vmatpush.bf16.msra.mxu0 %v4564
    %4584 = vmatpush.bf16.msra.mxu0 %v4563
    %4585 = vmatpush.bf16.msra.mxu0 %v4562
    %4586 = vmatmul.bf16.gmra.mxu0 %v4513
    %v4587 = vpop.f32.mrf.mxu0
    %v4588 = vadd.f32 0.0, %v4587
    %v4589 = vpop.f32.mrf.mxu0
    %v4590 = vadd.f32 0.0, %v4589
    %4591 = vdwg.mxu0
    %v4608 = vunpack.c.l.b16 %v4491
    %v4609 = vunpack.c.l.b16 %v4492
    %v4610 = vunpack.c.l.b16 %v4493
    %v4611 = vunpack.c.l.b16 %v4494
    %v4612 = vunpack.c.l.b16 %v4495
    %v4613 = vunpack.c.l.b16 %v4496
    %v4614 = vunpack.c.l.b16 %v4497
    %v4615 = vunpack.c.l.b16 %v4498
    %v4616 = vunpack.c.l.b16 %v4499
    %v4617 = vunpack.c.l.b16 %v4500
    %v4618 = vunpack.c.l.b16 %v4501
    %v4619 = vunpack.c.l.b16 %v4502
    %v4620 = vunpack.c.l.b16 %v4503
    %v4621 = vunpack.c.l.b16 %v4504
    %v4622 = vunpack.c.l.b16 %v4505
    %v4623 = vunpack.c.l.b16 %v4506
    %v4624 = vpack.c.b16 %v4609, %v4608
    %v4625 = vpack.c.b16 %v4611, %v4610
    %v4626 = vpack.c.b16 %v4613, %v4612
    %v4627 = vpack.c.b16 %v4615, %v4614
    %v4628 = vpack.c.b16 %v4617, %v4616
    %v4629 = vpack.c.b16 %v4619, %v4618
    %v4630 = vpack.c.b16 %v4621, %v4620
    %v4631 = vpack.c.b16 %v4623, %v4622
    %4640 = vmatpush.bf16.msra.mxu0 %v4631
    %4641 = vmatpush.bf16.msra.mxu0 %v4630
    %4642 = vmatpush.bf16.msra.mxu0 %v4629
    %4643 = vmatpush.bf16.msra.mxu0 %v4628
    %4644 = vmatpush.bf16.msra.mxu0 %v4627
    %4645 = vmatpush.bf16.msra.mxu0 %v4626
    %4646 = vmatpush.bf16.msra.mxu0 %v4625
    %4647 = vmatpush.bf16.msra.mxu0 %v4624
    %4648 = vmatmul.bf16.gmra.mxu0 %v4489
    %v4649 = vpop.f32.mrf.mxu0
    %v4650 = vadd.f32 %v4588, %v4649
    %v4651 = vpop.f32.mrf.mxu0
    %v4652 = vadd.f32 %v4590, %v4651
    %4653 = vdwg.mxu0
    %v4654 = vrot.slane %v4487, 1
    %v4655 = vrot.slane %v4488, 1
    %v4656 = vsel %vm947, %v4654, %v4655
    %v4657 = vsel %vm947, %v4655, %v4654
    %v4658 = vmul.f32 %v4656, %v1458
    %v4659 = vmul.f32 %v4657, %v1463
    %v4660 = vpack.c.bf16 %v4659, %v4658
    %s4661 = scalar_lea.vmem [#allocation18], 128
    %v4662 = vld [vmem:[%s4661] sm:$0xf]
    %v4663 = vld [vmem:[%s4661 + $0x4] sm:$0xf]
    %v4664 = vld [vmem:[%s4661 + $0x8] sm:$0xf]
    %v4665 = vld [vmem:[%s4661 + $0xc] sm:$0xf]
    %v4666 = vld [vmem:[%s4661 + $0x10] sm:$0xf]
    %v4667 = vld [vmem:[%s4661 + $0x14] sm:$0xf]
    %v4668 = vld [vmem:[%s4661 + $0x18] sm:$0xf]
    %v4669 = vld [vmem:[%s4661 + $0x1c] sm:$0xf]
    %v4670 = vld [vmem:[%s4661 + $0x20] sm:$0xf]
    %v4671 = vld [vmem:[%s4661 + $0x24] sm:$0xf]
    %v4672 = vld [vmem:[%s4661 + $0x28] sm:$0xf]
    %v4673 = vld [vmem:[%s4661 + $0x2c] sm:$0xf]
    %v4674 = vld [vmem:[%s4661 + $0x30] sm:$0xf]
    %v4675 = vld [vmem:[%s4661 + $0x34] sm:$0xf]
    %v4676 = vld [vmem:[%s4661 + $0x38] sm:$0xf]
    %v4677 = vld [vmem:[%s4661 + $0x3c] sm:$0xf]
    %v4694 = vunpack.c.l.b16 %v4662
    %v4695 = vunpack.c.l.b16 %v4663
    %v4696 = vunpack.c.l.b16 %v4664
    %v4697 = vunpack.c.l.b16 %v4665
    %v4698 = vunpack.c.l.b16 %v4666
    %v4699 = vunpack.c.l.b16 %v4667
    %v4700 = vunpack.c.l.b16 %v4668
    %v4701 = vunpack.c.l.b16 %v4669
    %v4702 = vunpack.c.l.b16 %v4670
    %v4703 = vunpack.c.l.b16 %v4671
    %v4704 = vunpack.c.l.b16 %v4672
    %v4705 = vunpack.c.l.b16 %v4673
    %v4706 = vunpack.c.l.b16 %v4674
    %v4707 = vunpack.c.l.b16 %v4675
    %v4708 = vunpack.c.l.b16 %v4676
    %v4709 = vunpack.c.l.b16 %v4677
    %v4710 = vpack.c.b16 %v4695, %v4694
    %v4711 = vpack.c.b16 %v4697, %v4696
    %v4712 = vpack.c.b16 %v4699, %v4698
    %v4713 = vpack.c.b16 %v4701, %v4700
    %v4714 = vpack.c.b16 %v4703, %v4702
    %v4715 = vpack.c.b16 %v4705, %v4704
    %v4716 = vpack.c.b16 %v4707, %v4706
    %v4717 = vpack.c.b16 %v4709, %v4708
    %4726 = vmatpush.bf16.msra.mxu0 %v4717
    %4727 = vmatpush.bf16.msra.mxu0 %v4716
    %4728 = vmatpush.bf16.msra.mxu0 %v4715
    %4729 = vmatpush.bf16.msra.mxu0 %v4714
    %4730 = vmatpush.bf16.msra.mxu0 %v4713
    %4731 = vmatpush.bf16.msra.mxu0 %v4712
    %4732 = vmatpush.bf16.msra.mxu0 %v4711
    %4733 = vmatpush.bf16.msra.mxu0 %v4710
    %4734 = vmatmul.bf16.gmra.mxu0 %v4660
    %v4735 = vpop.f32.mrf.mxu0
    %v4736 = vadd.f32 0.0, %v4735
    %v4737 = vpop.f32.mrf.mxu0
    %v4738 = vadd.f32 0.0, %v4737
    %4739 = vdwg.mxu0
    %v4740 = vadd.f32 %v4650, %v4736
    %v4741 = vadd.f32 %v4652, %v4738
    %v4742 = vld [vmem:[%s69] sm:$0x1]
    %v4744 = vperm.slane %v4742, 0
    %v4746 = vadd.f32 %v4740, %v4744
    %v4747 = vadd.f32 %v4741, %v4744
    %v4748 = vmax.f32 %v4746, 0.0
    %v4749 = vmax.f32 %v4747, 0.0
    %4750 = vmatpush.msra.mxu0 0.0
    %4751 = vmatpush.msra.mxu0 0.0
    %4752 = vmatpush.msra.mxu0 0.0
    %4753 = vmatpush.msra.mxu0 0.0
    %4754 = vmatpush.msra.mxu0 0.0
    %4755 = vmatpush.msra.mxu0 0.0
    %4756 = vmatpush.msra.mxu0 0.0
    %4757 = vmatpush.msra.mxu0 0.0
    %4758 = vmatpush.msra.mxu0 0.0
    %4759 = vmatpush.msra.mxu0 0.0
    %4760 = vmatpush.msra.mxu0 0.0
    %4761 = vmatpush.msra.mxu0 0.0
    %4762 = vmatpush.msra.mxu0 0.0
    %4763 = vmatpush.msra.mxu0 0.0
    %4764 = vmatpush.msra.mxu0 %v4749
    %4765 = vmatpush.msra.mxu0 %v4748
    %4766 = vmatmul.f32.gmra.mxu0 %v1790
    %v4767 = vpop.f32.mrf.mxu0
    %v4768 = vadd.f32 0.0, %v4767
    %4769 = vdwg.mxu0
    %4770 = vmatpush.msra.mxu0 0.0
    %4771 = vmatpush.msra.mxu0 0.0
    %4772 = vmatpush.msra.mxu0 0.0
    %4773 = vmatpush.msra.mxu0 0.0
    %4774 = vmatpush.msra.mxu0 0.0
    %4775 = vmatpush.msra.mxu0 0.0
    %4776 = vmatpush.msra.mxu0 0.0
    %4777 = vmatpush.msra.mxu0 0.0
    %4778 = vmatpush.msra.mxu0 0.0
    %4779 = vmatpush.msra.mxu0 0.0
    %4780 = vmatpush.msra.mxu0 0.0
    %4781 = vmatpush.msra.mxu0 0.0
    %4782 = vmatpush.msra.mxu0 0.0
    %4783 = vmatpush.msra.mxu0 0.0
    %4784 = vmatpush.msra.mxu0 %v4749
    %4785 = vmatpush.msra.mxu0 %v4748
    %4786 = vmatmul.f32.gmra.mxu0 %v1812
    %v4787 = vpop.f32.mrf.mxu0
    %v4788 = vadd.f32 0.0, %v4787
    %4789 = vdwg.mxu0
    %v4790 = vmax.f32 %v4768, %v4788
    %vm4791 = vcmp.gt.f32.partialorder %v4788, %v4768
    %v4792 = vpack.c.bf16 %v4790, %v4790
    %s4793 = scalar_lea.vmem [#allocation20], 128
    %v4794 = vld [vmem:[%s4793] sm:$0xff]
    %v4795 = vld [vmem:[%s4793 + $0x8] sm:$0xff]
    %v4796 = vld [vmem:[%s4793 + $0x10] sm:$0xff]
    %v4797 = vld [vmem:[%s4793 + $0x18] sm:$0xff]
    %v4798 = vld [vmem:[%s4793 + $0x20] sm:$0xff]
    %v4799 = vld [vmem:[%s4793 + $0x28] sm:$0xff]
    %v4800 = vld [vmem:[%s4793 + $0x30] sm:$0xff]
    %v4801 = vld [vmem:[%s4793 + $0x38] sm:$0xff]
    %v4802 = vld [vmem:[%s4793 + $0x40] sm:$0xff]
    %v4803 = vld [vmem:[%s4793 + $0x48] sm:$0xff]
    %v4804 = vld [vmem:[%s4793 + $0x50] sm:$0xff]
    %v4805 = vld [vmem:[%s4793 + $0x58] sm:$0xff]
    %v4806 = vld [vmem:[%s4793 + $0x60] sm:$0xff]
    %v4807 = vld [vmem:[%s4793 + $0x68] sm:$0xff]
    %v4808 = vld [vmem:[%s4793 + $0x70] sm:$0xff]
    %v4809 = vld [vmem:[%s4793 + $0x78] sm:$0xff]
    %v4810 = vrot.slane %v4790, 7
    %v4811 = vmul.f32 %v4810, %v1858
    %v4812 = vpack.c.bf16 %v4811, %v4811
    %v4813 = vld [vmem:[#allocation20] sm:$0xff]
    %v4814 = vld [vmem:[#allocation20 + $0x8] sm:$0xff]
    %v4815 = vld [vmem:[#allocation20 + $0x10] sm:$0xff]
    %v4816 = vld [vmem:[#allocation20 + $0x18] sm:$0xff]
    %v4817 = vld [vmem:[#allocation20 + $0x20] sm:$0xff]
    %v4818 = vld [vmem:[#allocation20 + $0x28] sm:$0xff]
    %v4819 = vld [vmem:[#allocation20 + $0x30] sm:$0xff]
    %v4820 = vld [vmem:[#allocation20 + $0x38] sm:$0xff]
    %v4821 = vld [vmem:[#allocation20 + $0x40] sm:$0xff]
    %v4822 = vld [vmem:[#allocation20 + $0x48] sm:$0xff]
    %v4823 = vld [vmem:[#allocation20 + $0x50] sm:$0xff]
    %v4824 = vld [vmem:[#allocation20 + $0x58] sm:$0xff]
    %v4825 = vld [vmem:[#allocation20 + $0x60] sm:$0xff]
    %v4826 = vld [vmem:[#allocation20 + $0x68] sm:$0xff]
    %v4827 = vld [vmem:[#allocation20 + $0x70] sm:$0xff]
    %v4828 = vld [vmem:[#allocation20 + $0x78] sm:$0xff]
    %v4845 = vunpack.c.l.b16 %v4813
    %v4846 = vunpack.c.h.b16 %v4813
    %v4847 = vunpack.c.l.b16 %v4814
    %v4848 = vunpack.c.h.b16 %v4814
    %v4849 = vunpack.c.l.b16 %v4815
    %v4850 = vunpack.c.h.b16 %v4815
    %v4851 = vunpack.c.l.b16 %v4816
    %v4852 = vunpack.c.h.b16 %v4816
    %v4853 = vunpack.c.l.b16 %v4817
    %v4854 = vunpack.c.h.b16 %v4817
    %v4855 = vunpack.c.l.b16 %v4818
    %v4856 = vunpack.c.h.b16 %v4818
    %v4857 = vunpack.c.l.b16 %v4819
    %v4858 = vunpack.c.h.b16 %v4819
    %v4859 = vunpack.c.l.b16 %v4820
    %v4860 = vunpack.c.h.b16 %v4820
    %v4861 = vunpack.c.l.b16 %v4821
    %v4862 = vunpack.c.h.b16 %v4821
    %v4863 = vunpack.c.l.b16 %v4822
    %v4864 = vunpack.c.h.b16 %v4822
    %v4865 = vunpack.c.l.b16 %v4823
    %v4866 = vunpack.c.h.b16 %v4823
    %v4867 = vunpack.c.l.b16 %v4824
    %v4868 = vunpack.c.h.b16 %v4824
    %v4869 = vunpack.c.l.b16 %v4825
    %v4870 = vunpack.c.h.b16 %v4825
    %v4871 = vunpack.c.l.b16 %v4826
    %v4872 = vunpack.c.h.b16 %v4826
    %v4873 = vunpack.c.l.b16 %v4827
    %v4874 = vunpack.c.h.b16 %v4827
    %v4875 = vunpack.c.l.b16 %v4828
    %v4876 = vunpack.c.h.b16 %v4828
    %v4877 = vpack.c.b16 %v4847, %v4845
    %v4878 = vpack.c.b16 %v4848, %v4846
    %v4879 = vpack.c.b16 %v4851, %v4849
    %v4880 = vpack.c.b16 %v4852, %v4850
    %v4881 = vpack.c.b16 %v4855, %v4853
    %v4882 = vpack.c.b16 %v4856, %v4854
    %v4883 = vpack.c.b16 %v4859, %v4857
    %v4884 = vpack.c.b16 %v4860, %v4858
    %v4885 = vpack.c.b16 %v4863, %v4861
    %v4886 = vpack.c.b16 %v4864, %v4862
    %v4887 = vpack.c.b16 %v4867, %v4865
    %v4888 = vpack.c.b16 %v4868, %v4866
    %v4889 = vpack.c.b16 %v4871, %v4869
    %v4890 = vpack.c.b16 %v4872, %v4870
    %v4891 = vpack.c.b16 %v4875, %v4873
    %v4892 = vpack.c.b16 %v4876, %v4874
    %4909 = vmatpush.bf16.msra.mxu0 %v4891
    %4910 = vmatpush.bf16.msra.mxu0 %v4889
    %4911 = vmatpush.bf16.msra.mxu0 %v4887
    %4912 = vmatpush.bf16.msra.mxu0 %v4885
    %4913 = vmatpush.bf16.msra.mxu0 %v4883
    %4914 = vmatpush.bf16.msra.mxu0 %v4881
    %4915 = vmatpush.bf16.msra.mxu0 %v4879
    %4916 = vmatpush.bf16.msra.mxu0 %v4877
    %4917 = vmatmul.bf16.gmra.mxu0 %v4812
    %v4918 = vpop.f32.mrf.mxu0
    %v4919 = vadd.f32 0.0, %v4918
    %v4920 = vpop.f32.mrf.mxu0
    %4921 = vdwg.mxu0
    %4922 = vmatpush.bf16.msra.mxu0 %v4892
    %4923 = vmatpush.bf16.msra.mxu0 %v4890
    %4924 = vmatpush.bf16.msra.mxu0 %v4888
    %4925 = vmatpush.bf16.msra.mxu0 %v4886
    %4926 = vmatpush.bf16.msra.mxu0 %v4884
    %4927 = vmatpush.bf16.msra.mxu0 %v4882
    %4928 = vmatpush.bf16.msra.mxu0 %v4880
    %4929 = vmatpush.bf16.msra.mxu0 %v4878
    %4930 = vmatmul.bf16.gmra.mxu0 %v4812
    %v4931 = vpop.f32.mrf.mxu0
    %v4932 = vadd.f32 0.0, %v4931
    %v4933 = vpop.f32.mrf.mxu0
    %4934 = vdwg.mxu0
    %v4951 = vunpack.c.l.b16 %v4794
    %v4952 = vunpack.c.h.b16 %v4794
    %v4953 = vunpack.c.l.b16 %v4795
    %v4954 = vunpack.c.h.b16 %v4795
    %v4955 = vunpack.c.l.b16 %v4796
    %v4956 = vunpack.c.h.b16 %v4796
    %v4957 = vunpack.c.l.b16 %v4797
    %v4958 = vunpack.c.h.b16 %v4797
    %v4959 = vunpack.c.l.b16 %v4798
    %v4960 = vunpack.c.h.b16 %v4798
    %v4961 = vunpack.c.l.b16 %v4799
    %v4962 = vunpack.c.h.b16 %v4799
    %v4963 = vunpack.c.l.b16 %v4800
    %v4964 = vunpack.c.h.b16 %v4800
    %v4965 = vunpack.c.l.b16 %v4801
    %v4966 = vunpack.c.h.b16 %v4801
    %v4967 = vunpack.c.l.b16 %v4802
    %v4968 = vunpack.c.h.b16 %v4802
    %v4969 = vunpack.c.l.b16 %v4803
    %v4970 = vunpack.c.h.b16 %v4803
    %v4971 = vunpack.c.l.b16 %v4804
    %v4972 = vunpack.c.h.b16 %v4804
    %v4973 = vunpack.c.l.b16 %v4805
    %v4974 = vunpack.c.h.b16 %v4805
    %v4975 = vunpack.c.l.b16 %v4806
    %v4976 = vunpack.c.h.b16 %v4806
    %v4977 = vunpack.c.l.b16 %v4807
    %v4978 = vunpack.c.h.b16 %v4807
    %v4979 = vunpack.c.l.b16 %v4808
    %v4980 = vunpack.c.h.b16 %v4808
    %v4981 = vunpack.c.l.b16 %v4809
    %v4982 = vunpack.c.h.b16 %v4809
    %v4983 = vpack.c.b16 %v4953, %v4951
    %v4984 = vpack.c.b16 %v4954, %v4952
    %v4985 = vpack.c.b16 %v4957, %v4955
    %v4986 = vpack.c.b16 %v4958, %v4956
    %v4987 = vpack.c.b16 %v4961, %v4959
    %v4988 = vpack.c.b16 %v4962, %v4960
    %v4989 = vpack.c.b16 %v4965, %v4963
    %v4990 = vpack.c.b16 %v4966, %v4964
    %v4991 = vpack.c.b16 %v4969, %v4967
    %v4992 = vpack.c.b16 %v4970, %v4968
    %v4993 = vpack.c.b16 %v4973, %v4971
    %v4994 = vpack.c.b16 %v4974, %v4972
    %v4995 = vpack.c.b16 %v4977, %v4975
    %v4996 = vpack.c.b16 %v4978, %v4976
    %v4997 = vpack.c.b16 %v4981, %v4979
    %v4998 = vpack.c.b16 %v4982, %v4980
    %5015 = vmatpush.bf16.msra.mxu0 %v4997
    %5016 = vmatpush.bf16.msra.mxu0 %v4995
    %5017 = vmatpush.bf16.msra.mxu0 %v4993
    %5018 = vmatpush.bf16.msra.mxu0 %v4991
    %5019 = vmatpush.bf16.msra.mxu0 %v4989
    %5020 = vmatpush.bf16.msra.mxu0 %v4987
    %5021 = vmatpush.bf16.msra.mxu0 %v4985
    %5022 = vmatpush.bf16.msra.mxu0 %v4983
    %5023 = vmatmul.bf16.gmra.mxu0 %v4792
    %v5024 = vpop.f32.mrf.mxu0
    %v5025 = vadd.f32 %v4919, %v5024
    %v5026 = vpop.f32.mrf.mxu0
    %5027 = vdwg.mxu0
    %5028 = vmatpush.bf16.msra.mxu0 %v4998
    %5029 = vmatpush.bf16.msra.mxu0 %v4996
    %5030 = vmatpush.bf16.msra.mxu0 %v4994
    %5031 = vmatpush.bf16.msra.mxu0 %v4992
    %5032 = vmatpush.bf16.msra.mxu0 %v4990
    %5033 = vmatpush.bf16.msra.mxu0 %v4988
    %5034 = vmatpush.bf16.msra.mxu0 %v4986
    %5035 = vmatpush.bf16.msra.mxu0 %v4984
    %5036 = vmatmul.bf16.gmra.mxu0 %v4792
    %v5037 = vpop.f32.mrf.mxu0
    %v5038 = vadd.f32 %v4932, %v5037
    %v5039 = vpop.f32.mrf.mxu0
    %5040 = vdwg.mxu0
    %v5041 = vrot.slane %v4790, 1
    %v5042 = vmul.f32 %v5041, %v2094
    %v5043 = vpack.c.bf16 %v5042, %v5042
    %s5044 = scalar_lea.vmem [#allocation20], 256
    %v5045 = vld [vmem:[%s5044] sm:$0xff]
    %v5046 = vld [vmem:[%s5044 + $0x8] sm:$0xff]
    %v5047 = vld [vmem:[%s5044 + $0x10] sm:$0xff]
    %v5048 = vld [vmem:[%s5044 + $0x18] sm:$0xff]
    %v5049 = vld [vmem:[%s5044 + $0x20] sm:$0xff]
    %v5050 = vld [vmem:[%s5044 + $0x28] sm:$0xff]
    %v5051 = vld [vmem:[%s5044 + $0x30] sm:$0xff]
    %v5052 = vld [vmem:[%s5044 + $0x38] sm:$0xff]
    %v5053 = vld [vmem:[%s5044 + $0x40] sm:$0xff]
    %v5054 = vld [vmem:[%s5044 + $0x48] sm:$0xff]
    %v5055 = vld [vmem:[%s5044 + $0x50] sm:$0xff]
    %v5056 = vld [vmem:[%s5044 + $0x58] sm:$0xff]
    %v5057 = vld [vmem:[%s5044 + $0x60] sm:$0xff]
    %v5058 = vld [vmem:[%s5044 + $0x68] sm:$0xff]
    %v5059 = vld [vmem:[%s5044 + $0x70] sm:$0xff]
    %v5060 = vld [vmem:[%s5044 + $0x78] sm:$0xff]
    %v5077 = vunpack.c.l.b16 %v5045
    %v5078 = vunpack.c.h.b16 %v5045
    %v5079 = vunpack.c.l.b16 %v5046
    %v5080 = vunpack.c.h.b16 %v5046
    %v5081 = vunpack.c.l.b16 %v5047
    %v5082 = vunpack.c.h.b16 %v5047
    %v5083 = vunpack.c.l.b16 %v5048
    %v5084 = vunpack.c.h.b16 %v5048
    %v5085 = vunpack.c.l.b16 %v5049
    %v5086 = vunpack.c.h.b16 %v5049
    %v5087 = vunpack.c.l.b16 %v5050
    %v5088 = vunpack.c.h.b16 %v5050
    %v5089 = vunpack.c.l.b16 %v5051
    %v5090 = vunpack.c.h.b16 %v5051
    %v5091 = vunpack.c.l.b16 %v5052
    %v5092 = vunpack.c.h.b16 %v5052
    %v5093 = vunpack.c.l.b16 %v5053
    %v5094 = vunpack.c.h.b16 %v5053
    %v5095 = vunpack.c.l.b16 %v5054
    %v5096 = vunpack.c.h.b16 %v5054
    %v5097 = vunpack.c.l.b16 %v5055
    %v5098 = vunpack.c.h.b16 %v5055
    %v5099 = vunpack.c.l.b16 %v5056
    %v5100 = vunpack.c.h.b16 %v5056
    %v5101 = vunpack.c.l.b16 %v5057
    %v5102 = vunpack.c.h.b16 %v5057
    %v5103 = vunpack.c.l.b16 %v5058
    %v5104 = vunpack.c.h.b16 %v5058
    %v5105 = vunpack.c.l.b16 %v5059
    %v5106 = vunpack.c.h.b16 %v5059
    %v5107 = vunpack.c.l.b16 %v5060
    %v5108 = vunpack.c.h.b16 %v5060
    %v5109 = vpack.c.b16 %v5079, %v5077
    %v5110 = vpack.c.b16 %v5080, %v5078
    %v5111 = vpack.c.b16 %v5083, %v5081
    %v5112 = vpack.c.b16 %v5084, %v5082
    %v5113 = vpack.c.b16 %v5087, %v5085
    %v5114 = vpack.c.b16 %v5088, %v5086
    %v5115 = vpack.c.b16 %v5091, %v5089
    %v5116 = vpack.c.b16 %v5092, %v5090
    %v5117 = vpack.c.b16 %v5095, %v5093
    %v5118 = vpack.c.b16 %v5096, %v5094
    %v5119 = vpack.c.b16 %v5099, %v5097
    %v5120 = vpack.c.b16 %v5100, %v5098
    %v5121 = vpack.c.b16 %v5103, %v5101
    %v5122 = vpack.c.b16 %v5104, %v5102
    %v5123 = vpack.c.b16 %v5107, %v5105
    %v5124 = vpack.c.b16 %v5108, %v5106
    %5141 = vmatpush.bf16.msra.mxu0 %v5123
    %5142 = vmatpush.bf16.msra.mxu0 %v5121
    %5143 = vmatpush.bf16.msra.mxu0 %v5119
    %5144 = vmatpush.bf16.msra.mxu0 %v5117
    %5145 = vmatpush.bf16.msra.mxu0 %v5115
    %5146 = vmatpush.bf16.msra.mxu0 %v5113
    %5147 = vmatpush.bf16.msra.mxu0 %v5111
    %5148 = vmatpush.bf16.msra.mxu0 %v5109
    %5149 = vmatmul.bf16.gmra.mxu0 %v5043
    %v5150 = vpop.f32.mrf.mxu0
    %v5151 = vadd.f32 0.0, %v5150
    %v5152 = vpop.f32.mrf.mxu0
    %5153 = vdwg.mxu0
    %5154 = vmatpush.bf16.msra.mxu0 %v5124
    %5155 = vmatpush.bf16.msra.mxu0 %v5122
    %5156 = vmatpush.bf16.msra.mxu0 %v5120
    %5157 = vmatpush.bf16.msra.mxu0 %v5118
    %5158 = vmatpush.bf16.msra.mxu0 %v5116
    %5159 = vmatpush.bf16.msra.mxu0 %v5114
    %5160 = vmatpush.bf16.msra.mxu0 %v5112
    %5161 = vmatpush.bf16.msra.mxu0 %v5110
    %5162 = vmatmul.bf16.gmra.mxu0 %v5043
    %v5163 = vpop.f32.mrf.mxu0
    %v5164 = vadd.f32 0.0, %v5163
    %v5165 = vpop.f32.mrf.mxu0
    %5166 = vdwg.mxu0
    %v5167 = vadd.f32 %v5025, %v5151
    %v5168 = vadd.f32 %v5038, %v5164
    %v5169 = vld [vmem:[%s73] sm:$0x3]
    %v5171 = vperm.slane %v5169, 0
    %v5172 = vperm.slane %v5169, 1
    %v5175 = vadd.f32 %v5167, %v5171
    %v5176 = vadd.f32 %v5168, %v5172
    %v5177 = vmax.f32 %v5175, 0.0
    %v5178 = vmax.f32 %v5176, 0.0
    %v5179 = vpack.c.bf16 %v5177, %v5177
    %v5180 = vpack.c.bf16 %v5178, %v5178
    %s5181 = scalar_lea.vmem [#allocation21], 128
    %v5182 = vld [vmem:[%s5181] sm:$0xf]
    %v5183 = vld [vmem:[%s5181 + $0x4] sm:$0xf]
    %v5184 = vld [vmem:[%s5181 + $0x8] sm:$0xf]
    %v5185 = vld [vmem:[%s5181 + $0xc] sm:$0xf]
    %v5186 = vld [vmem:[%s5181 + $0x10] sm:$0xf]
    %v5187 = vld [vmem:[%s5181 + $0x14] sm:$0xf]
    %v5188 = vld [vmem:[%s5181 + $0x18] sm:$0xf]
    %v5189 = vld [vmem:[%s5181 + $0x1c] sm:$0xf]
    %v5190 = vld [vmem:[%s5181 + $0x20] sm:$0xf]
    %v5191 = vld [vmem:[%s5181 + $0x24] sm:$0xf]
    %v5192 = vld [vmem:[%s5181 + $0x28] sm:$0xf]
    %v5193 = vld [vmem:[%s5181 + $0x2c] sm:$0xf]
    %v5194 = vld [vmem:[%s5181 + $0x30] sm:$0xf]
    %v5195 = vld [vmem:[%s5181 + $0x34] sm:$0xf]
    %v5196 = vld [vmem:[%s5181 + $0x38] sm:$0xf]
    %v5197 = vld [vmem:[%s5181 + $0x3c] sm:$0xf]
    %v5198 = vld [vmem:[%s5181 + $0x40] sm:$0xf]
    %v5199 = vld [vmem:[%s5181 + $0x44] sm:$0xf]
    %v5200 = vld [vmem:[%s5181 + $0x48] sm:$0xf]
    %v5201 = vld [vmem:[%s5181 + $0x4c] sm:$0xf]
    %v5202 = vld [vmem:[%s5181 + $0x50] sm:$0xf]
    %v5203 = vld [vmem:[%s5181 + $0x54] sm:$0xf]
    %v5204 = vld [vmem:[%s5181 + $0x58] sm:$0xf]
    %v5205 = vld [vmem:[%s5181 + $0x5c] sm:$0xf]
    %v5206 = vld [vmem:[%s5181 + $0x60] sm:$0xf]
    %v5207 = vld [vmem:[%s5181 + $0x64] sm:$0xf]
    %v5208 = vld [vmem:[%s5181 + $0x68] sm:$0xf]
    %v5209 = vld [vmem:[%s5181 + $0x6c] sm:$0xf]
    %v5210 = vld [vmem:[%s5181 + $0x70] sm:$0xf]
    %v5211 = vld [vmem:[%s5181 + $0x74] sm:$0xf]
    %v5212 = vld [vmem:[%s5181 + $0x78] sm:$0xf]
    %v5213 = vld [vmem:[%s5181 + $0x7c] sm:$0xf]
    %v5214 = vrot.slane %v5177, 7
    %v5215 = vrot.slane %v5178, 7
    %v5216 = vmul.f32 %v5214, %v1858
    %v5217 = vmul.f32 %v5215, %v1858
    %v5218 = vpack.c.bf16 %v5216, %v5216
    %v5219 = vpack.c.bf16 %v5217, %v5217
    %v5220 = vld [vmem:[#allocation21] sm:$0xf]
    %v5221 = vld [vmem:[#allocation21 + $0x4] sm:$0xf]
    %v5222 = vld [vmem:[#allocation21 + $0x8] sm:$0xf]
    %v5223 = vld [vmem:[#allocation21 + $0xc] sm:$0xf]
    %v5224 = vld [vmem:[#allocation21 + $0x10] sm:$0xf]
    %v5225 = vld [vmem:[#allocation21 + $0x14] sm:$0xf]
    %v5226 = vld [vmem:[#allocation21 + $0x18] sm:$0xf]
    %v5227 = vld [vmem:[#allocation21 + $0x1c] sm:$0xf]
    %v5228 = vld [vmem:[#allocation21 + $0x20] sm:$0xf]
    %v5229 = vld [vmem:[#allocation21 + $0x24] sm:$0xf]
    %v5230 = vld [vmem:[#allocation21 + $0x28] sm:$0xf]
    %v5231 = vld [vmem:[#allocation21 + $0x2c] sm:$0xf]
    %v5232 = vld [vmem:[#allocation21 + $0x30] sm:$0xf]
    %v5233 = vld [vmem:[#allocation21 + $0x34] sm:$0xf]
    %v5234 = vld [vmem:[#allocation21 + $0x38] sm:$0xf]
    %v5235 = vld [vmem:[#allocation21 + $0x3c] sm:$0xf]
    %v5236 = vld [vmem:[#allocation21 + $0x40] sm:$0xf]
    %v5237 = vld [vmem:[#allocation21 + $0x44] sm:$0xf]
    %v5238 = vld [vmem:[#allocation21 + $0x48] sm:$0xf]
    %v5239 = vld [vmem:[#allocation21 + $0x4c] sm:$0xf]
    %v5240 = vld [vmem:[#allocation21 + $0x50] sm:$0xf]
    %v5241 = vld [vmem:[#allocation21 + $0x54] sm:$0xf]
    %v5242 = vld [vmem:[#allocation21 + $0x58] sm:$0xf]
    %v5243 = vld [vmem:[#allocation21 + $0x5c] sm:$0xf]
    %v5244 = vld [vmem:[#allocation21 + $0x60] sm:$0xf]
    %v5245 = vld [vmem:[#allocation21 + $0x64] sm:$0xf]
    %v5246 = vld [vmem:[#allocation21 + $0x68] sm:$0xf]
    %v5247 = vld [vmem:[#allocation21 + $0x6c] sm:$0xf]
    %v5248 = vld [vmem:[#allocation21 + $0x70] sm:$0xf]
    %v5249 = vld [vmem:[#allocation21 + $0x74] sm:$0xf]
    %v5250 = vld [vmem:[#allocation21 + $0x78] sm:$0xf]
    %v5251 = vld [vmem:[#allocation21 + $0x7c] sm:$0xf]
    %v5284 = vunpack.c.l.b16 %v5220
    %v5285 = vunpack.c.l.b16 %v5221
    %v5286 = vunpack.c.l.b16 %v5222
    %v5287 = vunpack.c.l.b16 %v5223
    %v5288 = vunpack.c.l.b16 %v5224
    %v5289 = vunpack.c.l.b16 %v5225
    %v5290 = vunpack.c.l.b16 %v5226
    %v5291 = vunpack.c.l.b16 %v5227
    %v5292 = vunpack.c.l.b16 %v5228
    %v5293 = vunpack.c.l.b16 %v5229
    %v5294 = vunpack.c.l.b16 %v5230
    %v5295 = vunpack.c.l.b16 %v5231
    %v5296 = vunpack.c.l.b16 %v5232
    %v5297 = vunpack.c.l.b16 %v5233
    %v5298 = vunpack.c.l.b16 %v5234
    %v5299 = vunpack.c.l.b16 %v5235
    %v5300 = vunpack.c.l.b16 %v5236
    %v5301 = vunpack.c.l.b16 %v5237
    %v5302 = vunpack.c.l.b16 %v5238
    %v5303 = vunpack.c.l.b16 %v5239
    %v5304 = vunpack.c.l.b16 %v5240
    %v5305 = vunpack.c.l.b16 %v5241
    %v5306 = vunpack.c.l.b16 %v5242
    %v5307 = vunpack.c.l.b16 %v5243
    %v5308 = vunpack.c.l.b16 %v5244
    %v5309 = vunpack.c.l.b16 %v5245
    %v5310 = vunpack.c.l.b16 %v5246
    %v5311 = vunpack.c.l.b16 %v5247
    %v5312 = vunpack.c.l.b16 %v5248
    %v5313 = vunpack.c.l.b16 %v5249
    %v5314 = vunpack.c.l.b16 %v5250
    %v5315 = vunpack.c.l.b16 %v5251
    %v5316 = vpack.c.b16 %v5285, %v5284
    %v5317 = vpack.c.b16 %v5287, %v5286
    %v5318 = vpack.c.b16 %v5289, %v5288
    %v5319 = vpack.c.b16 %v5291, %v5290
    %v5320 = vpack.c.b16 %v5293, %v5292
    %v5321 = vpack.c.b16 %v5295, %v5294
    %v5322 = vpack.c.b16 %v5297, %v5296
    %v5323 = vpack.c.b16 %v5299, %v5298
    %v5324 = vpack.c.b16 %v5301, %v5300
    %v5325 = vpack.c.b16 %v5303, %v5302
    %v5326 = vpack.c.b16 %v5305, %v5304
    %v5327 = vpack.c.b16 %v5307, %v5306
    %v5328 = vpack.c.b16 %v5309, %v5308
    %v5329 = vpack.c.b16 %v5311, %v5310
    %v5330 = vpack.c.b16 %v5313, %v5312
    %v5331 = vpack.c.b16 %v5315, %v5314
    %5348 = vmatpush.bf16.msra.mxu0 %v5323
    %5349 = vmatpush.bf16.msra.mxu0 %v5322
    %5350 = vmatpush.bf16.msra.mxu0 %v5321
    %5351 = vmatpush.bf16.msra.mxu0 %v5320
    %5352 = vmatpush.bf16.msra.mxu0 %v5319
    %5353 = vmatpush.bf16.msra.mxu0 %v5318
    %5354 = vmatpush.bf16.msra.mxu0 %v5317
    %5355 = vmatpush.bf16.msra.mxu0 %v5316
    %5356 = vmatmul.bf16.gmra.mxu0 %v5218
    %v5357 = vpop.f32.mrf.mxu0
    %v5358 = vadd.f32 0.0, %v5357
    %v5359 = vpop.f32.mrf.mxu0
    %5360 = vdwg.mxu0
    %5361 = vmatpush.bf16.msra.mxu0 %v5331
    %5362 = vmatpush.bf16.msra.mxu0 %v5330
    %5363 = vmatpush.bf16.msra.mxu0 %v5329
    %5364 = vmatpush.bf16.msra.mxu0 %v5328
    %5365 = vmatpush.bf16.msra.mxu0 %v5327
    %5366 = vmatpush.bf16.msra.mxu0 %v5326
    %5367 = vmatpush.bf16.msra.mxu0 %v5325
    %5368 = vmatpush.bf16.msra.mxu0 %v5324
    %5369 = vmatmul.bf16.gmra.mxu0 %v5219
    %v5370 = vpop.f32.mrf.mxu0
    %v5371 = vadd.f32 %v5358, %v5370
    %v5372 = vpop.f32.mrf.mxu0
    %5373 = vdwg.mxu0
    %v5406 = vunpack.c.l.b16 %v5182
    %v5407 = vunpack.c.l.b16 %v5183
    %v5408 = vunpack.c.l.b16 %v5184
    %v5409 = vunpack.c.l.b16 %v5185
    %v5410 = vunpack.c.l.b16 %v5186
    %v5411 = vunpack.c.l.b16 %v5187
    %v5412 = vunpack.c.l.b16 %v5188
    %v5413 = vunpack.c.l.b16 %v5189
    %v5414 = vunpack.c.l.b16 %v5190
    %v5415 = vunpack.c.l.b16 %v5191
    %v5416 = vunpack.c.l.b16 %v5192
    %v5417 = vunpack.c.l.b16 %v5193
    %v5418 = vunpack.c.l.b16 %v5194
    %v5419 = vunpack.c.l.b16 %v5195
    %v5420 = vunpack.c.l.b16 %v5196
    %v5421 = vunpack.c.l.b16 %v5197
    %v5422 = vunpack.c.l.b16 %v5198
    %v5423 = vunpack.c.l.b16 %v5199
    %v5424 = vunpack.c.l.b16 %v5200
    %v5425 = vunpack.c.l.b16 %v5201
    %v5426 = vunpack.c.l.b16 %v5202
    %v5427 = vunpack.c.l.b16 %v5203
    %v5428 = vunpack.c.l.b16 %v5204
    %v5429 = vunpack.c.l.b16 %v5205
    %v5430 = vunpack.c.l.b16 %v5206
    %v5431 = vunpack.c.l.b16 %v5207
    %v5432 = vunpack.c.l.b16 %v5208
    %v5433 = vunpack.c.l.b16 %v5209
    %v5434 = vunpack.c.l.b16 %v5210
    %v5435 = vunpack.c.l.b16 %v5211
    %v5436 = vunpack.c.l.b16 %v5212
    %v5437 = vunpack.c.l.b16 %v5213
    %v5438 = vpack.c.b16 %v5407, %v5406
    %v5439 = vpack.c.b16 %v5409, %v5408
    %v5440 = vpack.c.b16 %v5411, %v5410
    %v5441 = vpack.c.b16 %v5413, %v5412
    %v5442 = vpack.c.b16 %v5415, %v5414
    %v5443 = vpack.c.b16 %v5417, %v5416
    %v5444 = vpack.c.b16 %v5419, %v5418
    %v5445 = vpack.c.b16 %v5421, %v5420
    %v5446 = vpack.c.b16 %v5423, %v5422
    %v5447 = vpack.c.b16 %v5425, %v5424
    %v5448 = vpack.c.b16 %v5427, %v5426
    %v5449 = vpack.c.b16 %v5429, %v5428
    %v5450 = vpack.c.b16 %v5431, %v5430
    %v5451 = vpack.c.b16 %v5433, %v5432
    %v5452 = vpack.c.b16 %v5435, %v5434
    %v5453 = vpack.c.b16 %v5437, %v5436
    %5470 = vmatpush.bf16.msra.mxu0 %v5445
    %5471 = vmatpush.bf16.msra.mxu0 %v5444
    %5472 = vmatpush.bf16.msra.mxu0 %v5443
    %5473 = vmatpush.bf16.msra.mxu0 %v5442
    %5474 = vmatpush.bf16.msra.mxu0 %v5441
    %5475 = vmatpush.bf16.msra.mxu0 %v5440
    %5476 = vmatpush.bf16.msra.mxu0 %v5439
    %5477 = vmatpush.bf16.msra.mxu0 %v5438
    %5478 = vmatmul.bf16.gmra.mxu0 %v5179
    %v5479 = vpop.f32.mrf.mxu0
    %v5480 = vadd.f32 %v5371, %v5479
    %v5481 = vpop.f32.mrf.mxu0
    %5482 = vdwg.mxu0
    %5483 = vmatpush.bf16.msra.mxu0 %v5453
    %5484 = vmatpush.bf16.msra.mxu0 %v5452
    %5485 = vmatpush.bf16.msra.mxu0 %v5451
    %5486 = vmatpush.bf16.msra.mxu0 %v5450
    %5487 = vmatpush.bf16.msra.mxu0 %v5449
    %5488 = vmatpush.bf16.msra.mxu0 %v5448
    %5489 = vmatpush.bf16.msra.mxu0 %v5447
    %5490 = vmatpush.bf16.msra.mxu0 %v5446
    %5491 = vmatmul.bf16.gmra.mxu0 %v5180
    %v5492 = vpop.f32.mrf.mxu0
    %v5493 = vadd.f32 %v5480, %v5492
    %v5494 = vpop.f32.mrf.mxu0
    %5495 = vdwg.mxu0
    %v5496 = vrot.slane %v5177, 1
    %v5497 = vrot.slane %v5178, 1
    %v5498 = vmul.f32 %v5496, %v2094
    %v5499 = vmul.f32 %v5497, %v2094
    %v5500 = vpack.c.bf16 %v5498, %v5498
    %v5501 = vpack.c.bf16 %v5499, %v5499
    %s5502 = scalar_lea.vmem [#allocation21], 256
    %v5503 = vld [vmem:[%s5502] sm:$0xf]
    %v5504 = vld [vmem:[%s5502 + $0x4] sm:$0xf]
    %v5505 = vld [vmem:[%s5502 + $0x8] sm:$0xf]
    %v5506 = vld [vmem:[%s5502 + $0xc] sm:$0xf]
    %v5507 = vld [vmem:[%s5502 + $0x10] sm:$0xf]
    %v5508 = vld [vmem:[%s5502 + $0x14] sm:$0xf]
    %v5509 = vld [vmem:[%s5502 + $0x18] sm:$0xf]
    %v5510 = vld [vmem:[%s5502 + $0x1c] sm:$0xf]
    %v5511 = vld [vmem:[%s5502 + $0x20] sm:$0xf]
    %v5512 = vld [vmem:[%s5502 + $0x24] sm:$0xf]
    %v5513 = vld [vmem:[%s5502 + $0x28] sm:$0xf]
    %v5514 = vld [vmem:[%s5502 + $0x2c] sm:$0xf]
    %v5515 = vld [vmem:[%s5502 + $0x30] sm:$0xf]
    %v5516 = vld [vmem:[%s5502 + $0x34] sm:$0xf]
    %v5517 = vld [vmem:[%s5502 + $0x38] sm:$0xf]
    %v5518 = vld [vmem:[%s5502 + $0x3c] sm:$0xf]
    %v5519 = vld [vmem:[%s5502 + $0x40] sm:$0xf]
    %v5520 = vld [vmem:[%s5502 + $0x44] sm:$0xf]
    %v5521 = vld [vmem:[%s5502 + $0x48] sm:$0xf]
    %v5522 = vld [vmem:[%s5502 + $0x4c] sm:$0xf]
    %v5523 = vld [vmem:[%s5502 + $0x50] sm:$0xf]
    %v5524 = vld [vmem:[%s5502 + $0x54] sm:$0xf]
    %v5525 = vld [vmem:[%s5502 + $0x58] sm:$0xf]
    %v5526 = vld [vmem:[%s5502 + $0x5c] sm:$0xf]
    %v5527 = vld [vmem:[%s5502 + $0x60] sm:$0xf]
    %v5528 = vld [vmem:[%s5502 + $0x64] sm:$0xf]
    %v5529 = vld [vmem:[%s5502 + $0x68] sm:$0xf]
    %v5530 = vld [vmem:[%s5502 + $0x6c] sm:$0xf]
    %v5531 = vld [vmem:[%s5502 + $0x70] sm:$0xf]
    %v5532 = vld [vmem:[%s5502 + $0x74] sm:$0xf]
    %v5533 = vld [vmem:[%s5502 + $0x78] sm:$0xf]
    %v5534 = vld [vmem:[%s5502 + $0x7c] sm:$0xf]
    %v5567 = vunpack.c.l.b16 %v5503
    %v5568 = vunpack.c.l.b16 %v5504
    %v5569 = vunpack.c.l.b16 %v5505
    %v5570 = vunpack.c.l.b16 %v5506
    %v5571 = vunpack.c.l.b16 %v5507
    %v5572 = vunpack.c.l.b16 %v5508
    %v5573 = vunpack.c.l.b16 %v5509
    %v5574 = vunpack.c.l.b16 %v5510
    %v5575 = vunpack.c.l.b16 %v5511
    %v5576 = vunpack.c.l.b16 %v5512
    %v5577 = vunpack.c.l.b16 %v5513
    %v5578 = vunpack.c.l.b16 %v5514
    %v5579 = vunpack.c.l.b16 %v5515
    %v5580 = vunpack.c.l.b16 %v5516
    %v5581 = vunpack.c.l.b16 %v5517
    %v5582 = vunpack.c.l.b16 %v5518
    %v5583 = vunpack.c.l.b16 %v5519
    %v5584 = vunpack.c.l.b16 %v5520
    %v5585 = vunpack.c.l.b16 %v5521
    %v5586 = vunpack.c.l.b16 %v5522
    %v5587 = vunpack.c.l.b16 %v5523
    %v5588 = vunpack.c.l.b16 %v5524
    %v5589 = vunpack.c.l.b16 %v5525
    %v5590 = vunpack.c.l.b16 %v5526
    %v5591 = vunpack.c.l.b16 %v5527
    %v5592 = vunpack.c.l.b16 %v5528
    %v5593 = vunpack.c.l.b16 %v5529
    %v5594 = vunpack.c.l.b16 %v5530
    %v5595 = vunpack.c.l.b16 %v5531
    %v5596 = vunpack.c.l.b16 %v5532
    %v5597 = vunpack.c.l.b16 %v5533
    %v5598 = vunpack.c.l.b16 %v5534
    %v5599 = vpack.c.b16 %v5568, %v5567
    %v5600 = vpack.c.b16 %v5570, %v5569
    %v5601 = vpack.c.b16 %v5572, %v5571
    %v5602 = vpack.c.b16 %v5574, %v5573
    %v5603 = vpack.c.b16 %v5576, %v5575
    %v5604 = vpack.c.b16 %v5578, %v5577
    %v5605 = vpack.c.b16 %v5580, %v5579
    %v5606 = vpack.c.b16 %v5582, %v5581
    %v5607 = vpack.c.b16 %v5584, %v5583
    %v5608 = vpack.c.b16 %v5586, %v5585
    %v5609 = vpack.c.b16 %v5588, %v5587
    %v5610 = vpack.c.b16 %v5590, %v5589
    %v5611 = vpack.c.b16 %v5592, %v5591
    %v5612 = vpack.c.b16 %v5594, %v5593
    %v5613 = vpack.c.b16 %v5596, %v5595
    %v5614 = vpack.c.b16 %v5598, %v5597
    %5631 = vmatpush.bf16.msra.mxu0 %v5606
    %5632 = vmatpush.bf16.msra.mxu0 %v5605
    %5633 = vmatpush.bf16.msra.mxu0 %v5604
    %5634 = vmatpush.bf16.msra.mxu0 %v5603
    %5635 = vmatpush.bf16.msra.mxu0 %v5602
    %5636 = vmatpush.bf16.msra.mxu0 %v5601
    %5637 = vmatpush.bf16.msra.mxu0 %v5600
    %5638 = vmatpush.bf16.msra.mxu0 %v5599
    %5639 = vmatmul.bf16.gmra.mxu0 %v5500
    %v5640 = vpop.f32.mrf.mxu0
    %v5641 = vadd.f32 0.0, %v5640
    %v5642 = vpop.f32.mrf.mxu0
    %5643 = vdwg.mxu0
    %5644 = vmatpush.bf16.msra.mxu0 %v5614
    %5645 = vmatpush.bf16.msra.mxu0 %v5613
    %5646 = vmatpush.bf16.msra.mxu0 %v5612
    %5647 = vmatpush.bf16.msra.mxu0 %v5611
    %5648 = vmatpush.bf16.msra.mxu0 %v5610
    %5649 = vmatpush.bf16.msra.mxu0 %v5609
    %5650 = vmatpush.bf16.msra.mxu0 %v5608
    %5651 = vmatpush.bf16.msra.mxu0 %v5607
    %5652 = vmatmul.bf16.gmra.mxu0 %v5501
    %v5653 = vpop.f32.mrf.mxu0
    %v5654 = vadd.f32 %v5641, %v5653
    %v5655 = vpop.f32.mrf.mxu0
    %5656 = vdwg.mxu0
    %v5657 = vadd.f32 %v5493, %v5654
    %v5658 = vld [vmem:[%s77] sm:$0x1]
    %v5660 = vperm.slane %v5658, 0
    %v5662 = vadd.f32 %v5657, %v5660
    %v5663 = vmax.f32 %v5662, 0.0
    %v5664 = vsel %vm4791, 0.0, %v5663
    %v5665 = vsel %vm4791, %v5663, 0.0
    %5666 = vmatpush.msra.mxu0 0.0
    %5667 = vmatpush.msra.mxu0 0.0
    %5668 = vmatpush.msra.mxu0 0.0
    %5669 = vmatpush.msra.mxu0 0.0
    %5670 = vmatpush.msra.mxu0 0.0
    %5671 = vmatpush.msra.mxu0 0.0
    %5672 = vmatpush.msra.mxu0 0.0
    %5673 = vmatpush.msra.mxu0 0.0
    %5674 = vmatpush.msra.mxu0 0.0
    %5675 = vmatpush.msra.mxu0 0.0
    %5676 = vmatpush.msra.mxu0 0.0
    %5677 = vmatpush.msra.mxu0 0.0
    %5678 = vmatpush.msra.mxu0 0.0
    %5679 = vmatpush.msra.mxu0 0.0
    %5680 = vmatpush.msra.mxu0 0.0
    %5681 = vmatpush.msra.mxu0 %v5665
    %5682 = vmatmul.f32.gmra.mxu0 %v2722
    %v5683 = vpop.f32.mrf.mxu0
    %v5684 = vadd.f32 0.0, %v5683
    %5685 = vmatmul.f32.gmra.mxu0 %v2725
    %v5686 = vpop.f32.mrf.mxu0
    %v5687 = vadd.f32 0.0, %v5686
    %5688 = vdwg.mxu0
    %5689 = vmatpush.msra.mxu0 0.0
    %5690 = vmatpush.msra.mxu0 0.0
    %5691 = vmatpush.msra.mxu0 0.0
    %5692 = vmatpush.msra.mxu0 0.0
    %5693 = vmatpush.msra.mxu0 0.0
    %5694 = vmatpush.msra.mxu0 0.0
    %5695 = vmatpush.msra.mxu0 0.0
    %5696 = vmatpush.msra.mxu0 0.0
    %5697 = vmatpush.msra.mxu0 0.0
    %5698 = vmatpush.msra.mxu0 0.0
    %5699 = vmatpush.msra.mxu0 0.0
    %5700 = vmatpush.msra.mxu0 0.0
    %5701 = vmatpush.msra.mxu0 0.0
    %5702 = vmatpush.msra.mxu0 0.0
    %5703 = vmatpush.msra.mxu0 0.0
    %5704 = vmatpush.msra.mxu0 %v5664
    %5705 = vmatmul.f32.gmra.mxu0 %v2751
    %v5706 = vpop.f32.mrf.mxu0
    %v5707 = vadd.f32 %v5684, %v5706
    %5708 = vmatmul.f32.gmra.mxu0 %v2754
    %v5709 = vpop.f32.mrf.mxu0
    %v5710 = vadd.f32 %v5687, %v5709
    %5711 = vdwg.mxu0
    %v5712 = vadd.f32 %v4748, %v5707
    %v5713 = vadd.f32 %v4749, %v5710
    %v5714 = vpack.c.bf16 %v5713, %v5712
    %s5715 = scalar_lea.vmem [#allocation26], 64
    %v5716 = vld [vmem:[%s5715] sm:$0xf]
    %v5717 = vld [vmem:[%s5715 + $0x4] sm:$0xf]
    %v5718 = vld [vmem:[%s5715 + $0x8] sm:$0xf]
    %v5719 = vld [vmem:[%s5715 + $0xc] sm:$0xf]
    %v5720 = vld [vmem:[%s5715 + $0x10] sm:$0xf]
    %v5721 = vld [vmem:[%s5715 + $0x14] sm:$0xf]
    %v5722 = vld [vmem:[%s5715 + $0x18] sm:$0xf]
    %v5723 = vld [vmem:[%s5715 + $0x1c] sm:$0xf]
    %v5724 = vld [vmem:[%s5715 + $0x20] sm:$0xf]
    %v5725 = vld [vmem:[%s5715 + $0x24] sm:$0xf]
    %v5726 = vld [vmem:[%s5715 + $0x28] sm:$0xf]
    %v5727 = vld [vmem:[%s5715 + $0x2c] sm:$0xf]
    %v5728 = vld [vmem:[%s5715 + $0x30] sm:$0xf]
    %v5729 = vld [vmem:[%s5715 + $0x34] sm:$0xf]
    %v5730 = vld [vmem:[%s5715 + $0x38] sm:$0xf]
    %v5731 = vld [vmem:[%s5715 + $0x3c] sm:$0xf]
    %v5732 = vrot.slane %v5712, 7
    %v5733 = vrot.slane %v5713, 7
    %v5734 = vsel %vm805, %v5732, %v5733
    %v5735 = vsel %vm805, %v5733, %v5732
    %v5736 = vmul.f32 %v5735, %v1351
    %v5737 = vmul.f32 %v5734, %v1356
    %v5738 = vpack.c.bf16 %v5737, %v5736
    %v5739 = vld [vmem:[#allocation26] sm:$0xf]
    %v5740 = vld [vmem:[#allocation26 + $0x4] sm:$0xf]
    %v5741 = vld [vmem:[#allocation26 + $0x8] sm:$0xf]
    %v5742 = vld [vmem:[#allocation26 + $0xc] sm:$0xf]
    %v5743 = vld [vmem:[#allocation26 + $0x10] sm:$0xf]
    %v5744 = vld [vmem:[#allocation26 + $0x14] sm:$0xf]
    %v5745 = vld [vmem:[#allocation26 + $0x18] sm:$0xf]
    %v5746 = vld [vmem:[#allocation26 + $0x1c] sm:$0xf]
    %v5747 = vld [vmem:[#allocation26 + $0x20] sm:$0xf]
    %v5748 = vld [vmem:[#allocation26 + $0x24] sm:$0xf]
    %v5749 = vld [vmem:[#allocation26 + $0x28] sm:$0xf]
    %v5750 = vld [vmem:[#allocation26 + $0x2c] sm:$0xf]
    %v5751 = vld [vmem:[#allocation26 + $0x30] sm:$0xf]
    %v5752 = vld [vmem:[#allocation26 + $0x34] sm:$0xf]
    %v5753 = vld [vmem:[#allocation26 + $0x38] sm:$0xf]
    %v5754 = vld [vmem:[#allocation26 + $0x3c] sm:$0xf]
    %v5771 = vunpack.c.l.b16 %v5739
    %v5772 = vunpack.c.l.b16 %v5740
    %v5773 = vunpack.c.l.b16 %v5741
    %v5774 = vunpack.c.l.b16 %v5742
    %v5775 = vunpack.c.l.b16 %v5743
    %v5776 = vunpack.c.l.b16 %v5744
    %v5777 = vunpack.c.l.b16 %v5745
    %v5778 = vunpack.c.l.b16 %v5746
    %v5779 = vunpack.c.l.b16 %v5747
    %v5780 = vunpack.c.l.b16 %v5748
    %v5781 = vunpack.c.l.b16 %v5749
    %v5782 = vunpack.c.l.b16 %v5750
    %v5783 = vunpack.c.l.b16 %v5751
    %v5784 = vunpack.c.l.b16 %v5752
    %v5785 = vunpack.c.l.b16 %v5753
    %v5786 = vunpack.c.l.b16 %v5754
    %v5787 = vpack.c.b16 %v5772, %v5771
    %v5788 = vpack.c.b16 %v5774, %v5773
    %v5789 = vpack.c.b16 %v5776, %v5775
    %v5790 = vpack.c.b16 %v5778, %v5777
    %v5791 = vpack.c.b16 %v5780, %v5779
    %v5792 = vpack.c.b16 %v5782, %v5781
    %v5793 = vpack.c.b16 %v5784, %v5783
    %v5794 = vpack.c.b16 %v5786, %v5785
    %5803 = vmatpush.bf16.msra.mxu0 %v5794
    %5804 = vmatpush.bf16.msra.mxu0 %v5793
    %5805 = vmatpush.bf16.msra.mxu0 %v5792
    %5806 = vmatpush.bf16.msra.mxu0 %v5791
    %5807 = vmatpush.bf16.msra.mxu0 %v5790
    %5808 = vmatpush.bf16.msra.mxu0 %v5789
    %5809 = vmatpush.bf16.msra.mxu0 %v5788
    %5810 = vmatpush.bf16.msra.mxu0 %v5787
    %5811 = vmatmul.bf16.gmra.mxu0 %v5738
    %v5812 = vpop.f32.mrf.mxu0
    %v5813 = vadd.f32 0.0, %v5812
    %v5814 = vpop.f32.mrf.mxu0
    %v5815 = vadd.f32 0.0, %v5814
    %5816 = vdwg.mxu0
    %v5833 = vunpack.c.l.b16 %v5716
    %v5834 = vunpack.c.l.b16 %v5717
    %v5835 = vunpack.c.l.b16 %v5718
    %v5836 = vunpack.c.l.b16 %v5719
    %v5837 = vunpack.c.l.b16 %v5720
    %v5838 = vunpack.c.l.b16 %v5721
    %v5839 = vunpack.c.l.b16 %v5722
    %v5840 = vunpack.c.l.b16 %v5723
    %v5841 = vunpack.c.l.b16 %v5724
    %v5842 = vunpack.c.l.b16 %v5725
    %v5843 = vunpack.c.l.b16 %v5726
    %v5844 = vunpack.c.l.b16 %v5727
    %v5845 = vunpack.c.l.b16 %v5728
    %v5846 = vunpack.c.l.b16 %v5729
    %v5847 = vunpack.c.l.b16 %v5730
    %v5848 = vunpack.c.l.b16 %v5731
    %v5849 = vpack.c.b16 %v5834, %v5833
    %v5850 = vpack.c.b16 %v5836, %v5835
    %v5851 = vpack.c.b16 %v5838, %v5837
    %v5852 = vpack.c.b16 %v5840, %v5839
    %v5853 = vpack.c.b16 %v5842, %v5841
    %v5854 = vpack.c.b16 %v5844, %v5843
    %v5855 = vpack.c.b16 %v5846, %v5845
    %v5856 = vpack.c.b16 %v5848, %v5847
    %5865 = vmatpush.bf16.msra.mxu0 %v5856
    %5866 = vmatpush.bf16.msra.mxu0 %v5855
    %5867 = vmatpush.bf16.msra.mxu0 %v5854
    %5868 = vmatpush.bf16.msra.mxu0 %v5853
    %5869 = vmatpush.bf16.msra.mxu0 %v5852
    %5870 = vmatpush.bf16.msra.mxu0 %v5851
    %5871 = vmatpush.bf16.msra.mxu0 %v5850
    %5872 = vmatpush.bf16.msra.mxu0 %v5849
    %5873 = vmatmul.bf16.gmra.mxu0 %v5714
    %v5874 = vpop.f32.mrf.mxu0
    %v5875 = vadd.f32 %v5813, %v5874
    %v5876 = vpop.f32.mrf.mxu0
    %v5877 = vadd.f32 %v5815, %v5876
    %5878 = vdwg.mxu0
    %v5879 = vrot.slane %v5712, 1
    %v5880 = vrot.slane %v5713, 1
    %v5881 = vsel %vm947, %v5879, %v5880
    %v5882 = vsel %vm947, %v5880, %v5879
    %v5883 = vmul.f32 %v5881, %v1458
    %v5884 = vmul.f32 %v5882, %v1463
    %v5885 = vpack.c.bf16 %v5884, %v5883
    %s5886 = scalar_lea.vmem [#allocation26], 128
    %v5887 = vld [vmem:[%s5886] sm:$0xf]
    %v5888 = vld [vmem:[%s5886 + $0x4] sm:$0xf]
    %v5889 = vld [vmem:[%s5886 + $0x8] sm:$0xf]
    %v5890 = vld [vmem:[%s5886 + $0xc] sm:$0xf]
    %v5891 = vld [vmem:[%s5886 + $0x10] sm:$0xf]
    %v5892 = vld [vmem:[%s5886 + $0x14] sm:$0xf]
    %v5893 = vld [vmem:[%s5886 + $0x18] sm:$0xf]
    %v5894 = vld [vmem:[%s5886 + $0x1c] sm:$0xf]
    %v5895 = vld [vmem:[%s5886 + $0x20] sm:$0xf]
    %v5896 = vld [vmem:[%s5886 + $0x24] sm:$0xf]
    %v5897 = vld [vmem:[%s5886 + $0x28] sm:$0xf]
    %v5898 = vld [vmem:[%s5886 + $0x2c] sm:$0xf]
    %v5899 = vld [vmem:[%s5886 + $0x30] sm:$0xf]
    %v5900 = vld [vmem:[%s5886 + $0x34] sm:$0xf]
    %v5901 = vld [vmem:[%s5886 + $0x38] sm:$0xf]
    %v5902 = vld [vmem:[%s5886 + $0x3c] sm:$0xf]
    %v5919 = vunpack.c.l.b16 %v5887
    %v5920 = vunpack.c.l.b16 %v5888
    %v5921 = vunpack.c.l.b16 %v5889
    %v5922 = vunpack.c.l.b16 %v5890
    %v5923 = vunpack.c.l.b16 %v5891
    %v5924 = vunpack.c.l.b16 %v5892
    %v5925 = vunpack.c.l.b16 %v5893
    %v5926 = vunpack.c.l.b16 %v5894
    %v5927 = vunpack.c.l.b16 %v5895
    %v5928 = vunpack.c.l.b16 %v5896
    %v5929 = vunpack.c.l.b16 %v5897
    %v5930 = vunpack.c.l.b16 %v5898
    %v5931 = vunpack.c.l.b16 %v5899
    %v5932 = vunpack.c.l.b16 %v5900
    %v5933 = vunpack.c.l.b16 %v5901
    %v5934 = vunpack.c.l.b16 %v5902
    %v5935 = vpack.c.b16 %v5920, %v5919
    %v5936 = vpack.c.b16 %v5922, %v5921
    %v5937 = vpack.c.b16 %v5924, %v5923
    %v5938 = vpack.c.b16 %v5926, %v5925
    %v5939 = vpack.c.b16 %v5928, %v5927
    %v5940 = vpack.c.b16 %v5930, %v5929
    %v5941 = vpack.c.b16 %v5932, %v5931
    %v5942 = vpack.c.b16 %v5934, %v5933
    %5951 = vmatpush.bf16.msra.mxu0 %v5942
    %5952 = vmatpush.bf16.msra.mxu0 %v5941
    %5953 = vmatpush.bf16.msra.mxu0 %v5940
    %5954 = vmatpush.bf16.msra.mxu0 %v5939
    %5955 = vmatpush.bf16.msra.mxu0 %v5938
    %5956 = vmatpush.bf16.msra.mxu0 %v5937
    %5957 = vmatpush.bf16.msra.mxu0 %v5936
    %5958 = vmatpush.bf16.msra.mxu0 %v5935
    %5959 = vmatmul.bf16.gmra.mxu0 %v5885
    %v5960 = vpop.f32.mrf.mxu0
    %v5961 = vadd.f32 0.0, %v5960
    %v5962 = vpop.f32.mrf.mxu0
    %v5963 = vadd.f32 0.0, %v5962
    %5964 = vdwg.mxu0
    %v5965 = vadd.f32 %v5875, %v5961
    %v5966 = vadd.f32 %v5877, %v5963
    %v5967 = vld [vmem:[%s89] sm:$0x1]
    %v5969 = vperm.slane %v5967, 0
    %v5971 = vadd.f32 %v5965, %v5969
    %v5972 = vadd.f32 %v5966, %v5969
    %v5973 = vmax.f32 %v5971, 0.0
    %v5974 = vmax.f32 %v5972, 0.0
    %v5975 = vpack.c.bf16 %v5974, %v5973
    %s5976 = scalar_lea.vmem %s95, 64
    %v5977 = vld [vmem:[%s5976] sm:$0xf]
    %v5978 = vld [vmem:[%s5976 + $0x4] sm:$0xf]
    %v5979 = vld [vmem:[%s5976 + $0x8] sm:$0xf]
    %v5980 = vld [vmem:[%s5976 + $0xc] sm:$0xf]
    %v5981 = vld [vmem:[%s5976 + $0x10] sm:$0xf]
    %v5982 = vld [vmem:[%s5976 + $0x14] sm:$0xf]
    %v5983 = vld [vmem:[%s5976 + $0x18] sm:$0xf]
    %v5984 = vld [vmem:[%s5976 + $0x1c] sm:$0xf]
    %v5985 = vld [vmem:[%s5976 + $0x20] sm:$0xf]
    %v5986 = vld [vmem:[%s5976 + $0x24] sm:$0xf]
    %v5987 = vld [vmem:[%s5976 + $0x28] sm:$0xf]
    %v5988 = vld [vmem:[%s5976 + $0x2c] sm:$0xf]
    %v5989 = vld [vmem:[%s5976 + $0x30] sm:$0xf]
    %v5990 = vld [vmem:[%s5976 + $0x34] sm:$0xf]
    %v5991 = vld [vmem:[%s5976 + $0x38] sm:$0xf]
    %v5992 = vld [vmem:[%s5976 + $0x3c] sm:$0xf]
    %v5993 = vrot.slane %v5973, 7
    %v5994 = vrot.slane %v5974, 7
    %v5995 = vsel %vm805, %v5993, %v5994
    %v5996 = vsel %vm805, %v5994, %v5993
    %v5997 = vmul.f32 %v5996, %v1351
    %v5998 = vmul.f32 %v5995, %v1356
    %v5999 = vpack.c.bf16 %v5998, %v5997
    %v6000 = vld [vmem:[%s95] sm:$0xf]
    %v6001 = vld [vmem:[%s95 + $0x4] sm:$0xf]
    %v6002 = vld [vmem:[%s95 + $0x8] sm:$0xf]
    %v6003 = vld [vmem:[%s95 + $0xc] sm:$0xf]
    %v6004 = vld [vmem:[%s95 + $0x10] sm:$0xf]
    %v6005 = vld [vmem:[%s95 + $0x14] sm:$0xf]
    %v6006 = vld [vmem:[%s95 + $0x18] sm:$0xf]
    %v6007 = vld [vmem:[%s95 + $0x1c] sm:$0xf]
    %v6008 = vld [vmem:[%s95 + $0x20] sm:$0xf]
    %v6009 = vld [vmem:[%s95 + $0x24] sm:$0xf]
    %v6010 = vld [vmem:[%s95 + $0x28] sm:$0xf]
    %v6011 = vld [vmem:[%s95 + $0x2c] sm:$0xf]
    %v6012 = vld [vmem:[%s95 + $0x30] sm:$0xf]
    %v6013 = vld [vmem:[%s95 + $0x34] sm:$0xf]
    %v6014 = vld [vmem:[%s95 + $0x38] sm:$0xf]
    %v6015 = vld [vmem:[%s95 + $0x3c] sm:$0xf]
    %v6032 = vunpack.c.l.b16 %v6000
    %v6033 = vunpack.c.l.b16 %v6001
    %v6034 = vunpack.c.l.b16 %v6002
    %v6035 = vunpack.c.l.b16 %v6003
    %v6036 = vunpack.c.l.b16 %v6004
    %v6037 = vunpack.c.l.b16 %v6005
    %v6038 = vunpack.c.l.b16 %v6006
    %v6039 = vunpack.c.l.b16 %v6007
    %v6040 = vunpack.c.l.b16 %v6008
    %v6041 = vunpack.c.l.b16 %v6009
    %v6042 = vunpack.c.l.b16 %v6010
    %v6043 = vunpack.c.l.b16 %v6011
    %v6044 = vunpack.c.l.b16 %v6012
    %v6045 = vunpack.c.l.b16 %v6013
    %v6046 = vunpack.c.l.b16 %v6014
    %v6047 = vunpack.c.l.b16 %v6015
    %v6048 = vpack.c.b16 %v6033, %v6032
    %v6049 = vpack.c.b16 %v6035, %v6034
    %v6050 = vpack.c.b16 %v6037, %v6036
    %v6051 = vpack.c.b16 %v6039, %v6038
    %v6052 = vpack.c.b16 %v6041, %v6040
    %v6053 = vpack.c.b16 %v6043, %v6042
    %v6054 = vpack.c.b16 %v6045, %v6044
    %v6055 = vpack.c.b16 %v6047, %v6046
    %6064 = vmatpush.bf16.msra.mxu0 %v6055
    %6065 = vmatpush.bf16.msra.mxu0 %v6054
    %6066 = vmatpush.bf16.msra.mxu0 %v6053
    %6067 = vmatpush.bf16.msra.mxu0 %v6052
    %6068 = vmatpush.bf16.msra.mxu0 %v6051
    %6069 = vmatpush.bf16.msra.mxu0 %v6050
    %6070 = vmatpush.bf16.msra.mxu0 %v6049
    %6071 = vmatpush.bf16.msra.mxu0 %v6048
    %6072 = vmatmul.bf16.gmra.mxu0 %v5999
    %v6073 = vpop.f32.mrf.mxu0
    %v6074 = vadd.f32 0.0, %v6073
    %v6075 = vpop.f32.mrf.mxu0
    %v6076 = vadd.f32 0.0, %v6075
    %6077 = vdwg.mxu0
    %v6094 = vunpack.c.l.b16 %v5977
    %v6095 = vunpack.c.l.b16 %v5978
    %v6096 = vunpack.c.l.b16 %v5979
    %v6097 = vunpack.c.l.b16 %v5980
    %v6098 = vunpack.c.l.b16 %v5981
    %v6099 = vunpack.c.l.b16 %v5982
    %v6100 = vunpack.c.l.b16 %v5983
    %v6101 = vunpack.c.l.b16 %v5984
    %v6102 = vunpack.c.l.b16 %v5985
    %v6103 = vunpack.c.l.b16 %v5986
    %v6104 = vunpack.c.l.b16 %v5987
    %v6105 = vunpack.c.l.b16 %v5988
    %v6106 = vunpack.c.l.b16 %v5989
    %v6107 = vunpack.c.l.b16 %v5990
    %v6108 = vunpack.c.l.b16 %v5991
    %v6109 = vunpack.c.l.b16 %v5992
    %v6110 = vpack.c.b16 %v6095, %v6094
    %v6111 = vpack.c.b16 %v6097, %v6096
    %v6112 = vpack.c.b16 %v6099, %v6098
    %v6113 = vpack.c.b16 %v6101, %v6100
    %v6114 = vpack.c.b16 %v6103, %v6102
    %v6115 = vpack.c.b16 %v6105, %v6104
    %v6116 = vpack.c.b16 %v6107, %v6106
    %v6117 = vpack.c.b16 %v6109, %v6108
    %6126 = vmatpush.bf16.msra.mxu0 %v6117
    %6127 = vmatpush.bf16.msra.mxu0 %v6116
    %6128 = vmatpush.bf16.msra.mxu0 %v6115
    %6129 = vmatpush.bf16.msra.mxu0 %v6114
    %6130 = vmatpush.bf16.msra.mxu0 %v6113
    %6131 = vmatpush.bf16.msra.mxu0 %v6112
    %6132 = vmatpush.bf16.msra.mxu0 %v6111
    %6133 = vmatpush.bf16.msra.mxu0 %v6110
    %6134 = vmatmul.bf16.gmra.mxu0 %v5975
    %v6135 = vpop.f32.mrf.mxu0
    %v6136 = vadd.f32 %v6074, %v6135
    %v6137 = vpop.f32.mrf.mxu0
    %v6138 = vadd.f32 %v6076, %v6137
    %6139 = vdwg.mxu0
    %v6140 = vrot.slane %v5973, 1
    %v6141 = vrot.slane %v5974, 1
    %v6142 = vsel %vm947, %v6140, %v6141
    %v6143 = vsel %vm947, %v6141, %v6140
    %v6144 = vmul.f32 %v6142, %v1458
    %v6145 = vmul.f32 %v6143, %v1463
    %v6146 = vpack.c.bf16 %v6145, %v6144
    %s6147 = scalar_lea.vmem %s95, 128
    %v6148 = vld [vmem:[%s6147] sm:$0xf]
    %v6149 = vld [vmem:[%s6147 + $0x4] sm:$0xf]
    %v6150 = vld [vmem:[%s6147 + $0x8] sm:$0xf]
    %v6151 = vld [vmem:[%s6147 + $0xc] sm:$0xf]
    %v6152 = vld [vmem:[%s6147 + $0x10] sm:$0xf]
    %v6153 = vld [vmem:[%s6147 + $0x14] sm:$0xf]
    %v6154 = vld [vmem:[%s6147 + $0x18] sm:$0xf]
    %v6155 = vld [vmem:[%s6147 + $0x1c] sm:$0xf]
    %v6156 = vld [vmem:[%s6147 + $0x20] sm:$0xf]
    %v6157 = vld [vmem:[%s6147 + $0x24] sm:$0xf]
    %v6158 = vld [vmem:[%s6147 + $0x28] sm:$0xf]
    %v6159 = vld [vmem:[%s6147 + $0x2c] sm:$0xf]
    %v6160 = vld [vmem:[%s6147 + $0x30] sm:$0xf]
    %v6161 = vld [vmem:[%s6147 + $0x34] sm:$0xf]
    %v6162 = vld [vmem:[%s6147 + $0x38] sm:$0xf]
    %v6163 = vld [vmem:[%s6147 + $0x3c] sm:$0xf]
    %v6180 = vunpack.c.l.b16 %v6148
    %v6181 = vunpack.c.l.b16 %v6149
    %v6182 = vunpack.c.l.b16 %v6150
    %v6183 = vunpack.c.l.b16 %v6151
    %v6184 = vunpack.c.l.b16 %v6152
    %v6185 = vunpack.c.l.b16 %v6153
    %v6186 = vunpack.c.l.b16 %v6154
    %v6187 = vunpack.c.l.b16 %v6155
    %v6188 = vunpack.c.l.b16 %v6156
    %v6189 = vunpack.c.l.b16 %v6157
    %v6190 = vunpack.c.l.b16 %v6158
    %v6191 = vunpack.c.l.b16 %v6159
    %v6192 = vunpack.c.l.b16 %v6160
    %v6193 = vunpack.c.l.b16 %v6161
    %v6194 = vunpack.c.l.b16 %v6162
    %v6195 = vunpack.c.l.b16 %v6163
    %v6196 = vpack.c.b16 %v6181, %v6180
    %v6197 = vpack.c.b16 %v6183, %v6182
    %v6198 = vpack.c.b16 %v6185, %v6184
    %v6199 = vpack.c.b16 %v6187, %v6186
    %v6200 = vpack.c.b16 %v6189, %v6188
    %v6201 = vpack.c.b16 %v6191, %v6190
    %v6202 = vpack.c.b16 %v6193, %v6192
    %v6203 = vpack.c.b16 %v6195, %v6194
    %6212 = vmatpush.bf16.msra.mxu0 %v6203
    %6213 = vmatpush.bf16.msra.mxu0 %v6202
    %6214 = vmatpush.bf16.msra.mxu0 %v6201
    %6215 = vmatpush.bf16.msra.mxu0 %v6200
    %6216 = vmatpush.bf16.msra.mxu0 %v6199
    %6217 = vmatpush.bf16.msra.mxu0 %v6198
    %6218 = vmatpush.bf16.msra.mxu0 %v6197
    %6219 = vmatpush.bf16.msra.mxu0 %v6196
    %6220 = vmatmul.bf16.gmra.mxu0 %v6146
    %v6221 = vpop.f32.mrf.mxu0
    %v6222 = vadd.f32 0.0, %v6221
    %v6223 = vpop.f32.mrf.mxu0
    %v6224 = vadd.f32 0.0, %v6223
    %6225 = vdwg.mxu0
    %v6226 = vadd.f32 %v6136, %v6222
    %v6227 = vadd.f32 %v6138, %v6224
    %v6228 = vld [vmem:[%s93] sm:$0x1]
    %v6230 = vperm.slane %v6228, 0
    %v6232 = vadd.f32 %v6226, %v6230
    %v6233 = vadd.f32 %v6227, %v6230
    %v6234 = vmax.f32 %v6232, 0.0
    %v6235 = vmax.f32 %v6233, 0.0
    %v6236 = vsel %vm4313, 0.0, %v6234
    %v6237 = vsel %vm4314, 0.0, %v6235
    %v6238 = vsel %vm4313, %v6234, 0.0
    %v6239 = vsel %vm4314, %v6235, 0.0
    %6240 = vmatpush.msra.mxu0 0.0
    %6241 = vmatpush.msra.mxu0 0.0
    %6242 = vmatpush.msra.mxu0 0.0
    %6243 = vmatpush.msra.mxu0 0.0
    %6244 = vmatpush.msra.mxu0 0.0
    %6245 = vmatpush.msra.mxu0 0.0
    %6246 = vmatpush.msra.mxu0 0.0
    %6247 = vmatpush.msra.mxu0 0.0
    %6248 = vmatpush.msra.mxu0 0.0
    %6249 = vmatpush.msra.mxu0 0.0
    %6250 = vmatpush.msra.mxu0 0.0
    %6251 = vmatpush.msra.mxu0 0.0
    %6252 = vmatpush.msra.mxu0 0.0
    %6253 = vmatpush.msra.mxu0 0.0
    %6254 = vmatpush.msra.mxu0 %v6239
    %6255 = vmatpush.msra.mxu0 %v6238
    %6256 = vmatmul.f32.gmra.mxu0 %v3307
    %v6257 = vpop.f32.mrf.mxu0
    %v6258 = vadd.f32 0.0, %v6257
    %6259 = vmatmul.f32.gmra.mxu0 %v3309
    %v6260 = vpop.f32.mrf.mxu0
    %v6261 = vadd.f32 0.0, %v6260
    %6262 = vmatmul.f32.gmra.mxu0 %v3312
    %v6263 = vpop.f32.mrf.mxu0
    %v6264 = vadd.f32 0.0, %v6263
    %6265 = vmatmul.f32.gmra.mxu0 %v3315
    %v6266 = vpop.f32.mrf.mxu0
    %v6267 = vadd.f32 0.0, %v6266
    %6268 = vdwg.mxu0
    %6269 = vmatpush.msra.mxu0 0.0
    %6270 = vmatpush.msra.mxu0 0.0
    %6271 = vmatpush.msra.mxu0 0.0
    %6272 = vmatpush.msra.mxu0 0.0
    %6273 = vmatpush.msra.mxu0 0.0
    %6274 = vmatpush.msra.mxu0 0.0
    %6275 = vmatpush.msra.mxu0 0.0
    %6276 = vmatpush.msra.mxu0 0.0
    %6277 = vmatpush.msra.mxu0 0.0
    %6278 = vmatpush.msra.mxu0 0.0
    %6279 = vmatpush.msra.mxu0 0.0
    %6280 = vmatpush.msra.mxu0 0.0
    %6281 = vmatpush.msra.mxu0 0.0
    %6282 = vmatpush.msra.mxu0 0.0
    %6283 = vmatpush.msra.mxu0 %v6237
    %6284 = vmatpush.msra.mxu0 %v6236
    %6285 = vmatmul.f32.gmra.mxu0 %v3346
    %v6286 = vpop.f32.mrf.mxu0
    %v6287 = vadd.f32 %v6258, %v6286
    %6288 = vmatmul.f32.gmra.mxu0 %v3348
    %v6289 = vpop.f32.mrf.mxu0
    %v6290 = vadd.f32 %v6261, %v6289
    %6291 = vmatmul.f32.gmra.mxu0 %v3351
    %v6292 = vpop.f32.mrf.mxu0
    %v6293 = vadd.f32 %v6264, %v6292
    %6294 = vmatmul.f32.gmra.mxu0 %v3354
    %v6295 = vpop.f32.mrf.mxu0
    %v6296 = vadd.f32 %v6267, %v6295
    %6297 = vdwg.mxu0
    %v6298 = vadd.f32 %v4261, %v6287
    %v6299 = vadd.f32 %v4262, %v6290
    %v6300 = vadd.f32 %v4263, %v6293
    %v6301 = vadd.f32 %v4264, %v6296
    %v6302 = vpack.c.bf16 %v6299, %v6298
    %v6303 = vpack.c.bf16 %v6301, %v6300
    %s6304 = scalar_lea.vmem [#allocation23], 32
    %v6305 = vld [vmem:[%s6304] sm:$0xf]
    %v6306 = vld [vmem:[%s6304 + $0x4] sm:$0xf]
    %v6307 = vld [vmem:[%s6304 + $0x8] sm:$0xf]
    %v6308 = vld [vmem:[%s6304 + $0xc] sm:$0xf]
    %v6309 = vld [vmem:[%s6304 + $0x10] sm:$0xf]
    %v6310 = vld [vmem:[%s6304 + $0x14] sm:$0xf]
    %v6311 = vld [vmem:[%s6304 + $0x18] sm:$0xf]
    %v6312 = vld [vmem:[%s6304 + $0x1c] sm:$0xf]
    %v6313 = vrot.slane %v6298, 7
    %v6314 = vrot.slane %v6299, 7
    %v6315 = vrot.slane %v6300, 7
    %v6316 = vrot.slane %v6301, 7
    %v6317 = vsel %vm805, %v6315, %v6316
    %v6318 = vsel %vm805, %v6314, %v6315
    %v6319 = vsel %vm805, %v6313, %v6314
    %v6320 = vsel %vm805, %v6316, %v6313
    %v6321 = vmul.f32 %v6320, %v813
    %v6322 = vmul.f32 %v6319, %v818
    %v6323 = vmul.f32 %v6318, %v823
    %v6324 = vmul.f32 %v6317, %v828
    %v6325 = vpack.c.bf16 %v6322, %v6321
    %v6326 = vpack.c.bf16 %v6324, %v6323
    %v6327 = vld [vmem:[#allocation23] sm:$0xf]
    %v6328 = vld [vmem:[#allocation23 + $0x4] sm:$0xf]
    %v6329 = vld [vmem:[#allocation23 + $0x8] sm:$0xf]
    %v6330 = vld [vmem:[#allocation23 + $0xc] sm:$0xf]
    %v6331 = vld [vmem:[#allocation23 + $0x10] sm:$0xf]
    %v6332 = vld [vmem:[#allocation23 + $0x14] sm:$0xf]
    %v6333 = vld [vmem:[#allocation23 + $0x18] sm:$0xf]
    %v6334 = vld [vmem:[#allocation23 + $0x1c] sm:$0xf]
    %v6343 = vunpack.c.l.b16 %v6327
    %v6344 = vunpack.c.l.b16 %v6328
    %v6345 = vunpack.c.l.b16 %v6329
    %v6346 = vunpack.c.l.b16 %v6330
    %v6347 = vunpack.c.l.b16 %v6331
    %v6348 = vunpack.c.l.b16 %v6332
    %v6349 = vunpack.c.l.b16 %v6333
    %v6350 = vunpack.c.l.b16 %v6334
    %v6351 = vpack.c.b16 %v6344, %v6343
    %v6352 = vpack.c.b16 %v6346, %v6345
    %v6353 = vpack.c.b16 %v6348, %v6347
    %v6354 = vpack.c.b16 %v6350, %v6349
    %v6360 = vsel %vm868, %v6325, 0
    %v6363 = vsel %vm868, %v6326, 0
    %6365 = vmatpush.bf16.msra.mxu0 0
    %6366 = vmatpush.bf16.msra.mxu0 0
    %6367 = vmatpush.bf16.msra.mxu0 0
    %6368 = vmatpush.bf16.msra.mxu0 0
    %6369 = vmatpush.bf16.msra.mxu0 %v6354
    %6370 = vmatpush.bf16.msra.mxu0 %v6353
    %6371 = vmatpush.bf16.msra.mxu0 %v6352
    %6372 = vmatpush.bf16.msra.mxu0 %v6351
    %6373 = vmatmul.bf16.gmra.mxu0 %v6360
    %v6374 = vpop.f32.mrf.mxu0
    %v6375 = vadd.f32 0.0, %v6374
    %v6376 = vpop.f32.mrf.mxu0
    %v6377 = vadd.f32 0.0, %v6376
    %6378 = vmatmul.bf16.gmra.mxu0 %v6363
    %v6379 = vpop.f32.mrf.mxu0
    %v6380 = vadd.f32 0.0, %v6379
    %v6381 = vpop.f32.mrf.mxu0
    %v6382 = vadd.f32 0.0, %v6381
    %6383 = vdwg.mxu0
    %v6392 = vunpack.c.l.b16 %v6305
    %v6393 = vunpack.c.l.b16 %v6306
    %v6394 = vunpack.c.l.b16 %v6307
    %v6395 = vunpack.c.l.b16 %v6308
    %v6396 = vunpack.c.l.b16 %v6309
    %v6397 = vunpack.c.l.b16 %v6310
    %v6398 = vunpack.c.l.b16 %v6311
    %v6399 = vunpack.c.l.b16 %v6312
    %v6400 = vpack.c.b16 %v6393, %v6392
    %v6401 = vpack.c.b16 %v6395, %v6394
    %v6402 = vpack.c.b16 %v6397, %v6396
    %v6403 = vpack.c.b16 %v6399, %v6398
    %v6409 = vsel %vm868, %v6302, 0
    %v6412 = vsel %vm868, %v6303, 0
    %6414 = vmatpush.bf16.msra.mxu0 0
    %6415 = vmatpush.bf16.msra.mxu0 0
    %6416 = vmatpush.bf16.msra.mxu0 0
    %6417 = vmatpush.bf16.msra.mxu0 0
    %6418 = vmatpush.bf16.msra.mxu0 %v6403
    %6419 = vmatpush.bf16.msra.mxu0 %v6402
    %6420 = vmatpush.bf16.msra.mxu0 %v6401
    %6421 = vmatpush.bf16.msra.mxu0 %v6400
    %6422 = vmatmul.bf16.gmra.mxu0 %v6409
    %v6423 = vpop.f32.mrf.mxu0
    %v6424 = vadd.f32 %v6375, %v6423
    %v6425 = vpop.f32.mrf.mxu0
    %v6426 = vadd.f32 %v6377, %v6425
    %6427 = vmatmul.bf16.gmra.mxu0 %v6412
    %v6428 = vpop.f32.mrf.mxu0
    %v6429 = vadd.f32 %v6380, %v6428
    %v6430 = vpop.f32.mrf.mxu0
    %v6431 = vadd.f32 %v6382, %v6430
    %6432 = vdwg.mxu0
    %v6433 = vrot.slane %v6298, 1
    %v6434 = vrot.slane %v6299, 1
    %v6435 = vrot.slane %v6300, 1
    %v6436 = vrot.slane %v6301, 1
    %v6437 = vsel %vm947, %v6435, %v6436
    %v6438 = vsel %vm947, %v6434, %v6435
    %v6439 = vsel %vm947, %v6433, %v6434
    %v6440 = vsel %vm947, %v6436, %v6433
    %v6441 = vmul.f32 %v6439, %v955
    %v6442 = vmul.f32 %v6438, %v960
    %v6443 = vmul.f32 %v6437, %v965
    %v6444 = vmul.f32 %v6440, %v970
    %v6445 = vpack.c.bf16 %v6442, %v6441
    %v6446 = vpack.c.bf16 %v6444, %v6443
    %s6447 = scalar_lea.vmem [#allocation23], 64
    %v6448 = vld [vmem:[%s6447] sm:$0xf]
    %v6449 = vld [vmem:[%s6447 + $0x4] sm:$0xf]
    %v6450 = vld [vmem:[%s6447 + $0x8] sm:$0xf]
    %v6451 = vld [vmem:[%s6447 + $0xc] sm:$0xf]
    %v6452 = vld [vmem:[%s6447 + $0x10] sm:$0xf]
    %v6453 = vld [vmem:[%s6447 + $0x14] sm:$0xf]
    %v6454 = vld [vmem:[%s6447 + $0x18] sm:$0xf]
    %v6455 = vld [vmem:[%s6447 + $0x1c] sm:$0xf]
    %v6464 = vunpack.c.l.b16 %v6448
    %v6465 = vunpack.c.l.b16 %v6449
    %v6466 = vunpack.c.l.b16 %v6450
    %v6467 = vunpack.c.l.b16 %v6451
    %v6468 = vunpack.c.l.b16 %v6452
    %v6469 = vunpack.c.l.b16 %v6453
    %v6470 = vunpack.c.l.b16 %v6454
    %v6471 = vunpack.c.l.b16 %v6455
    %v6472 = vpack.c.b16 %v6465, %v6464
    %v6473 = vpack.c.b16 %v6467, %v6466
    %v6474 = vpack.c.b16 %v6469, %v6468
    %v6475 = vpack.c.b16 %v6471, %v6470
    %v6481 = vsel %vm868, %v6445, 0
    %v6484 = vsel %vm868, %v6446, 0
    %6486 = vmatpush.bf16.msra.mxu0 0
    %6487 = vmatpush.bf16.msra.mxu0 0
    %6488 = vmatpush.bf16.msra.mxu0 0
    %6489 = vmatpush.bf16.msra.mxu0 0
    %6490 = vmatpush.bf16.msra.mxu0 %v6475
    %6491 = vmatpush.bf16.msra.mxu0 %v6474
    %6492 = vmatpush.bf16.msra.mxu0 %v6473
    %6493 = vmatpush.bf16.msra.mxu0 %v6472
    %6494 = vmatmul.bf16.gmra.mxu0 %v6481
    %v6495 = vpop.f32.mrf.mxu0
    %v6496 = vadd.f32 0.0, %v6495
    %v6497 = vpop.f32.mrf.mxu0
    %v6498 = vadd.f32 0.0, %v6497
    %6499 = vmatmul.bf16.gmra.mxu0 %v6484
    %v6500 = vpop.f32.mrf.mxu0
    %v6501 = vadd.f32 0.0, %v6500
    %v6502 = vpop.f32.mrf.mxu0
    %v6503 = vadd.f32 0.0, %v6502
    %6504 = vdwg.mxu0
    %v6505 = vadd.f32 %v6424, %v6496
    %v6506 = vadd.f32 %v6426, %v6498
    %v6507 = vadd.f32 %v6429, %v6501
    %v6508 = vadd.f32 %v6431, %v6503
    %v6509 = vld [vmem:[%s81] sm:$0x1]
    %v6511 = vperm.slane %v6509, 0
    %v6513 = vadd.f32 %v6505, %v6511
    %v6514 = vadd.f32 %v6506, %v6511
    %v6515 = vadd.f32 %v6507, %v6511
    %v6516 = vadd.f32 %v6508, %v6511
    %v6517 = vmax.f32 %v6513, 0.0
    %v6518 = vmax.f32 %v6514, 0.0
    %v6519 = vmax.f32 %v6515, 0.0
    %v6520 = vmax.f32 %v6516, 0.0
    %v6521 = vpack.c.bf16 %v6518, %v6517
    %v6522 = vpack.c.bf16 %v6520, %v6519
    %s6523 = scalar_lea.vmem [#allocation24], 32
    %v6524 = vld [vmem:[%s6523] sm:$0xf]
    %v6525 = vld [vmem:[%s6523 + $0x4] sm:$0xf]
    %v6526 = vld [vmem:[%s6523 + $0x8] sm:$0xf]
    %v6527 = vld [vmem:[%s6523 + $0xc] sm:$0xf]
    %v6528 = vld [vmem:[%s6523 + $0x10] sm:$0xf]
    %v6529 = vld [vmem:[%s6523 + $0x14] sm:$0xf]
    %v6530 = vld [vmem:[%s6523 + $0x18] sm:$0xf]
    %v6531 = vld [vmem:[%s6523 + $0x1c] sm:$0xf]
    %v6532 = vrot.slane %v6517, 7
    %v6533 = vrot.slane %v6518, 7
    %v6534 = vrot.slane %v6519, 7
    %v6535 = vrot.slane %v6520, 7
    %v6536 = vsel %vm805, %v6534, %v6535
    %v6537 = vsel %vm805, %v6533, %v6534
    %v6538 = vsel %vm805, %v6532, %v6533
    %v6539 = vsel %vm805, %v6535, %v6532
    %v6540 = vmul.f32 %v6539, %v813
    %v6541 = vmul.f32 %v6538, %v818
    %v6542 = vmul.f32 %v6537, %v823
    %v6543 = vmul.f32 %v6536, %v828
    %v6544 = vpack.c.bf16 %v6541, %v6540
    %v6545 = vpack.c.bf16 %v6543, %v6542
    %v6546 = vld [vmem:[#allocation24] sm:$0xf]
    %v6547 = vld [vmem:[#allocation24 + $0x4] sm:$0xf]
    %v6548 = vld [vmem:[#allocation24 + $0x8] sm:$0xf]
    %v6549 = vld [vmem:[#allocation24 + $0xc] sm:$0xf]
    %v6550 = vld [vmem:[#allocation24 + $0x10] sm:$0xf]
    %v6551 = vld [vmem:[#allocation24 + $0x14] sm:$0xf]
    %v6552 = vld [vmem:[#allocation24 + $0x18] sm:$0xf]
    %v6553 = vld [vmem:[#allocation24 + $0x1c] sm:$0xf]
    %v6562 = vunpack.c.l.b16 %v6546
    %v6563 = vunpack.c.l.b16 %v6547
    %v6564 = vunpack.c.l.b16 %v6548
    %v6565 = vunpack.c.l.b16 %v6549
    %v6566 = vunpack.c.l.b16 %v6550
    %v6567 = vunpack.c.l.b16 %v6551
    %v6568 = vunpack.c.l.b16 %v6552
    %v6569 = vunpack.c.l.b16 %v6553
    %v6570 = vpack.c.b16 %v6563, %v6562
    %v6571 = vpack.c.b16 %v6565, %v6564
    %v6572 = vpack.c.b16 %v6567, %v6566
    %v6573 = vpack.c.b16 %v6569, %v6568
    %v6579 = vsel %vm868, %v6544, 0
    %v6582 = vsel %vm868, %v6545, 0
    %6584 = vmatpush.bf16.msra.mxu0 0
    %6585 = vmatpush.bf16.msra.mxu0 0
    %6586 = vmatpush.bf16.msra.mxu0 0
    %6587 = vmatpush.bf16.msra.mxu0 0
    %6588 = vmatpush.bf16.msra.mxu0 %v6573
    %6589 = vmatpush.bf16.msra.mxu0 %v6572
    %6590 = vmatpush.bf16.msra.mxu0 %v6571
    %6591 = vmatpush.bf16.msra.mxu0 %v6570
    %6592 = vmatmul.bf16.gmra.mxu0 %v6579
    %v6593 = vpop.f32.mrf.mxu0
    %v6594 = vadd.f32 0.0, %v6593
    %v6595 = vpop.f32.mrf.mxu0
    %v6596 = vadd.f32 0.0, %v6595
    %6597 = vmatmul.bf16.gmra.mxu0 %v6582
    %v6598 = vpop.f32.mrf.mxu0
    %v6599 = vadd.f32 0.0, %v6598
    %v6600 = vpop.f32.mrf.mxu0
    %v6601 = vadd.f32 0.0, %v6600
    %6602 = vdwg.mxu0
    %v6611 = vunpack.c.l.b16 %v6524
    %v6612 = vunpack.c.l.b16 %v6525
    %v6613 = vunpack.c.l.b16 %v6526
    %v6614 = vunpack.c.l.b16 %v6527
    %v6615 = vunpack.c.l.b16 %v6528
    %v6616 = vunpack.c.l.b16 %v6529
    %v6617 = vunpack.c.l.b16 %v6530
    %v6618 = vunpack.c.l.b16 %v6531
    %v6619 = vpack.c.b16 %v6612, %v6611
    %v6620 = vpack.c.b16 %v6614, %v6613
    %v6621 = vpack.c.b16 %v6616, %v6615
    %v6622 = vpack.c.b16 %v6618, %v6617
    %v6628 = vsel %vm868, %v6521, 0
    %v6631 = vsel %vm868, %v6522, 0
    %6633 = vmatpush.bf16.msra.mxu0 0
    %6634 = vmatpush.bf16.msra.mxu0 0
    %6635 = vmatpush.bf16.msra.mxu0 0
    %6636 = vmatpush.bf16.msra.mxu0 0
    %6637 = vmatpush.bf16.msra.mxu0 %v6622
    %6638 = vmatpush.bf16.msra.mxu0 %v6621
    %6639 = vmatpush.bf16.msra.mxu0 %v6620
    %6640 = vmatpush.bf16.msra.mxu0 %v6619
    %6641 = vmatmul.bf16.gmra.mxu0 %v6628
    %v6642 = vpop.f32.mrf.mxu0
    %v6643 = vadd.f32 %v6594, %v6642
    %v6644 = vpop.f32.mrf.mxu0
    %v6645 = vadd.f32 %v6596, %v6644
    %6646 = vmatmul.bf16.gmra.mxu0 %v6631
    %v6647 = vpop.f32.mrf.mxu0
    %v6648 = vadd.f32 %v6599, %v6647
    %v6649 = vpop.f32.mrf.mxu0
    %v6650 = vadd.f32 %v6601, %v6649
    %6651 = vdwg.mxu0
    %v6652 = vrot.slane %v6517, 1
    %v6653 = vrot.slane %v6518, 1
    %v6654 = vrot.slane %v6519, 1
    %v6655 = vrot.slane %v6520, 1
    %v6656 = vsel %vm947, %v6654, %v6655
    %v6657 = vsel %vm947, %v6653, %v6654
    %v6658 = vsel %vm947, %v6652, %v6653
    %v6659 = vsel %vm947, %v6655, %v6652
    %v6660 = vmul.f32 %v6658, %v955
    %v6661 = vmul.f32 %v6657, %v960
    %v6662 = vmul.f32 %v6656, %v965
    %v6663 = vmul.f32 %v6659, %v970
    %v6664 = vpack.c.bf16 %v6661, %v6660
    %v6665 = vpack.c.bf16 %v6663, %v6662
    %s6666 = scalar_lea.vmem [#allocation24], 64
    %v6667 = vld [vmem:[%s6666] sm:$0xf]
    %v6668 = vld [vmem:[%s6666 + $0x4] sm:$0xf]
    %v6669 = vld [vmem:[%s6666 + $0x8] sm:$0xf]
    %v6670 = vld [vmem:[%s6666 + $0xc] sm:$0xf]
    %v6671 = vld [vmem:[%s6666 + $0x10] sm:$0xf]
    %v6672 = vld [vmem:[%s6666 + $0x14] sm:$0xf]
    %v6673 = vld [vmem:[%s6666 + $0x18] sm:$0xf]
    %v6674 = vld [vmem:[%s6666 + $0x1c] sm:$0xf]
    %v6683 = vunpack.c.l.b16 %v6667
    %v6684 = vunpack.c.l.b16 %v6668
    %v6685 = vunpack.c.l.b16 %v6669
    %v6686 = vunpack.c.l.b16 %v6670
    %v6687 = vunpack.c.l.b16 %v6671
    %v6688 = vunpack.c.l.b16 %v6672
    %v6689 = vunpack.c.l.b16 %v6673
    %v6690 = vunpack.c.l.b16 %v6674
    %v6691 = vpack.c.b16 %v6684, %v6683
    %v6692 = vpack.c.b16 %v6686, %v6685
    %v6693 = vpack.c.b16 %v6688, %v6687
    %v6694 = vpack.c.b16 %v6690, %v6689
    %v6700 = vsel %vm868, %v6664, 0
    %v6703 = vsel %vm868, %v6665, 0
    %6705 = vmatpush.bf16.msra.mxu0 0
    %6706 = vmatpush.bf16.msra.mxu0 0
    %6707 = vmatpush.bf16.msra.mxu0 0
    %6708 = vmatpush.bf16.msra.mxu0 0
    %6709 = vmatpush.bf16.msra.mxu0 %v6694
    %6710 = vmatpush.bf16.msra.mxu0 %v6693
    %6711 = vmatpush.bf16.msra.mxu0 %v6692
    %6712 = vmatpush.bf16.msra.mxu0 %v6691
    %6713 = vmatmul.bf16.gmra.mxu0 %v6700
    %v6714 = vpop.f32.mrf.mxu0
    %v6715 = vadd.f32 0.0, %v6714
    %v6716 = vpop.f32.mrf.mxu0
    %v6717 = vadd.f32 0.0, %v6716
    %6718 = vmatmul.bf16.gmra.mxu0 %v6703
    %v6719 = vpop.f32.mrf.mxu0
    %v6720 = vadd.f32 0.0, %v6719
    %v6721 = vpop.f32.mrf.mxu0
    %v6722 = vadd.f32 0.0, %v6721
    %6723 = vdwg.mxu0
    %v6724 = vadd.f32 %v6643, %v6715
    %v6725 = vadd.f32 %v6645, %v6717
    %v6726 = vadd.f32 %v6648, %v6720
    %v6727 = vadd.f32 %v6650, %v6722
    %v6728 = vld [vmem:[%s85] sm:$0x1]
    %v6730 = vperm.slane %v6728, 0
    %v6732 = vadd.f32 %v6724, %v6730
    %v6733 = vadd.f32 %v6725, %v6730
    %v6734 = vadd.f32 %v6726, %v6730
    %v6735 = vadd.f32 %v6727, %v6730
    %v6736 = vmax.f32 %v6732, 0.0
    %v6737 = vmax.f32 %v6733, 0.0
    %v6738 = vmax.f32 %v6734, 0.0
    %v6739 = vmax.f32 %v6735, 0.0
    %v6740 = vpack.c.bf16 %v6737, %v6736
    %v6741 = vpack.c.bf16 %v6739, %v6738
    %s6742 = scalar_lea.vmem [#allocation27], 32
    %v6743 = vld [vmem:[%s6742] sm:$0xf]
    %v6744 = vld [vmem:[%s6742 + $0x4] sm:$0xf]
    %v6745 = vld [vmem:[%s6742 + $0x8] sm:$0xf]
    %v6746 = vld [vmem:[%s6742 + $0xc] sm:$0xf]
    %v6747 = vld [vmem:[%s6742 + $0x10] sm:$0xf]
    %v6748 = vld [vmem:[%s6742 + $0x14] sm:$0xf]
    %v6749 = vld [vmem:[%s6742 + $0x18] sm:$0xf]
    %v6750 = vld [vmem:[%s6742 + $0x1c] sm:$0xf]
    %v6751 = vrot.slane %v6736, 7
    %v6752 = vrot.slane %v6737, 7
    %v6753 = vrot.slane %v6738, 7
    %v6754 = vrot.slane %v6739, 7
    %v6755 = vsel %vm805, %v6753, %v6754
    %v6756 = vsel %vm805, %v6752, %v6753
    %v6757 = vsel %vm805, %v6751, %v6752
    %v6758 = vsel %vm805, %v6754, %v6751
    %v6759 = vmul.f32 %v6758, %v813
    %v6760 = vmul.f32 %v6757, %v818
    %v6761 = vmul.f32 %v6756, %v823
    %v6762 = vmul.f32 %v6755, %v828
    %v6763 = vpack.c.bf16 %v6760, %v6759
    %v6764 = vpack.c.bf16 %v6762, %v6761
    %v6765 = vld [vmem:[#allocation27] sm:$0xf]
    %v6766 = vld [vmem:[#allocation27 + $0x4] sm:$0xf]
    %v6767 = vld [vmem:[#allocation27 + $0x8] sm:$0xf]
    %v6768 = vld [vmem:[#allocation27 + $0xc] sm:$0xf]
    %v6769 = vld [vmem:[#allocation27 + $0x10] sm:$0xf]
    %v6770 = vld [vmem:[#allocation27 + $0x14] sm:$0xf]
    %v6771 = vld [vmem:[#allocation27 + $0x18] sm:$0xf]
    %v6772 = vld [vmem:[#allocation27 + $0x1c] sm:$0xf]
    %v6781 = vunpack.c.l.b16 %v6765
    %v6782 = vunpack.c.l.b16 %v6766
    %v6783 = vunpack.c.l.b16 %v6767
    %v6784 = vunpack.c.l.b16 %v6768
    %v6785 = vunpack.c.l.b16 %v6769
    %v6786 = vunpack.c.l.b16 %v6770
    %v6787 = vunpack.c.l.b16 %v6771
    %v6788 = vunpack.c.l.b16 %v6772
    %v6789 = vpack.c.b16 %v6782, %v6781
    %v6790 = vpack.c.b16 %v6784, %v6783
    %v6791 = vpack.c.b16 %v6786, %v6785
    %v6792 = vpack.c.b16 %v6788, %v6787
    %v6798 = vsel %vm868, %v6763, 0
    %v6801 = vsel %vm868, %v6764, 0
    %6803 = vmatpush.bf16.msra.mxu0 0
    %6804 = vmatpush.bf16.msra.mxu0 0
    %6805 = vmatpush.bf16.msra.mxu0 0
    %6806 = vmatpush.bf16.msra.mxu0 0
    %6807 = vmatpush.bf16.msra.mxu0 %v6792
    %6808 = vmatpush.bf16.msra.mxu0 %v6791
    %6809 = vmatpush.bf16.msra.mxu0 %v6790
    %6810 = vmatpush.bf16.msra.mxu0 %v6789
    %6811 = vmatmul.bf16.gmra.mxu0 %v6798
    %v6812 = vpop.f32.mrf.mxu0
    %v6813 = vadd.f32 0.0, %v6812
    %v6814 = vpop.f32.mrf.mxu0
    %v6815 = vadd.f32 0.0, %v6814
    %6816 = vmatmul.bf16.gmra.mxu0 %v6801
    %v6817 = vpop.f32.mrf.mxu0
    %v6818 = vadd.f32 0.0, %v6817
    %v6819 = vpop.f32.mrf.mxu0
    %v6820 = vadd.f32 0.0, %v6819
    %6821 = vdwg.mxu0
    %v6830 = vunpack.c.l.b16 %v6743
    %v6831 = vunpack.c.l.b16 %v6744
    %v6832 = vunpack.c.l.b16 %v6745
    %v6833 = vunpack.c.l.b16 %v6746
    %v6834 = vunpack.c.l.b16 %v6747
    %v6835 = vunpack.c.l.b16 %v6748
    %v6836 = vunpack.c.l.b16 %v6749
    %v6837 = vunpack.c.l.b16 %v6750
    %v6838 = vpack.c.b16 %v6831, %v6830
    %v6839 = vpack.c.b16 %v6833, %v6832
    %v6840 = vpack.c.b16 %v6835, %v6834
    %v6841 = vpack.c.b16 %v6837, %v6836
    %v6847 = vsel %vm868, %v6740, 0
    %v6850 = vsel %vm868, %v6741, 0
    %6852 = vmatpush.bf16.msra.mxu0 0
    %6853 = vmatpush.bf16.msra.mxu0 0
    %6854 = vmatpush.bf16.msra.mxu0 0
    %6855 = vmatpush.bf16.msra.mxu0 0
    %6856 = vmatpush.bf16.msra.mxu0 %v6841
    %6857 = vmatpush.bf16.msra.mxu0 %v6840
    %6858 = vmatpush.bf16.msra.mxu0 %v6839
    %6859 = vmatpush.bf16.msra.mxu0 %v6838
    %6860 = vmatmul.bf16.gmra.mxu0 %v6847
    %v6861 = vpop.f32.mrf.mxu0
    %v6862 = vadd.f32 %v6813, %v6861
    %v6863 = vpop.f32.mrf.mxu0
    %v6864 = vadd.f32 %v6815, %v6863
    %6865 = vmatmul.bf16.gmra.mxu0 %v6850
    %v6866 = vpop.f32.mrf.mxu0
    %v6867 = vadd.f32 %v6818, %v6866
    %v6868 = vpop.f32.mrf.mxu0
    %v6869 = vadd.f32 %v6820, %v6868
    %6870 = vdwg.mxu0
    %v6871 = vrot.slane %v6736, 1
    %v6872 = vrot.slane %v6737, 1
    %v6873 = vrot.slane %v6738, 1
    %v6874 = vrot.slane %v6739, 1
    %v6875 = vsel %vm947, %v6873, %v6874
    %v6876 = vsel %vm947, %v6872, %v6873
    %v6877 = vsel %vm947, %v6871, %v6872
    %v6878 = vsel %vm947, %v6874, %v6871
    %v6879 = vmul.f32 %v6877, %v955
    %v6880 = vmul.f32 %v6876, %v960
    %v6881 = vmul.f32 %v6875, %v965
    %v6882 = vmul.f32 %v6878, %v970
    %v6883 = vpack.c.bf16 %v6880, %v6879
    %v6884 = vpack.c.bf16 %v6882, %v6881
    %s6885 = scalar_lea.vmem [#allocation27], 64
    %v6886 = vld [vmem:[%s6885] sm:$0xf]
    %v6887 = vld [vmem:[%s6885 + $0x4] sm:$0xf]
    %v6888 = vld [vmem:[%s6885 + $0x8] sm:$0xf]
    %v6889 = vld [vmem:[%s6885 + $0xc] sm:$0xf]
    %v6890 = vld [vmem:[%s6885 + $0x10] sm:$0xf]
    %v6891 = vld [vmem:[%s6885 + $0x14] sm:$0xf]
    %v6892 = vld [vmem:[%s6885 + $0x18] sm:$0xf]
    %v6893 = vld [vmem:[%s6885 + $0x1c] sm:$0xf]
    %v6902 = vunpack.c.l.b16 %v6886
    %v6903 = vunpack.c.l.b16 %v6887
    %v6904 = vunpack.c.l.b16 %v6888
    %v6905 = vunpack.c.l.b16 %v6889
    %v6906 = vunpack.c.l.b16 %v6890
    %v6907 = vunpack.c.l.b16 %v6891
    %v6908 = vunpack.c.l.b16 %v6892
    %v6909 = vunpack.c.l.b16 %v6893
    %v6910 = vpack.c.b16 %v6903, %v6902
    %v6911 = vpack.c.b16 %v6905, %v6904
    %v6912 = vpack.c.b16 %v6907, %v6906
    %v6913 = vpack.c.b16 %v6909, %v6908
    %v6919 = vsel %vm868, %v6883, 0
    %v6922 = vsel %vm868, %v6884, 0
    %6924 = vmatpush.bf16.msra.mxu0 0
    %6925 = vmatpush.bf16.msra.mxu0 0
    %6926 = vmatpush.bf16.msra.mxu0 0
    %6927 = vmatpush.bf16.msra.mxu0 0
    %6928 = vmatpush.bf16.msra.mxu0 %v6913
    %6929 = vmatpush.bf16.msra.mxu0 %v6912
    %6930 = vmatpush.bf16.msra.mxu0 %v6911
    %6931 = vmatpush.bf16.msra.mxu0 %v6910
    %6932 = vmatmul.bf16.gmra.mxu0 %v6919
    %v6933 = vpop.f32.mrf.mxu0
    %v6934 = vadd.f32 0.0, %v6933
    %v6935 = vpop.f32.mrf.mxu0
    %v6936 = vadd.f32 0.0, %v6935
    %6937 = vmatmul.bf16.gmra.mxu0 %v6922
    %v6938 = vpop.f32.mrf.mxu0
    %v6939 = vadd.f32 0.0, %v6938
    %v6940 = vpop.f32.mrf.mxu0
    %v6941 = vadd.f32 0.0, %v6940
    %6942 = vdwg.mxu0
    %v6943 = vadd.f32 %v6862, %v6934
    %v6944 = vadd.f32 %v6864, %v6936
    %v6945 = vadd.f32 %v6867, %v6939
    %v6946 = vadd.f32 %v6869, %v6941
    %v6947 = vld [vmem:[%s97] sm:$0x1]
    %v6949 = vperm.slane %v6947, 0
    %v6951 = vadd.f32 %v6943, %v6949
    %v6952 = vadd.f32 %v6944, %v6949
    %v6953 = vadd.f32 %v6945, %v6949
    %v6954 = vadd.f32 %v6946, %v6949
    %v6955 = vmax.f32 %v6951, 0.0
    %v6956 = vmax.f32 %v6952, 0.0
    %v6957 = vmax.f32 %v6953, 0.0
    %v6958 = vmax.f32 %v6954, 0.0
    %v6959 = vpack.c.bf16 %v6956, %v6955
    %v6960 = vpack.c.bf16 %v6958, %v6957
    %s6961 = scalar_lea.vmem [#allocation29], 32
    %v6962 = vld [vmem:[%s6961] sm:$0xf]
    %v6963 = vld [vmem:[%s6961 + $0x4] sm:$0xf]
    %v6964 = vld [vmem:[%s6961 + $0x8] sm:$0xf]
    %v6965 = vld [vmem:[%s6961 + $0xc] sm:$0xf]
    %v6966 = vld [vmem:[%s6961 + $0x10] sm:$0xf]
    %v6967 = vld [vmem:[%s6961 + $0x14] sm:$0xf]
    %v6968 = vld [vmem:[%s6961 + $0x18] sm:$0xf]
    %v6969 = vld [vmem:[%s6961 + $0x1c] sm:$0xf]
    %v6970 = vrot.slane %v6955, 7
    %v6971 = vrot.slane %v6956, 7
    %v6972 = vrot.slane %v6957, 7
    %v6973 = vrot.slane %v6958, 7
    %v6974 = vsel %vm805, %v6972, %v6973
    %v6975 = vsel %vm805, %v6971, %v6972
    %v6976 = vsel %vm805, %v6970, %v6971
    %v6977 = vsel %vm805, %v6973, %v6970
    %v6978 = vmul.f32 %v6977, %v813
    %v6979 = vmul.f32 %v6976, %v818
    %v6980 = vmul.f32 %v6975, %v823
    %v6981 = vmul.f32 %v6974, %v828
    %v6982 = vpack.c.bf16 %v6979, %v6978
    %v6983 = vpack.c.bf16 %v6981, %v6980
    %v6984 = vld [vmem:[#allocation29] sm:$0xf]
    %v6985 = vld [vmem:[#allocation29 + $0x4] sm:$0xf]
    %v6986 = vld [vmem:[#allocation29 + $0x8] sm:$0xf]
    %v6987 = vld [vmem:[#allocation29 + $0xc] sm:$0xf]
    %v6988 = vld [vmem:[#allocation29 + $0x10] sm:$0xf]
    %v6989 = vld [vmem:[#allocation29 + $0x14] sm:$0xf]
    %v6990 = vld [vmem:[#allocation29 + $0x18] sm:$0xf]
    %v6991 = vld [vmem:[#allocation29 + $0x1c] sm:$0xf]
    %v7000 = vunpack.c.l.b16 %v6984
    %v7001 = vunpack.c.l.b16 %v6985
    %v7002 = vunpack.c.l.b16 %v6986
    %v7003 = vunpack.c.l.b16 %v6987
    %v7004 = vunpack.c.l.b16 %v6988
    %v7005 = vunpack.c.l.b16 %v6989
    %v7006 = vunpack.c.l.b16 %v6990
    %v7007 = vunpack.c.l.b16 %v6991
    %v7008 = vpack.c.b16 %v7001, %v7000
    %v7009 = vpack.c.b16 %v7003, %v7002
    %v7010 = vpack.c.b16 %v7005, %v7004
    %v7011 = vpack.c.b16 %v7007, %v7006
    %v7017 = vsel %vm868, %v6982, 0
    %v7020 = vsel %vm868, %v6983, 0
    %7022 = vmatpush.bf16.msra.mxu0 0
    %7023 = vmatpush.bf16.msra.mxu0 0
    %7024 = vmatpush.bf16.msra.mxu0 0
    %7025 = vmatpush.bf16.msra.mxu0 0
    %7026 = vmatpush.bf16.msra.mxu0 %v7011
    %7027 = vmatpush.bf16.msra.mxu0 %v7010
    %7028 = vmatpush.bf16.msra.mxu0 %v7009
    %7029 = vmatpush.bf16.msra.mxu0 %v7008
    %7030 = vmatmul.bf16.gmra.mxu0 %v7017
    %v7031 = vpop.f32.mrf.mxu0
    %v7032 = vadd.f32 0.0, %v7031
    %v7033 = vpop.f32.mrf.mxu0
    %v7034 = vadd.f32 0.0, %v7033
    %7035 = vmatmul.bf16.gmra.mxu0 %v7020
    %v7036 = vpop.f32.mrf.mxu0
    %v7037 = vadd.f32 0.0, %v7036
    %v7038 = vpop.f32.mrf.mxu0
    %v7039 = vadd.f32 0.0, %v7038
    %7040 = vdwg.mxu0
    %v7049 = vunpack.c.l.b16 %v6962
    %v7050 = vunpack.c.l.b16 %v6963
    %v7051 = vunpack.c.l.b16 %v6964
    %v7052 = vunpack.c.l.b16 %v6965
    %v7053 = vunpack.c.l.b16 %v6966
    %v7054 = vunpack.c.l.b16 %v6967
    %v7055 = vunpack.c.l.b16 %v6968
    %v7056 = vunpack.c.l.b16 %v6969
    %v7057 = vpack.c.b16 %v7050, %v7049
    %v7058 = vpack.c.b16 %v7052, %v7051
    %v7059 = vpack.c.b16 %v7054, %v7053
    %v7060 = vpack.c.b16 %v7056, %v7055
    %v7066 = vsel %vm868, %v6959, 0
    %v7069 = vsel %vm868, %v6960, 0
    %7071 = vmatpush.bf16.msra.mxu0 0
    %7072 = vmatpush.bf16.msra.mxu0 0
    %7073 = vmatpush.bf16.msra.mxu0 0
    %7074 = vmatpush.bf16.msra.mxu0 0
    %7075 = vmatpush.bf16.msra.mxu0 %v7060
    %7076 = vmatpush.bf16.msra.mxu0 %v7059
    %7077 = vmatpush.bf16.msra.mxu0 %v7058
    %7078 = vmatpush.bf16.msra.mxu0 %v7057
    %7079 = vmatmul.bf16.gmra.mxu0 %v7066
    %v7080 = vpop.f32.mrf.mxu0
    %v7081 = vadd.f32 %v7032, %v7080
    %v7082 = vpop.f32.mrf.mxu0
    %v7083 = vadd.f32 %v7034, %v7082
    %7084 = vmatmul.bf16.gmra.mxu0 %v7069
    %v7085 = vpop.f32.mrf.mxu0
    %v7086 = vadd.f32 %v7037, %v7085
    %v7087 = vpop.f32.mrf.mxu0
    %v7088 = vadd.f32 %v7039, %v7087
    %7089 = vdwg.mxu0
    %v7090 = vrot.slane %v6955, 1
    %v7091 = vrot.slane %v6956, 1
    %v7092 = vrot.slane %v6957, 1
    %v7093 = vrot.slane %v6958, 1
    %v7094 = vsel %vm947, %v7092, %v7093
    %v7095 = vsel %vm947, %v7091, %v7092
    %v7096 = vsel %vm947, %v7090, %v7091
    %v7097 = vsel %vm947, %v7093, %v7090
    %v7098 = vmul.f32 %v7096, %v955
    %v7099 = vmul.f32 %v7095, %v960
    %v7100 = vmul.f32 %v7094, %v965
    %v7101 = vmul.f32 %v7097, %v970
    %v7102 = vpack.c.bf16 %v7099, %v7098
    %v7103 = vpack.c.bf16 %v7101, %v7100
    %s7104 = scalar_lea.vmem [#allocation29], 64
    %v7105 = vld [vmem:[%s7104] sm:$0xf]
    %v7106 = vld [vmem:[%s7104 + $0x4] sm:$0xf]
    %v7107 = vld [vmem:[%s7104 + $0x8] sm:$0xf]
    %v7108 = vld [vmem:[%s7104 + $0xc] sm:$0xf]
    %v7109 = vld [vmem:[%s7104 + $0x10] sm:$0xf]
    %v7110 = vld [vmem:[%s7104 + $0x14] sm:$0xf]
    %v7111 = vld [vmem:[%s7104 + $0x18] sm:$0xf]
    %v7112 = vld [vmem:[%s7104 + $0x1c] sm:$0xf]
    %v7121 = vunpack.c.l.b16 %v7105
    %v7122 = vunpack.c.l.b16 %v7106
    %v7123 = vunpack.c.l.b16 %v7107
    %v7124 = vunpack.c.l.b16 %v7108
    %v7125 = vunpack.c.l.b16 %v7109
    %v7126 = vunpack.c.l.b16 %v7110
    %v7127 = vunpack.c.l.b16 %v7111
    %v7128 = vunpack.c.l.b16 %v7112
    %v7129 = vpack.c.b16 %v7122, %v7121
    %v7130 = vpack.c.b16 %v7124, %v7123
    %v7131 = vpack.c.b16 %v7126, %v7125
    %v7132 = vpack.c.b16 %v7128, %v7127
    %v7138 = vsel %vm868, %v7102, 0
    %v7141 = vsel %vm868, %v7103, 0
    %7143 = vmatpush.bf16.msra.mxu0 0
    %7144 = vmatpush.bf16.msra.mxu0 0
    %7145 = vmatpush.bf16.msra.mxu0 0
    %7146 = vmatpush.bf16.msra.mxu0 0
    %7147 = vmatpush.bf16.msra.mxu0 %v7132
    %7148 = vmatpush.bf16.msra.mxu0 %v7131
    %7149 = vmatpush.bf16.msra.mxu0 %v7130
    %7150 = vmatpush.bf16.msra.mxu0 %v7129
    %7151 = vmatmul.bf16.gmra.mxu0 %v7138
    %v7152 = vpop.f32.mrf.mxu0
    %v7153 = vadd.f32 0.0, %v7152
    %v7154 = vpop.f32.mrf.mxu0
    %v7155 = vadd.f32 0.0, %v7154
    %7156 = vmatmul.bf16.gmra.mxu0 %v7141
    %v7157 = vpop.f32.mrf.mxu0
    %v7158 = vadd.f32 0.0, %v7157
    %v7159 = vpop.f32.mrf.mxu0
    %v7160 = vadd.f32 0.0, %v7159
    %7161 = vdwg.mxu0
    %v7162 = vadd.f32 %v7081, %v7153
    %v7163 = vadd.f32 %v7083, %v7155
    %v7164 = vadd.f32 %v7086, %v7158
    %v7165 = vadd.f32 %v7088, %v7160
    %v7166 = vld [vmem:[%s101] sm:$0x1]
    %v7168 = vperm.slane %v7166, 0
    %v7170 = vadd.f32 %v7162, %v7168
    %v7171 = vadd.f32 %v7163, %v7168
    %v7172 = vadd.f32 %v7164, %v7168
    %v7173 = vadd.f32 %v7165, %v7168
    %v7174 = vmax.f32 %v7170, 0.0
    %v7175 = vmax.f32 %v7171, 0.0
    %v7176 = vmax.f32 %v7172, 0.0
    %v7177 = vmax.f32 %v7173, 0.0
    %7178 = vmatpush.msra.mxu0 0.0
    %7179 = vmatpush.msra.mxu0 0.0
    %7180 = vmatpush.msra.mxu0 0.0
    %7181 = vmatpush.msra.mxu0 0.0
    %7182 = vmatpush.msra.mxu0 0.0
    %7183 = vmatpush.msra.mxu0 0.0
    %7184 = vmatpush.msra.mxu0 0.0
    %7185 = vmatpush.msra.mxu0 0.0
    %7186 = vmatpush.msra.mxu0 0.0
    %7187 = vmatpush.msra.mxu0 0.0
    %7188 = vmatpush.msra.mxu0 0.0
    %7189 = vmatpush.msra.mxu0 0.0
    %7190 = vmatpush.msra.mxu0 %v7177
    %7191 = vmatpush.msra.mxu0 %v7176
    %7192 = vmatpush.msra.mxu0 %v7175
    %7193 = vmatpush.msra.mxu0 %v7174
    %7194 = vmatmul.f32.gmra.mxu0 %v1273
    %v7195 = vpop.f32.mrf.mxu0
    %v7196 = vadd.f32 0.0, %v7195
    %7197 = vmatmul.f32.gmra.mxu0 %v1276
    %v7198 = vpop.f32.mrf.mxu0
    %v7199 = vadd.f32 0.0, %v7198
    %7200 = vdwg.mxu0
    %7201 = vmatpush.msra.mxu0 0.0
    %7202 = vmatpush.msra.mxu0 0.0
    %7203 = vmatpush.msra.mxu0 0.0
    %7204 = vmatpush.msra.mxu0 0.0
    %7205 = vmatpush.msra.mxu0 0.0
    %7206 = vmatpush.msra.mxu0 0.0
    %7207 = vmatpush.msra.mxu0 0.0
    %7208 = vmatpush.msra.mxu0 0.0
    %7209 = vmatpush.msra.mxu0 0.0
    %7210 = vmatpush.msra.mxu0 0.0
    %7211 = vmatpush.msra.mxu0 0.0
    %7212 = vmatpush.msra.mxu0 0.0
    %7213 = vmatpush.msra.mxu0 %v7177
    %7214 = vmatpush.msra.mxu0 %v7176
    %7215 = vmatpush.msra.mxu0 %v7175
    %7216 = vmatpush.msra.mxu0 %v7174
    %7217 = vmatmul.f32.gmra.mxu0 %v1302
    %v7218 = vpop.f32.mrf.mxu0
    %v7219 = vadd.f32 0.0, %v7218
    %7220 = vmatmul.f32.gmra.mxu0 %v1305
    %v7221 = vpop.f32.mrf.mxu0
    %v7222 = vadd.f32 0.0, %v7221
    %7223 = vdwg.mxu0
    %v7224 = vmax.f32 %v7196, %v7219
    %v7225 = vmax.f32 %v7199, %v7222
    %vm7226 = vcmp.gt.f32.partialorder %v7219, %v7196
    %vm7227 = vcmp.gt.f32.partialorder %v7222, %v7199
    %v7228 = vpack.c.bf16 %v7225, %v7224
    %s7229 = scalar_lea.vmem [#allocation30], 32
    %v7230 = vld [vmem:[%s7229] sm:$0xf]
    %v7231 = vld [vmem:[%s7229 + $0x4] sm:$0xf]
    %v7232 = vld [vmem:[%s7229 + $0x8] sm:$0xf]
    %v7233 = vld [vmem:[%s7229 + $0xc] sm:$0xf]
    %v7234 = vld [vmem:[%s7229 + $0x10] sm:$0xf]
    %v7235 = vld [vmem:[%s7229 + $0x14] sm:$0xf]
    %v7236 = vld [vmem:[%s7229 + $0x18] sm:$0xf]
    %v7237 = vld [vmem:[%s7229 + $0x1c] sm:$0xf]
    %v7238 = vrot.slane %v7224, 7
    %v7239 = vrot.slane %v7225, 7
    %v7240 = vsel %vm805, %v7238, %v7239
    %v7241 = vsel %vm805, %v7239, %v7238
    %v7242 = vmul.f32 %v7241, %v1351
    %v7243 = vmul.f32 %v7240, %v1356
    %v7244 = vpack.c.bf16 %v7243, %v7242
    %v7245 = vld [vmem:[#allocation30] sm:$0xf]
    %v7246 = vld [vmem:[#allocation30 + $0x4] sm:$0xf]
    %v7247 = vld [vmem:[#allocation30 + $0x8] sm:$0xf]
    %v7248 = vld [vmem:[#allocation30 + $0xc] sm:$0xf]
    %v7249 = vld [vmem:[#allocation30 + $0x10] sm:$0xf]
    %v7250 = vld [vmem:[#allocation30 + $0x14] sm:$0xf]
    %v7251 = vld [vmem:[#allocation30 + $0x18] sm:$0xf]
    %v7252 = vld [vmem:[#allocation30 + $0x1c] sm:$0xf]
    %v7261 = vunpack.c.l.b16 %v7245
    %v7262 = vunpack.c.l.b16 %v7246
    %v7263 = vunpack.c.l.b16 %v7247
    %v7264 = vunpack.c.l.b16 %v7248
    %v7265 = vunpack.c.l.b16 %v7249
    %v7266 = vunpack.c.l.b16 %v7250
    %v7267 = vunpack.c.l.b16 %v7251
    %v7268 = vunpack.c.l.b16 %v7252
    %v7269 = vpack.c.b16 %v7262, %v7261
    %v7270 = vpack.c.b16 %v7264, %v7263
    %v7271 = vpack.c.b16 %v7266, %v7265
    %v7272 = vpack.c.b16 %v7268, %v7267
    %v7278 = vsel %vm868, %v7244, 0
    %7280 = vmatpush.bf16.msra.mxu0 0
    %7281 = vmatpush.bf16.msra.mxu0 0
    %7282 = vmatpush.bf16.msra.mxu0 0
    %7283 = vmatpush.bf16.msra.mxu0 0
    %7284 = vmatpush.bf16.msra.mxu0 %v7272
    %7285 = vmatpush.bf16.msra.mxu0 %v7271
    %7286 = vmatpush.bf16.msra.mxu0 %v7270
    %7287 = vmatpush.bf16.msra.mxu0 %v7269
    %7288 = vmatmul.bf16.gmra.mxu0 %v7278
    %v7289 = vpop.f32.mrf.mxu0
    %v7290 = vadd.f32 0.0, %v7289
    %v7291 = vpop.f32.mrf.mxu0
    %v7292 = vadd.f32 0.0, %v7291
    %7293 = vdwg.mxu0
    %v7302 = vunpack.c.l.b16 %v7230
    %v7303 = vunpack.c.l.b16 %v7231
    %v7304 = vunpack.c.l.b16 %v7232
    %v7305 = vunpack.c.l.b16 %v7233
    %v7306 = vunpack.c.l.b16 %v7234
    %v7307 = vunpack.c.l.b16 %v7235
    %v7308 = vunpack.c.l.b16 %v7236
    %v7309 = vunpack.c.l.b16 %v7237
    %v7310 = vpack.c.b16 %v7303, %v7302
    %v7311 = vpack.c.b16 %v7305, %v7304
    %v7312 = vpack.c.b16 %v7307, %v7306
    %v7313 = vpack.c.b16 %v7309, %v7308
    %v7319 = vsel %vm868, %v7228, 0
    %7321 = vmatpush.bf16.msra.mxu0 0
    %7322 = vmatpush.bf16.msra.mxu0 0
    %7323 = vmatpush.bf16.msra.mxu0 0
    %7324 = vmatpush.bf16.msra.mxu0 0
    %7325 = vmatpush.bf16.msra.mxu0 %v7313
    %7326 = vmatpush.bf16.msra.mxu0 %v7312
    %7327 = vmatpush.bf16.msra.mxu0 %v7311
    %7328 = vmatpush.bf16.msra.mxu0 %v7310
    %7329 = vmatmul.bf16.gmra.mxu0 %v7319
    %v7330 = vpop.f32.mrf.mxu0
    %v7331 = vadd.f32 %v7290, %v7330
    %v7332 = vpop.f32.mrf.mxu0
    %v7333 = vadd.f32 %v7292, %v7332
    %7334 = vdwg.mxu0
    %v7335 = vrot.slane %v7224, 1
    %v7336 = vrot.slane %v7225, 1
    %v7337 = vsel %vm947, %v7335, %v7336
    %v7338 = vsel %vm947, %v7336, %v7335
    %v7339 = vmul.f32 %v7337, %v1458
    %v7340 = vmul.f32 %v7338, %v1463
    %v7341 = vpack.c.bf16 %v7340, %v7339
    %s7342 = scalar_lea.vmem [#allocation30], 64
    %v7343 = vld [vmem:[%s7342] sm:$0xf]
    %v7344 = vld [vmem:[%s7342 + $0x4] sm:$0xf]
    %v7345 = vld [vmem:[%s7342 + $0x8] sm:$0xf]
    %v7346 = vld [vmem:[%s7342 + $0xc] sm:$0xf]
    %v7347 = vld [vmem:[%s7342 + $0x10] sm:$0xf]
    %v7348 = vld [vmem:[%s7342 + $0x14] sm:$0xf]
    %v7349 = vld [vmem:[%s7342 + $0x18] sm:$0xf]
    %v7350 = vld [vmem:[%s7342 + $0x1c] sm:$0xf]
    %v7359 = vunpack.c.l.b16 %v7343
    %v7360 = vunpack.c.l.b16 %v7344
    %v7361 = vunpack.c.l.b16 %v7345
    %v7362 = vunpack.c.l.b16 %v7346
    %v7363 = vunpack.c.l.b16 %v7347
    %v7364 = vunpack.c.l.b16 %v7348
    %v7365 = vunpack.c.l.b16 %v7349
    %v7366 = vunpack.c.l.b16 %v7350
    %v7367 = vpack.c.b16 %v7360, %v7359
    %v7368 = vpack.c.b16 %v7362, %v7361
    %v7369 = vpack.c.b16 %v7364, %v7363
    %v7370 = vpack.c.b16 %v7366, %v7365
    %v7376 = vsel %vm868, %v7341, 0
    %7378 = vmatpush.bf16.msra.mxu0 0
    %7379 = vmatpush.bf16.msra.mxu0 0
    %7380 = vmatpush.bf16.msra.mxu0 0
    %7381 = vmatpush.bf16.msra.mxu0 0
    %7382 = vmatpush.bf16.msra.mxu0 %v7370
    %7383 = vmatpush.bf16.msra.mxu0 %v7369
    %7384 = vmatpush.bf16.msra.mxu0 %v7368
    %7385 = vmatpush.bf16.msra.mxu0 %v7367
    %7386 = vmatmul.bf16.gmra.mxu0 %v7376
    %v7387 = vpop.f32.mrf.mxu0
    %v7388 = vadd.f32 0.0, %v7387
    %v7389 = vpop.f32.mrf.mxu0
    %v7390 = vadd.f32 0.0, %v7389
    %7391 = vdwg.mxu0
    %v7392 = vadd.f32 %v7331, %v7388
    %v7393 = vadd.f32 %v7333, %v7390
    %v7394 = vld [vmem:[%s105] sm:$0x1]
    %v7396 = vperm.slane %v7394, 0
    %v7398 = vadd.f32 %v7392, %v7396
    %v7399 = vadd.f32 %v7393, %v7396
    %v7400 = vmax.f32 %v7398, 0.0
    %v7401 = vmax.f32 %v7399, 0.0
    %v7402 = vpack.c.bf16 %v7401, %v7400
    %s7403 = scalar_lea.vmem [#allocation32], 64
    %v7404 = vld [vmem:[%s7403] sm:$0xf]
    %v7405 = vld [vmem:[%s7403 + $0x4] sm:$0xf]
    %v7406 = vld [vmem:[%s7403 + $0x8] sm:$0xf]
    %v7407 = vld [vmem:[%s7403 + $0xc] sm:$0xf]
    %v7408 = vld [vmem:[%s7403 + $0x10] sm:$0xf]
    %v7409 = vld [vmem:[%s7403 + $0x14] sm:$0xf]
    %v7410 = vld [vmem:[%s7403 + $0x18] sm:$0xf]
    %v7411 = vld [vmem:[%s7403 + $0x1c] sm:$0xf]
    %v7412 = vld [vmem:[%s7403 + $0x20] sm:$0xf]
    %v7413 = vld [vmem:[%s7403 + $0x24] sm:$0xf]
    %v7414 = vld [vmem:[%s7403 + $0x28] sm:$0xf]
    %v7415 = vld [vmem:[%s7403 + $0x2c] sm:$0xf]
    %v7416 = vld [vmem:[%s7403 + $0x30] sm:$0xf]
    %v7417 = vld [vmem:[%s7403 + $0x34] sm:$0xf]
    %v7418 = vld [vmem:[%s7403 + $0x38] sm:$0xf]
    %v7419 = vld [vmem:[%s7403 + $0x3c] sm:$0xf]
    %v7420 = vrot.slane %v7400, 7
    %v7421 = vrot.slane %v7401, 7
    %v7422 = vsel %vm805, %v7420, %v7421
    %v7423 = vsel %vm805, %v7421, %v7420
    %v7424 = vmul.f32 %v7423, %v1351
    %v7425 = vmul.f32 %v7422, %v1356
    %v7426 = vpack.c.bf16 %v7425, %v7424
    %v7427 = vld [vmem:[#allocation32] sm:$0xf]
    %v7428 = vld [vmem:[#allocation32 + $0x4] sm:$0xf]
    %v7429 = vld [vmem:[#allocation32 + $0x8] sm:$0xf]
    %v7430 = vld [vmem:[#allocation32 + $0xc] sm:$0xf]
    %v7431 = vld [vmem:[#allocation32 + $0x10] sm:$0xf]
    %v7432 = vld [vmem:[#allocation32 + $0x14] sm:$0xf]
    %v7433 = vld [vmem:[#allocation32 + $0x18] sm:$0xf]
    %v7434 = vld [vmem:[#allocation32 + $0x1c] sm:$0xf]
    %v7435 = vld [vmem:[#allocation32 + $0x20] sm:$0xf]
    %v7436 = vld [vmem:[#allocation32 + $0x24] sm:$0xf]
    %v7437 = vld [vmem:[#allocation32 + $0x28] sm:$0xf]
    %v7438 = vld [vmem:[#allocation32 + $0x2c] sm:$0xf]
    %v7439 = vld [vmem:[#allocation32 + $0x30] sm:$0xf]
    %v7440 = vld [vmem:[#allocation32 + $0x34] sm:$0xf]
    %v7441 = vld [vmem:[#allocation32 + $0x38] sm:$0xf]
    %v7442 = vld [vmem:[#allocation32 + $0x3c] sm:$0xf]
    %v7459 = vunpack.c.l.b16 %v7427
    %v7460 = vunpack.c.l.b16 %v7428
    %v7461 = vunpack.c.l.b16 %v7429
    %v7462 = vunpack.c.l.b16 %v7430
    %v7463 = vunpack.c.l.b16 %v7431
    %v7464 = vunpack.c.l.b16 %v7432
    %v7465 = vunpack.c.l.b16 %v7433
    %v7466 = vunpack.c.l.b16 %v7434
    %v7467 = vunpack.c.l.b16 %v7435
    %v7468 = vunpack.c.l.b16 %v7436
    %v7469 = vunpack.c.l.b16 %v7437
    %v7470 = vunpack.c.l.b16 %v7438
    %v7471 = vunpack.c.l.b16 %v7439
    %v7472 = vunpack.c.l.b16 %v7440
    %v7473 = vunpack.c.l.b16 %v7441
    %v7474 = vunpack.c.l.b16 %v7442
    %v7475 = vpack.c.b16 %v7460, %v7459
    %v7476 = vpack.c.b16 %v7462, %v7461
    %v7477 = vpack.c.b16 %v7464, %v7463
    %v7478 = vpack.c.b16 %v7466, %v7465
    %v7479 = vpack.c.b16 %v7468, %v7467
    %v7480 = vpack.c.b16 %v7470, %v7469
    %v7481 = vpack.c.b16 %v7472, %v7471
    %v7482 = vpack.c.b16 %v7474, %v7473
    %7491 = vmatpush.bf16.msra.mxu0 %v7482
    %7492 = vmatpush.bf16.msra.mxu0 %v7481
    %7493 = vmatpush.bf16.msra.mxu0 %v7480
    %7494 = vmatpush.bf16.msra.mxu0 %v7479
    %7495 = vmatpush.bf16.msra.mxu0 %v7478
    %7496 = vmatpush.bf16.msra.mxu0 %v7477
    %7497 = vmatpush.bf16.msra.mxu0 %v7476
    %7498 = vmatpush.bf16.msra.mxu0 %v7475
    %7499 = vmatmul.bf16.gmra.mxu0 %v7426
    %v7500 = vpop.f32.mrf.mxu0
    %v7501 = vadd.f32 0.0, %v7500
    %v7502 = vpop.f32.mrf.mxu0
    %v7503 = vadd.f32 0.0, %v7502
    %7504 = vdwg.mxu0
    %v7521 = vunpack.c.l.b16 %v7404
    %v7522 = vunpack.c.l.b16 %v7405
    %v7523 = vunpack.c.l.b16 %v7406
    %v7524 = vunpack.c.l.b16 %v7407
    %v7525 = vunpack.c.l.b16 %v7408
    %v7526 = vunpack.c.l.b16 %v7409
    %v7527 = vunpack.c.l.b16 %v7410
    %v7528 = vunpack.c.l.b16 %v7411
    %v7529 = vunpack.c.l.b16 %v7412
    %v7530 = vunpack.c.l.b16 %v7413
    %v7531 = vunpack.c.l.b16 %v7414
    %v7532 = vunpack.c.l.b16 %v7415
    %v7533 = vunpack.c.l.b16 %v7416
    %v7534 = vunpack.c.l.b16 %v7417
    %v7535 = vunpack.c.l.b16 %v7418
    %v7536 = vunpack.c.l.b16 %v7419
    %v7537 = vpack.c.b16 %v7522, %v7521
    %v7538 = vpack.c.b16 %v7524, %v7523
    %v7539 = vpack.c.b16 %v7526, %v7525
    %v7540 = vpack.c.b16 %v7528, %v7527
    %v7541 = vpack.c.b16 %v7530, %v7529
    %v7542 = vpack.c.b16 %v7532, %v7531
    %v7543 = vpack.c.b16 %v7534, %v7533
    %v7544 = vpack.c.b16 %v7536, %v7535
    %7553 = vmatpush.bf16.msra.mxu0 %v7544
    %7554 = vmatpush.bf16.msra.mxu0 %v7543
    %7555 = vmatpush.bf16.msra.mxu0 %v7542
    %7556 = vmatpush.bf16.msra.mxu0 %v7541
    %7557 = vmatpush.bf16.msra.mxu0 %v7540
    %7558 = vmatpush.bf16.msra.mxu0 %v7539
    %7559 = vmatpush.bf16.msra.mxu0 %v7538
    %7560 = vmatpush.bf16.msra.mxu0 %v7537
    %7561 = vmatmul.bf16.gmra.mxu0 %v7402
    %v7562 = vpop.f32.mrf.mxu0
    %v7563 = vadd.f32 %v7501, %v7562
    %v7564 = vpop.f32.mrf.mxu0
    %v7565 = vadd.f32 %v7503, %v7564
    %7566 = vdwg.mxu0
    %v7567 = vrot.slane %v7400, 1
    %v7568 = vrot.slane %v7401, 1
    %v7569 = vsel %vm947, %v7567, %v7568
    %v7570 = vsel %vm947, %v7568, %v7567
    %v7571 = vmul.f32 %v7569, %v1458
    %v7572 = vmul.f32 %v7570, %v1463
    %v7573 = vpack.c.bf16 %v7572, %v7571
    %s7574 = scalar_lea.vmem [#allocation32], 128
    %v7575 = vld [vmem:[%s7574] sm:$0xf]
    %v7576 = vld [vmem:[%s7574 + $0x4] sm:$0xf]
    %v7577 = vld [vmem:[%s7574 + $0x8] sm:$0xf]
    %v7578 = vld [vmem:[%s7574 + $0xc] sm:$0xf]
    %v7579 = vld [vmem:[%s7574 + $0x10] sm:$0xf]
    %v7580 = vld [vmem:[%s7574 + $0x14] sm:$0xf]
    %v7581 = vld [vmem:[%s7574 + $0x18] sm:$0xf]
    %v7582 = vld [vmem:[%s7574 + $0x1c] sm:$0xf]
    %v7583 = vld [vmem:[%s7574 + $0x20] sm:$0xf]
    %v7584 = vld [vmem:[%s7574 + $0x24] sm:$0xf]
    %v7585 = vld [vmem:[%s7574 + $0x28] sm:$0xf]
    %v7586 = vld [vmem:[%s7574 + $0x2c] sm:$0xf]
    %v7587 = vld [vmem:[%s7574 + $0x30] sm:$0xf]
    %v7588 = vld [vmem:[%s7574 + $0x34] sm:$0xf]
    %v7589 = vld [vmem:[%s7574 + $0x38] sm:$0xf]
    %v7590 = vld [vmem:[%s7574 + $0x3c] sm:$0xf]
    %v7607 = vunpack.c.l.b16 %v7575
    %v7608 = vunpack.c.l.b16 %v7576
    %v7609 = vunpack.c.l.b16 %v7577
    %v7610 = vunpack.c.l.b16 %v7578
    %v7611 = vunpack.c.l.b16 %v7579
    %v7612 = vunpack.c.l.b16 %v7580
    %v7613 = vunpack.c.l.b16 %v7581
    %v7614 = vunpack.c.l.b16 %v7582
    %v7615 = vunpack.c.l.b16 %v7583
    %v7616 = vunpack.c.l.b16 %v7584
    %v7617 = vunpack.c.l.b16 %v7585
    %v7618 = vunpack.c.l.b16 %v7586
    %v7619 = vunpack.c.l.b16 %v7587
    %v7620 = vunpack.c.l.b16 %v7588
    %v7621 = vunpack.c.l.b16 %v7589
    %v7622 = vunpack.c.l.b16 %v7590
    %v7623 = vpack.c.b16 %v7608, %v7607
    %v7624 = vpack.c.b16 %v7610, %v7609
    %v7625 = vpack.c.b16 %v7612, %v7611
    %v7626 = vpack.c.b16 %v7614, %v7613
    %v7627 = vpack.c.b16 %v7616, %v7615
    %v7628 = vpack.c.b16 %v7618, %v7617
    %v7629 = vpack.c.b16 %v7620, %v7619
    %v7630 = vpack.c.b16 %v7622, %v7621
    %7639 = vmatpush.bf16.msra.mxu0 %v7630
    %7640 = vmatpush.bf16.msra.mxu0 %v7629
    %7641 = vmatpush.bf16.msra.mxu0 %v7628
    %7642 = vmatpush.bf16.msra.mxu0 %v7627
    %7643 = vmatpush.bf16.msra.mxu0 %v7626
    %7644 = vmatpush.bf16.msra.mxu0 %v7625
    %7645 = vmatpush.bf16.msra.mxu0 %v7624
    %7646 = vmatpush.bf16.msra.mxu0 %v7623
    %7647 = vmatmul.bf16.gmra.mxu0 %v7573
    %v7648 = vpop.f32.mrf.mxu0
    %v7649 = vadd.f32 0.0, %v7648
    %v7650 = vpop.f32.mrf.mxu0
    %v7651 = vadd.f32 0.0, %v7650
    %7652 = vdwg.mxu0
    %v7653 = vadd.f32 %v7563, %v7649
    %v7654 = vadd.f32 %v7565, %v7651
    %v7655 = vld [vmem:[%s109] sm:$0x1]
    %v7657 = vperm.slane %v7655, 0
    %v7659 = vadd.f32 %v7653, %v7657
    %v7660 = vadd.f32 %v7654, %v7657
    %v7661 = vmax.f32 %v7659, 0.0
    %v7662 = vmax.f32 %v7660, 0.0
    %7663 = vmatpush.msra.mxu0 0.0
    %7664 = vmatpush.msra.mxu0 0.0
    %7665 = vmatpush.msra.mxu0 0.0
    %7666 = vmatpush.msra.mxu0 0.0
    %7667 = vmatpush.msra.mxu0 0.0
    %7668 = vmatpush.msra.mxu0 0.0
    %7669 = vmatpush.msra.mxu0 0.0
    %7670 = vmatpush.msra.mxu0 0.0
    %7671 = vmatpush.msra.mxu0 0.0
    %7672 = vmatpush.msra.mxu0 0.0
    %7673 = vmatpush.msra.mxu0 0.0
    %7674 = vmatpush.msra.mxu0 0.0
    %7675 = vmatpush.msra.mxu0 0.0
    %7676 = vmatpush.msra.mxu0 0.0
    %7677 = vmatpush.msra.mxu0 %v7662
    %7678 = vmatpush.msra.mxu0 %v7661
    %7679 = vmatmul.f32.gmra.mxu0 %v1790
    %v7680 = vpop.f32.mrf.mxu0
    %v7681 = vadd.f32 0.0, %v7680
    %7682 = vdwg.mxu0
    %7683 = vmatpush.msra.mxu0 0.0
    %7684 = vmatpush.msra.mxu0 0.0
    %7685 = vmatpush.msra.mxu0 0.0
    %7686 = vmatpush.msra.mxu0 0.0
    %7687 = vmatpush.msra.mxu0 0.0
    %7688 = vmatpush.msra.mxu0 0.0
    %7689 = vmatpush.msra.mxu0 0.0
    %7690 = vmatpush.msra.mxu0 0.0
    %7691 = vmatpush.msra.mxu0 0.0
    %7692 = vmatpush.msra.mxu0 0.0
    %7693 = vmatpush.msra.mxu0 0.0
    %7694 = vmatpush.msra.mxu0 0.0
    %7695 = vmatpush.msra.mxu0 0.0
    %7696 = vmatpush.msra.mxu0 0.0
    %7697 = vmatpush.msra.mxu0 %v7662
    %7698 = vmatpush.msra.mxu0 %v7661
    %7699 = vmatmul.f32.gmra.mxu0 %v1812
    %v7700 = vpop.f32.mrf.mxu0
    %v7701 = vadd.f32 0.0, %v7700
    %7702 = vdwg.mxu0
    %v7703 = vmax.f32 %v7681, %v7701
    %vm7704 = vcmp.gt.f32.partialorder %v7701, %v7681
    %v7705 = vpack.c.bf16 %v7703, %v7703
    %s7706 = scalar_lea.vmem [#allocation33], 128
    %v7707 = vld [vmem:[%s7706] sm:$0xff]
    %v7708 = vld [vmem:[%s7706 + $0x8] sm:$0xff]
    %v7709 = vld [vmem:[%s7706 + $0x10] sm:$0xff]
    %v7710 = vld [vmem:[%s7706 + $0x18] sm:$0xff]
    %v7711 = vld [vmem:[%s7706 + $0x20] sm:$0xff]
    %v7712 = vld [vmem:[%s7706 + $0x28] sm:$0xff]
    %v7713 = vld [vmem:[%s7706 + $0x30] sm:$0xff]
    %v7714 = vld [vmem:[%s7706 + $0x38] sm:$0xff]
    %v7715 = vld [vmem:[%s7706 + $0x40] sm:$0xff]
    %v7716 = vld [vmem:[%s7706 + $0x48] sm:$0xff]
    %v7717 = vld [vmem:[%s7706 + $0x50] sm:$0xff]
    %v7718 = vld [vmem:[%s7706 + $0x58] sm:$0xff]
    %v7719 = vld [vmem:[%s7706 + $0x60] sm:$0xff]
    %v7720 = vld [vmem:[%s7706 + $0x68] sm:$0xff]
    %v7721 = vld [vmem:[%s7706 + $0x70] sm:$0xff]
    %v7722 = vld [vmem:[%s7706 + $0x78] sm:$0xff]
    %v7723 = vrot.slane %v7703, 7
    %v7724 = vmul.f32 %v7723, %v1858
    %v7725 = vpack.c.bf16 %v7724, %v7724
    %v7726 = vld [vmem:[#allocation33] sm:$0xff]
    %v7727 = vld [vmem:[#allocation33 + $0x8] sm:$0xff]
    %v7728 = vld [vmem:[#allocation33 + $0x10] sm:$0xff]
    %v7729 = vld [vmem:[#allocation33 + $0x18] sm:$0xff]
    %v7730 = vld [vmem:[#allocation33 + $0x20] sm:$0xff]
    %v7731 = vld [vmem:[#allocation33 + $0x28] sm:$0xff]
    %v7732 = vld [vmem:[#allocation33 + $0x30] sm:$0xff]
    %v7733 = vld [vmem:[#allocation33 + $0x38] sm:$0xff]
    %v7734 = vld [vmem:[#allocation33 + $0x40] sm:$0xff]
    %v7735 = vld [vmem:[#allocation33 + $0x48] sm:$0xff]
    %v7736 = vld [vmem:[#allocation33 + $0x50] sm:$0xff]
    %v7737 = vld [vmem:[#allocation33 + $0x58] sm:$0xff]
    %v7738 = vld [vmem:[#allocation33 + $0x60] sm:$0xff]
    %v7739 = vld [vmem:[#allocation33 + $0x68] sm:$0xff]
    %v7740 = vld [vmem:[#allocation33 + $0x70] sm:$0xff]
    %v7741 = vld [vmem:[#allocation33 + $0x78] sm:$0xff]
    %v7758 = vunpack.c.l.b16 %v7726
    %v7759 = vunpack.c.h.b16 %v7726
    %v7760 = vunpack.c.l.b16 %v7727
    %v7761 = vunpack.c.h.b16 %v7727
    %v7762 = vunpack.c.l.b16 %v7728
    %v7763 = vunpack.c.h.b16 %v7728
    %v7764 = vunpack.c.l.b16 %v7729
    %v7765 = vunpack.c.h.b16 %v7729
    %v7766 = vunpack.c.l.b16 %v7730
    %v7767 = vunpack.c.h.b16 %v7730
    %v7768 = vunpack.c.l.b16 %v7731
    %v7769 = vunpack.c.h.b16 %v7731
    %v7770 = vunpack.c.l.b16 %v7732
    %v7771 = vunpack.c.h.b16 %v7732
    %v7772 = vunpack.c.l.b16 %v7733
    %v7773 = vunpack.c.h.b16 %v7733
    %v7774 = vunpack.c.l.b16 %v7734
    %v7775 = vunpack.c.h.b16 %v7734
    %v7776 = vunpack.c.l.b16 %v7735
    %v7777 = vunpack.c.h.b16 %v7735
    %v7778 = vunpack.c.l.b16 %v7736
    %v7779 = vunpack.c.h.b16 %v7736
    %v7780 = vunpack.c.l.b16 %v7737
    %v7781 = vunpack.c.h.b16 %v7737
    %v7782 = vunpack.c.l.b16 %v7738
    %v7783 = vunpack.c.h.b16 %v7738
    %v7784 = vunpack.c.l.b16 %v7739
    %v7785 = vunpack.c.h.b16 %v7739
    %v7786 = vunpack.c.l.b16 %v7740
    %v7787 = vunpack.c.h.b16 %v7740
    %v7788 = vunpack.c.l.b16 %v7741
    %v7789 = vunpack.c.h.b16 %v7741
    %v7790 = vpack.c.b16 %v7760, %v7758
    %v7791 = vpack.c.b16 %v7761, %v7759
    %v7792 = vpack.c.b16 %v7764, %v7762
    %v7793 = vpack.c.b16 %v7765, %v7763
    %v7794 = vpack.c.b16 %v7768, %v7766
    %v7795 = vpack.c.b16 %v7769, %v7767
    %v7796 = vpack.c.b16 %v7772, %v7770
    %v7797 = vpack.c.b16 %v7773, %v7771
    %v7798 = vpack.c.b16 %v7776, %v7774
    %v7799 = vpack.c.b16 %v7777, %v7775
    %v7800 = vpack.c.b16 %v7780, %v7778
    %v7801 = vpack.c.b16 %v7781, %v7779
    %v7802 = vpack.c.b16 %v7784, %v7782
    %v7803 = vpack.c.b16 %v7785, %v7783
    %v7804 = vpack.c.b16 %v7788, %v7786
    %v7805 = vpack.c.b16 %v7789, %v7787
    %7822 = vmatpush.bf16.msra.mxu0 %v7804
    %7823 = vmatpush.bf16.msra.mxu0 %v7802
    %7824 = vmatpush.bf16.msra.mxu0 %v7800
    %7825 = vmatpush.bf16.msra.mxu0 %v7798
    %7826 = vmatpush.bf16.msra.mxu0 %v7796
    %7827 = vmatpush.bf16.msra.mxu0 %v7794
    %7828 = vmatpush.bf16.msra.mxu0 %v7792
    %7829 = vmatpush.bf16.msra.mxu0 %v7790
    %7830 = vmatmul.bf16.gmra.mxu0 %v7725
    %v7831 = vpop.f32.mrf.mxu0
    %v7832 = vadd.f32 0.0, %v7831
    %v7833 = vpop.f32.mrf.mxu0
    %7834 = vdwg.mxu0
    %7835 = vmatpush.bf16.msra.mxu0 %v7805
    %7836 = vmatpush.bf16.msra.mxu0 %v7803
    %7837 = vmatpush.bf16.msra.mxu0 %v7801
    %7838 = vmatpush.bf16.msra.mxu0 %v7799
    %7839 = vmatpush.bf16.msra.mxu0 %v7797
    %7840 = vmatpush.bf16.msra.mxu0 %v7795
    %7841 = vmatpush.bf16.msra.mxu0 %v7793
    %7842 = vmatpush.bf16.msra.mxu0 %v7791
    %7843 = vmatmul.bf16.gmra.mxu0 %v7725
    %v7844 = vpop.f32.mrf.mxu0
    %v7845 = vadd.f32 0.0, %v7844
    %v7846 = vpop.f32.mrf.mxu0
    %7847 = vdwg.mxu0
    %v7864 = vunpack.c.l.b16 %v7707
    %v7865 = vunpack.c.h.b16 %v7707
    %v7866 = vunpack.c.l.b16 %v7708
    %v7867 = vunpack.c.h.b16 %v7708
    %v7868 = vunpack.c.l.b16 %v7709
    %v7869 = vunpack.c.h.b16 %v7709
    %v7870 = vunpack.c.l.b16 %v7710
    %v7871 = vunpack.c.h.b16 %v7710
    %v7872 = vunpack.c.l.b16 %v7711
    %v7873 = vunpack.c.h.b16 %v7711
    %v7874 = vunpack.c.l.b16 %v7712
    %v7875 = vunpack.c.h.b16 %v7712
    %v7876 = vunpack.c.l.b16 %v7713
    %v7877 = vunpack.c.h.b16 %v7713
    %v7878 = vunpack.c.l.b16 %v7714
    %v7879 = vunpack.c.h.b16 %v7714
    %v7880 = vunpack.c.l.b16 %v7715
    %v7881 = vunpack.c.h.b16 %v7715
    %v7882 = vunpack.c.l.b16 %v7716
    %v7883 = vunpack.c.h.b16 %v7716
    %v7884 = vunpack.c.l.b16 %v7717
    %v7885 = vunpack.c.h.b16 %v7717
    %v7886 = vunpack.c.l.b16 %v7718
    %v7887 = vunpack.c.h.b16 %v7718
    %v7888 = vunpack.c.l.b16 %v7719
    %v7889 = vunpack.c.h.b16 %v7719
    %v7890 = vunpack.c.l.b16 %v7720
    %v7891 = vunpack.c.h.b16 %v7720
    %v7892 = vunpack.c.l.b16 %v7721
    %v7893 = vunpack.c.h.b16 %v7721
    %v7894 = vunpack.c.l.b16 %v7722
    %v7895 = vunpack.c.h.b16 %v7722
    %v7896 = vpack.c.b16 %v7866, %v7864
    %v7897 = vpack.c.b16 %v7867, %v7865
    %v7898 = vpack.c.b16 %v7870, %v7868
    %v7899 = vpack.c.b16 %v7871, %v7869
    %v7900 = vpack.c.b16 %v7874, %v7872
    %v7901 = vpack.c.b16 %v7875, %v7873
    %v7902 = vpack.c.b16 %v7878, %v7876
    %v7903 = vpack.c.b16 %v7879, %v7877
    %v7904 = vpack.c.b16 %v7882, %v7880
    %v7905 = vpack.c.b16 %v7883, %v7881
    %v7906 = vpack.c.b16 %v7886, %v7884
    %v7907 = vpack.c.b16 %v7887, %v7885
    %v7908 = vpack.c.b16 %v7890, %v7888
    %v7909 = vpack.c.b16 %v7891, %v7889
    %v7910 = vpack.c.b16 %v7894, %v7892
    %v7911 = vpack.c.b16 %v7895, %v7893
    %7928 = vmatpush.bf16.msra.mxu0 %v7910
    %7929 = vmatpush.bf16.msra.mxu0 %v7908
    %7930 = vmatpush.bf16.msra.mxu0 %v7906
    %7931 = vmatpush.bf16.msra.mxu0 %v7904
    %7932 = vmatpush.bf16.msra.mxu0 %v7902
    %7933 = vmatpush.bf16.msra.mxu0 %v7900
    %7934 = vmatpush.bf16.msra.mxu0 %v7898
    %7935 = vmatpush.bf16.msra.mxu0 %v7896
    %7936 = vmatmul.bf16.gmra.mxu0 %v7705
    %v7937 = vpop.f32.mrf.mxu0
    %v7938 = vadd.f32 %v7832, %v7937
    %v7939 = vpop.f32.mrf.mxu0
    %7940 = vdwg.mxu0
    %7941 = vmatpush.bf16.msra.mxu0 %v7911
    %7942 = vmatpush.bf16.msra.mxu0 %v7909
    %7943 = vmatpush.bf16.msra.mxu0 %v7907
    %7944 = vmatpush.bf16.msra.mxu0 %v7905
    %7945 = vmatpush.bf16.msra.mxu0 %v7903
    %7946 = vmatpush.bf16.msra.mxu0 %v7901
    %7947 = vmatpush.bf16.msra.mxu0 %v7899
    %7948 = vmatpush.bf16.msra.mxu0 %v7897
    %7949 = vmatmul.bf16.gmra.mxu0 %v7705
    %v7950 = vpop.f32.mrf.mxu0
    %v7951 = vadd.f32 %v7845, %v7950
    %v7952 = vpop.f32.mrf.mxu0
    %7953 = vdwg.mxu0
    %v7954 = vrot.slane %v7703, 1
    %v7955 = vmul.f32 %v7954, %v2094
    %v7956 = vpack.c.bf16 %v7955, %v7955
    %s7957 = scalar_lea.vmem [#allocation33], 256
    %v7958 = vld [vmem:[%s7957] sm:$0xff]
    %v7959 = vld [vmem:[%s7957 + $0x8] sm:$0xff]
    %v7960 = vld [vmem:[%s7957 + $0x10] sm:$0xff]
    %v7961 = vld [vmem:[%s7957 + $0x18] sm:$0xff]
    %v7962 = vld [vmem:[%s7957 + $0x20] sm:$0xff]
    %v7963 = vld [vmem:[%s7957 + $0x28] sm:$0xff]
    %v7964 = vld [vmem:[%s7957 + $0x30] sm:$0xff]
    %v7965 = vld [vmem:[%s7957 + $0x38] sm:$0xff]
    %v7966 = vld [vmem:[%s7957 + $0x40] sm:$0xff]
    %v7967 = vld [vmem:[%s7957 + $0x48] sm:$0xff]
    %v7968 = vld [vmem:[%s7957 + $0x50] sm:$0xff]
    %v7969 = vld [vmem:[%s7957 + $0x58] sm:$0xff]
    %v7970 = vld [vmem:[%s7957 + $0x60] sm:$0xff]
    %v7971 = vld [vmem:[%s7957 + $0x68] sm:$0xff]
    %v7972 = vld [vmem:[%s7957 + $0x70] sm:$0xff]
    %v7973 = vld [vmem:[%s7957 + $0x78] sm:$0xff]
    %v7990 = vunpack.c.l.b16 %v7958
    %v7991 = vunpack.c.h.b16 %v7958
    %v7992 = vunpack.c.l.b16 %v7959
    %v7993 = vunpack.c.h.b16 %v7959
    %v7994 = vunpack.c.l.b16 %v7960
    %v7995 = vunpack.c.h.b16 %v7960
    %v7996 = vunpack.c.l.b16 %v7961
    %v7997 = vunpack.c.h.b16 %v7961
    %v7998 = vunpack.c.l.b16 %v7962
    %v7999 = vunpack.c.h.b16 %v7962
    %v8000 = vunpack.c.l.b16 %v7963
    %v8001 = vunpack.c.h.b16 %v7963
    %v8002 = vunpack.c.l.b16 %v7964
    %v8003 = vunpack.c.h.b16 %v7964
    %v8004 = vunpack.c.l.b16 %v7965
    %v8005 = vunpack.c.h.b16 %v7965
    %v8006 = vunpack.c.l.b16 %v7966
    %v8007 = vunpack.c.h.b16 %v7966
    %v8008 = vunpack.c.l.b16 %v7967
    %v8009 = vunpack.c.h.b16 %v7967
    %v8010 = vunpack.c.l.b16 %v7968
    %v8011 = vunpack.c.h.b16 %v7968
    %v8012 = vunpack.c.l.b16 %v7969
    %v8013 = vunpack.c.h.b16 %v7969
    %v8014 = vunpack.c.l.b16 %v7970
    %v8015 = vunpack.c.h.b16 %v7970
    %v8016 = vunpack.c.l.b16 %v7971
    %v8017 = vunpack.c.h.b16 %v7971
    %v8018 = vunpack.c.l.b16 %v7972
    %v8019 = vunpack.c.h.b16 %v7972
    %v8020 = vunpack.c.l.b16 %v7973
    %v8021 = vunpack.c.h.b16 %v7973
    %v8022 = vpack.c.b16 %v7992, %v7990
    %v8023 = vpack.c.b16 %v7993, %v7991
    %v8024 = vpack.c.b16 %v7996, %v7994
    %v8025 = vpack.c.b16 %v7997, %v7995
    %v8026 = vpack.c.b16 %v8000, %v7998
    %v8027 = vpack.c.b16 %v8001, %v7999
    %v8028 = vpack.c.b16 %v8004, %v8002
    %v8029 = vpack.c.b16 %v8005, %v8003
    %v8030 = vpack.c.b16 %v8008, %v8006
    %v8031 = vpack.c.b16 %v8009, %v8007
    %v8032 = vpack.c.b16 %v8012, %v8010
    %v8033 = vpack.c.b16 %v8013, %v8011
    %v8034 = vpack.c.b16 %v8016, %v8014
    %v8035 = vpack.c.b16 %v8017, %v8015
    %v8036 = vpack.c.b16 %v8020, %v8018
    %v8037 = vpack.c.b16 %v8021, %v8019
    %8054 = vmatpush.bf16.msra.mxu0 %v8036
    %8055 = vmatpush.bf16.msra.mxu0 %v8034
    %8056 = vmatpush.bf16.msra.mxu0 %v8032
    %8057 = vmatpush.bf16.msra.mxu0 %v8030
    %8058 = vmatpush.bf16.msra.mxu0 %v8028
    %8059 = vmatpush.bf16.msra.mxu0 %v8026
    %8060 = vmatpush.bf16.msra.mxu0 %v8024
    %8061 = vmatpush.bf16.msra.mxu0 %v8022
    %8062 = vmatmul.bf16.gmra.mxu0 %v7956
    %v8063 = vpop.f32.mrf.mxu0
    %v8064 = vadd.f32 0.0, %v8063
    %v8065 = vpop.f32.mrf.mxu0
    %8066 = vdwg.mxu0
    %8067 = vmatpush.bf16.msra.mxu0 %v8037
    %8068 = vmatpush.bf16.msra.mxu0 %v8035
    %8069 = vmatpush.bf16.msra.mxu0 %v8033
    %8070 = vmatpush.bf16.msra.mxu0 %v8031
    %8071 = vmatpush.bf16.msra.mxu0 %v8029
    %8072 = vmatpush.bf16.msra.mxu0 %v8027
    %8073 = vmatpush.bf16.msra.mxu0 %v8025
    %8074 = vmatpush.bf16.msra.mxu0 %v8023
    %8075 = vmatmul.bf16.gmra.mxu0 %v7956
    %v8076 = vpop.f32.mrf.mxu0
    %v8077 = vadd.f32 0.0, %v8076
    %v8078 = vpop.f32.mrf.mxu0
    %8079 = vdwg.mxu0
    %v8080 = vadd.f32 %v7938, %v8064
    %v8081 = vadd.f32 %v7951, %v8077
    %v8082 = vld [vmem:[%s113] sm:$0x3]
    %v8084 = vperm.slane %v8082, 0
    %v8085 = vperm.slane %v8082, 1
    %v8088 = vadd.f32 %v8080, %v8084
    %v8089 = vadd.f32 %v8081, %v8085
    %v8090 = vmax.f32 %v8088, 0.0
    %v8091 = vmax.f32 %v8089, 0.0
    %v8092 = vpack.c.bf16 %v8090, %v8090
    %v8093 = vpack.c.bf16 %v8091, %v8091
    %s8094 = scalar_lea.vmem [#allocation35], 128
    %v8095 = vld [vmem:[%s8094] sm:$0xf]
    %v8096 = vld [vmem:[%s8094 + $0x4] sm:$0xf]
    %v8097 = vld [vmem:[%s8094 + $0x8] sm:$0xf]
    %v8098 = vld [vmem:[%s8094 + $0xc] sm:$0xf]
    %v8099 = vld [vmem:[%s8094 + $0x10] sm:$0xf]
    %v8100 = vld [vmem:[%s8094 + $0x14] sm:$0xf]
    %v8101 = vld [vmem:[%s8094 + $0x18] sm:$0xf]
    %v8102 = vld [vmem:[%s8094 + $0x1c] sm:$0xf]
    %v8103 = vld [vmem:[%s8094 + $0x20] sm:$0xf]
    %v8104 = vld [vmem:[%s8094 + $0x24] sm:$0xf]
    %v8105 = vld [vmem:[%s8094 + $0x28] sm:$0xf]
    %v8106 = vld [vmem:[%s8094 + $0x2c] sm:$0xf]
    %v8107 = vld [vmem:[%s8094 + $0x30] sm:$0xf]
    %v8108 = vld [vmem:[%s8094 + $0x34] sm:$0xf]
    %v8109 = vld [vmem:[%s8094 + $0x38] sm:$0xf]
    %v8110 = vld [vmem:[%s8094 + $0x3c] sm:$0xf]
    %v8111 = vld [vmem:[%s8094 + $0x40] sm:$0xf]
    %v8112 = vld [vmem:[%s8094 + $0x44] sm:$0xf]
    %v8113 = vld [vmem:[%s8094 + $0x48] sm:$0xf]
    %v8114 = vld [vmem:[%s8094 + $0x4c] sm:$0xf]
    %v8115 = vld [vmem:[%s8094 + $0x50] sm:$0xf]
    %v8116 = vld [vmem:[%s8094 + $0x54] sm:$0xf]
    %v8117 = vld [vmem:[%s8094 + $0x58] sm:$0xf]
    %v8118 = vld [vmem:[%s8094 + $0x5c] sm:$0xf]
    %v8119 = vld [vmem:[%s8094 + $0x60] sm:$0xf]
    %v8120 = vld [vmem:[%s8094 + $0x64] sm:$0xf]
    %v8121 = vld [vmem:[%s8094 + $0x68] sm:$0xf]
    %v8122 = vld [vmem:[%s8094 + $0x6c] sm:$0xf]
    %v8123 = vld [vmem:[%s8094 + $0x70] sm:$0xf]
    %v8124 = vld [vmem:[%s8094 + $0x74] sm:$0xf]
    %v8125 = vld [vmem:[%s8094 + $0x78] sm:$0xf]
    %v8126 = vld [vmem:[%s8094 + $0x7c] sm:$0xf]
    %v8127 = vrot.slane %v8090, 7
    %v8128 = vrot.slane %v8091, 7
    %v8129 = vmul.f32 %v8127, %v1858
    %v8130 = vmul.f32 %v8128, %v1858
    %v8131 = vpack.c.bf16 %v8129, %v8129
    %v8132 = vpack.c.bf16 %v8130, %v8130
    %v8133 = vld [vmem:[#allocation35] sm:$0xf]
    %v8134 = vld [vmem:[#allocation35 + $0x4] sm:$0xf]
    %v8135 = vld [vmem:[#allocation35 + $0x8] sm:$0xf]
    %v8136 = vld [vmem:[#allocation35 + $0xc] sm:$0xf]
    %v8137 = vld [vmem:[#allocation35 + $0x10] sm:$0xf]
    %v8138 = vld [vmem:[#allocation35 + $0x14] sm:$0xf]
    %v8139 = vld [vmem:[#allocation35 + $0x18] sm:$0xf]
    %v8140 = vld [vmem:[#allocation35 + $0x1c] sm:$0xf]
    %v8141 = vld [vmem:[#allocation35 + $0x20] sm:$0xf]
    %v8142 = vld [vmem:[#allocation35 + $0x24] sm:$0xf]
    %v8143 = vld [vmem:[#allocation35 + $0x28] sm:$0xf]
    %v8144 = vld [vmem:[#allocation35 + $0x2c] sm:$0xf]
    %v8145 = vld [vmem:[#allocation35 + $0x30] sm:$0xf]
    %v8146 = vld [vmem:[#allocation35 + $0x34] sm:$0xf]
    %v8147 = vld [vmem:[#allocation35 + $0x38] sm:$0xf]
    %v8148 = vld [vmem:[#allocation35 + $0x3c] sm:$0xf]
    %v8149 = vld [vmem:[#allocation35 + $0x40] sm:$0xf]
    %v8150 = vld [vmem:[#allocation35 + $0x44] sm:$0xf]
    %v8151 = vld [vmem:[#allocation35 + $0x48] sm:$0xf]
    %v8152 = vld [vmem:[#allocation35 + $0x4c] sm:$0xf]
    %v8153 = vld [vmem:[#allocation35 + $0x50] sm:$0xf]
    %v8154 = vld [vmem:[#allocation35 + $0x54] sm:$0xf]
    %v8155 = vld [vmem:[#allocation35 + $0x58] sm:$0xf]
    %v8156 = vld [vmem:[#allocation35 + $0x5c] sm:$0xf]
    %v8157 = vld [vmem:[#allocation35 + $0x60] sm:$0xf]
    %v8158 = vld [vmem:[#allocation35 + $0x64] sm:$0xf]
    %v8159 = vld [vmem:[#allocation35 + $0x68] sm:$0xf]
    %v8160 = vld [vmem:[#allocation35 + $0x6c] sm:$0xf]
    %v8161 = vld [vmem:[#allocation35 + $0x70] sm:$0xf]
    %v8162 = vld [vmem:[#allocation35 + $0x74] sm:$0xf]
    %v8163 = vld [vmem:[#allocation35 + $0x78] sm:$0xf]
    %v8164 = vld [vmem:[#allocation35 + $0x7c] sm:$0xf]
    %v8197 = vunpack.c.l.b16 %v8133
    %v8198 = vunpack.c.l.b16 %v8134
    %v8199 = vunpack.c.l.b16 %v8135
    %v8200 = vunpack.c.l.b16 %v8136
    %v8201 = vunpack.c.l.b16 %v8137
    %v8202 = vunpack.c.l.b16 %v8138
    %v8203 = vunpack.c.l.b16 %v8139
    %v8204 = vunpack.c.l.b16 %v8140
    %v8205 = vunpack.c.l.b16 %v8141
    %v8206 = vunpack.c.l.b16 %v8142
    %v8207 = vunpack.c.l.b16 %v8143
    %v8208 = vunpack.c.l.b16 %v8144
    %v8209 = vunpack.c.l.b16 %v8145
    %v8210 = vunpack.c.l.b16 %v8146
    %v8211 = vunpack.c.l.b16 %v8147
    %v8212 = vunpack.c.l.b16 %v8148
    %v8213 = vunpack.c.l.b16 %v8149
    %v8214 = vunpack.c.l.b16 %v8150
    %v8215 = vunpack.c.l.b16 %v8151
    %v8216 = vunpack.c.l.b16 %v8152
    %v8217 = vunpack.c.l.b16 %v8153
    %v8218 = vunpack.c.l.b16 %v8154
    %v8219 = vunpack.c.l.b16 %v8155
    %v8220 = vunpack.c.l.b16 %v8156
    %v8221 = vunpack.c.l.b16 %v8157
    %v8222 = vunpack.c.l.b16 %v8158
    %v8223 = vunpack.c.l.b16 %v8159
    %v8224 = vunpack.c.l.b16 %v8160
    %v8225 = vunpack.c.l.b16 %v8161
    %v8226 = vunpack.c.l.b16 %v8162
    %v8227 = vunpack.c.l.b16 %v8163
    %v8228 = vunpack.c.l.b16 %v8164
    %v8229 = vpack.c.b16 %v8198, %v8197
    %v8230 = vpack.c.b16 %v8200, %v8199
    %v8231 = vpack.c.b16 %v8202, %v8201
    %v8232 = vpack.c.b16 %v8204, %v8203
    %v8233 = vpack.c.b16 %v8206, %v8205
    %v8234 = vpack.c.b16 %v8208, %v8207
    %v8235 = vpack.c.b16 %v8210, %v8209
    %v8236 = vpack.c.b16 %v8212, %v8211
    %v8237 = vpack.c.b16 %v8214, %v8213
    %v8238 = vpack.c.b16 %v8216, %v8215
    %v8239 = vpack.c.b16 %v8218, %v8217
    %v8240 = vpack.c.b16 %v8220, %v8219
    %v8241 = vpack.c.b16 %v8222, %v8221
    %v8242 = vpack.c.b16 %v8224, %v8223
    %v8243 = vpack.c.b16 %v8226, %v8225
    %v8244 = vpack.c.b16 %v8228, %v8227
    %8261 = vmatpush.bf16.msra.mxu0 %v8236
    %8262 = vmatpush.bf16.msra.mxu0 %v8235
    %8263 = vmatpush.bf16.msra.mxu0 %v8234
    %8264 = vmatpush.bf16.msra.mxu0 %v8233
    %8265 = vmatpush.bf16.msra.mxu0 %v8232
    %8266 = vmatpush.bf16.msra.mxu0 %v8231
    %8267 = vmatpush.bf16.msra.mxu0 %v8230
    %8268 = vmatpush.bf16.msra.mxu0 %v8229
    %8269 = vmatmul.bf16.gmra.mxu0 %v8131
    %v8270 = vpop.f32.mrf.mxu0
    %v8271 = vadd.f32 0.0, %v8270
    %v8272 = vpop.f32.mrf.mxu0
    %8273 = vdwg.mxu0
    %8274 = vmatpush.bf16.msra.mxu0 %v8244
    %8275 = vmatpush.bf16.msra.mxu0 %v8243
    %8276 = vmatpush.bf16.msra.mxu0 %v8242
    %8277 = vmatpush.bf16.msra.mxu0 %v8241
    %8278 = vmatpush.bf16.msra.mxu0 %v8240
    %8279 = vmatpush.bf16.msra.mxu0 %v8239
    %8280 = vmatpush.bf16.msra.mxu0 %v8238
    %8281 = vmatpush.bf16.msra.mxu0 %v8237
    %8282 = vmatmul.bf16.gmra.mxu0 %v8132
    %v8283 = vpop.f32.mrf.mxu0
    %v8284 = vadd.f32 %v8271, %v8283
    %v8285 = vpop.f32.mrf.mxu0
    %8286 = vdwg.mxu0
    %v8319 = vunpack.c.l.b16 %v8095
    %v8320 = vunpack.c.l.b16 %v8096
    %v8321 = vunpack.c.l.b16 %v8097
    %v8322 = vunpack.c.l.b16 %v8098
    %v8323 = vunpack.c.l.b16 %v8099
    %v8324 = vunpack.c.l.b16 %v8100
    %v8325 = vunpack.c.l.b16 %v8101
    %v8326 = vunpack.c.l.b16 %v8102
    %v8327 = vunpack.c.l.b16 %v8103
    %v8328 = vunpack.c.l.b16 %v8104
    %v8329 = vunpack.c.l.b16 %v8105
    %v8330 = vunpack.c.l.b16 %v8106
    %v8331 = vunpack.c.l.b16 %v8107
    %v8332 = vunpack.c.l.b16 %v8108
    %v8333 = vunpack.c.l.b16 %v8109
    %v8334 = vunpack.c.l.b16 %v8110
    %v8335 = vunpack.c.l.b16 %v8111
    %v8336 = vunpack.c.l.b16 %v8112
    %v8337 = vunpack.c.l.b16 %v8113
    %v8338 = vunpack.c.l.b16 %v8114
    %v8339 = vunpack.c.l.b16 %v8115
    %v8340 = vunpack.c.l.b16 %v8116
    %v8341 = vunpack.c.l.b16 %v8117
    %v8342 = vunpack.c.l.b16 %v8118
    %v8343 = vunpack.c.l.b16 %v8119
    %v8344 = vunpack.c.l.b16 %v8120
    %v8345 = vunpack.c.l.b16 %v8121
    %v8346 = vunpack.c.l.b16 %v8122
    %v8347 = vunpack.c.l.b16 %v8123
    %v8348 = vunpack.c.l.b16 %v8124
    %v8349 = vunpack.c.l.b16 %v8125
    %v8350 = vunpack.c.l.b16 %v8126
    %v8351 = vpack.c.b16 %v8320, %v8319
    %v8352 = vpack.c.b16 %v8322, %v8321
    %v8353 = vpack.c.b16 %v8324, %v8323
    %v8354 = vpack.c.b16 %v8326, %v8325
    %v8355 = vpack.c.b16 %v8328, %v8327
    %v8356 = vpack.c.b16 %v8330, %v8329
    %v8357 = vpack.c.b16 %v8332, %v8331
    %v8358 = vpack.c.b16 %v8334, %v8333
    %v8359 = vpack.c.b16 %v8336, %v8335
    %v8360 = vpack.c.b16 %v8338, %v8337
    %v8361 = vpack.c.b16 %v8340, %v8339
    %v8362 = vpack.c.b16 %v8342, %v8341
    %v8363 = vpack.c.b16 %v8344, %v8343
    %v8364 = vpack.c.b16 %v8346, %v8345
    %v8365 = vpack.c.b16 %v8348, %v8347
    %v8366 = vpack.c.b16 %v8350, %v8349
    %8383 = vmatpush.bf16.msra.mxu0 %v8358
    %8384 = vmatpush.bf16.msra.mxu0 %v8357
    %8385 = vmatpush.bf16.msra.mxu0 %v8356
    %8386 = vmatpush.bf16.msra.mxu0 %v8355
    %8387 = vmatpush.bf16.msra.mxu0 %v8354
    %8388 = vmatpush.bf16.msra.mxu0 %v8353
    %8389 = vmatpush.bf16.msra.mxu0 %v8352
    %8390 = vmatpush.bf16.msra.mxu0 %v8351
    %8391 = vmatmul.bf16.gmra.mxu0 %v8092
    %v8392 = vpop.f32.mrf.mxu0
    %v8393 = vadd.f32 %v8284, %v8392
    %v8394 = vpop.f32.mrf.mxu0
    %8395 = vdwg.mxu0
    %8396 = vmatpush.bf16.msra.mxu0 %v8366
    %8397 = vmatpush.bf16.msra.mxu0 %v8365
    %8398 = vmatpush.bf16.msra.mxu0 %v8364
    %8399 = vmatpush.bf16.msra.mxu0 %v8363
    %8400 = vmatpush.bf16.msra.mxu0 %v8362
    %8401 = vmatpush.bf16.msra.mxu0 %v8361
    %8402 = vmatpush.bf16.msra.mxu0 %v8360
    %8403 = vmatpush.bf16.msra.mxu0 %v8359
    %8404 = vmatmul.bf16.gmra.mxu0 %v8093
    %v8405 = vpop.f32.mrf.mxu0
    %v8406 = vadd.f32 %v8393, %v8405
    %v8407 = vpop.f32.mrf.mxu0
    %8408 = vdwg.mxu0
    %v8409 = vrot.slane %v8090, 1
    %v8410 = vrot.slane %v8091, 1
    %v8411 = vmul.f32 %v8409, %v2094
    %v8412 = vmul.f32 %v8410, %v2094
    %v8413 = vpack.c.bf16 %v8411, %v8411
    %v8414 = vpack.c.bf16 %v8412, %v8412
    %s8415 = scalar_lea.vmem [#allocation35], 256
    %v8416 = vld [vmem:[%s8415] sm:$0xf]
    %v8417 = vld [vmem:[%s8415 + $0x4] sm:$0xf]
    %v8418 = vld [vmem:[%s8415 + $0x8] sm:$0xf]
    %v8419 = vld [vmem:[%s8415 + $0xc] sm:$0xf]
    %v8420 = vld [vmem:[%s8415 + $0x10] sm:$0xf]
    %v8421 = vld [vmem:[%s8415 + $0x14] sm:$0xf]
    %v8422 = vld [vmem:[%s8415 + $0x18] sm:$0xf]
    %v8423 = vld [vmem:[%s8415 + $0x1c] sm:$0xf]
    %v8424 = vld [vmem:[%s8415 + $0x20] sm:$0xf]
    %v8425 = vld [vmem:[%s8415 + $0x24] sm:$0xf]
    %v8426 = vld [vmem:[%s8415 + $0x28] sm:$0xf]
    %v8427 = vld [vmem:[%s8415 + $0x2c] sm:$0xf]
    %v8428 = vld [vmem:[%s8415 + $0x30] sm:$0xf]
    %v8429 = vld [vmem:[%s8415 + $0x34] sm:$0xf]
    %v8430 = vld [vmem:[%s8415 + $0x38] sm:$0xf]
    %v8431 = vld [vmem:[%s8415 + $0x3c] sm:$0xf]
    %v8432 = vld [vmem:[%s8415 + $0x40] sm:$0xf]
    %v8433 = vld [vmem:[%s8415 + $0x44] sm:$0xf]
    %v8434 = vld [vmem:[%s8415 + $0x48] sm:$0xf]
    %v8435 = vld [vmem:[%s8415 + $0x4c] sm:$0xf]
    %v8436 = vld [vmem:[%s8415 + $0x50] sm:$0xf]
    %v8437 = vld [vmem:[%s8415 + $0x54] sm:$0xf]
    %v8438 = vld [vmem:[%s8415 + $0x58] sm:$0xf]
    %v8439 = vld [vmem:[%s8415 + $0x5c] sm:$0xf]
    %v8440 = vld [vmem:[%s8415 + $0x60] sm:$0xf]
    %v8441 = vld [vmem:[%s8415 + $0x64] sm:$0xf]
    %v8442 = vld [vmem:[%s8415 + $0x68] sm:$0xf]
    %v8443 = vld [vmem:[%s8415 + $0x6c] sm:$0xf]
    %v8444 = vld [vmem:[%s8415 + $0x70] sm:$0xf]
    %v8445 = vld [vmem:[%s8415 + $0x74] sm:$0xf]
    %v8446 = vld [vmem:[%s8415 + $0x78] sm:$0xf]
    %v8447 = vld [vmem:[%s8415 + $0x7c] sm:$0xf]
    %v8480 = vunpack.c.l.b16 %v8416
    %v8481 = vunpack.c.l.b16 %v8417
    %v8482 = vunpack.c.l.b16 %v8418
    %v8483 = vunpack.c.l.b16 %v8419
    %v8484 = vunpack.c.l.b16 %v8420
    %v8485 = vunpack.c.l.b16 %v8421
    %v8486 = vunpack.c.l.b16 %v8422
    %v8487 = vunpack.c.l.b16 %v8423
    %v8488 = vunpack.c.l.b16 %v8424
    %v8489 = vunpack.c.l.b16 %v8425
    %v8490 = vunpack.c.l.b16 %v8426
    %v8491 = vunpack.c.l.b16 %v8427
    %v8492 = vunpack.c.l.b16 %v8428
    %v8493 = vunpack.c.l.b16 %v8429
    %v8494 = vunpack.c.l.b16 %v8430
    %v8495 = vunpack.c.l.b16 %v8431
    %v8496 = vunpack.c.l.b16 %v8432
    %v8497 = vunpack.c.l.b16 %v8433
    %v8498 = vunpack.c.l.b16 %v8434
    %v8499 = vunpack.c.l.b16 %v8435
    %v8500 = vunpack.c.l.b16 %v8436
    %v8501 = vunpack.c.l.b16 %v8437
    %v8502 = vunpack.c.l.b16 %v8438
    %v8503 = vunpack.c.l.b16 %v8439
    %v8504 = vunpack.c.l.b16 %v8440
    %v8505 = vunpack.c.l.b16 %v8441
    %v8506 = vunpack.c.l.b16 %v8442
    %v8507 = vunpack.c.l.b16 %v8443
    %v8508 = vunpack.c.l.b16 %v8444
    %v8509 = vunpack.c.l.b16 %v8445
    %v8510 = vunpack.c.l.b16 %v8446
    %v8511 = vunpack.c.l.b16 %v8447
    %v8512 = vpack.c.b16 %v8481, %v8480
    %v8513 = vpack.c.b16 %v8483, %v8482
    %v8514 = vpack.c.b16 %v8485, %v8484
    %v8515 = vpack.c.b16 %v8487, %v8486
    %v8516 = vpack.c.b16 %v8489, %v8488
    %v8517 = vpack.c.b16 %v8491, %v8490
    %v8518 = vpack.c.b16 %v8493, %v8492
    %v8519 = vpack.c.b16 %v8495, %v8494
    %v8520 = vpack.c.b16 %v8497, %v8496
    %v8521 = vpack.c.b16 %v8499, %v8498
    %v8522 = vpack.c.b16 %v8501, %v8500
    %v8523 = vpack.c.b16 %v8503, %v8502
    %v8524 = vpack.c.b16 %v8505, %v8504
    %v8525 = vpack.c.b16 %v8507, %v8506
    %v8526 = vpack.c.b16 %v8509, %v8508
    %v8527 = vpack.c.b16 %v8511, %v8510
    %8544 = vmatpush.bf16.msra.mxu0 %v8519
    %8545 = vmatpush.bf16.msra.mxu0 %v8518
    %8546 = vmatpush.bf16.msra.mxu0 %v8517
    %8547 = vmatpush.bf16.msra.mxu0 %v8516
    %8548 = vmatpush.bf16.msra.mxu0 %v8515
    %8549 = vmatpush.bf16.msra.mxu0 %v8514
    %8550 = vmatpush.bf16.msra.mxu0 %v8513
    %8551 = vmatpush.bf16.msra.mxu0 %v8512
    %8552 = vmatmul.bf16.gmra.mxu0 %v8413
    %v8553 = vpop.f32.mrf.mxu0
    %v8554 = vadd.f32 0.0, %v8553
    %v8555 = vpop.f32.mrf.mxu0
    %8556 = vdwg.mxu0
    %8557 = vmatpush.bf16.msra.mxu0 %v8527
    %8558 = vmatpush.bf16.msra.mxu0 %v8526
    %8559 = vmatpush.bf16.msra.mxu0 %v8525
    %8560 = vmatpush.bf16.msra.mxu0 %v8524
    %8561 = vmatpush.bf16.msra.mxu0 %v8523
    %8562 = vmatpush.bf16.msra.mxu0 %v8522
    %8563 = vmatpush.bf16.msra.mxu0 %v8521
    %8564 = vmatpush.bf16.msra.mxu0 %v8520
    %8565 = vmatmul.bf16.gmra.mxu0 %v8414
    %v8566 = vpop.f32.mrf.mxu0
    %v8567 = vadd.f32 %v8554, %v8566
    %v8568 = vpop.f32.mrf.mxu0
    %8569 = vdwg.mxu0
    %v8570 = vadd.f32 %v8406, %v8567
    %v8571 = vld [vmem:[%s117] sm:$0x1]
    %v8573 = vperm.slane %v8571, 0
    %v8575 = vadd.f32 %v8570, %v8573
    %v8576 = vmax.f32 %v8575, 0.0
    %v8577 = vsel %vm7704, 0.0, %v8576
    %v8578 = vsel %vm7704, %v8576, 0.0
    %8579 = vmatpush.msra.mxu0 0.0
    %8580 = vmatpush.msra.mxu0 0.0
    %8581 = vmatpush.msra.mxu0 0.0
    %8582 = vmatpush.msra.mxu0 0.0
    %8583 = vmatpush.msra.mxu0 0.0
    %8584 = vmatpush.msra.mxu0 0.0
    %8585 = vmatpush.msra.mxu0 0.0
    %8586 = vmatpush.msra.mxu0 0.0
    %8587 = vmatpush.msra.mxu0 0.0
    %8588 = vmatpush.msra.mxu0 0.0
    %8589 = vmatpush.msra.mxu0 0.0
    %8590 = vmatpush.msra.mxu0 0.0
    %8591 = vmatpush.msra.mxu0 0.0
    %8592 = vmatpush.msra.mxu0 0.0
    %8593 = vmatpush.msra.mxu0 0.0
    %8594 = vmatpush.msra.mxu0 %v8578
    %8595 = vmatmul.f32.gmra.mxu0 %v2722
    %v8596 = vpop.f32.mrf.mxu0
    %v8597 = vadd.f32 0.0, %v8596
    %8598 = vmatmul.f32.gmra.mxu0 %v2725
    %v8599 = vpop.f32.mrf.mxu0
    %v8600 = vadd.f32 0.0, %v8599
    %8601 = vdwg.mxu0
    %8602 = vmatpush.msra.mxu0 0.0
    %8603 = vmatpush.msra.mxu0 0.0
    %8604 = vmatpush.msra.mxu0 0.0
    %8605 = vmatpush.msra.mxu0 0.0
    %8606 = vmatpush.msra.mxu0 0.0
    %8607 = vmatpush.msra.mxu0 0.0
    %8608 = vmatpush.msra.mxu0 0.0
    %8609 = vmatpush.msra.mxu0 0.0
    %8610 = vmatpush.msra.mxu0 0.0
    %8611 = vmatpush.msra.mxu0 0.0
    %8612 = vmatpush.msra.mxu0 0.0
    %8613 = vmatpush.msra.mxu0 0.0
    %8614 = vmatpush.msra.mxu0 0.0
    %8615 = vmatpush.msra.mxu0 0.0
    %8616 = vmatpush.msra.mxu0 0.0
    %8617 = vmatpush.msra.mxu0 %v8577
    %8618 = vmatmul.f32.gmra.mxu0 %v2751
    %v8619 = vpop.f32.mrf.mxu0
    %v8620 = vadd.f32 %v8597, %v8619
    %8621 = vmatmul.f32.gmra.mxu0 %v2754
    %v8622 = vpop.f32.mrf.mxu0
    %v8623 = vadd.f32 %v8600, %v8622
    %8624 = vdwg.mxu0
    %v8625 = vadd.f32 %v7661, %v8620
    %v8626 = vadd.f32 %v7662, %v8623
    %v8627 = vpack.c.bf16 %v8626, %v8625
    %s8628 = scalar_lea.vmem [#allocation39], 64
    %v8629 = vld [vmem:[%s8628] sm:$0xf]
    %v8630 = vld [vmem:[%s8628 + $0x4] sm:$0xf]
    %v8631 = vld [vmem:[%s8628 + $0x8] sm:$0xf]
    %v8632 = vld [vmem:[%s8628 + $0xc] sm:$0xf]
    %v8633 = vld [vmem:[%s8628 + $0x10] sm:$0xf]
    %v8634 = vld [vmem:[%s8628 + $0x14] sm:$0xf]
    %v8635 = vld [vmem:[%s8628 + $0x18] sm:$0xf]
    %v8636 = vld [vmem:[%s8628 + $0x1c] sm:$0xf]
    %v8637 = vld [vmem:[%s8628 + $0x20] sm:$0xf]
    %v8638 = vld [vmem:[%s8628 + $0x24] sm:$0xf]
    %v8639 = vld [vmem:[%s8628 + $0x28] sm:$0xf]
    %v8640 = vld [vmem:[%s8628 + $0x2c] sm:$0xf]
    %v8641 = vld [vmem:[%s8628 + $0x30] sm:$0xf]
    %v8642 = vld [vmem:[%s8628 + $0x34] sm:$0xf]
    %v8643 = vld [vmem:[%s8628 + $0x38] sm:$0xf]
    %v8644 = vld [vmem:[%s8628 + $0x3c] sm:$0xf]
    %v8645 = vrot.slane %v8625, 7
    %v8646 = vrot.slane %v8626, 7
    %v8647 = vsel %vm805, %v8645, %v8646
    %v8648 = vsel %vm805, %v8646, %v8645
    %v8649 = vmul.f32 %v8648, %v1351
    %v8650 = vmul.f32 %v8647, %v1356
    %v8651 = vpack.c.bf16 %v8650, %v8649
    %v8652 = vld [vmem:[#allocation39] sm:$0xf]
    %v8653 = vld [vmem:[#allocation39 + $0x4] sm:$0xf]
    %v8654 = vld [vmem:[#allocation39 + $0x8] sm:$0xf]
    %v8655 = vld [vmem:[#allocation39 + $0xc] sm:$0xf]
    %v8656 = vld [vmem:[#allocation39 + $0x10] sm:$0xf]
    %v8657 = vld [vmem:[#allocation39 + $0x14] sm:$0xf]
    %v8658 = vld [vmem:[#allocation39 + $0x18] sm:$0xf]
    %v8659 = vld [vmem:[#allocation39 + $0x1c] sm:$0xf]
    %v8660 = vld [vmem:[#allocation39 + $0x20] sm:$0xf]
    %v8661 = vld [vmem:[#allocation39 + $0x24] sm:$0xf]
    %v8662 = vld [vmem:[#allocation39 + $0x28] sm:$0xf]
    %v8663 = vld [vmem:[#allocation39 + $0x2c] sm:$0xf]
    %v8664 = vld [vmem:[#allocation39 + $0x30] sm:$0xf]
    %v8665 = vld [vmem:[#allocation39 + $0x34] sm:$0xf]
    %v8666 = vld [vmem:[#allocation39 + $0x38] sm:$0xf]
    %v8667 = vld [vmem:[#allocation39 + $0x3c] sm:$0xf]
    %v8684 = vunpack.c.l.b16 %v8652
    %v8685 = vunpack.c.l.b16 %v8653
    %v8686 = vunpack.c.l.b16 %v8654
    %v8687 = vunpack.c.l.b16 %v8655
    %v8688 = vunpack.c.l.b16 %v8656
    %v8689 = vunpack.c.l.b16 %v8657
    %v8690 = vunpack.c.l.b16 %v8658
    %v8691 = vunpack.c.l.b16 %v8659
    %v8692 = vunpack.c.l.b16 %v8660
    %v8693 = vunpack.c.l.b16 %v8661
    %v8694 = vunpack.c.l.b16 %v8662
    %v8695 = vunpack.c.l.b16 %v8663
    %v8696 = vunpack.c.l.b16 %v8664
    %v8697 = vunpack.c.l.b16 %v8665
    %v8698 = vunpack.c.l.b16 %v8666
    %v8699 = vunpack.c.l.b16 %v8667
    %v8700 = vpack.c.b16 %v8685, %v8684
    %v8701 = vpack.c.b16 %v8687, %v8686
    %v8702 = vpack.c.b16 %v8689, %v8688
    %v8703 = vpack.c.b16 %v8691, %v8690
    %v8704 = vpack.c.b16 %v8693, %v8692
    %v8705 = vpack.c.b16 %v8695, %v8694
    %v8706 = vpack.c.b16 %v8697, %v8696
    %v8707 = vpack.c.b16 %v8699, %v8698
    %8716 = vmatpush.bf16.msra.mxu0 %v8707
    %8717 = vmatpush.bf16.msra.mxu0 %v8706
    %8718 = vmatpush.bf16.msra.mxu0 %v8705
    %8719 = vmatpush.bf16.msra.mxu0 %v8704
    %8720 = vmatpush.bf16.msra.mxu0 %v8703
    %8721 = vmatpush.bf16.msra.mxu0 %v8702
    %8722 = vmatpush.bf16.msra.mxu0 %v8701
    %8723 = vmatpush.bf16.msra.mxu0 %v8700
    %8724 = vmatmul.bf16.gmra.mxu0 %v8651
    %v8725 = vpop.f32.mrf.mxu0
    %v8726 = vadd.f32 0.0, %v8725
    %v8727 = vpop.f32.mrf.mxu0
    %v8728 = vadd.f32 0.0, %v8727
    %8729 = vdwg.mxu0
    %v8746 = vunpack.c.l.b16 %v8629
    %v8747 = vunpack.c.l.b16 %v8630
    %v8748 = vunpack.c.l.b16 %v8631
    %v8749 = vunpack.c.l.b16 %v8632
    %v8750 = vunpack.c.l.b16 %v8633
    %v8751 = vunpack.c.l.b16 %v8634
    %v8752 = vunpack.c.l.b16 %v8635
    %v8753 = vunpack.c.l.b16 %v8636
    %v8754 = vunpack.c.l.b16 %v8637
    %v8755 = vunpack.c.l.b16 %v8638
    %v8756 = vunpack.c.l.b16 %v8639
    %v8757 = vunpack.c.l.b16 %v8640
    %v8758 = vunpack.c.l.b16 %v8641
    %v8759 = vunpack.c.l.b16 %v8642
    %v8760 = vunpack.c.l.b16 %v8643
    %v8761 = vunpack.c.l.b16 %v8644
    %v8762 = vpack.c.b16 %v8747, %v8746
    %v8763 = vpack.c.b16 %v8749, %v8748
    %v8764 = vpack.c.b16 %v8751, %v8750
    %v8765 = vpack.c.b16 %v8753, %v8752
    %v8766 = vpack.c.b16 %v8755, %v8754
    %v8767 = vpack.c.b16 %v8757, %v8756
    %v8768 = vpack.c.b16 %v8759, %v8758
    %v8769 = vpack.c.b16 %v8761, %v8760
    %8778 = vmatpush.bf16.msra.mxu0 %v8769
    %8779 = vmatpush.bf16.msra.mxu0 %v8768
    %8780 = vmatpush.bf16.msra.mxu0 %v8767
    %8781 = vmatpush.bf16.msra.mxu0 %v8766
    %8782 = vmatpush.bf16.msra.mxu0 %v8765
    %8783 = vmatpush.bf16.msra.mxu0 %v8764
    %8784 = vmatpush.bf16.msra.mxu0 %v8763
    %8785 = vmatpush.bf16.msra.mxu0 %v8762
    %8786 = vmatmul.bf16.gmra.mxu0 %v8627
    %v8787 = vpop.f32.mrf.mxu0
    %v8788 = vadd.f32 %v8726, %v8787
    %v8789 = vpop.f32.mrf.mxu0
    %v8790 = vadd.f32 %v8728, %v8789
    %8791 = vdwg.mxu0
    %v8792 = vrot.slane %v8625, 1
    %v8793 = vrot.slane %v8626, 1
    %v8794 = vsel %vm947, %v8792, %v8793
    %v8795 = vsel %vm947, %v8793, %v8792
    %v8796 = vmul.f32 %v8794, %v1458
    %v8797 = vmul.f32 %v8795, %v1463
    %v8798 = vpack.c.bf16 %v8797, %v8796
    %s8799 = scalar_lea.vmem [#allocation39], 128
    %v8800 = vld [vmem:[%s8799] sm:$0xf]
    %v8801 = vld [vmem:[%s8799 + $0x4] sm:$0xf]
    %v8802 = vld [vmem:[%s8799 + $0x8] sm:$0xf]
    %v8803 = vld [vmem:[%s8799 + $0xc] sm:$0xf]
    %v8804 = vld [vmem:[%s8799 + $0x10] sm:$0xf]
    %v8805 = vld [vmem:[%s8799 + $0x14] sm:$0xf]
    %v8806 = vld [vmem:[%s8799 + $0x18] sm:$0xf]
    %v8807 = vld [vmem:[%s8799 + $0x1c] sm:$0xf]
    %v8808 = vld [vmem:[%s8799 + $0x20] sm:$0xf]
    %v8809 = vld [vmem:[%s8799 + $0x24] sm:$0xf]
    %v8810 = vld [vmem:[%s8799 + $0x28] sm:$0xf]
    %v8811 = vld [vmem:[%s8799 + $0x2c] sm:$0xf]
    %v8812 = vld [vmem:[%s8799 + $0x30] sm:$0xf]
    %v8813 = vld [vmem:[%s8799 + $0x34] sm:$0xf]
    %v8814 = vld [vmem:[%s8799 + $0x38] sm:$0xf]
    %v8815 = vld [vmem:[%s8799 + $0x3c] sm:$0xf]
    %v8832 = vunpack.c.l.b16 %v8800
    %v8833 = vunpack.c.l.b16 %v8801
    %v8834 = vunpack.c.l.b16 %v8802
    %v8835 = vunpack.c.l.b16 %v8803
    %v8836 = vunpack.c.l.b16 %v8804
    %v8837 = vunpack.c.l.b16 %v8805
    %v8838 = vunpack.c.l.b16 %v8806
    %v8839 = vunpack.c.l.b16 %v8807
    %v8840 = vunpack.c.l.b16 %v8808
    %v8841 = vunpack.c.l.b16 %v8809
    %v8842 = vunpack.c.l.b16 %v8810
    %v8843 = vunpack.c.l.b16 %v8811
    %v8844 = vunpack.c.l.b16 %v8812
    %v8845 = vunpack.c.l.b16 %v8813
    %v8846 = vunpack.c.l.b16 %v8814
    %v8847 = vunpack.c.l.b16 %v8815
    %v8848 = vpack.c.b16 %v8833, %v8832
    %v8849 = vpack.c.b16 %v8835, %v8834
    %v8850 = vpack.c.b16 %v8837, %v8836
    %v8851 = vpack.c.b16 %v8839, %v8838
    %v8852 = vpack.c.b16 %v8841, %v8840
    %v8853 = vpack.c.b16 %v8843, %v8842
    %v8854 = vpack.c.b16 %v8845, %v8844
    %v8855 = vpack.c.b16 %v8847, %v8846
    %8864 = vmatpush.bf16.msra.mxu0 %v8855
    %8865 = vmatpush.bf16.msra.mxu0 %v8854
    %8866 = vmatpush.bf16.msra.mxu0 %v8853
    %8867 = vmatpush.bf16.msra.mxu0 %v8852
    %8868 = vmatpush.bf16.msra.mxu0 %v8851
    %8869 = vmatpush.bf16.msra.mxu0 %v8850
    %8870 = vmatpush.bf16.msra.mxu0 %v8849
    %8871 = vmatpush.bf16.msra.mxu0 %v8848
    %8872 = vmatmul.bf16.gmra.mxu0 %v8798
    %v8873 = vpop.f32.mrf.mxu0
    %v8874 = vadd.f32 0.0, %v8873
    %v8875 = vpop.f32.mrf.mxu0
    %v8876 = vadd.f32 0.0, %v8875
    %8877 = vdwg.mxu0
    %v8878 = vadd.f32 %v8788, %v8874
    %v8879 = vadd.f32 %v8790, %v8876
    %v8880 = vld [vmem:[%s129] sm:$0x1]
    %v8882 = vperm.slane %v8880, 0
    %v8884 = vadd.f32 %v8878, %v8882
    %v8885 = vadd.f32 %v8879, %v8882
    %v8886 = vmax.f32 %v8884, 0.0
    %v8887 = vmax.f32 %v8885, 0.0
    %v8888 = vpack.c.bf16 %v8887, %v8886
    %s8889 = scalar_lea.vmem %s135, 64
    %v8890 = vld [vmem:[%s8889] sm:$0xf]
    %v8891 = vld [vmem:[%s8889 + $0x4] sm:$0xf]
    %v8892 = vld [vmem:[%s8889 + $0x8] sm:$0xf]
    %v8893 = vld [vmem:[%s8889 + $0xc] sm:$0xf]
    %v8894 = vld [vmem:[%s8889 + $0x10] sm:$0xf]
    %v8895 = vld [vmem:[%s8889 + $0x14] sm:$0xf]
    %v8896 = vld [vmem:[%s8889 + $0x18] sm:$0xf]
    %v8897 = vld [vmem:[%s8889 + $0x1c] sm:$0xf]
    %v8898 = vld [vmem:[%s8889 + $0x20] sm:$0xf]
    %v8899 = vld [vmem:[%s8889 + $0x24] sm:$0xf]
    %v8900 = vld [vmem:[%s8889 + $0x28] sm:$0xf]
    %v8901 = vld [vmem:[%s8889 + $0x2c] sm:$0xf]
    %v8902 = vld [vmem:[%s8889 + $0x30] sm:$0xf]
    %v8903 = vld [vmem:[%s8889 + $0x34] sm:$0xf]
    %v8904 = vld [vmem:[%s8889 + $0x38] sm:$0xf]
    %v8905 = vld [vmem:[%s8889 + $0x3c] sm:$0xf]
    %v8906 = vrot.slane %v8886, 7
    %v8907 = vrot.slane %v8887, 7
    %v8908 = vsel %vm805, %v8906, %v8907
    %v8909 = vsel %vm805, %v8907, %v8906
    %v8910 = vmul.f32 %v8909, %v1351
    %v8911 = vmul.f32 %v8908, %v1356
    %v8912 = vpack.c.bf16 %v8911, %v8910
    %v8913 = vld [vmem:[%s135] sm:$0xf]
    %v8914 = vld [vmem:[%s135 + $0x4] sm:$0xf]
    %v8915 = vld [vmem:[%s135 + $0x8] sm:$0xf]
    %v8916 = vld [vmem:[%s135 + $0xc] sm:$0xf]
    %v8917 = vld [vmem:[%s135 + $0x10] sm:$0xf]
    %v8918 = vld [vmem:[%s135 + $0x14] sm:$0xf]
    %v8919 = vld [vmem:[%s135 + $0x18] sm:$0xf]
    %v8920 = vld [vmem:[%s135 + $0x1c] sm:$0xf]
    %v8921 = vld [vmem:[%s135 + $0x20] sm:$0xf]
    %v8922 = vld [vmem:[%s135 + $0x24] sm:$0xf]
    %v8923 = vld [vmem:[%s135 + $0x28] sm:$0xf]
    %v8924 = vld [vmem:[%s135 + $0x2c] sm:$0xf]
    %v8925 = vld [vmem:[%s135 + $0x30] sm:$0xf]
    %v8926 = vld [vmem:[%s135 + $0x34] sm:$0xf]
    %v8927 = vld [vmem:[%s135 + $0x38] sm:$0xf]
    %v8928 = vld [vmem:[%s135 + $0x3c] sm:$0xf]
    %v8945 = vunpack.c.l.b16 %v8913
    %v8946 = vunpack.c.l.b16 %v8914
    %v8947 = vunpack.c.l.b16 %v8915
    %v8948 = vunpack.c.l.b16 %v8916
    %v8949 = vunpack.c.l.b16 %v8917
    %v8950 = vunpack.c.l.b16 %v8918
    %v8951 = vunpack.c.l.b16 %v8919
    %v8952 = vunpack.c.l.b16 %v8920
    %v8953 = vunpack.c.l.b16 %v8921
    %v8954 = vunpack.c.l.b16 %v8922
    %v8955 = vunpack.c.l.b16 %v8923
    %v8956 = vunpack.c.l.b16 %v8924
    %v8957 = vunpack.c.l.b16 %v8925
    %v8958 = vunpack.c.l.b16 %v8926
    %v8959 = vunpack.c.l.b16 %v8927
    %v8960 = vunpack.c.l.b16 %v8928
    %v8961 = vpack.c.b16 %v8946, %v8945
    %v8962 = vpack.c.b16 %v8948, %v8947
    %v8963 = vpack.c.b16 %v8950, %v8949
    %v8964 = vpack.c.b16 %v8952, %v8951
    %v8965 = vpack.c.b16 %v8954, %v8953
    %v8966 = vpack.c.b16 %v8956, %v8955
    %v8967 = vpack.c.b16 %v8958, %v8957
    %v8968 = vpack.c.b16 %v8960, %v8959
    %8977 = vmatpush.bf16.msra.mxu0 %v8968
    %8978 = vmatpush.bf16.msra.mxu0 %v8967
    %8979 = vmatpush.bf16.msra.mxu0 %v8966
    %8980 = vmatpush.bf16.msra.mxu0 %v8965
    %8981 = vmatpush.bf16.msra.mxu0 %v8964
    %8982 = vmatpush.bf16.msra.mxu0 %v8963
    %8983 = vmatpush.bf16.msra.mxu0 %v8962
    %8984 = vmatpush.bf16.msra.mxu0 %v8961
    %8985 = vmatmul.bf16.gmra.mxu0 %v8912
    %v8986 = vpop.f32.mrf.mxu0
    %v8987 = vadd.f32 0.0, %v8986
    %v8988 = vpop.f32.mrf.mxu0
    %v8989 = vadd.f32 0.0, %v8988
    %8990 = vdwg.mxu0
    %v9007 = vunpack.c.l.b16 %v8890
    %v9008 = vunpack.c.l.b16 %v8891
    %v9009 = vunpack.c.l.b16 %v8892
    %v9010 = vunpack.c.l.b16 %v8893
    %v9011 = vunpack.c.l.b16 %v8894
    %v9012 = vunpack.c.l.b16 %v8895
    %v9013 = vunpack.c.l.b16 %v8896
    %v9014 = vunpack.c.l.b16 %v8897
    %v9015 = vunpack.c.l.b16 %v8898
    %v9016 = vunpack.c.l.b16 %v8899
    %v9017 = vunpack.c.l.b16 %v8900
    %v9018 = vunpack.c.l.b16 %v8901
    %v9019 = vunpack.c.l.b16 %v8902
    %v9020 = vunpack.c.l.b16 %v8903
    %v9021 = vunpack.c.l.b16 %v8904
    %v9022 = vunpack.c.l.b16 %v8905
    %v9023 = vpack.c.b16 %v9008, %v9007
    %v9024 = vpack.c.b16 %v9010, %v9009
    %v9025 = vpack.c.b16 %v9012, %v9011
    %v9026 = vpack.c.b16 %v9014, %v9013
    %v9027 = vpack.c.b16 %v9016, %v9015
    %v9028 = vpack.c.b16 %v9018, %v9017
    %v9029 = vpack.c.b16 %v9020, %v9019
    %v9030 = vpack.c.b16 %v9022, %v9021
    %9039 = vmatpush.bf16.msra.mxu0 %v9030
    %9040 = vmatpush.bf16.msra.mxu0 %v9029
    %9041 = vmatpush.bf16.msra.mxu0 %v9028
    %9042 = vmatpush.bf16.msra.mxu0 %v9027
    %9043 = vmatpush.bf16.msra.mxu0 %v9026
    %9044 = vmatpush.bf16.msra.mxu0 %v9025
    %9045 = vmatpush.bf16.msra.mxu0 %v9024
    %9046 = vmatpush.bf16.msra.mxu0 %v9023
    %9047 = vmatmul.bf16.gmra.mxu0 %v8888
    %v9048 = vpop.f32.mrf.mxu0
    %v9049 = vadd.f32 %v8987, %v9048
    %v9050 = vpop.f32.mrf.mxu0
    %v9051 = vadd.f32 %v8989, %v9050
    %9052 = vdwg.mxu0
    %v9053 = vrot.slane %v8886, 1
    %v9054 = vrot.slane %v8887, 1
    %v9055 = vsel %vm947, %v9053, %v9054
    %v9056 = vsel %vm947, %v9054, %v9053
    %v9057 = vmul.f32 %v9055, %v1458
    %v9058 = vmul.f32 %v9056, %v1463
    %v9059 = vpack.c.bf16 %v9058, %v9057
    %s9060 = scalar_lea.vmem %s135, 128
    %v9061 = vld [vmem:[%s9060] sm:$0xf]
    %v9062 = vld [vmem:[%s9060 + $0x4] sm:$0xf]
    %v9063 = vld [vmem:[%s9060 + $0x8] sm:$0xf]
    %v9064 = vld [vmem:[%s9060 + $0xc] sm:$0xf]
    %v9065 = vld [vmem:[%s9060 + $0x10] sm:$0xf]
    %v9066 = vld [vmem:[%s9060 + $0x14] sm:$0xf]
    %v9067 = vld [vmem:[%s9060 + $0x18] sm:$0xf]
    %v9068 = vld [vmem:[%s9060 + $0x1c] sm:$0xf]
    %v9069 = vld [vmem:[%s9060 + $0x20] sm:$0xf]
    %v9070 = vld [vmem:[%s9060 + $0x24] sm:$0xf]
    %v9071 = vld [vmem:[%s9060 + $0x28] sm:$0xf]
    %v9072 = vld [vmem:[%s9060 + $0x2c] sm:$0xf]
    %v9073 = vld [vmem:[%s9060 + $0x30] sm:$0xf]
    %v9074 = vld [vmem:[%s9060 + $0x34] sm:$0xf]
    %v9075 = vld [vmem:[%s9060 + $0x38] sm:$0xf]
    %v9076 = vld [vmem:[%s9060 + $0x3c] sm:$0xf]
    %v9093 = vunpack.c.l.b16 %v9061
    %v9094 = vunpack.c.l.b16 %v9062
    %v9095 = vunpack.c.l.b16 %v9063
    %v9096 = vunpack.c.l.b16 %v9064
    %v9097 = vunpack.c.l.b16 %v9065
    %v9098 = vunpack.c.l.b16 %v9066
    %v9099 = vunpack.c.l.b16 %v9067
    %v9100 = vunpack.c.l.b16 %v9068
    %v9101 = vunpack.c.l.b16 %v9069
    %v9102 = vunpack.c.l.b16 %v9070
    %v9103 = vunpack.c.l.b16 %v9071
    %v9104 = vunpack.c.l.b16 %v9072
    %v9105 = vunpack.c.l.b16 %v9073
    %v9106 = vunpack.c.l.b16 %v9074
    %v9107 = vunpack.c.l.b16 %v9075
    %v9108 = vunpack.c.l.b16 %v9076
    %v9109 = vpack.c.b16 %v9094, %v9093
    %v9110 = vpack.c.b16 %v9096, %v9095
    %v9111 = vpack.c.b16 %v9098, %v9097
    %v9112 = vpack.c.b16 %v9100, %v9099
    %v9113 = vpack.c.b16 %v9102, %v9101
    %v9114 = vpack.c.b16 %v9104, %v9103
    %v9115 = vpack.c.b16 %v9106, %v9105
    %v9116 = vpack.c.b16 %v9108, %v9107
    %9125 = vmatpush.bf16.msra.mxu0 %v9116
    %9126 = vmatpush.bf16.msra.mxu0 %v9115
    %9127 = vmatpush.bf16.msra.mxu0 %v9114
    %9128 = vmatpush.bf16.msra.mxu0 %v9113
    %9129 = vmatpush.bf16.msra.mxu0 %v9112
    %9130 = vmatpush.bf16.msra.mxu0 %v9111
    %9131 = vmatpush.bf16.msra.mxu0 %v9110
    %9132 = vmatpush.bf16.msra.mxu0 %v9109
    %9133 = vmatmul.bf16.gmra.mxu0 %v9059
    %v9134 = vpop.f32.mrf.mxu0
    %v9135 = vadd.f32 0.0, %v9134
    %v9136 = vpop.f32.mrf.mxu0
    %v9137 = vadd.f32 0.0, %v9136
    %9138 = vdwg.mxu0
    %v9139 = vadd.f32 %v9049, %v9135
    %v9140 = vadd.f32 %v9051, %v9137
    %v9141 = vld [vmem:[%s133] sm:$0x1]
    %v9143 = vperm.slane %v9141, 0
    %v9145 = vadd.f32 %v9139, %v9143
    %v9146 = vadd.f32 %v9140, %v9143
    %v9147 = vmax.f32 %v9145, 0.0
    %v9148 = vmax.f32 %v9146, 0.0
    %v9149 = vsel %vm7226, 0.0, %v9147
    %v9150 = vsel %vm7227, 0.0, %v9148
    %v9151 = vsel %vm7226, %v9147, 0.0
    %v9152 = vsel %vm7227, %v9148, 0.0
    %9153 = vmatpush.msra.mxu0 0.0
    %9154 = vmatpush.msra.mxu0 0.0
    %9155 = vmatpush.msra.mxu0 0.0
    %9156 = vmatpush.msra.mxu0 0.0
    %9157 = vmatpush.msra.mxu0 0.0
    %9158 = vmatpush.msra.mxu0 0.0
    %9159 = vmatpush.msra.mxu0 0.0
    %9160 = vmatpush.msra.mxu0 0.0
    %9161 = vmatpush.msra.mxu0 0.0
    %9162 = vmatpush.msra.mxu0 0.0
    %9163 = vmatpush.msra.mxu0 0.0
    %9164 = vmatpush.msra.mxu0 0.0
    %9165 = vmatpush.msra.mxu0 0.0
    %9166 = vmatpush.msra.mxu0 0.0
    %9167 = vmatpush.msra.mxu0 %v9152
    %9168 = vmatpush.msra.mxu0 %v9151
    %9169 = vmatmul.f32.gmra.mxu0 %v3307
    %v9170 = vpop.f32.mrf.mxu0
    %v9171 = vadd.f32 0.0, %v9170
    %9172 = vmatmul.f32.gmra.mxu0 %v3309
    %v9173 = vpop.f32.mrf.mxu0
    %v9174 = vadd.f32 0.0, %v9173
    %9175 = vmatmul.f32.gmra.mxu0 %v3312
    %v9176 = vpop.f32.mrf.mxu0
    %v9177 = vadd.f32 0.0, %v9176
    %9178 = vmatmul.f32.gmra.mxu0 %v3315
    %v9179 = vpop.f32.mrf.mxu0
    %v9180 = vadd.f32 0.0, %v9179
    %9181 = vdwg.mxu0
    %9182 = vmatpush.msra.mxu0 0.0
    %9183 = vmatpush.msra.mxu0 0.0
    %9184 = vmatpush.msra.mxu0 0.0
    %9185 = vmatpush.msra.mxu0 0.0
    %9186 = vmatpush.msra.mxu0 0.0
    %9187 = vmatpush.msra.mxu0 0.0
    %9188 = vmatpush.msra.mxu0 0.0
    %9189 = vmatpush.msra.mxu0 0.0
    %9190 = vmatpush.msra.mxu0 0.0
    %9191 = vmatpush.msra.mxu0 0.0
    %9192 = vmatpush.msra.mxu0 0.0
    %9193 = vmatpush.msra.mxu0 0.0
    %9194 = vmatpush.msra.mxu0 0.0
    %9195 = vmatpush.msra.mxu0 0.0
    %9196 = vmatpush.msra.mxu0 %v9150
    %9197 = vmatpush.msra.mxu0 %v9149
    %9198 = vmatmul.f32.gmra.mxu0 %v3346
    %v9199 = vpop.f32.mrf.mxu0
    %v9200 = vadd.f32 %v9171, %v9199
    %9201 = vmatmul.f32.gmra.mxu0 %v3348
    %v9202 = vpop.f32.mrf.mxu0
    %v9203 = vadd.f32 %v9174, %v9202
    %9204 = vmatmul.f32.gmra.mxu0 %v3351
    %v9205 = vpop.f32.mrf.mxu0
    %v9206 = vadd.f32 %v9177, %v9205
    %9207 = vmatmul.f32.gmra.mxu0 %v3354
    %v9208 = vpop.f32.mrf.mxu0
    %v9209 = vadd.f32 %v9180, %v9208
    %9210 = vdwg.mxu0
    %v9211 = vadd.f32 %v7174, %v9200
    %v9212 = vadd.f32 %v7175, %v9203
    %v9213 = vadd.f32 %v7176, %v9206
    %v9214 = vadd.f32 %v7177, %v9209
    %v9215 = vpack.c.bf16 %v9212, %v9211
    %v9216 = vpack.c.bf16 %v9214, %v9213
    %s9217 = scalar_lea.vmem [#allocation36], 32
    %v9218 = vld [vmem:[%s9217] sm:$0xf]
    %v9219 = vld [vmem:[%s9217 + $0x4] sm:$0xf]
    %v9220 = vld [vmem:[%s9217 + $0x8] sm:$0xf]
    %v9221 = vld [vmem:[%s9217 + $0xc] sm:$0xf]
    %v9222 = vld [vmem:[%s9217 + $0x10] sm:$0xf]
    %v9223 = vld [vmem:[%s9217 + $0x14] sm:$0xf]
    %v9224 = vld [vmem:[%s9217 + $0x18] sm:$0xf]
    %v9225 = vld [vmem:[%s9217 + $0x1c] sm:$0xf]
    %v9226 = vrot.slane %v9211, 7
    %v9227 = vrot.slane %v9212, 7
    %v9228 = vrot.slane %v9213, 7
    %v9229 = vrot.slane %v9214, 7
    %v9230 = vsel %vm805, %v9228, %v9229
    %v9231 = vsel %vm805, %v9227, %v9228
    %v9232 = vsel %vm805, %v9226, %v9227
    %v9233 = vsel %vm805, %v9229, %v9226
    %v9234 = vmul.f32 %v9233, %v813
    %v9235 = vmul.f32 %v9232, %v818
    %v9236 = vmul.f32 %v9231, %v823
    %v9237 = vmul.f32 %v9230, %v828
    %v9238 = vpack.c.bf16 %v9235, %v9234
    %v9239 = vpack.c.bf16 %v9237, %v9236
    %v9240 = vld [vmem:[#allocation36] sm:$0xf]
    %v9241 = vld [vmem:[#allocation36 + $0x4] sm:$0xf]
    %v9242 = vld [vmem:[#allocation36 + $0x8] sm:$0xf]
    %v9243 = vld [vmem:[#allocation36 + $0xc] sm:$0xf]
    %v9244 = vld [vmem:[#allocation36 + $0x10] sm:$0xf]
    %v9245 = vld [vmem:[#allocation36 + $0x14] sm:$0xf]
    %v9246 = vld [vmem:[#allocation36 + $0x18] sm:$0xf]
    %v9247 = vld [vmem:[#allocation36 + $0x1c] sm:$0xf]
    %v9256 = vunpack.c.l.b16 %v9240
    %v9257 = vunpack.c.l.b16 %v9241
    %v9258 = vunpack.c.l.b16 %v9242
    %v9259 = vunpack.c.l.b16 %v9243
    %v9260 = vunpack.c.l.b16 %v9244
    %v9261 = vunpack.c.l.b16 %v9245
    %v9262 = vunpack.c.l.b16 %v9246
    %v9263 = vunpack.c.l.b16 %v9247
    %v9264 = vpack.c.b16 %v9257, %v9256
    %v9265 = vpack.c.b16 %v9259, %v9258
    %v9266 = vpack.c.b16 %v9261, %v9260
    %v9267 = vpack.c.b16 %v9263, %v9262
    %v9273 = vsel %vm868, %v9238, 0
    %v9276 = vsel %vm868, %v9239, 0
    %9278 = vmatpush.bf16.msra.mxu0 0
    %9279 = vmatpush.bf16.msra.mxu0 0
    %9280 = vmatpush.bf16.msra.mxu0 0
    %9281 = vmatpush.bf16.msra.mxu0 0
    %9282 = vmatpush.bf16.msra.mxu0 %v9267
    %9283 = vmatpush.bf16.msra.mxu0 %v9266
    %9284 = vmatpush.bf16.msra.mxu0 %v9265
    %9285 = vmatpush.bf16.msra.mxu0 %v9264
    %9286 = vmatmul.bf16.gmra.mxu0 %v9273
    %v9287 = vpop.f32.mrf.mxu0
    %v9288 = vadd.f32 0.0, %v9287
    %v9289 = vpop.f32.mrf.mxu0
    %v9290 = vadd.f32 0.0, %v9289
    %9291 = vmatmul.bf16.gmra.mxu0 %v9276
    %v9292 = vpop.f32.mrf.mxu0
    %v9293 = vadd.f32 0.0, %v9292
    %v9294 = vpop.f32.mrf.mxu0
    %v9295 = vadd.f32 0.0, %v9294
    %9296 = vdwg.mxu0
    %v9305 = vunpack.c.l.b16 %v9218
    %v9306 = vunpack.c.l.b16 %v9219
    %v9307 = vunpack.c.l.b16 %v9220
    %v9308 = vunpack.c.l.b16 %v9221
    %v9309 = vunpack.c.l.b16 %v9222
    %v9310 = vunpack.c.l.b16 %v9223
    %v9311 = vunpack.c.l.b16 %v9224
    %v9312 = vunpack.c.l.b16 %v9225
    %v9313 = vpack.c.b16 %v9306, %v9305
    %v9314 = vpack.c.b16 %v9308, %v9307
    %v9315 = vpack.c.b16 %v9310, %v9309
    %v9316 = vpack.c.b16 %v9312, %v9311
    %v9322 = vsel %vm868, %v9215, 0
    %v9325 = vsel %vm868, %v9216, 0
    %9327 = vmatpush.bf16.msra.mxu0 0
    %9328 = vmatpush.bf16.msra.mxu0 0
    %9329 = vmatpush.bf16.msra.mxu0 0
    %9330 = vmatpush.bf16.msra.mxu0 0
    %9331 = vmatpush.bf16.msra.mxu0 %v9316
    %9332 = vmatpush.bf16.msra.mxu0 %v9315
    %9333 = vmatpush.bf16.msra.mxu0 %v9314
    %9334 = vmatpush.bf16.msra.mxu0 %v9313
    %9335 = vmatmul.bf16.gmra.mxu0 %v9322
    %v9336 = vpop.f32.mrf.mxu0
    %v9337 = vadd.f32 %v9288, %v9336
    %v9338 = vpop.f32.mrf.mxu0
    %v9339 = vadd.f32 %v9290, %v9338
    %9340 = vmatmul.bf16.gmra.mxu0 %v9325
    %v9341 = vpop.f32.mrf.mxu0
    %v9342 = vadd.f32 %v9293, %v9341
    %v9343 = vpop.f32.mrf.mxu0
    %v9344 = vadd.f32 %v9295, %v9343
    %9345 = vdwg.mxu0
    %v9346 = vrot.slane %v9211, 1
    %v9347 = vrot.slane %v9212, 1
    %v9348 = vrot.slane %v9213, 1
    %v9349 = vrot.slane %v9214, 1
    %v9350 = vsel %vm947, %v9348, %v9349
    %v9351 = vsel %vm947, %v9347, %v9348
    %v9352 = vsel %vm947, %v9346, %v9347
    %v9353 = vsel %vm947, %v9349, %v9346
    %v9354 = vmul.f32 %v9352, %v955
    %v9355 = vmul.f32 %v9351, %v960
    %v9356 = vmul.f32 %v9350, %v965
    %v9357 = vmul.f32 %v9353, %v970
    %v9358 = vpack.c.bf16 %v9355, %v9354
    %v9359 = vpack.c.bf16 %v9357, %v9356
    %s9360 = scalar_lea.vmem [#allocation36], 64
    %v9361 = vld [vmem:[%s9360] sm:$0xf]
    %v9362 = vld [vmem:[%s9360 + $0x4] sm:$0xf]
    %v9363 = vld [vmem:[%s9360 + $0x8] sm:$0xf]
    %v9364 = vld [vmem:[%s9360 + $0xc] sm:$0xf]
    %v9365 = vld [vmem:[%s9360 + $0x10] sm:$0xf]
    %v9366 = vld [vmem:[%s9360 + $0x14] sm:$0xf]
    %v9367 = vld [vmem:[%s9360 + $0x18] sm:$0xf]
    %v9368 = vld [vmem:[%s9360 + $0x1c] sm:$0xf]
    %v9377 = vunpack.c.l.b16 %v9361
    %v9378 = vunpack.c.l.b16 %v9362
    %v9379 = vunpack.c.l.b16 %v9363
    %v9380 = vunpack.c.l.b16 %v9364
    %v9381 = vunpack.c.l.b16 %v9365
    %v9382 = vunpack.c.l.b16 %v9366
    %v9383 = vunpack.c.l.b16 %v9367
    %v9384 = vunpack.c.l.b16 %v9368
    %v9385 = vpack.c.b16 %v9378, %v9377
    %v9386 = vpack.c.b16 %v9380, %v9379
    %v9387 = vpack.c.b16 %v9382, %v9381
    %v9388 = vpack.c.b16 %v9384, %v9383
    %v9394 = vsel %vm868, %v9358, 0
    %v9397 = vsel %vm868, %v9359, 0
    %9399 = vmatpush.bf16.msra.mxu0 0
    %9400 = vmatpush.bf16.msra.mxu0 0
    %9401 = vmatpush.bf16.msra.mxu0 0
    %9402 = vmatpush.bf16.msra.mxu0 0
    %9403 = vmatpush.bf16.msra.mxu0 %v9388
    %9404 = vmatpush.bf16.msra.mxu0 %v9387
    %9405 = vmatpush.bf16.msra.mxu0 %v9386
    %9406 = vmatpush.bf16.msra.mxu0 %v9385
    %9407 = vmatmul.bf16.gmra.mxu0 %v9394
    %v9408 = vpop.f32.mrf.mxu0
    %v9409 = vadd.f32 0.0, %v9408
    %v9410 = vpop.f32.mrf.mxu0
    %v9411 = vadd.f32 0.0, %v9410
    %9412 = vmatmul.bf16.gmra.mxu0 %v9397
    %v9413 = vpop.f32.mrf.mxu0
    %v9414 = vadd.f32 0.0, %v9413
    %v9415 = vpop.f32.mrf.mxu0
    %v9416 = vadd.f32 0.0, %v9415
    %9417 = vdwg.mxu0
    %v9418 = vadd.f32 %v9337, %v9409
    %v9419 = vadd.f32 %v9339, %v9411
    %v9420 = vadd.f32 %v9342, %v9414
    %v9421 = vadd.f32 %v9344, %v9416
    %v9422 = vld [vmem:[%s121] sm:$0x1]
    %v9424 = vperm.slane %v9422, 0
    %v9426 = vadd.f32 %v9418, %v9424
    %v9427 = vadd.f32 %v9419, %v9424
    %v9428 = vadd.f32 %v9420, %v9424
    %v9429 = vadd.f32 %v9421, %v9424
    %v9430 = vmax.f32 %v9426, 0.0
    %v9431 = vmax.f32 %v9427, 0.0
    %v9432 = vmax.f32 %v9428, 0.0
    %v9433 = vmax.f32 %v9429, 0.0
    %v9434 = vpack.c.bf16 %v9431, %v9430
    %v9435 = vpack.c.bf16 %v9433, %v9432
    %s9436 = scalar_lea.vmem [#allocation38], 32
    %v9437 = vld [vmem:[%s9436] sm:$0xf]
    %v9438 = vld [vmem:[%s9436 + $0x4] sm:$0xf]
    %v9439 = vld [vmem:[%s9436 + $0x8] sm:$0xf]
    %v9440 = vld [vmem:[%s9436 + $0xc] sm:$0xf]
    %v9441 = vld [vmem:[%s9436 + $0x10] sm:$0xf]
    %v9442 = vld [vmem:[%s9436 + $0x14] sm:$0xf]
    %v9443 = vld [vmem:[%s9436 + $0x18] sm:$0xf]
    %v9444 = vld [vmem:[%s9436 + $0x1c] sm:$0xf]
    %v9445 = vrot.slane %v9430, 7
    %v9446 = vrot.slane %v9431, 7
    %v9447 = vrot.slane %v9432, 7
    %v9448 = vrot.slane %v9433, 7
    %v9449 = vsel %vm805, %v9447, %v9448
    %v9450 = vsel %vm805, %v9446, %v9447
    %v9451 = vsel %vm805, %v9445, %v9446
    %v9452 = vsel %vm805, %v9448, %v9445
    %v9453 = vmul.f32 %v9452, %v813
    %v9454 = vmul.f32 %v9451, %v818
    %v9455 = vmul.f32 %v9450, %v823
    %v9456 = vmul.f32 %v9449, %v828
    %v9457 = vpack.c.bf16 %v9454, %v9453
    %v9458 = vpack.c.bf16 %v9456, %v9455
    %v9459 = vld [vmem:[#allocation38] sm:$0xf]
    %v9460 = vld [vmem:[#allocation38 + $0x4] sm:$0xf]
    %v9461 = vld [vmem:[#allocation38 + $0x8] sm:$0xf]
    %v9462 = vld [vmem:[#allocation38 + $0xc] sm:$0xf]
    %v9463 = vld [vmem:[#allocation38 + $0x10] sm:$0xf]
    %v9464 = vld [vmem:[#allocation38 + $0x14] sm:$0xf]
    %v9465 = vld [vmem:[#allocation38 + $0x18] sm:$0xf]
    %v9466 = vld [vmem:[#allocation38 + $0x1c] sm:$0xf]
    %v9475 = vunpack.c.l.b16 %v9459
    %v9476 = vunpack.c.l.b16 %v9460
    %v9477 = vunpack.c.l.b16 %v9461
    %v9478 = vunpack.c.l.b16 %v9462
    %v9479 = vunpack.c.l.b16 %v9463
    %v9480 = vunpack.c.l.b16 %v9464
    %v9481 = vunpack.c.l.b16 %v9465
    %v9482 = vunpack.c.l.b16 %v9466
    %v9483 = vpack.c.b16 %v9476, %v9475
    %v9484 = vpack.c.b16 %v9478, %v9477
    %v9485 = vpack.c.b16 %v9480, %v9479
    %v9486 = vpack.c.b16 %v9482, %v9481
    %v9492 = vsel %vm868, %v9457, 0
    %v9495 = vsel %vm868, %v9458, 0
    %9497 = vmatpush.bf16.msra.mxu0 0
    %9498 = vmatpush.bf16.msra.mxu0 0
    %9499 = vmatpush.bf16.msra.mxu0 0
    %9500 = vmatpush.bf16.msra.mxu0 0
    %9501 = vmatpush.bf16.msra.mxu0 %v9486
    %9502 = vmatpush.bf16.msra.mxu0 %v9485
    %9503 = vmatpush.bf16.msra.mxu0 %v9484
    %9504 = vmatpush.bf16.msra.mxu0 %v9483
    %9505 = vmatmul.bf16.gmra.mxu0 %v9492
    %v9506 = vpop.f32.mrf.mxu0
    %v9507 = vadd.f32 0.0, %v9506
    %v9508 = vpop.f32.mrf.mxu0
    %v9509 = vadd.f32 0.0, %v9508
    %9510 = vmatmul.bf16.gmra.mxu0 %v9495
    %v9511 = vpop.f32.mrf.mxu0
    %v9512 = vadd.f32 0.0, %v9511
    %v9513 = vpop.f32.mrf.mxu0
    %v9514 = vadd.f32 0.0, %v9513
    %9515 = vdwg.mxu0
    %v9524 = vunpack.c.l.b16 %v9437
    %v9525 = vunpack.c.l.b16 %v9438
    %v9526 = vunpack.c.l.b16 %v9439
    %v9527 = vunpack.c.l.b16 %v9440
    %v9528 = vunpack.c.l.b16 %v9441
    %v9529 = vunpack.c.l.b16 %v9442
    %v9530 = vunpack.c.l.b16 %v9443
    %v9531 = vunpack.c.l.b16 %v9444
    %v9532 = vpack.c.b16 %v9525, %v9524
    %v9533 = vpack.c.b16 %v9527, %v9526
    %v9534 = vpack.c.b16 %v9529, %v9528
    %v9535 = vpack.c.b16 %v9531, %v9530
    %v9541 = vsel %vm868, %v9434, 0
    %v9544 = vsel %vm868, %v9435, 0
    %9546 = vmatpush.bf16.msra.mxu0 0
    %9547 = vmatpush.bf16.msra.mxu0 0
    %9548 = vmatpush.bf16.msra.mxu0 0
    %9549 = vmatpush.bf16.msra.mxu0 0
    %9550 = vmatpush.bf16.msra.mxu0 %v9535
    %9551 = vmatpush.bf16.msra.mxu0 %v9534
    %9552 = vmatpush.bf16.msra.mxu0 %v9533
    %9553 = vmatpush.bf16.msra.mxu0 %v9532
    %9554 = vmatmul.bf16.gmra.mxu0 %v9541
    %v9555 = vpop.f32.mrf.mxu0
    %v9556 = vadd.f32 %v9507, %v9555
    %v9557 = vpop.f32.mrf.mxu0
    %v9558 = vadd.f32 %v9509, %v9557
    %9559 = vmatmul.bf16.gmra.mxu0 %v9544
    %v9560 = vpop.f32.mrf.mxu0
    %v9561 = vadd.f32 %v9512, %v9560
    %v9562 = vpop.f32.mrf.mxu0
    %v9563 = vadd.f32 %v9514, %v9562
    %9564 = vdwg.mxu0
    %v9565 = vrot.slane %v9430, 1
    %v9566 = vrot.slane %v9431, 1
    %v9567 = vrot.slane %v9432, 1
    %v9568 = vrot.slane %v9433, 1
    %v9569 = vsel %vm947, %v9567, %v9568
    %v9570 = vsel %vm947, %v9566, %v9567
    %v9571 = vsel %vm947, %v9565, %v9566
    %v9572 = vsel %vm947, %v9568, %v9565
    %v9573 = vmul.f32 %v9571, %v955
    %v9574 = vmul.f32 %v9570, %v960
    %v9575 = vmul.f32 %v9569, %v965
    %v9576 = vmul.f32 %v9572, %v970
    %v9577 = vpack.c.bf16 %v9574, %v9573
    %v9578 = vpack.c.bf16 %v9576, %v9575
    %s9579 = scalar_lea.vmem [#allocation38], 64
    %v9580 = vld [vmem:[%s9579] sm:$0xf]
    %v9581 = vld [vmem:[%s9579 + $0x4] sm:$0xf]
    %v9582 = vld [vmem:[%s9579 + $0x8] sm:$0xf]
    %v9583 = vld [vmem:[%s9579 + $0xc] sm:$0xf]
    %v9584 = vld [vmem:[%s9579 + $0x10] sm:$0xf]
    %v9585 = vld [vmem:[%s9579 + $0x14] sm:$0xf]
    %v9586 = vld [vmem:[%s9579 + $0x18] sm:$0xf]
    %v9587 = vld [vmem:[%s9579 + $0x1c] sm:$0xf]
    %v9596 = vunpack.c.l.b16 %v9580
    %v9597 = vunpack.c.l.b16 %v9581
    %v9598 = vunpack.c.l.b16 %v9582
    %v9599 = vunpack.c.l.b16 %v9583
    %v9600 = vunpack.c.l.b16 %v9584
    %v9601 = vunpack.c.l.b16 %v9585
    %v9602 = vunpack.c.l.b16 %v9586
    %v9603 = vunpack.c.l.b16 %v9587
    %v9604 = vpack.c.b16 %v9597, %v9596
    %v9605 = vpack.c.b16 %v9599, %v9598
    %v9606 = vpack.c.b16 %v9601, %v9600
    %v9607 = vpack.c.b16 %v9603, %v9602
    %v9613 = vsel %vm868, %v9577, 0
    %v9616 = vsel %vm868, %v9578, 0
    %9618 = vmatpush.bf16.msra.mxu0 0
    %9619 = vmatpush.bf16.msra.mxu0 0
    %9620 = vmatpush.bf16.msra.mxu0 0
    %9621 = vmatpush.bf16.msra.mxu0 0
    %9622 = vmatpush.bf16.msra.mxu0 %v9607
    %9623 = vmatpush.bf16.msra.mxu0 %v9606
    %9624 = vmatpush.bf16.msra.mxu0 %v9605
    %9625 = vmatpush.bf16.msra.mxu0 %v9604
    %9626 = vmatmul.bf16.gmra.mxu0 %v9613
    %v9627 = vpop.f32.mrf.mxu0
    %v9628 = vadd.f32 0.0, %v9627
    %v9629 = vpop.f32.mrf.mxu0
    %v9630 = vadd.f32 0.0, %v9629
    %9631 = vmatmul.bf16.gmra.mxu0 %v9616
    %v9632 = vpop.f32.mrf.mxu0
    %v9633 = vadd.f32 0.0, %v9632
    %v9634 = vpop.f32.mrf.mxu0
    %v9635 = vadd.f32 0.0, %v9634
    %9636 = vdwg.mxu0
    %v9637 = vadd.f32 %v9556, %v9628
    %v9638 = vadd.f32 %v9558, %v9630
    %v9639 = vadd.f32 %v9561, %v9633
    %v9640 = vadd.f32 %v9563, %v9635
    %v9641 = vld [vmem:[%s125] sm:$0x1]
    %v9643 = vperm.slane %v9641, 0
    %v9645 = vadd.f32 %v9637, %v9643
    %v9646 = vadd.f32 %v9638, %v9643
    %v9647 = vadd.f32 %v9639, %v9643
    %v9648 = vadd.f32 %v9640, %v9643
    %v9649 = vmax.f32 %v9645, 0.0
    %v9650 = vmax.f32 %v9646, 0.0
    %v9651 = vmax.f32 %v9647, 0.0
    %v9652 = vmax.f32 %v9648, 0.0
    %v9653 = vld [vmem:[%s15] sm:$0x1]
    %v9655 = vperm.slane %v9653, 0
    %v9657 = vmul.f32 %v9649, %v9655
    %v9658 = vmul.f32 %v9650, %v9655
    %v9659 = vmul.f32 %v9651, %v9655
    %v9660 = vmul.f32 %v9652, %v9655
    %v9661 = vsel %vm868, %v9657, 0.0
    %9662 = vadd.xlane.f32.xlu0 %v9661
    %v9663 = vpop.xlane.xlu0 %9662
    %v9664 = vsel %vm868, %v9658, 0.0
    %9665 = vadd.xlane.f32.xlu0 %v9664
    %v9666 = vpop.xlane.xlu0 %9665
    %v9667 = vsel %vm868, %v9659, 0.0
    %9668 = vadd.xlane.f32.xlu0 %v9667
    %v9669 = vpop.xlane.xlu0 %9668
    %v9670 = vsel %vm868, %v9660, 0.0
    %9671 = vadd.xlane.f32.xlu0 %v9670
    %v9672 = vpop.xlane.xlu0 %9671
    %v9673 = vld [vmem:[#allocation2] sm:$0x1]
    %v9675 = vperm.slane %v9673, 0
    %v9677 = vadd.f32 %v9663, %v9675
    %v9678 = vadd.f32 %v9666, %v9675
    %v9679 = vadd.f32 %v9669, %v9675
    %v9680 = vadd.f32 %v9672, %v9675
    %vm9681 = vcmask 7168
    %9682 = vst.msk [vmem:[%s139] sm:$0xff] %vm9681, %v9677
    %9683 = vst.msk [vmem:[%s139 + $0x8] sm:$0xff] %vm9681, %v9678
    %9684 = vst.msk [vmem:[%s139 + $0x10] sm:$0xff] %vm9681, %v9679
    %9685 = vst.msk [vmem:[%s139 + $0x18] sm:$0xff] %vm9681, %v9680
    %v9686 = vrot.slane %v9677, 5
    %v9687 = vrot.slane %v9678, 5
    %v9688 = vrot.slane %v9679, 5
    %v9689 = vrot.slane %v9680, 5
    %vm9690 = vcmp.lt.s32.totalorder %v710, 3
    %v9691 = vsel %vm9690, %v9688, %v9689
    %v9692 = vsel %vm9690, %v9687, %v9688
    %v9693 = vsel %vm9690, %v9686, %v9687
    %v9694 = vsel %vm9690, %v9689, %v9686
    %vm9695 = vcmp.ge.s32.totalorder %v674, 3
    %vm9696 = vcmp.ge.s32.totalorder %v675, 3
    %vm9697 = vcmp.ge.s32.totalorder %v676, 3
    %vm9698 = vcmp.ge.s32.totalorder %v677, 3
    %v9699 = vsel %vm9695, %v9694, -1e+30
    %v9700 = vsel %vm9696, %v9693, -1e+30
    %v9701 = vsel %vm9697, %v9692, -1e+30
    %v9702 = vsel %vm9698, %v9691, -1e+30
    %v9703 = vrot.slane %v9677, 6
    %v9704 = vrot.slane %v9678, 6
    %v9705 = vrot.slane %v9679, 6
    %v9706 = vrot.slane %v9680, 6
    %vm9707 = vcmp.lt.s32.totalorder %v710, 2
    %v9708 = vsel %vm9707, %v9705, %v9706
    %v9709 = vsel %vm9707, %v9704, %v9705
    %v9710 = vsel %vm9707, %v9703, %v9704
    %v9711 = vsel %vm9707, %v9706, %v9703
    %vm9712 = vcmp.ge.s32.totalorder %v674, 2
    %vm9713 = vcmp.ge.s32.totalorder %v675, 2
    %vm9714 = vcmp.ge.s32.totalorder %v676, 2
    %vm9715 = vcmp.ge.s32.totalorder %v677, 2
    %v9716 = vsel %vm9712, %v9711, -1e+30
    %v9717 = vsel %vm9713, %v9710, -1e+30
    %v9718 = vsel %vm9714, %v9709, -1e+30
    %v9719 = vsel %vm9715, %v9708, -1e+30
    %v9720 = vrot.slane %v9677, 7
    %v9721 = vrot.slane %v9678, 7
    %v9722 = vrot.slane %v9679, 7
    %v9723 = vrot.slane %v9680, 7
    %v9724 = vsel %vm805, %v9722, %v9723
    %v9725 = vsel %vm805, %v9721, %v9722
    %v9726 = vsel %vm805, %v9720, %v9721
    %v9727 = vsel %vm805, %v9723, %v9720
    %v9728 = vsel %vm681, %v9727, -1e+30
    %v9729 = vsel %vm682, %v9726, -1e+30
    %v9730 = vsel %vm683, %v9725, -1e+30
    %v9731 = vsel %vm684, %v9724, -1e+30
    %v9732 = vrot.slane %v9677, 1
    %v9733 = vrot.slane %v9678, 1
    %v9734 = vrot.slane %v9679, 1
    %v9735 = vrot.slane %v9680, 1
    %v9736 = vsel %vm947, %v9734, %v9735
    %v9737 = vsel %vm947, %v9733, %v9734
    %v9738 = vsel %vm947, %v9732, %v9733
    %v9739 = vsel %vm947, %v9735, %v9732
    %v9740 = vsel %vm689, %v9738, -1e+30
    %v9741 = vsel %vm690, %v9737, -1e+30
    %v9742 = vsel %vm691, %v9736, -1e+30
    %v9743 = vsel %vm692, %v9739, -1e+30
    %v9744 = vrot.slane %v9677, 2
    %v9745 = vrot.slane %v9678, 2
    %v9746 = vrot.slane %v9679, 2
    %v9747 = vrot.slane %v9680, 2
    %vm9748 = vcmp.lt.s32.totalorder %v710, 6
    %v9749 = vsel %vm9748, %v9746, %v9747
    %v9750 = vsel %vm9748, %v9745, %v9746
    %v9751 = vsel %vm9748, %v9744, %v9745
    %v9752 = vsel %vm9748, %v9747, %v9744
    %vm9753 = vcmp.le.s32.totalorder %v674, 13
    %vm9754 = vcmp.le.s32.totalorder %v675, 13
    %vm9755 = vcmp.le.s32.totalorder %v676, 13
    %vm9756 = vcmp.le.s32.totalorder %v677, 13
    %v9757 = vsel %vm9753, %v9751, -1e+30
    %v9758 = vsel %vm9754, %v9750, -1e+30
    %v9759 = vsel %vm9755, %v9749, -1e+30
    %v9760 = vsel %vm9756, %v9752, -1e+30
    %v9761 = vrot.slane %v9677, 3
    %v9762 = vrot.slane %v9678, 3
    %v9763 = vrot.slane %v9679, 3
    %v9764 = vrot.slane %v9680, 3
    %vm9765 = vcmp.lt.s32.totalorder %v710, 5
    %v9766 = vsel %vm9765, %v9763, %v9764
    %v9767 = vsel %vm9765, %v9762, %v9763
    %v9768 = vsel %vm9765, %v9761, %v9762
    %v9769 = vsel %vm9765, %v9764, %v9761
    %vm9770 = vcmp.le.s32.totalorder %v674, 12
    %vm9771 = vcmp.le.s32.totalorder %v675, 12
    %vm9772 = vcmp.le.s32.totalorder %v676, 12
    %vm9773 = vcmp.le.s32.totalorder %v677, 12
    %v9774 = vsel %vm9770, %v9768, -1e+30
    %v9775 = vsel %vm9771, %v9767, -1e+30
    %v9776 = vsel %vm9772, %v9766, -1e+30
    %v9777 = vsel %vm9773, %v9769, -1e+30
    %v9778 = vmax.f32 %v9699, %v9716
    %v9779 = vmax.f32 %v9700, %v9717
    %v9780 = vmax.f32 %v9701, %v9718
    %v9781 = vmax.f32 %v9702, %v9719
    %v9782 = vmax.f32 %v9778, %v9728
    %v9783 = vmax.f32 %v9779, %v9729
    %v9784 = vmax.f32 %v9780, %v9730
    %v9785 = vmax.f32 %v9781, %v9731
    %v9786 = vmax.f32 %v9782, %v9677
    %v9787 = vmax.f32 %v9783, %v9678
    %v9788 = vmax.f32 %v9784, %v9679
    %v9789 = vmax.f32 %v9785, %v9680
    %v9790 = vmax.f32 %v9786, %v9740
    %v9791 = vmax.f32 %v9787, %v9741
    %v9792 = vmax.f32 %v9788, %v9742
    %v9793 = vmax.f32 %v9789, %v9743
    %v9794 = vmax.f32 %v9790, %v9757
    %v9795 = vmax.f32 %v9791, %v9758
    %v9796 = vmax.f32 %v9792, %v9759
    %v9797 = vmax.f32 %v9793, %v9760
    %v9798 = vmax.f32 %v9794, %v9774
    %v9799 = vmax.f32 %v9795, %v9775
    %v9800 = vmax.f32 %v9796, %v9776
    %v9801 = vmax.f32 %v9797, %v9777
    %s9802 = sld [smem:[#allocation41]]
    %v9803 = vsub.f32 %v9699, %v9798
    %v9804 = vsub.f32 %v9700, %v9799
    %v9805 = vsub.f32 %v9701, %v9800
    %v9806 = vsub.f32 %v9702, %v9801
    %v9807 = vmul.f32 %v9803, 1.442695
    %v9808 = vpow.pop %v9807
    %v9809 = vmul.f32 %v9804, 1.442695
    %v9810 = vpow.pop %v9809
    %v9811 = vmul.f32 %v9805, 1.442695
    %v9812 = vpow.pop %v9811
    %v9813 = vmul.f32 %v9806, 1.442695
    %v9814 = vpow.pop %v9813
    %v9815 = vstv %s9802
    %v9816 = vmul.f32 %v9815, %v9808
    %v9817 = vmul.f32 %v9815, %v9810
    %v9818 = vmul.f32 %v9815, %v9812
    %v9819 = vmul.f32 %v9815, %v9814
    %v9820 = vadd.f32 %v9816, 0.0
    %v9821 = vadd.f32 %v9817, 0.0
    %v9822 = vadd.f32 %v9818, 0.0
    %v9823 = vadd.f32 %v9819, 0.0
    %s9824 = sld [smem:[#allocation41 + $0x1]]
    %v9825 = vsub.f32 %v9716, %v9798
    %v9826 = vsub.f32 %v9717, %v9799
    %v9827 = vsub.f32 %v9718, %v9800
    %v9828 = vsub.f32 %v9719, %v9801
    %v9829 = vmul.f32 %v9825, 1.442695
    %v9830 = vpow.pop %v9829
    %v9831 = vmul.f32 %v9826, 1.442695
    %v9832 = vpow.pop %v9831
    %v9833 = vmul.f32 %v9827, 1.442695
    %v9834 = vpow.pop %v9833
    %v9835 = vmul.f32 %v9828, 1.442695
    %v9836 = vpow.pop %v9835
    %v9837 = vstv %s9824
    %v9838 = vmul.f32 %v9837, %v9830
    %v9839 = vmul.f32 %v9837, %v9832
    %v9840 = vmul.f32 %v9837, %v9834
    %v9841 = vmul.f32 %v9837, %v9836
    %v9842 = vadd.f32 %v9820, %v9838
    %v9843 = vadd.f32 %v9821, %v9839
    %v9844 = vadd.f32 %v9822, %v9840
    %v9845 = vadd.f32 %v9823, %v9841
    %s9846 = sld [smem:[#allocation41 + $0x2]]
    %v9847 = vsub.f32 %v9728, %v9798
    %v9848 = vsub.f32 %v9729, %v9799
    %v9849 = vsub.f32 %v9730, %v9800
    %v9850 = vsub.f32 %v9731, %v9801
    %v9851 = vmul.f32 %v9847, 1.442695
    %v9852 = vpow.pop %v9851
    %v9853 = vmul.f32 %v9848, 1.442695
    %v9854 = vpow.pop %v9853
    %v9855 = vmul.f32 %v9849, 1.442695
    %v9856 = vpow.pop %v9855
    %v9857 = vmul.f32 %v9850, 1.442695
    %v9858 = vpow.pop %v9857
    %v9859 = vstv %s9846
    %v9860 = vmul.f32 %v9859, %v9852
    %v9861 = vmul.f32 %v9859, %v9854
    %v9862 = vmul.f32 %v9859, %v9856
    %v9863 = vmul.f32 %v9859, %v9858
    %v9864 = vadd.f32 %v9842, %v9860
    %v9865 = vadd.f32 %v9843, %v9861
    %v9866 = vadd.f32 %v9844, %v9862
    %v9867 = vadd.f32 %v9845, %v9863
    %s9868 = sld [smem:[#allocation41 + $0x3]]
    %v9869 = vsub.f32 %v9677, %v9798
    %v9870 = vsub.f32 %v9678, %v9799
    %v9871 = vsub.f32 %v9679, %v9800
    %v9872 = vsub.f32 %v9680, %v9801
    %v9873 = vmul.f32 %v9869, 1.442695
    %v9874 = vpow.pop %v9873
    %v9875 = vmul.f32 %v9870, 1.442695
    %v9876 = vpow.pop %v9875
    %v9877 = vmul.f32 %v9871, 1.442695
    %v9878 = vpow.pop %v9877
    %v9879 = vmul.f32 %v9872, 1.442695
    %v9880 = vpow.pop %v9879
    %v9881 = vstv %s9868
    %v9882 = vmul.f32 %v9881, %v9874
    %v9883 = vmul.f32 %v9881, %v9876
    %v9884 = vmul.f32 %v9881, %v9878
    %v9885 = vmul.f32 %v9881, %v9880
    %v9886 = vadd.f32 %v9864, %v9882
    %v9887 = vadd.f32 %v9865, %v9883
    %v9888 = vadd.f32 %v9866, %v9884
    %v9889 = vadd.f32 %v9867, %v9885
    %s9890 = sld [smem:[#allocation41 + $0x4]]
    %v9891 = vsub.f32 %v9740, %v9798
    %v9892 = vsub.f32 %v9741, %v9799
    %v9893 = vsub.f32 %v9742, %v9800
    %v9894 = vsub.f32 %v9743, %v9801
    %v9895 = vmul.f32 %v9891, 1.442695
    %v9896 = vpow.pop %v9895
    %v9897 = vmul.f32 %v9892, 1.442695
    %v9898 = vpow.pop %v9897
    %v9899 = vmul.f32 %v9893, 1.442695
    %v9900 = vpow.pop %v9899
    %v9901 = vmul.f32 %v9894, 1.442695
    %v9902 = vpow.pop %v9901
    %v9903 = vstv %s9890
    %v9904 = vmul.f32 %v9903, %v9896
    %v9905 = vmul.f32 %v9903, %v9898
    %v9906 = vmul.f32 %v9903, %v9900
    %v9907 = vmul.f32 %v9903, %v9902
    %v9908 = vadd.f32 %v9886, %v9904
    %v9909 = vadd.f32 %v9887, %v9905
    %v9910 = vadd.f32 %v9888, %v9906
    %v9911 = vadd.f32 %v9889, %v9907
    %s9912 = sld [smem:[#allocation41 + $0x5]]
    %v9913 = vsub.f32 %v9757, %v9798
    %v9914 = vsub.f32 %v9758, %v9799
    %v9915 = vsub.f32 %v9759, %v9800
    %v9916 = vsub.f32 %v9760, %v9801
    %v9917 = vmul.f32 %v9913, 1.442695
    %v9918 = vpow.pop %v9917
    %v9919 = vmul.f32 %v9914, 1.442695
    %v9920 = vpow.pop %v9919
    %v9921 = vmul.f32 %v9915, 1.442695
    %v9922 = vpow.pop %v9921
    %v9923 = vmul.f32 %v9916, 1.442695
    %v9924 = vpow.pop %v9923
    %v9925 = vstv %s9912
    %v9926 = vmul.f32 %v9925, %v9918
    %v9927 = vmul.f32 %v9925, %v9920
    %v9928 = vmul.f32 %v9925, %v9922
    %v9929 = vmul.f32 %v9925, %v9924
    %v9930 = vadd.f32 %v9908, %v9926
    %v9931 = vadd.f32 %v9909, %v9927
    %v9932 = vadd.f32 %v9910, %v9928
    %v9933 = vadd.f32 %v9911, %v9929
    %s9934 = sld [smem:[#allocation41 + $0x6]]
    %v9935 = vsub.f32 %v9774, %v9798
    %v9936 = vsub.f32 %v9775, %v9799
    %v9937 = vsub.f32 %v9776, %v9800
    %v9938 = vsub.f32 %v9777, %v9801
    %v9939 = vmul.f32 %v9935, 1.442695
    %v9940 = vpow.pop %v9939
    %v9941 = vmul.f32 %v9936, 1.442695
    %v9942 = vpow.pop %v9941
    %v9943 = vmul.f32 %v9937, 1.442695
    %v9944 = vpow.pop %v9943
    %v9945 = vmul.f32 %v9938, 1.442695
    %v9946 = vpow.pop %v9945
    %v9947 = vstv %s9934
    %v9948 = vmul.f32 %v9947, %v9940
    %v9949 = vmul.f32 %v9947, %v9942
    %v9950 = vmul.f32 %v9947, %v9944
    %v9951 = vmul.f32 %v9947, %v9946
    %v9952 = vadd.f32 %v9930, %v9948
    %v9953 = vadd.f32 %v9931, %v9949
    %v9954 = vadd.f32 %v9932, %v9950
    %v9955 = vadd.f32 %v9933, %v9951
    %v9956 = vlog2.pop %v9952
    %v9957 = vmul.f32 %v9956, 0.6931472
    %v9958 = vlog2.pop %v9953
    %v9959 = vmul.f32 %v9958, 0.6931472
    %v9960 = vlog2.pop %v9954
    %v9961 = vmul.f32 %v9960, 0.6931472
    %v9962 = vlog2.pop %v9955
    %v9963 = vmul.f32 %v9962, 0.6931472
    %v9964 = vadd.f32 %v9798, %v9957
    %v9965 = vadd.f32 %v9799, %v9959
    %v9966 = vadd.f32 %v9800, %v9961
    %v9967 = vadd.f32 %v9801, %v9963
    %9968 = vst.msk [vmem:[%s141] sm:$0xff] %vm9681, %v9964
    %9969 = vst.msk [vmem:[%s141 + $0x8] sm:$0xff] %vm9681, %v9965
    %9970 = vst.msk [vmem:[%s141 + $0x10] sm:$0xff] %vm9681, %v9966
    %9971 = vst.msk [vmem:[%s141 + $0x18] sm:$0xff] %vm9681, %v9967
    // Predicated region
    $region378: #{combine_net.1} parent=1 // pred_check
      _
    $region379: #{combine_net.1} parent=1 // pred_check_branch
      %9973 = sbr.rel (0) target = $region381
    $region380: #{combine_net.1} parent=1 // pred_region
      _
    $region381: #{combine_net.1} parent=1 // pred_fallthru
      _
    // Predicated region
    $region382: #{combine_net.1} parent=1 // pred_check
      _
    $region383: #{combine_net.1} parent=1 // pred_check_branch
      %9975 = sbr.rel (0) target = $region385
    $region384: #{combine_net.1} parent=1 // pred_region
      _
    $region385: #{combine_net.1} parent=1 // pred_fallthru
      _
    // Predicated region
    $region386: #{combine_net.1} parent=1 // pred_check
      _
    $region387: #{combine_net.1} parent=1 // pred_check_branch
      %9977 = sbr.rel (0) target = $region389
    $region388: #{combine_net.1} parent=1 // pred_region
      _
    $region389: #{combine_net.1} parent=1 // pred_fallthru
      _
    // Predicated region
    $region390: #{combine_net.1} parent=1 // pred_check
      _
    $region391: #{combine_net.1} parent=1 // pred_check_branch
      %9979 = sbr.rel (0) target = $region393
    $region392: #{combine_net.1} parent=1 // pred_region
      _
    $region393: #{combine_net.1} parent=1 // pred_fallthru
      _
    %9980 = vsyncpa [#allocation4], 1
    %9981 = vsyncpa [#allocation7], 1
    %9982 = vsyncpa [#allocation10], 1
    %9983 = vsyncpa [#allocation13], 1
    %9984 = vsyncpa [#allocation16], 1
    %9985 = vsyncpa [#allocation19], 1
    %9986 = vsyncpa [#allocation22], 1
    %9987 = vsyncpa [#allocation25], 1
    %9988 = vsyncpa [#allocation28], 1
    %9989 = vsyncpa [#allocation31], 1
    %9990 = vsyncpa [#allocation34], 1
    %9991 = vsyncpa [#allocation37], 1
    %9992 = vsyncpa [#allocation40], 1
    %9993 = vsyncpa [#allocation5], 1

</llo_original>
